<compile_context>
chip_gen: v7x
topology: tpu7x:2x2x1
jax: 0.10.0
libtpu: 0.0.40
codegen_flags: <defaults>
</compile_context>

<pallas_src>
import functools

import jax
import jax.numpy as jnp
from jax.experimental import pallas as pl
from jax.experimental.pallas import tpu as pltpu


# ----------------------------------------------------------------------------
# Pallas kernel: fused (patches @ W) + bias, then activation.
# ----------------------------------------------------------------------------
def _fused_matmul_kernel(a_ref, b_ref, bias_ref, o_ref, *, act):
    acc = jnp.dot(a_ref[...], b_ref[...], preferred_element_type=jnp.float32)
    y = acc + bias_ref[...]
    if act == "relu":
        y = jnp.maximum(y, 0.0)
    else:  # "tanh"
        y = jnp.tanh(y)
    o_ref[...] = y.astype(o_ref.dtype)


def _round_up(x, m):
    return ((x + m - 1) // m) * m


def _choose_tile_m(M):
    """Pick a row-tile size.  Returns (tm, M_padded)."""
    if M <= 256:
        # Single tile; block equals full array dim so no (8,128) constraint.
        return M, M
    Mp = _round_up(M, 256)
    tm = 256
    # Grow the tile (fewer grid steps = less per-step overhead) but keep the
    # tile <= 2048 rows and keep grid >= 2 so v7x's two TensorCores both work.
    while tm * 2 <= 2048 and Mp % (tm * 2) == 0 and Mp // (tm * 2) >= 2:
        tm *= 2
    return tm, Mp


def fused_matmul(a, b, bias, act):
    """a: (M, K) bf16, b: (K, Cp) bf16, bias: (1, Cp) f32, Cp % 128 == 0."""
    M, K = a.shape
    _, Cp = b.shape
    tm, Mp = _choose_tile_m(M)
    if Mp != M:
        a = jnp.pad(a, ((0, Mp - M), (0, 0)))
    grid = (Mp // tm,)
    out = pl.pallas_call(
        functools.partial(_fused_matmul_kernel, act=act),
        out_shape=jax.ShapeDtypeStruct((Mp, Cp), jnp.bfloat16),
        grid_spec=pltpu.PrefetchScalarGridSpec(
            num_scalar_prefetch=0,
            grid=grid,
            in_specs=[
                pl.BlockSpec((tm, K), lambda i: (i, 0)),
                pl.BlockSpec((K, Cp), lambda i: (0, 0)),
                pl.BlockSpec((1, Cp), lambda i: (0, 0)),
            ],
            out_specs=pl.BlockSpec((tm, Cp), lambda i: (i, 0)),
        ),
        compiler_params=pltpu.CompilerParams(
            dimension_semantics=("parallel",)),
    )(a, b, bias)
    return out[:M]


# ----------------------------------------------------------------------------
# Glue: ConvTranspose2d == (zero-dilate + pad) -> im2col -> fused matmul
# ----------------------------------------------------------------------------
def conv_transpose_layer(x_nhwc, Wm, bias, cout, k, stride, pad, act):
    N, H, W, Cin = x_nhwc.shape
    OH = (H - 1) * stride - 2 * pad + k
    OW = (W - 1) * stride - 2 * pad + k
    # TODO(synk): stride-2 layers waste 75% of MACs on structural zeros; a
    # sub-pixel (pixel-shuffle) decomposition into 4 stride-1 matmuls would
    # remove them.
    if stride > 1:
        Hd, Wd = (H - 1) * stride + 1, (W - 1) * stride + 1
        xd = jnp.zeros((N, Hd, Wd, Cin), x_nhwc.dtype)
        xd = xd.at[:, ::stride, ::stride, :].set(x_nhwc)
    else:
        xd = x_nhwc
    p = k - 1 - pad
    xp = jnp.pad(xd, ((0, 0), (p, p), (p, p), (0, 0)))
    # im2col: (N*OH*OW, k*k*Cin), kernel-position major, channel minor (bf16).
    cols = [xp[:, i:i + OH, j:j + OW, :] for i in range(k) for j in range(k)]
    patches = jnp.stack(cols, axis=3).reshape(N * OH * OW, k * k * Cin)
    out = fused_matmul(patches, Wm, bias, act)         # (M, Cp) bf16
    return out[:, :cout].reshape(N, OH, OW, cout)


def make_weight_matrix(W_t):
    """W_t: ConvTranspose2d weight (Cin, Cout, k, k) -> (k*k*Cin, Cout) f32."""
    Cin, Cout, k, _ = W_t.shape
    Wf = W_t[:, :, ::-1, ::-1]                          # spatial flip
    return jnp.transpose(Wf, (2, 3, 0, 1)).reshape(k * k * Cin, Cout)


# ----------------------------------------------------------------------------
# Static layer config + deterministic parameter construction
# ----------------------------------------------------------------------------
def generator_config(channels_noise, channels_img, features_g):
    # (Cin, Cout, k, stride, pad, has_bn, act)  -- mirrors Generator.__init__
    return (
        (channels_noise, features_g * 8, 4, 1, 0, True, "relu"),
        (features_g * 8, features_g * 4, 4, 2, 1, True, "relu"),
        (features_g * 4, features_g * 8, 4, 2, 1, True, "relu"),
        (features_g * 8, features_g,     4, 2, 1, True, "relu"),
        (features_g,     channels_img,   4, 2, 1, False, "tanh"),
    )


def init_generator_params(key, cfg):
    eps = 1e-5
    params = []
    for (cin, cout, k, stride, pad, has_bn, act) in cfg:
        key, kw, kb, kg, kbe, km, kv = jax.random.split(key, 7)
        W = 0.02 * jax.random.normal(kw, (cin, cout, k, k), jnp.float32)
        b = 0.02 * jax.random.normal(kb, (cout,), jnp.float32)
        if has_bn:
            gamma = 1.0 + 0.02 * jax.random.normal(kg, (cout,), jnp.float32)
            beta = 0.02 * jax.random.normal(kbe, (cout,), jnp.float32)
            r_mean = 0.01 * jax.random.normal(km, (cout,), jnp.float32)
            r_var = 1.0 + jnp.abs(0.05 * jax.random.normal(kv, (cout,), jnp.float32))
            scale = gamma / jnp.sqrt(r_var + eps)
            bias = (b - r_mean) * scale + beta
        else:
            scale = jnp.ones((cout,), jnp.float32)
            bias = b
        # Fold BN scale into the weight columns; pad Cout to 128 lanes.
        Wm = make_weight_matrix(W) * scale[None, :]
        cp = _round_up(cout, 128)
        Wm = jnp.pad(Wm, ((0, 0), (0, cp - cout))).astype(jnp.bfloat16)
        bias = jnp.pad(bias, (0, cp - cout)).reshape(1, cp).astype(jnp.float32)
        params.append((Wm, bias))
    return params


def build_generator_forward(cfg):
    """cfg is static (closed over); params is a pytree of arrays only."""
    def forward(params, z_nchw):
        x = jnp.transpose(z_nchw, (0, 2, 3, 1)).astype(jnp.bfloat16)  # NCHW->NHWC
        for (Wm, bias), (cin, cout, k, stride, pad, has_bn, act) in zip(params, cfg):
            x = conv_transpose_layer(x, Wm, bias, cout, k, stride, pad, act)
        return jnp.transpose(x.astype(jnp.float32), (0, 3, 1, 2))     # NHWC->NCHW
    return jax.jit(forward)


# ----------------------------------------------------------------------------
if __name__ == "__main__":
    channels_noise, channels_img, features_g = 8, 3, 8
    batch = 2

    key = jax.random.PRNGKey(0)
    key, kz = jax.random.split(key)
    z = jax.random.normal(kz, (batch, channels_noise, 1, 1), jnp.float32)

    cfg = generator_config(channels_noise, channels_img, features_g)
    params = init_generator_params(key, cfg)
    forward = build_generator_forward(cfg)

    out = jax.block_until_ready(forward(params, z))

    assert out.shape == (batch, channels_img, 64, 64), out.shape
    assert bool(jnp.all(jnp.isfinite(out)))
    assert bool(jnp.all(jnp.abs(out) <= 1.0 + 1e-6))  # tanh output range

    print("KERNEL_OK")
</pallas_src>

<mosaic_0001>
module attributes {stable_mosaic.version = 11 : i64} {
  func.func @_fused_matmul_kernel(%arg0: i32, %arg1: memref<32x128xbf16, #tpu.memory_space<vmem>>, %arg2: memref<128x128xbf16, #tpu.memory_space<vmem>>, %arg3: memref<1x128xf32, #tpu.memory_space<vmem>>, %arg4: memref<32x128xbf16, #tpu.memory_space<vmem>>) attributes {dimension_semantics = [#tpu.dimension_semantics<parallel>], iteration_bounds = array<i64: 1>, scalar_prefetch = 0 : i64, scratch_operands = 0 : i64, tpu.core_type = #tpu.core_type<tc>, window_params = [{transform_indices = @transform_0, window_bounds = array<i64: 32, 128>}, {pipeline_mode = #tpu.pipeline_mode<synchronous>, transform_indices = @transform_1, window_bounds = array<i64: 128, 128>}, {pipeline_mode = #tpu.pipeline_mode<synchronous>, transform_indices = @transform_2, window_bounds = array<i64: 1, 128>}, {transform_indices = @transform_3, window_bounds = array<i64: 32, 128>}]} {
    %c0 = arith.constant 0 : index
    %c0_0 = arith.constant 0 : index
    %0 = vector.load %arg1[%c0, %c0_0] : memref<32x128xbf16, #tpu.memory_space<vmem>>, vector<32x128xbf16>
    %c0_1 = arith.constant 0 : index
    %c0_2 = arith.constant 0 : index
    %1 = vector.load %arg2[%c0_1, %c0_2] : memref<128x128xbf16, #tpu.memory_space<vmem>>, vector<128x128xbf16>
    %cst = arith.constant dense<0.000000e+00> : vector<32x128xf32>
    %2 = tpu.matmul %0, %1, %cst {dimension_numbers = #tpu.dot_dimension_numbers<[1], [0], [0], [1], [0, 0, 1, 1], [], []>} : vector<32x128xbf16>, vector<128x128xbf16>, vector<32x128xf32> -> vector<32x128xf32>
    %c0_3 = arith.constant 0 : index
    %c0_4 = arith.constant 0 : index
    %3 = vector.load %arg3[%c0_3, %c0_4] : memref<1x128xf32, #tpu.memory_space<vmem>>, vector<1x128xf32>
    %4 = vector.broadcast %3 : vector<1x128xf32> to vector<32x128xf32>
    %5 = arith.addf %2, %4 : vector<32x128xf32>
    %cst_5 = arith.constant 0.000000e+00 : f32
    %6 = vector.broadcast %cst_5 : f32 to vector<32x128xf32>
    %7 = arith.maximumf %5, %6 : vector<32x128xf32>
    %8 = arith.truncf %7 : vector<32x128xf32> to vector<32x128xbf16>
    %c0_6 = arith.constant 0 : index
    %c0_7 = arith.constant 0 : index
    %9 = vector.load %arg4[%c0_6, %c0_7] : memref<32x128xbf16, #tpu.memory_space<vmem>>, vector<32x128xbf16>
    tpu.vector_store %arg4[%c0_6, %c0_7], %8 {strides = array<i32>} : memref<32x128xbf16, #tpu.memory_space<vmem>>, vector<32x128xbf16>,
    return
  }
  func.func @transform_0(%arg0: i32) -> (i32, i32) {
    %c0_i32 = arith.constant 0 : i32
    %c0_i32_0 = arith.constant 0 : i32
    return %arg0, %c0_i32 : i32, i32
  }
  func.func @transform_1(%arg0: i32) -> (i32, i32) {
    %c0_i32 = arith.constant 0 : i32
    %c0_i32_0 = arith.constant 0 : i32
    %c0_i32_1 = arith.constant 0 : i32
    return %c0_i32, %c0_i32_0 : i32, i32
  }
  func.func @transform_2(%arg0: i32) -> (i32, i32) {
    %c0_i32 = arith.constant 0 : i32
    %c0_i32_0 = arith.constant 0 : i32
    %c0_i32_1 = arith.constant 0 : i32
    return %c0_i32, %c0_i32_0 : i32, i32
  }
  func.func @transform_3(%arg0: i32) -> (i32, i32) {
    %c0_i32 = arith.constant 0 : i32
    %c0_i32_0 = arith.constant 0 : i32
    return %arg0, %c0_i32 : i32, i32
  }
}

module attributes {stable_mosaic.version = 11 : i64} {
  func.func @_fused_matmul_kernel(%arg0: i32, %arg1: memref<128x1024xbf16, #tpu.memory_space<vmem>>, %arg2: memref<1024x128xbf16, #tpu.memory_space<vmem>>, %arg3: memref<1x128xf32, #tpu.memory_space<vmem>>, %arg4: memref<128x128xbf16, #tpu.memory_space<vmem>>) attributes {dimension_semantics = [#tpu.dimension_semantics<parallel>], iteration_bounds = array<i64: 1>, scalar_prefetch = 0 : i64, scratch_operands = 0 : i64, tpu.core_type = #tpu.core_type<tc>, window_params = [{transform_indices = @transform_0, window_bounds = array<i64: 128, 1024>}, {pipeline_mode = #tpu.pipeline_mode<synchronous>, transform_indices = @transform_1, window_bounds = array<i64: 1024, 128>}, {pipeline_mode = #tpu.pipeline_mode<synchronous>, transform_indices = @transform_2, window_bounds = array<i64: 1, 128>}, {transform_indices = @transform_3, window_bounds = array<i64: 128, 128>}]} {
    %c0 = arith.constant 0 : index
    %c0_0 = arith.constant 0 : index
    %0 = vector.load %arg1[%c0, %c0_0] : memref<128x1024xbf16, #tpu.memory_space<vmem>>, vector<128x1024xbf16>
    %c0_1 = arith.constant 0 : index
    %c0_2 = arith.constant 0 : index
    %1 = vector.load %arg2[%c0_1, %c0_2] : memref<1024x128xbf16, #tpu.memory_space<vmem>>, vector<1024x128xbf16>
    %cst = arith.constant dense<0.000000e+00> : vector<128x128xf32>
    %2 = tpu.matmul %0, %1, %cst {dimension_numbers = #tpu.dot_dimension_numbers<[1], [0], [0], [1], [0, 0, 1, 1], [], []>} : vector<128x1024xbf16>, vector<1024x128xbf16>, vector<128x128xf32> -> vector<128x128xf32>
    %c0_3 = arith.constant 0 : index
    %c0_4 = arith.constant 0 : index
    %3 = vector.load %arg3[%c0_3, %c0_4] : memref<1x128xf32, #tpu.memory_space<vmem>>, vector<1x128xf32>
    %4 = vector.broadcast %3 : vector<1x128xf32> to vector<128x128xf32>
    %5 = arith.addf %2, %4 : vector<128x128xf32>
    %cst_5 = arith.constant 0.000000e+00 : f32
    %6 = vector.broadcast %cst_5 : f32 to vector<128x128xf32>
    %7 = arith.maximumf %5, %6 : vector<128x128xf32>
    %8 = arith.truncf %7 : vector<128x128xf32> to vector<128x128xbf16>
    %c0_6 = arith.constant 0 : index
    %c0_7 = arith.constant 0 : index
    %9 = vector.load %arg4[%c0_6, %c0_7] : memref<128x128xbf16, #tpu.memory_space<vmem>>, vector<128x128xbf16>
    tpu.vector_store %arg4[%c0_6, %c0_7], %8 {strides = array<i32>} : memref<128x128xbf16, #tpu.memory_space<vmem>>, vector<128x128xbf16>,
    return
  }
  func.func @transform_0(%arg0: i32) -> (i32, i32) {
    %c0_i32 = arith.constant 0 : i32
    %c0_i32_0 = arith.constant 0 : i32
    return %arg0, %c0_i32 : i32, i32
  }
  func.func @transform_1(%arg0: i32) -> (i32, i32) {
    %c0_i32 = arith.constant 0 : i32
    %c0_i32_0 = arith.constant 0 : i32
    %c0_i32_1 = arith.constant 0 : i32
    return %c0_i32, %c0_i32_0 : i32, i32
  }
  func.func @transform_2(%arg0: i32) -> (i32, i32) {
    %c0_i32 = arith.constant 0 : i32
    %c0_i32_0 = arith.constant 0 : i32
    %c0_i32_1 = arith.constant 0 : i32
    return %c0_i32, %c0_i32_0 : i32, i32
  }
  func.func @transform_3(%arg0: i32) -> (i32, i32) {
    %c0_i32 = arith.constant 0 : i32
    %c0_i32_0 = arith.constant 0 : i32
    return %arg0, %c0_i32 : i32, i32
  }
}

module attributes {stable_mosaic.version = 11 : i64} {
  func.func @_fused_matmul_kernel(%arg0: i32, %arg1: memref<256x512xbf16, #tpu.memory_space<vmem>>, %arg2: memref<512x128xbf16, #tpu.memory_space<vmem>>, %arg3: memref<1x128xf32, #tpu.memory_space<vmem>>, %arg4: memref<256x128xbf16, #tpu.memory_space<vmem>>) attributes {dimension_semantics = [#tpu.dimension_semantics<parallel>], iteration_bounds = array<i64: 2>, scalar_prefetch = 0 : i64, scratch_operands = 0 : i64, tpu.core_type = #tpu.core_type<tc>, window_params = [{transform_indices = @transform_0, window_bounds = array<i64: 256, 512>}, {pipeline_mode = #tpu.pipeline_mode<synchronous>, transform_indices = @transform_1, window_bounds = array<i64: 512, 128>}, {pipeline_mode = #tpu.pipeline_mode<synchronous>, transform_indices = @transform_2, window_bounds = array<i64: 1, 128>}, {transform_indices = @transform_3, window_bounds = array<i64: 256, 128>}]} {
    %c0 = arith.constant 0 : index
    %c0_0 = arith.constant 0 : index
    %0 = vector.load %arg1[%c0, %c0_0] : memref<256x512xbf16, #tpu.memory_space<vmem>>, vector<256x512xbf16>
    %c0_1 = arith.constant 0 : index
    %c0_2 = arith.constant 0 : index
    %1 = vector.load %arg2[%c0_1, %c0_2] : memref<512x128xbf16, #tpu.memory_space<vmem>>, vector<512x128xbf16>
    %cst = arith.constant dense<0.000000e+00> : vector<256x128xf32>
    %2 = tpu.matmul %0, %1, %cst {dimension_numbers = #tpu.dot_dimension_numbers<[1], [0], [0], [1], [0, 0, 1, 1], [], []>} : vector<256x512xbf16>, vector<512x128xbf16>, vector<256x128xf32> -> vector<256x128xf32>
    %c0_3 = arith.constant 0 : index
    %c0_4 = arith.constant 0 : index
    %3 = vector.load %arg3[%c0_3, %c0_4] : memref<1x128xf32, #tpu.memory_space<vmem>>, vector<1x128xf32>
    %4 = vector.broadcast %3 : vector<1x128xf32> to vector<256x128xf32>
    %5 = arith.addf %2, %4 : vector<256x128xf32>
    %cst_5 = arith.constant 0.000000e+00 : f32
    %6 = vector.broadcast %cst_5 : f32 to vector<256x128xf32>
    %7 = arith.maximumf %5, %6 : vector<256x128xf32>
    %8 = arith.truncf %7 : vector<256x128xf32> to vector<256x128xbf16>
    %c0_6 = arith.constant 0 : index
    %c0_7 = arith.constant 0 : index
    %9 = vector.load %arg4[%c0_6, %c0_7] : memref<256x128xbf16, #tpu.memory_space<vmem>>, vector<256x128xbf16>
    tpu.vector_store %arg4[%c0_6, %c0_7], %8 {strides = array<i32>} : memref<256x128xbf16, #tpu.memory_space<vmem>>, vector<256x128xbf16>,
    return
  }
  func.func @transform_0(%arg0: i32) -> (i32, i32) {
    %c0_i32 = arith.constant 0 : i32
    %c0_i32_0 = arith.constant 0 : i32
    return %arg0, %c0_i32 : i32, i32
  }
  func.func @transform_1(%arg0: i32) -> (i32, i32) {
    %c0_i32 = arith.constant 0 : i32
    %c0_i32_0 = arith.constant 0 : i32
    %c0_i32_1 = arith.constant 0 : i32
    return %c0_i32, %c0_i32_0 : i32, i32
  }
  func.func @transform_2(%arg0: i32) -> (i32, i32) {
    %c0_i32 = arith.constant 0 : i32
    %c0_i32_0 = arith.constant 0 : i32
    %c0_i32_1 = arith.constant 0 : i32
    return %c0_i32, %c0_i32_0 : i32, i32
  }
  func.func @transform_3(%arg0: i32) -> (i32, i32) {
    %c0_i32 = arith.constant 0 : i32
    %c0_i32_0 = arith.constant 0 : i32
    return %arg0, %c0_i32 : i32, i32
  }
}

module attributes {stable_mosaic.version = 11 : i64} {
  func.func @_fused_matmul_kernel(%arg0: i32, %arg1: memref<1024x1024xbf16, #tpu.memory_space<vmem>>, %arg2: memref<1024x128xbf16, #tpu.memory_space<vmem>>, %arg3: memref<1x128xf32, #tpu.memory_space<vmem>>, %arg4: memref<1024x128xbf16, #tpu.memory_space<vmem>>) attributes {dimension_semantics = [#tpu.dimension_semantics<parallel>], iteration_bounds = array<i64: 2>, scalar_prefetch = 0 : i64, scratch_operands = 0 : i64, tpu.core_type = #tpu.core_type<tc>, window_params = [{transform_indices = @transform_0, window_bounds = array<i64: 1024, 1024>}, {pipeline_mode = #tpu.pipeline_mode<synchronous>, transform_indices = @transform_1, window_bounds = array<i64: 1024, 128>}, {pipeline_mode = #tpu.pipeline_mode<synchronous>, transform_indices = @transform_2, window_bounds = array<i64: 1, 128>}, {transform_indices = @transform_3, window_bounds = array<i64: 1024, 128>}]} {
    %c0 = arith.constant 0 : index
    %c0_0 = arith.constant 0 : index
    %0 = vector.load %arg1[%c0, %c0_0] : memref<1024x1024xbf16, #tpu.memory_space<vmem>>, vector<1024x1024xbf16>
    %c0_1 = arith.constant 0 : index
    %c0_2 = arith.constant 0 : index
    %1 = vector.load %arg2[%c0_1, %c0_2] : memref<1024x128xbf16, #tpu.memory_space<vmem>>, vector<1024x128xbf16>
    %cst = arith.constant dense<0.000000e+00> : vector<1024x128xf32>
    %2 = tpu.matmul %0, %1, %cst {dimension_numbers = #tpu.dot_dimension_numbers<[1], [0], [0], [1], [0, 0, 1, 1], [], []>} : vector<1024x1024xbf16>, vector<1024x128xbf16>, vector<1024x128xf32> -> vector<1024x128xf32>
    %c0_3 = arith.constant 0 : index
    %c0_4 = arith.constant 0 : index
    %3 = vector.load %arg3[%c0_3, %c0_4] : memref<1x128xf32, #tpu.memory_space<vmem>>, vector<1x128xf32>
    %4 = vector.broadcast %3 : vector<1x128xf32> to vector<1024x128xf32>
    %5 = arith.addf %2, %4 : vector<1024x128xf32>
    %cst_5 = arith.constant 0.000000e+00 : f32
    %6 = vector.broadcast %cst_5 : f32 to vector<1024x128xf32>
    %7 = arith.maximumf %5, %6 : vector<1024x128xf32>
    %8 = arith.truncf %7 : vector<1024x128xf32> to vector<1024x128xbf16>
    %c0_6 = arith.constant 0 : index
    %c0_7 = arith.constant 0 : index
    %9 = vector.load %arg4[%c0_6, %c0_7] : memref<1024x128xbf16, #tpu.memory_space<vmem>>, vector<1024x128xbf16>
    tpu.vector_store %arg4[%c0_6, %c0_7], %8 {strides = array<i32>} : memref<1024x128xbf16, #tpu.memory_space<vmem>>, vector<1024x128xbf16>,
    return
  }
  func.func @transform_0(%arg0: i32) -> (i32, i32) {
    %c0_i32 = arith.constant 0 : i32
    %c0_i32_0 = arith.constant 0 : i32
    return %arg0, %c0_i32 : i32, i32
  }
  func.func @transform_1(%arg0: i32) -> (i32, i32) {
    %c0_i32 = arith.constant 0 : i32
    %c0_i32_0 = arith.constant 0 : i32
    %c0_i32_1 = arith.constant 0 : i32
    return %c0_i32, %c0_i32_0 : i32, i32
  }
  func.func @transform_2(%arg0: i32) -> (i32, i32) {
    %c0_i32 = arith.constant 0 : i32
    %c0_i32_0 = arith.constant 0 : i32
    %c0_i32_1 = arith.constant 0 : i32
    return %c0_i32, %c0_i32_0 : i32, i32
  }
  func.func @transform_3(%arg0: i32) -> (i32, i32) {
    %c0_i32 = arith.constant 0 : i32
    %c0_i32_0 = arith.constant 0 : i32
    return %arg0, %c0_i32 : i32, i32
  }
}

module attributes {stable_mosaic.version = 11 : i64} {
  func.func @_fused_matmul_kernel(%arg0: i32, %arg1: memref<2048x128xbf16, #tpu.memory_space<vmem>>, %arg2: memref<128x128xbf16, #tpu.memory_space<vmem>>, %arg3: memref<1x128xf32, #tpu.memory_space<vmem>>, %arg4: memref<2048x128xbf16, #tpu.memory_space<vmem>>) attributes {dimension_semantics = [#tpu.dimension_semantics<parallel>], iteration_bounds = array<i64: 4>, scalar_prefetch = 0 : i64, scratch_operands = 0 : i64, tpu.core_type = #tpu.core_type<tc>, window_params = [{transform_indices = @transform_0, window_bounds = array<i64: 2048, 128>}, {pipeline_mode = #tpu.pipeline_mode<synchronous>, transform_indices = @transform_1, window_bounds = array<i64: 128, 128>}, {pipeline_mode = #tpu.pipeline_mode<synchronous>, transform_indices = @transform_2, window_bounds = array<i64: 1, 128>}, {transform_indices = @transform_3, window_bounds = array<i64: 2048, 128>}]} {
    %c0 = arith.constant 0 : index
    %c0_0 = arith.constant 0 : index
    %0 = vector.load %arg1[%c0, %c0_0] : memref<2048x128xbf16, #tpu.memory_space<vmem>>, vector<2048x128xbf16>
    %c0_1 = arith.constant 0 : index
    %c0_2 = arith.constant 0 : index
    %1 = vector.load %arg2[%c0_1, %c0_2] : memref<128x128xbf16, #tpu.memory_space<vmem>>, vector<128x128xbf16>
    %cst = arith.constant dense<0.000000e+00> : vector<2048x128xf32>
    %2 = tpu.matmul %0, %1, %cst {dimension_numbers = #tpu.dot_dimension_numbers<[1], [0], [0], [1], [0, 0, 1, 1], [], []>} : vector<2048x128xbf16>, vector<128x128xbf16>, vector<2048x128xf32> -> vector<2048x128xf32>
    %c0_3 = arith.constant 0 : index
    %c0_4 = arith.constant 0 : index
    %3 = vector.load %arg3[%c0_3, %c0_4] : memref<1x128xf32, #tpu.memory_space<vmem>>, vector<1x128xf32>
    %4 = vector.broadcast %3 : vector<1x128xf32> to vector<2048x128xf32>
    %5 = arith.addf %2, %4 : vector<2048x128xf32>
    %6 = math.tanh %5 : vector<2048x128xf32>
    %7 = arith.truncf %6 : vector<2048x128xf32> to vector<2048x128xbf16>
    %c0_5 = arith.constant 0 : index
    %c0_6 = arith.constant 0 : index
    %8 = vector.load %arg4[%c0_5, %c0_6] : memref<2048x128xbf16, #tpu.memory_space<vmem>>, vector<2048x128xbf16>
    tpu.vector_store %arg4[%c0_5, %c0_6], %7 {strides = array<i32>} : memref<2048x128xbf16, #tpu.memory_space<vmem>>, vector<2048x128xbf16>,
    return
  }
  func.func @transform_0(%arg0: i32) -> (i32, i32) {
    %c0_i32 = arith.constant 0 : i32
    %c0_i32_0 = arith.constant 0 : i32
    return %arg0, %c0_i32 : i32, i32
  }
  func.func @transform_1(%arg0: i32) -> (i32, i32) {
    %c0_i32 = arith.constant 0 : i32
    %c0_i32_0 = arith.constant 0 : i32
    %c0_i32_1 = arith.constant 0 : i32
    return %c0_i32, %c0_i32_0 : i32, i32
  }
  func.func @transform_2(%arg0: i32) -> (i32, i32) {
    %c0_i32 = arith.constant 0 : i32
    %c0_i32_0 = arith.constant 0 : i32
    %c0_i32_1 = arith.constant 0 : i32
    return %c0_i32, %c0_i32_0 : i32, i32
  }
  func.func @transform_3(%arg0: i32) -> (i32, i32) {
    %c0_i32 = arith.constant 0 : i32
    %c0_i32_0 = arith.constant 0 : i32
    return %arg0, %c0_i32 : i32, i32
  }
}

</mosaic_0001>

<llo_original>
// kernel: forward.5
$region0: #{forward.5}
  #allocation0 [shape = 'u32[]', space=smem, size = 0x4, offset = 0x4, fixed_abs, tag = 'smem constant byte address 0x4 - core index']
  #allocation1 [shape = 'u32[144,128]{1,0:T(1,128)}', space=vmem, size = 0x12000, scoped, tag = 'internal scratch']
  %s0 = inlined_call_operand.vmem [shape: bf16[32,128], index: 0, kind: input, shape index: {}]
  %s1 = inlined_call_operand.hbm [shape: bf16[128,128], index: 1, kind: input, shape index: {}]
  %s2 = inlined_call_operand.hbm [shape: f32[1,128], index: 2, kind: input, shape index: {}]
  %s3 = inlined_call_operand.vmem [shape: bf16[32,128], index: 3, kind: output, shape index: {}]
  %s4 = sld [smem:[#allocation0]]
  $region30: #{forward.5} parent=0
    _
  %s6 = ssub.s32 1, %s4
  %s7 = scalar_select 0, %s6, %s4
  $region1: #{forward.5} parent=0
    #allocation2 [shape = 'u8[32768]{0}', space=vmem, size = 0x8000, scoped, tag = 'input window, operand 1, single buffered']
    #allocation3 [shape = 's32[1]{0}', space=sflag, size = 0x4, scoped, tag = 'scoped memory for forward.5']
    #allocation4 [shape = 'u8[512]{0}', space=vmem, size = 0x400, scoped, tag = 'input window, operand 2, single buffered']
    #allocation5 [shape = 's32[1]{0}', space=sflag, size = 0x4, scoped, tag = 'scoped memory for forward.5']
    %8 = vsyncpa [#allocation3], 0
    %9 = vsyncpa [#allocation5], 0
    // Predicated region
    $region2: #{forward.5} parent=1 // pred_check
      _
    $region3: #{forward.5} parent=1 // pred_check_branch
      %11 = sbr.rel (0) target = $region5
    $region4: #{forward.5} parent=1 // pred_region
      _
    $region5: #{forward.5} parent=1 // pred_fallthru
      _
    // Predicated region
    $region6: #{forward.5} parent=1 // pred_check
      _
    $region7: #{forward.5} parent=1 // pred_check_branch
      %13 = sbr.rel (0) target = $region9
    $region8: #{forward.5} parent=1 // pred_region
      %s15 = ssub.s32 1024, 1024
      %16 = vsyncadd [#allocation3], %s15
      %s17 = sshll.u32 [#allocation2], 4
      %s18 = int_to_ptr.vmem [resolvable:$true] %s17
      %23 = dma.hbm_to_vmem [thread:$0]  %s1, 1024, %s18, [#allocation3], 64, 64, 4
    $region9: #{forward.5} parent=1 // pred_fallthru
      _
    // Predicated region
    $region10: #{forward.5} parent=1 // pred_check
      _
    $region11: #{forward.5} parent=1 // pred_check_branch
      %25 = sbr.rel (0) target = $region13
    $region12: #{forward.5} parent=1 // pred_region
      %s27 = ssub.s32 16, 16
      %28 = vsyncadd [#allocation5], %s27
      %s30 = sshll.u32 [#allocation4], 4
      %s31 = int_to_ptr.vmem [resolvable:$true] %s30
      %33 = dma.hbm_to_vmem [thread:$0]  %s2, 16, %s31, [#allocation5]
    $region13: #{forward.5} parent=1 // pred_fallthru
      _
    // Predicated region
    $region14: #{forward.5} parent=1 // pred_check
      _
    $region15: #{forward.5} parent=1 // pred_check_branch
      %35 = sbr.rel (0) target = $region17
    $region16: #{forward.5} parent=1 // pred_region
      %36 = dma.done [#allocation3], 1024
    $region17: #{forward.5} parent=1 // pred_fallthru
      _
    // Predicated region
    $region18: #{forward.5} parent=1 // pred_check
      _
    $region19: #{forward.5} parent=1 // pred_check_branch
      %38 = sbr.rel (0) target = $region21
    $region20: #{forward.5} parent=1 // pred_region
      %39 = dma.done [#allocation5], 16
    $region21: #{forward.5} parent=1 // pred_fallthru
      _
    %v41 = vld [vmem:[%s0] sm:$0xf]
    %v42 = vld [vmem:[%s0 + $0x4] sm:$0xf]
    %v43 = vld [vmem:[%s0 + $0x8] sm:$0xf]
    %v44 = vld [vmem:[%s0 + $0xc] sm:$0xf]
    %v45 = vld [vmem:[#allocation2] sm:$0xf]
    %v46 = vld [vmem:[#allocation2 + $0x4] sm:$0xf]
    %v47 = vld [vmem:[#allocation2 + $0x8] sm:$0xf]
    %v48 = vld [vmem:[#allocation2 + $0xc] sm:$0xf]
    %v49 = vld [vmem:[#allocation2 + $0x10] sm:$0xf]
    %v50 = vld [vmem:[#allocation2 + $0x14] sm:$0xf]
    %v51 = vld [vmem:[#allocation2 + $0x18] sm:$0xf]
    %v52 = vld [vmem:[#allocation2 + $0x1c] sm:$0xf]
    %v53 = vld [vmem:[#allocation2 + $0x20] sm:$0xf]
    %v54 = vld [vmem:[#allocation2 + $0x24] sm:$0xf]
    %v55 = vld [vmem:[#allocation2 + $0x28] sm:$0xf]
    %v56 = vld [vmem:[#allocation2 + $0x2c] sm:$0xf]
    %v57 = vld [vmem:[#allocation2 + $0x30] sm:$0xf]
    %v58 = vld [vmem:[#allocation2 + $0x34] sm:$0xf]
    %v59 = vld [vmem:[#allocation2 + $0x38] sm:$0xf]
    %v60 = vld [vmem:[#allocation2 + $0x3c] sm:$0xf]
    %v61 = vld [vmem:[#allocation4] sm:$0x1]
    %v63 = vlaneseq
    %v64 = vshrl.u32 %v63, 7
    %v65 = vsub.s32 0, %v64
    %v66 = vrot.slane %v61, %v65
    %v72 = vunpack.c.l.b16 %v41
    %v73 = vunpack.c.l.b16 %v42
    %v74 = vunpack.c.l.b16 %v43
    %v75 = vunpack.c.l.b16 %v44
    %v76 = vpack.c.b16 %v73, %v72
    %v77 = vpack.c.b16 %v75, %v74
    %v96 = vunpack.c.l.b16 %v45
    %v97 = vunpack.c.l.b16 %v46
    %v98 = vunpack.c.l.b16 %v47
    %v99 = vunpack.c.l.b16 %v48
    %v100 = vunpack.c.l.b16 %v49
    %v101 = vunpack.c.l.b16 %v50
    %v102 = vunpack.c.l.b16 %v51
    %v103 = vunpack.c.l.b16 %v52
    %v104 = vunpack.c.l.b16 %v53
    %v105 = vunpack.c.l.b16 %v54
    %v106 = vunpack.c.l.b16 %v55
    %v107 = vunpack.c.l.b16 %v56
    %v108 = vunpack.c.l.b16 %v57
    %v109 = vunpack.c.l.b16 %v58
    %v110 = vunpack.c.l.b16 %v59
    %v111 = vunpack.c.l.b16 %v60
    %v112 = vpack.c.b16 %v97, %v96
    %v113 = vpack.c.b16 %v99, %v98
    %v114 = vpack.c.b16 %v101, %v100
    %v115 = vpack.c.b16 %v103, %v102
    %v116 = vpack.c.b16 %v105, %v104
    %v117 = vpack.c.b16 %v107, %v106
    %v118 = vpack.c.b16 %v109, %v108
    %v119 = vpack.c.b16 %v111, %v110
    %128 = vmatprep.subr.bf16.mxu0 0
    %129 = vmatpush1.bf16.msra.mxu0 %v112
    %130 = vmatprep.subr.bf16.mxu0 0
    %131 = vmatpush1.bf16.msra.mxu0 %v113
    %132 = vmatprep.subr.bf16.mxu0 0
    %133 = vmatpush1.bf16.msra.mxu0 %v114
    %134 = vmatprep.subr.bf16.mxu0 0
    %135 = vmatpush1.bf16.msra.mxu0 %v115
    %136 = vmatprep.subr.bf16.mxu0 0
    %137 = vmatpush1.bf16.msra.mxu0 %v116
    %138 = vmatprep.subr.bf16.mxu0 0
    %139 = vmatpush1.bf16.msra.mxu0 %v117
    %140 = vmatprep.subr.bf16.mxu0 0
    %141 = vmatpush1.bf16.msra.mxu0 %v118
    %142 = vmatprep.subr.bf16.mxu0 0
    %143 = vmatpush1.bf16.msra.mxu0 %v119
    %144 = vmatprep.subr.bf16.mxu0 0
    %145 = vmatpush1.bf16.msra.mxu0 0
    %146 = vmatprep.subr.bf16.mxu0 0
    %147 = vmatpush1.bf16.msra.mxu0 0
    %148 = vmatprep.subr.bf16.mxu0 0
    %149 = vmatpush1.bf16.msra.mxu0 0
    %150 = vmatprep.subr.bf16.mxu0 0
    %151 = vmatpush1.bf16.msra.mxu0 0
    %152 = vmatprep.subr.bf16.mxu0 0
    %153 = vmatpush1.bf16.msra.mxu0 0
    %154 = vmatprep.subr.bf16.mxu0 0
    %155 = vmatpush1.bf16.msra.mxu0 0
    %156 = vmatprep.subr.bf16.mxu0 0
    %157 = vmatpush1.bf16.msra.mxu0 0
    %158 = vmatprep.subr.bf16.mxu0 0
    %159 = vmatpush1.bf16.msra.mxu0 0
    %160 = vmatprep.mubr.bf16.mxu0 0
    %161 = vmatmul.mubr.bf16.gmra.mrb[0].mxu0 %v76
    %v162 = vpop.f32.mrb[0].mxu0
    %v163 = vadd.f32 %v66, %v162
    %v164 = vpop.f32.mrb[0].mxu0
    %v165 = vpop.f32.mrb[0].mxu0
    %v166 = vadd.f32 %v66, %v165
    %v167 = vpop.f32.mrb[0].mxu0
    %168 = vmatprep.mubr.bf16.mxu0 0
    %169 = vmatmul.mubr.bf16.gmra.mrb[0].mxu0 %v77
    %v170 = vpop.f32.mrb[0].mxu0
    %v171 = vadd.f32 %v66, %v170
    %v172 = vpop.f32.mrb[0].mxu0
    %v173 = vpop.f32.mrb[0].mxu0
    %v174 = vadd.f32 %v66, %v173
    %v175 = vpop.f32.mrb[0].mxu0
    %176 = vdwg.mxu0
    %v177 = vmax.f32 %v163, 0.0
    %v178 = vmax.f32 %v166, 0.0
    %v179 = vmax.f32 %v171, 0.0
    %v180 = vmax.f32 %v174, 0.0
    %v181 = vpack.c.bf16 %v178, %v177
    %v182 = vpack.c.bf16 %v180, %v179
    %v185 = vunpack.c.l.b16 %v181
    %v186 = vunpack.c.h.b16 %v181
    %v187 = vunpack.c.l.b16 %v182
    %v188 = vunpack.c.h.b16 %v182
    %v189 = vpack.c.b16 %v185, %v185
    %v190 = vpack.c.b16 %v186, %v186
    %v191 = vpack.c.b16 %v187, %v187
    %v192 = vpack.c.b16 %v188, %v188
    %197 = vst [vmem:[%s3] sm:$0xf] %v189
    %198 = vst [vmem:[%s3 + $0x4] sm:$0xf] %v190
    %199 = vst [vmem:[%s3 + $0x8] sm:$0xf] %v191
    %200 = vst [vmem:[%s3 + $0xc] sm:$0xf] %v192
    // Predicated region
    $region22: #{forward.5} parent=1 // pred_check
      _
    $region23: #{forward.5} parent=1 // pred_check_branch
      %202 = sbr.rel (0) target = $region25
    $region24: #{forward.5} parent=1 // pred_region
      _
    $region25: #{forward.5} parent=1 // pred_fallthru
      _
    // Predicated region
    $region26: #{forward.5} parent=1 // pred_check
      _
    $region27: #{forward.5} parent=1 // pred_check_branch
      %204 = sbr.rel (0) target = $region29
    $region28: #{forward.5} parent=1 // pred_region
      _
    $region29: #{forward.5} parent=1 // pred_fallthru
      _
    %205 = vsyncpa [#allocation3], 1
    %206 = vsyncpa [#allocation5], 1

// kernel: forward.6
$region0: #{forward.6}
  #allocation0 [shape = 'u32[]', space=smem, size = 0x4, offset = 0x4, fixed_abs, tag = 'smem constant byte address 0x4 - core index']
  #allocation1 [shape = 'u32[144,128]{1,0:T(1,128)}', space=vmem, size = 0x12000, scoped, tag = 'internal scratch']
  %s0 = inlined_call_operand.vmem [shape: bf16[128,1024], index: 0, kind: input, shape index: {}]
  %s1 = inlined_call_operand.hbm [shape: bf16[1024,128], index: 1, kind: input, shape index: {}]
  %s2 = inlined_call_operand.hbm [shape: f32[1,128], index: 2, kind: input, shape index: {}]
  %s3 = inlined_call_operand.vmem [shape: bf16[128,128], index: 3, kind: output, shape index: {}]
  %s4 = sld [smem:[#allocation0]]
  $region30: #{forward.6} parent=0
    _
  %s6 = ssub.s32 1, %s4
  %s7 = scalar_select 0, %s6, %s4
  $region1: #{forward.6} parent=0
    #allocation2 [shape = 'u8[262144]{0}', space=vmem, size = 0x40000, scoped, tag = 'input window, operand 1, single buffered']
    #allocation3 [shape = 's32[1]{0}', space=sflag, size = 0x4, scoped, tag = 'scoped memory for forward.6']
    #allocation4 [shape = 'u8[512]{0}', space=vmem, size = 0x400, scoped, tag = 'input window, operand 2, single buffered']
    #allocation5 [shape = 's32[1]{0}', space=sflag, size = 0x4, scoped, tag = 'scoped memory for forward.6']
    %8 = vsyncpa [#allocation3], 0
    %9 = vsyncpa [#allocation5], 0
    // Predicated region
    $region2: #{forward.6} parent=1 // pred_check
      _
    $region3: #{forward.6} parent=1 // pred_check_branch
      %11 = sbr.rel (0) target = $region5
    $region4: #{forward.6} parent=1 // pred_region
      _
    $region5: #{forward.6} parent=1 // pred_fallthru
      _
    // Predicated region
    $region6: #{forward.6} parent=1 // pred_check
      _
    $region7: #{forward.6} parent=1 // pred_check_branch
      %13 = sbr.rel (0) target = $region9
    $region8: #{forward.6} parent=1 // pred_region
      %s15 = ssub.s32 8192, 8192
      %16 = vsyncadd [#allocation3], %s15
      %s17 = sshll.u32 [#allocation2], 4
      %s18 = int_to_ptr.vmem [resolvable:$true] %s17
      %23 = dma.hbm_to_vmem [thread:$0]  %s1, 8192, %s18, [#allocation3], 64, 64, 4
    $region9: #{forward.6} parent=1 // pred_fallthru
      _
    // Predicated region
    $region10: #{forward.6} parent=1 // pred_check
      _
    $region11: #{forward.6} parent=1 // pred_check_branch
      %25 = sbr.rel (0) target = $region13
    $region12: #{forward.6} parent=1 // pred_region
      %s27 = ssub.s32 16, 16
      %28 = vsyncadd [#allocation5], %s27
      %s30 = sshll.u32 [#allocation4], 4
      %s31 = int_to_ptr.vmem [resolvable:$true] %s30
      %33 = dma.hbm_to_vmem [thread:$0]  %s2, 16, %s31, [#allocation5]
    $region13: #{forward.6} parent=1 // pred_fallthru
      _
    // Predicated region
    $region14: #{forward.6} parent=1 // pred_check
      _
    $region15: #{forward.6} parent=1 // pred_check_branch
      %35 = sbr.rel (0) target = $region17
    $region16: #{forward.6} parent=1 // pred_region
      %36 = dma.done [#allocation3], 8192
    $region17: #{forward.6} parent=1 // pred_fallthru
      _
    // Predicated region
    $region18: #{forward.6} parent=1 // pred_check
      _
    $region19: #{forward.6} parent=1 // pred_check_branch
      %38 = sbr.rel (0) target = $region21
    $region20: #{forward.6} parent=1 // pred_region
      %39 = dma.done [#allocation5], 16
    $region21: #{forward.6} parent=1 // pred_fallthru
      _
    %v41 = vld [vmem:[%s0] sm:$0xff]
    %v42 = vld [vmem:[%s0 + $0x8] sm:$0xff]
    %v43 = vld [vmem:[%s0 + $0x10] sm:$0xff]
    %v44 = vld [vmem:[%s0 + $0x18] sm:$0xff]
    %v45 = vld [vmem:[%s0 + $0x20] sm:$0xff]
    %v46 = vld [vmem:[%s0 + $0x28] sm:$0xff]
    %v47 = vld [vmem:[%s0 + $0x30] sm:$0xff]
    %v48 = vld [vmem:[%s0 + $0x38] sm:$0xff]
    %v49 = vld [vmem:[%s0 + $0x40] sm:$0xff]
    %v50 = vld [vmem:[%s0 + $0x48] sm:$0xff]
    %v51 = vld [vmem:[%s0 + $0x50] sm:$0xff]
    %v52 = vld [vmem:[%s0 + $0x58] sm:$0xff]
    %v53 = vld [vmem:[%s0 + $0x60] sm:$0xff]
    %v54 = vld [vmem:[%s0 + $0x68] sm:$0xff]
    %v55 = vld [vmem:[%s0 + $0x70] sm:$0xff]
    %v56 = vld [vmem:[%s0 + $0x78] sm:$0xff]
    %v57 = vld [vmem:[%s0 + $0x80] sm:$0xff]
    %v58 = vld [vmem:[%s0 + $0x88] sm:$0xff]
    %v59 = vld [vmem:[%s0 + $0x90] sm:$0xff]
    %v60 = vld [vmem:[%s0 + $0x98] sm:$0xff]
    %v61 = vld [vmem:[%s0 + $0xa0] sm:$0xff]
    %v62 = vld [vmem:[%s0 + $0xa8] sm:$0xff]
    %v63 = vld [vmem:[%s0 + $0xb0] sm:$0xff]
    %v64 = vld [vmem:[%s0 + $0xb8] sm:$0xff]
    %v65 = vld [vmem:[%s0 + $0xc0] sm:$0xff]
    %v66 = vld [vmem:[%s0 + $0xc8] sm:$0xff]
    %v67 = vld [vmem:[%s0 + $0xd0] sm:$0xff]
    %v68 = vld [vmem:[%s0 + $0xd8] sm:$0xff]
    %v69 = vld [vmem:[%s0 + $0xe0] sm:$0xff]
    %v70 = vld [vmem:[%s0 + $0xe8] sm:$0xff]
    %v71 = vld [vmem:[%s0 + $0xf0] sm:$0xff]
    %v72 = vld [vmem:[%s0 + $0xf8] sm:$0xff]
    %v73 = vld [vmem:[%s0 + $0x100] sm:$0xff]
    %v74 = vld [vmem:[%s0 + $0x108] sm:$0xff]
    %v75 = vld [vmem:[%s0 + $0x110] sm:$0xff]
    %v76 = vld [vmem:[%s0 + $0x118] sm:$0xff]
    %v77 = vld [vmem:[%s0 + $0x120] sm:$0xff]
    %v78 = vld [vmem:[%s0 + $0x128] sm:$0xff]
    %v79 = vld [vmem:[%s0 + $0x130] sm:$0xff]
    %v80 = vld [vmem:[%s0 + $0x138] sm:$0xff]
    %v81 = vld [vmem:[%s0 + $0x140] sm:$0xff]
    %v82 = vld [vmem:[%s0 + $0x148] sm:$0xff]
    %v83 = vld [vmem:[%s0 + $0x150] sm:$0xff]
    %v84 = vld [vmem:[%s0 + $0x158] sm:$0xff]
    %v85 = vld [vmem:[%s0 + $0x160] sm:$0xff]
    %v86 = vld [vmem:[%s0 + $0x168] sm:$0xff]
    %v87 = vld [vmem:[%s0 + $0x170] sm:$0xff]
    %v88 = vld [vmem:[%s0 + $0x178] sm:$0xff]
    %v89 = vld [vmem:[%s0 + $0x180] sm:$0xff]
    %v90 = vld [vmem:[%s0 + $0x188] sm:$0xff]
    %v91 = vld [vmem:[%s0 + $0x190] sm:$0xff]
    %v92 = vld [vmem:[%s0 + $0x198] sm:$0xff]
    %v93 = vld [vmem:[%s0 + $0x1a0] sm:$0xff]
    %v94 = vld [vmem:[%s0 + $0x1a8] sm:$0xff]
    %v95 = vld [vmem:[%s0 + $0x1b0] sm:$0xff]
    %v96 = vld [vmem:[%s0 + $0x1b8] sm:$0xff]
    %v97 = vld [vmem:[%s0 + $0x1c0] sm:$0xff]
    %v98 = vld [vmem:[%s0 + $0x1c8] sm:$0xff]
    %v99 = vld [vmem:[%s0 + $0x1d0] sm:$0xff]
    %v100 = vld [vmem:[%s0 + $0x1d8] sm:$0xff]
    %v101 = vld [vmem:[%s0 + $0x1e0] sm:$0xff]
    %v102 = vld [vmem:[%s0 + $0x1e8] sm:$0xff]
    %v103 = vld [vmem:[%s0 + $0x1f0] sm:$0xff]
    %v104 = vld [vmem:[%s0 + $0x1f8] sm:$0xff]
    %v105 = vld [vmem:[#allocation2] sm:$0xf]
    %v106 = vld [vmem:[#allocation2 + $0x4] sm:$0xf]
    %v107 = vld [vmem:[#allocation2 + $0x8] sm:$0xf]
    %v108 = vld [vmem:[#allocation2 + $0xc] sm:$0xf]
    %v109 = vld [vmem:[#allocation2 + $0x10] sm:$0xf]
    %v110 = vld [vmem:[#allocation2 + $0x14] sm:$0xf]
    %v111 = vld [vmem:[#allocation2 + $0x18] sm:$0xf]
    %v112 = vld [vmem:[#allocation2 + $0x1c] sm:$0xf]
    %v113 = vld [vmem:[#allocation2 + $0x20] sm:$0xf]
    %v114 = vld [vmem:[#allocation2 + $0x24] sm:$0xf]
    %v115 = vld [vmem:[#allocation2 + $0x28] sm:$0xf]
    %v116 = vld [vmem:[#allocation2 + $0x2c] sm:$0xf]
    %v117 = vld [vmem:[#allocation2 + $0x30] sm:$0xf]
    %v118 = vld [vmem:[#allocation2 + $0x34] sm:$0xf]
    %v119 = vld [vmem:[#allocation2 + $0x38] sm:$0xf]
    %v120 = vld [vmem:[#allocation2 + $0x3c] sm:$0xf]
    %v121 = vld [vmem:[#allocation2 + $0x40] sm:$0xf]
    %v122 = vld [vmem:[#allocation2 + $0x44] sm:$0xf]
    %v123 = vld [vmem:[#allocation2 + $0x48] sm:$0xf]
    %v124 = vld [vmem:[#allocation2 + $0x4c] sm:$0xf]
    %v125 = vld [vmem:[#allocation2 + $0x50] sm:$0xf]
    %v126 = vld [vmem:[#allocation2 + $0x54] sm:$0xf]
    %v127 = vld [vmem:[#allocation2 + $0x58] sm:$0xf]
    %v128 = vld [vmem:[#allocation2 + $0x5c] sm:$0xf]
    %v129 = vld [vmem:[#allocation2 + $0x60] sm:$0xf]
    %v130 = vld [vmem:[#allocation2 + $0x64] sm:$0xf]
    %v131 = vld [vmem:[#allocation2 + $0x68] sm:$0xf]
    %v132 = vld [vmem:[#allocation2 + $0x6c] sm:$0xf]
    %v133 = vld [vmem:[#allocation2 + $0x70] sm:$0xf]
    %v134 = vld [vmem:[#allocation2 + $0x74] sm:$0xf]
    %v135 = vld [vmem:[#allocation2 + $0x78] sm:$0xf]
    %v136 = vld [vmem:[#allocation2 + $0x7c] sm:$0xf]
    %v137 = vld [vmem:[#allocation2 + $0x80] sm:$0xf]
    %v138 = vld [vmem:[#allocation2 + $0x84] sm:$0xf]
    %v139 = vld [vmem:[#allocation2 + $0x88] sm:$0xf]
    %v140 = vld [vmem:[#allocation2 + $0x8c] sm:$0xf]
    %v141 = vld [vmem:[#allocation2 + $0x90] sm:$0xf]
    %v142 = vld [vmem:[#allocation2 + $0x94] sm:$0xf]
    %v143 = vld [vmem:[#allocation2 + $0x98] sm:$0xf]
    %v144 = vld [vmem:[#allocation2 + $0x9c] sm:$0xf]
    %v145 = vld [vmem:[#allocation2 + $0xa0] sm:$0xf]
    %v146 = vld [vmem:[#allocation2 + $0xa4] sm:$0xf]
    %v147 = vld [vmem:[#allocation2 + $0xa8] sm:$0xf]
    %v148 = vld [vmem:[#allocation2 + $0xac] sm:$0xf]
    %v149 = vld [vmem:[#allocation2 + $0xb0] sm:$0xf]
    %v150 = vld [vmem:[#allocation2 + $0xb4] sm:$0xf]
    %v151 = vld [vmem:[#allocation2 + $0xb8] sm:$0xf]
    %v152 = vld [vmem:[#allocation2 + $0xbc] sm:$0xf]
    %v153 = vld [vmem:[#allocation2 + $0xc0] sm:$0xf]
    %v154 = vld [vmem:[#allocation2 + $0xc4] sm:$0xf]
    %v155 = vld [vmem:[#allocation2 + $0xc8] sm:$0xf]
    %v156 = vld [vmem:[#allocation2 + $0xcc] sm:$0xf]
    %v157 = vld [vmem:[#allocation2 + $0xd0] sm:$0xf]
    %v158 = vld [vmem:[#allocation2 + $0xd4] sm:$0xf]
    %v159 = vld [vmem:[#allocation2 + $0xd8] sm:$0xf]
    %v160 = vld [vmem:[#allocation2 + $0xdc] sm:$0xf]
    %v161 = vld [vmem:[#allocation2 + $0xe0] sm:$0xf]
    %v162 = vld [vmem:[#allocation2 + $0xe4] sm:$0xf]
    %v163 = vld [vmem:[#allocation2 + $0xe8] sm:$0xf]
    %v164 = vld [vmem:[#allocation2 + $0xec] sm:$0xf]
    %v165 = vld [vmem:[#allocation2 + $0xf0] sm:$0xf]
    %v166 = vld [vmem:[#allocation2 + $0xf4] sm:$0xf]
    %v167 = vld [vmem:[#allocation2 + $0xf8] sm:$0xf]
    %v168 = vld [vmem:[#allocation2 + $0xfc] sm:$0xf]
    %v169 = vld [vmem:[#allocation2 + $0x100] sm:$0xf]
    %v170 = vld [vmem:[#allocation2 + $0x104] sm:$0xf]
    %v171 = vld [vmem:[#allocation2 + $0x108] sm:$0xf]
    %v172 = vld [vmem:[#allocation2 + $0x10c] sm:$0xf]
    %v173 = vld [vmem:[#allocation2 + $0x110] sm:$0xf]
    %v174 = vld [vmem:[#allocation2 + $0x114] sm:$0xf]
    %v175 = vld [vmem:[#allocation2 + $0x118] sm:$0xf]
    %v176 = vld [vmem:[#allocation2 + $0x11c] sm:$0xf]
    %v177 = vld [vmem:[#allocation2 + $0x120] sm:$0xf]
    %v178 = vld [vmem:[#allocation2 + $0x124] sm:$0xf]
    %v179 = vld [vmem:[#allocation2 + $0x128] sm:$0xf]
    %v180 = vld [vmem:[#allocation2 + $0x12c] sm:$0xf]
    %v181 = vld [vmem:[#allocation2 + $0x130] sm:$0xf]
    %v182 = vld [vmem:[#allocation2 + $0x134] sm:$0xf]
    %v183 = vld [vmem:[#allocation2 + $0x138] sm:$0xf]
    %v184 = vld [vmem:[#allocation2 + $0x13c] sm:$0xf]
    %v185 = vld [vmem:[#allocation2 + $0x140] sm:$0xf]
    %v186 = vld [vmem:[#allocation2 + $0x144] sm:$0xf]
    %v187 = vld [vmem:[#allocation2 + $0x148] sm:$0xf]
    %v188 = vld [vmem:[#allocation2 + $0x14c] sm:$0xf]
    %v189 = vld [vmem:[#allocation2 + $0x150] sm:$0xf]
    %v190 = vld [vmem:[#allocation2 + $0x154] sm:$0xf]
    %v191 = vld [vmem:[#allocation2 + $0x158] sm:$0xf]
    %v192 = vld [vmem:[#allocation2 + $0x15c] sm:$0xf]
    %v193 = vld [vmem:[#allocation2 + $0x160] sm:$0xf]
    %v194 = vld [vmem:[#allocation2 + $0x164] sm:$0xf]
    %v195 = vld [vmem:[#allocation2 + $0x168] sm:$0xf]
    %v196 = vld [vmem:[#allocation2 + $0x16c] sm:$0xf]
    %v197 = vld [vmem:[#allocation2 + $0x170] sm:$0xf]
    %v198 = vld [vmem:[#allocation2 + $0x174] sm:$0xf]
    %v199 = vld [vmem:[#allocation2 + $0x178] sm:$0xf]
    %v200 = vld [vmem:[#allocation2 + $0x17c] sm:$0xf]
    %v201 = vld [vmem:[#allocation2 + $0x180] sm:$0xf]
    %v202 = vld [vmem:[#allocation2 + $0x184] sm:$0xf]
    %v203 = vld [vmem:[#allocation2 + $0x188] sm:$0xf]
    %v204 = vld [vmem:[#allocation2 + $0x18c] sm:$0xf]
    %v205 = vld [vmem:[#allocation2 + $0x190] sm:$0xf]
    %v206 = vld [vmem:[#allocation2 + $0x194] sm:$0xf]
    %v207 = vld [vmem:[#allocation2 + $0x198] sm:$0xf]
    %v208 = vld [vmem:[#allocation2 + $0x19c] sm:$0xf]
    %v209 = vld [vmem:[#allocation2 + $0x1a0] sm:$0xf]
    %v210 = vld [vmem:[#allocation2 + $0x1a4] sm:$0xf]
    %v211 = vld [vmem:[#allocation2 + $0x1a8] sm:$0xf]
    %v212 = vld [vmem:[#allocation2 + $0x1ac] sm:$0xf]
    %v213 = vld [vmem:[#allocation2 + $0x1b0] sm:$0xf]
    %v214 = vld [vmem:[#allocation2 + $0x1b4] sm:$0xf]
    %v215 = vld [vmem:[#allocation2 + $0x1b8] sm:$0xf]
    %v216 = vld [vmem:[#allocation2 + $0x1bc] sm:$0xf]
    %v217 = vld [vmem:[#allocation2 + $0x1c0] sm:$0xf]
    %v218 = vld [vmem:[#allocation2 + $0x1c4] sm:$0xf]
    %v219 = vld [vmem:[#allocation2 + $0x1c8] sm:$0xf]
    %v220 = vld [vmem:[#allocation2 + $0x1cc] sm:$0xf]
    %v221 = vld [vmem:[#allocation2 + $0x1d0] sm:$0xf]
    %v222 = vld [vmem:[#allocation2 + $0x1d4] sm:$0xf]
    %v223 = vld [vmem:[#allocation2 + $0x1d8] sm:$0xf]
    %v224 = vld [vmem:[#allocation2 + $0x1dc] sm:$0xf]
    %v225 = vld [vmem:[#allocation2 + $0x1e0] sm:$0xf]
    %v226 = vld [vmem:[#allocation2 + $0x1e4] sm:$0xf]
    %v227 = vld [vmem:[#allocation2 + $0x1e8] sm:$0xf]
    %v228 = vld [vmem:[#allocation2 + $0x1ec] sm:$0xf]
    %v229 = vld [vmem:[#allocation2 + $0x1f0] sm:$0xf]
    %v230 = vld [vmem:[#allocation2 + $0x1f4] sm:$0xf]
    %v231 = vld [vmem:[#allocation2 + $0x1f8] sm:$0xf]
    %v232 = vld [vmem:[#allocation2 + $0x1fc] sm:$0xf]
    %v233 = vld [vmem:[#allocation4] sm:$0x1]
    %v235 = vlaneseq
    %v236 = vshrl.u32 %v235, 7
    %v237 = vsub.s32 0, %v236
    %v238 = vrot.slane %v233, %v237
    %v304 = vunpack.c.l.b16 %v41
    %v305 = vunpack.c.h.b16 %v41
    %v306 = vunpack.c.l.b16 %v42
    %v307 = vunpack.c.h.b16 %v42
    %v308 = vunpack.c.l.b16 %v43
    %v309 = vunpack.c.h.b16 %v43
    %v310 = vunpack.c.l.b16 %v44
    %v311 = vunpack.c.h.b16 %v44
    %v312 = vunpack.c.l.b16 %v45
    %v313 = vunpack.c.h.b16 %v45
    %v314 = vunpack.c.l.b16 %v46
    %v315 = vunpack.c.h.b16 %v46
    %v316 = vunpack.c.l.b16 %v47
    %v317 = vunpack.c.h.b16 %v47
    %v318 = vunpack.c.l.b16 %v48
    %v319 = vunpack.c.h.b16 %v48
    %v320 = vunpack.c.l.b16 %v49
    %v321 = vunpack.c.h.b16 %v49
    %v322 = vunpack.c.l.b16 %v50
    %v323 = vunpack.c.h.b16 %v50
    %v324 = vunpack.c.l.b16 %v51
    %v325 = vunpack.c.h.b16 %v51
    %v326 = vunpack.c.l.b16 %v52
    %v327 = vunpack.c.h.b16 %v52
    %v328 = vunpack.c.l.b16 %v53
    %v329 = vunpack.c.h.b16 %v53
    %v330 = vunpack.c.l.b16 %v54
    %v331 = vunpack.c.h.b16 %v54
    %v332 = vunpack.c.l.b16 %v55
    %v333 = vunpack.c.h.b16 %v55
    %v334 = vunpack.c.l.b16 %v56
    %v335 = vunpack.c.h.b16 %v56
    %v336 = vunpack.c.l.b16 %v57
    %v337 = vunpack.c.h.b16 %v57
    %v338 = vunpack.c.l.b16 %v58
    %v339 = vunpack.c.h.b16 %v58
    %v340 = vunpack.c.l.b16 %v59
    %v341 = vunpack.c.h.b16 %v59
    %v342 = vunpack.c.l.b16 %v60
    %v343 = vunpack.c.h.b16 %v60
    %v344 = vunpack.c.l.b16 %v61
    %v345 = vunpack.c.h.b16 %v61
    %v346 = vunpack.c.l.b16 %v62
    %v347 = vunpack.c.h.b16 %v62
    %v348 = vunpack.c.l.b16 %v63
    %v349 = vunpack.c.h.b16 %v63
    %v350 = vunpack.c.l.b16 %v64
    %v351 = vunpack.c.h.b16 %v64
    %v352 = vunpack.c.l.b16 %v65
    %v353 = vunpack.c.h.b16 %v65
    %v354 = vunpack.c.l.b16 %v66
    %v355 = vunpack.c.h.b16 %v66
    %v356 = vunpack.c.l.b16 %v67
    %v357 = vunpack.c.h.b16 %v67
    %v358 = vunpack.c.l.b16 %v68
    %v359 = vunpack.c.h.b16 %v68
    %v360 = vunpack.c.l.b16 %v69
    %v361 = vunpack.c.h.b16 %v69
    %v362 = vunpack.c.l.b16 %v70
    %v363 = vunpack.c.h.b16 %v70
    %v364 = vunpack.c.l.b16 %v71
    %v365 = vunpack.c.h.b16 %v71
    %v366 = vunpack.c.l.b16 %v72
    %v367 = vunpack.c.h.b16 %v72
    %v368 = vunpack.c.l.b16 %v73
    %v369 = vunpack.c.h.b16 %v73
    %v370 = vunpack.c.l.b16 %v74
    %v371 = vunpack.c.h.b16 %v74
    %v372 = vunpack.c.l.b16 %v75
    %v373 = vunpack.c.h.b16 %v75
    %v374 = vunpack.c.l.b16 %v76
    %v375 = vunpack.c.h.b16 %v76
    %v376 = vunpack.c.l.b16 %v77
    %v377 = vunpack.c.h.b16 %v77
    %v378 = vunpack.c.l.b16 %v78
    %v379 = vunpack.c.h.b16 %v78
    %v380 = vunpack.c.l.b16 %v79
    %v381 = vunpack.c.h.b16 %v79
    %v382 = vunpack.c.l.b16 %v80
    %v383 = vunpack.c.h.b16 %v80
    %v384 = vunpack.c.l.b16 %v81
    %v385 = vunpack.c.h.b16 %v81
    %v386 = vunpack.c.l.b16 %v82
    %v387 = vunpack.c.h.b16 %v82
    %v388 = vunpack.c.l.b16 %v83
    %v389 = vunpack.c.h.b16 %v83
    %v390 = vunpack.c.l.b16 %v84
    %v391 = vunpack.c.h.b16 %v84
    %v392 = vunpack.c.l.b16 %v85
    %v393 = vunpack.c.h.b16 %v85
    %v394 = vunpack.c.l.b16 %v86
    %v395 = vunpack.c.h.b16 %v86
    %v396 = vunpack.c.l.b16 %v87
    %v397 = vunpack.c.h.b16 %v87
    %v398 = vunpack.c.l.b16 %v88
    %v399 = vunpack.c.h.b16 %v88
    %v400 = vunpack.c.l.b16 %v89
    %v401 = vunpack.c.h.b16 %v89
    %v402 = vunpack.c.l.b16 %v90
    %v403 = vunpack.c.h.b16 %v90
    %v404 = vunpack.c.l.b16 %v91
    %v405 = vunpack.c.h.b16 %v91
    %v406 = vunpack.c.l.b16 %v92
    %v407 = vunpack.c.h.b16 %v92
    %v408 = vunpack.c.l.b16 %v93
    %v409 = vunpack.c.h.b16 %v93
    %v410 = vunpack.c.l.b16 %v94
    %v411 = vunpack.c.h.b16 %v94
    %v412 = vunpack.c.l.b16 %v95
    %v413 = vunpack.c.h.b16 %v95
    %v414 = vunpack.c.l.b16 %v96
    %v415 = vunpack.c.h.b16 %v96
    %v416 = vunpack.c.l.b16 %v97
    %v417 = vunpack.c.h.b16 %v97
    %v418 = vunpack.c.l.b16 %v98
    %v419 = vunpack.c.h.b16 %v98
    %v420 = vunpack.c.l.b16 %v99
    %v421 = vunpack.c.h.b16 %v99
    %v422 = vunpack.c.l.b16 %v100
    %v423 = vunpack.c.h.b16 %v100
    %v424 = vunpack.c.l.b16 %v101
    %v425 = vunpack.c.h.b16 %v101
    %v426 = vunpack.c.l.b16 %v102
    %v427 = vunpack.c.h.b16 %v102
    %v428 = vunpack.c.l.b16 %v103
    %v429 = vunpack.c.h.b16 %v103
    %v430 = vunpack.c.l.b16 %v104
    %v431 = vunpack.c.h.b16 %v104
    %v432 = vpack.c.b16 %v312, %v304
    %v433 = vpack.c.b16 %v313, %v305
    %v434 = vpack.c.b16 %v314, %v306
    %v435 = vpack.c.b16 %v315, %v307
    %v436 = vpack.c.b16 %v316, %v308
    %v437 = vpack.c.b16 %v317, %v309
    %v438 = vpack.c.b16 %v318, %v310
    %v439 = vpack.c.b16 %v319, %v311
    %v440 = vpack.c.b16 %v328, %v320
    %v441 = vpack.c.b16 %v329, %v321
    %v442 = vpack.c.b16 %v330, %v322
    %v443 = vpack.c.b16 %v331, %v323
    %v444 = vpack.c.b16 %v332, %v324
    %v445 = vpack.c.b16 %v333, %v325
    %v446 = vpack.c.b16 %v334, %v326
    %v447 = vpack.c.b16 %v335, %v327
    %v448 = vpack.c.b16 %v344, %v336
    %v449 = vpack.c.b16 %v345, %v337
    %v450 = vpack.c.b16 %v346, %v338
    %v451 = vpack.c.b16 %v347, %v339
    %v452 = vpack.c.b16 %v348, %v340
    %v453 = vpack.c.b16 %v349, %v341
    %v454 = vpack.c.b16 %v350, %v342
    %v455 = vpack.c.b16 %v351, %v343
    %v456 = vpack.c.b16 %v360, %v352
    %v457 = vpack.c.b16 %v361, %v353
    %v458 = vpack.c.b16 %v362, %v354
    %v459 = vpack.c.b16 %v363, %v355
    %v460 = vpack.c.b16 %v364, %v356
    %v461 = vpack.c.b16 %v365, %v357
    %v462 = vpack.c.b16 %v366, %v358
    %v463 = vpack.c.b16 %v367, %v359
    %v464 = vpack.c.b16 %v376, %v368
    %v465 = vpack.c.b16 %v377, %v369
    %v466 = vpack.c.b16 %v378, %v370
    %v467 = vpack.c.b16 %v379, %v371
    %v468 = vpack.c.b16 %v380, %v372
    %v469 = vpack.c.b16 %v381, %v373
    %v470 = vpack.c.b16 %v382, %v374
    %v471 = vpack.c.b16 %v383, %v375
    %v472 = vpack.c.b16 %v392, %v384
    %v473 = vpack.c.b16 %v393, %v385
    %v474 = vpack.c.b16 %v394, %v386
    %v475 = vpack.c.b16 %v395, %v387
    %v476 = vpack.c.b16 %v396, %v388
    %v477 = vpack.c.b16 %v397, %v389
    %v478 = vpack.c.b16 %v398, %v390
    %v479 = vpack.c.b16 %v399, %v391
    %v480 = vpack.c.b16 %v408, %v400
    %v481 = vpack.c.b16 %v409, %v401
    %v482 = vpack.c.b16 %v410, %v402
    %v483 = vpack.c.b16 %v411, %v403
    %v484 = vpack.c.b16 %v412, %v404
    %v485 = vpack.c.b16 %v413, %v405
    %v486 = vpack.c.b16 %v414, %v406
    %v487 = vpack.c.b16 %v415, %v407
    %v488 = vpack.c.b16 %v424, %v416
    %v489 = vpack.c.b16 %v425, %v417
    %v490 = vpack.c.b16 %v426, %v418
    %v491 = vpack.c.b16 %v427, %v419
    %v492 = vpack.c.b16 %v428, %v420
    %v493 = vpack.c.b16 %v429, %v421
    %v494 = vpack.c.b16 %v430, %v422
    %v495 = vpack.c.b16 %v431, %v423
    %v688 = vunpack.c.l.b16 %v105
    %v689 = vunpack.c.l.b16 %v106
    %v690 = vunpack.c.l.b16 %v107
    %v691 = vunpack.c.l.b16 %v108
    %v692 = vunpack.c.l.b16 %v109
    %v693 = vunpack.c.l.b16 %v110
    %v694 = vunpack.c.l.b16 %v111
    %v695 = vunpack.c.l.b16 %v112
    %v696 = vunpack.c.l.b16 %v113
    %v697 = vunpack.c.l.b16 %v114
    %v698 = vunpack.c.l.b16 %v115
    %v699 = vunpack.c.l.b16 %v116
    %v700 = vunpack.c.l.b16 %v117
    %v701 = vunpack.c.l.b16 %v118
    %v702 = vunpack.c.l.b16 %v119
    %v703 = vunpack.c.l.b16 %v120
    %v704 = vunpack.c.l.b16 %v121
    %v705 = vunpack.c.l.b16 %v122
    %v706 = vunpack.c.l.b16 %v123
    %v707 = vunpack.c.l.b16 %v124
    %v708 = vunpack.c.l.b16 %v125
    %v709 = vunpack.c.l.b16 %v126
    %v710 = vunpack.c.l.b16 %v127
    %v711 = vunpack.c.l.b16 %v128
    %v712 = vunpack.c.l.b16 %v129
    %v713 = vunpack.c.l.b16 %v130
    %v714 = vunpack.c.l.b16 %v131
    %v715 = vunpack.c.l.b16 %v132
    %v716 = vunpack.c.l.b16 %v133
    %v717 = vunpack.c.l.b16 %v134
    %v718 = vunpack.c.l.b16 %v135
    %v719 = vunpack.c.l.b16 %v136
    %v720 = vunpack.c.l.b16 %v137
    %v721 = vunpack.c.l.b16 %v138
    %v722 = vunpack.c.l.b16 %v139
    %v723 = vunpack.c.l.b16 %v140
    %v724 = vunpack.c.l.b16 %v141
    %v725 = vunpack.c.l.b16 %v142
    %v726 = vunpack.c.l.b16 %v143
    %v727 = vunpack.c.l.b16 %v144
    %v728 = vunpack.c.l.b16 %v145
    %v729 = vunpack.c.l.b16 %v146
    %v730 = vunpack.c.l.b16 %v147
    %v731 = vunpack.c.l.b16 %v148
    %v732 = vunpack.c.l.b16 %v149
    %v733 = vunpack.c.l.b16 %v150
    %v734 = vunpack.c.l.b16 %v151
    %v735 = vunpack.c.l.b16 %v152
    %v736 = vunpack.c.l.b16 %v153
    %v737 = vunpack.c.l.b16 %v154
    %v738 = vunpack.c.l.b16 %v155
    %v739 = vunpack.c.l.b16 %v156
    %v740 = vunpack.c.l.b16 %v157
    %v741 = vunpack.c.l.b16 %v158
    %v742 = vunpack.c.l.b16 %v159
    %v743 = vunpack.c.l.b16 %v160
    %v744 = vunpack.c.l.b16 %v161
    %v745 = vunpack.c.l.b16 %v162
    %v746 = vunpack.c.l.b16 %v163
    %v747 = vunpack.c.l.b16 %v164
    %v748 = vunpack.c.l.b16 %v165
    %v749 = vunpack.c.l.b16 %v166
    %v750 = vunpack.c.l.b16 %v167
    %v751 = vunpack.c.l.b16 %v168
    %v752 = vunpack.c.l.b16 %v169
    %v753 = vunpack.c.l.b16 %v170
    %v754 = vunpack.c.l.b16 %v171
    %v755 = vunpack.c.l.b16 %v172
    %v756 = vunpack.c.l.b16 %v173
    %v757 = vunpack.c.l.b16 %v174
    %v758 = vunpack.c.l.b16 %v175
    %v759 = vunpack.c.l.b16 %v176
    %v760 = vunpack.c.l.b16 %v177
    %v761 = vunpack.c.l.b16 %v178
    %v762 = vunpack.c.l.b16 %v179
    %v763 = vunpack.c.l.b16 %v180
    %v764 = vunpack.c.l.b16 %v181
    %v765 = vunpack.c.l.b16 %v182
    %v766 = vunpack.c.l.b16 %v183
    %v767 = vunpack.c.l.b16 %v184
    %v768 = vunpack.c.l.b16 %v185
    %v769 = vunpack.c.l.b16 %v186
    %v770 = vunpack.c.l.b16 %v187
    %v771 = vunpack.c.l.b16 %v188
    %v772 = vunpack.c.l.b16 %v189
    %v773 = vunpack.c.l.b16 %v190
    %v774 = vunpack.c.l.b16 %v191
    %v775 = vunpack.c.l.b16 %v192
    %v776 = vunpack.c.l.b16 %v193
    %v777 = vunpack.c.l.b16 %v194
    %v778 = vunpack.c.l.b16 %v195
    %v779 = vunpack.c.l.b16 %v196
    %v780 = vunpack.c.l.b16 %v197
    %v781 = vunpack.c.l.b16 %v198
    %v782 = vunpack.c.l.b16 %v199
    %v783 = vunpack.c.l.b16 %v200
    %v784 = vunpack.c.l.b16 %v201
    %v785 = vunpack.c.l.b16 %v202
    %v786 = vunpack.c.l.b16 %v203
    %v787 = vunpack.c.l.b16 %v204
    %v788 = vunpack.c.l.b16 %v205
    %v789 = vunpack.c.l.b16 %v206
    %v790 = vunpack.c.l.b16 %v207
    %v791 = vunpack.c.l.b16 %v208
    %v792 = vunpack.c.l.b16 %v209
    %v793 = vunpack.c.l.b16 %v210
    %v794 = vunpack.c.l.b16 %v211
    %v795 = vunpack.c.l.b16 %v212
    %v796 = vunpack.c.l.b16 %v213
    %v797 = vunpack.c.l.b16 %v214
    %v798 = vunpack.c.l.b16 %v215
    %v799 = vunpack.c.l.b16 %v216
    %v800 = vunpack.c.l.b16 %v217
    %v801 = vunpack.c.l.b16 %v218
    %v802 = vunpack.c.l.b16 %v219
    %v803 = vunpack.c.l.b16 %v220
    %v804 = vunpack.c.l.b16 %v221
    %v805 = vunpack.c.l.b16 %v222
    %v806 = vunpack.c.l.b16 %v223
    %v807 = vunpack.c.l.b16 %v224
    %v808 = vunpack.c.l.b16 %v225
    %v809 = vunpack.c.l.b16 %v226
    %v810 = vunpack.c.l.b16 %v227
    %v811 = vunpack.c.l.b16 %v228
    %v812 = vunpack.c.l.b16 %v229
    %v813 = vunpack.c.l.b16 %v230
    %v814 = vunpack.c.l.b16 %v231
    %v815 = vunpack.c.l.b16 %v232
    %v816 = vpack.c.b16 %v689, %v688
    %v817 = vpack.c.b16 %v691, %v690
    %v818 = vpack.c.b16 %v693, %v692
    %v819 = vpack.c.b16 %v695, %v694
    %v820 = vpack.c.b16 %v697, %v696
    %v821 = vpack.c.b16 %v699, %v698
    %v822 = vpack.c.b16 %v701, %v700
    %v823 = vpack.c.b16 %v703, %v702
    %v824 = vpack.c.b16 %v705, %v704
    %v825 = vpack.c.b16 %v707, %v706
    %v826 = vpack.c.b16 %v709, %v708
    %v827 = vpack.c.b16 %v711, %v710
    %v828 = vpack.c.b16 %v713, %v712
    %v829 = vpack.c.b16 %v715, %v714
    %v830 = vpack.c.b16 %v717, %v716
    %v831 = vpack.c.b16 %v719, %v718
    %v832 = vpack.c.b16 %v721, %v720
    %v833 = vpack.c.b16 %v723, %v722
    %v834 = vpack.c.b16 %v725, %v724
    %v835 = vpack.c.b16 %v727, %v726
    %v836 = vpack.c.b16 %v729, %v728
    %v837 = vpack.c.b16 %v731, %v730
    %v838 = vpack.c.b16 %v733, %v732
    %v839 = vpack.c.b16 %v735, %v734
    %v840 = vpack.c.b16 %v737, %v736
    %v841 = vpack.c.b16 %v739, %v738
    %v842 = vpack.c.b16 %v741, %v740
    %v843 = vpack.c.b16 %v743, %v742
    %v844 = vpack.c.b16 %v745, %v744
    %v845 = vpack.c.b16 %v747, %v746
    %v846 = vpack.c.b16 %v749, %v748
    %v847 = vpack.c.b16 %v751, %v750
    %v848 = vpack.c.b16 %v753, %v752
    %v849 = vpack.c.b16 %v755, %v754
    %v850 = vpack.c.b16 %v757, %v756
    %v851 = vpack.c.b16 %v759, %v758
    %v852 = vpack.c.b16 %v761, %v760
    %v853 = vpack.c.b16 %v763, %v762
    %v854 = vpack.c.b16 %v765, %v764
    %v855 = vpack.c.b16 %v767, %v766
    %v856 = vpack.c.b16 %v769, %v768
    %v857 = vpack.c.b16 %v771, %v770
    %v858 = vpack.c.b16 %v773, %v772
    %v859 = vpack.c.b16 %v775, %v774
    %v860 = vpack.c.b16 %v777, %v776
    %v861 = vpack.c.b16 %v779, %v778
    %v862 = vpack.c.b16 %v781, %v780
    %v863 = vpack.c.b16 %v783, %v782
    %v864 = vpack.c.b16 %v785, %v784
    %v865 = vpack.c.b16 %v787, %v786
    %v866 = vpack.c.b16 %v789, %v788
    %v867 = vpack.c.b16 %v791, %v790
    %v868 = vpack.c.b16 %v793, %v792
    %v869 = vpack.c.b16 %v795, %v794
    %v870 = vpack.c.b16 %v797, %v796
    %v871 = vpack.c.b16 %v799, %v798
    %v872 = vpack.c.b16 %v801, %v800
    %v873 = vpack.c.b16 %v803, %v802
    %v874 = vpack.c.b16 %v805, %v804
    %v875 = vpack.c.b16 %v807, %v806
    %v876 = vpack.c.b16 %v809, %v808
    %v877 = vpack.c.b16 %v811, %v810
    %v878 = vpack.c.b16 %v813, %v812
    %v879 = vpack.c.b16 %v815, %v814
    %944 = vmatprep.subr.bf16.mxu0 0
    %945 = vmatpush1.bf16.msra.mxu0 %v816
    %946 = vmatprep.subr.bf16.mxu0 0
    %947 = vmatpush1.bf16.msra.mxu0 %v817
    %948 = vmatprep.subr.bf16.mxu0 0
    %949 = vmatpush1.bf16.msra.mxu0 %v818
    %950 = vmatprep.subr.bf16.mxu0 0
    %951 = vmatpush1.bf16.msra.mxu0 %v819
    %952 = vmatprep.subr.bf16.mxu0 0
    %953 = vmatpush1.bf16.msra.mxu0 %v820
    %954 = vmatprep.subr.bf16.mxu0 0
    %955 = vmatpush1.bf16.msra.mxu0 %v821
    %956 = vmatprep.subr.bf16.mxu0 0
    %957 = vmatpush1.bf16.msra.mxu0 %v822
    %958 = vmatprep.subr.bf16.mxu0 0
    %959 = vmatpush1.bf16.msra.mxu0 %v823
    %960 = vmatprep.subr.bf16.mxu0 0
    %961 = vmatpush1.bf16.msra.mxu0 %v824
    %962 = vmatprep.subr.bf16.mxu0 0
    %963 = vmatpush1.bf16.msra.mxu0 %v825
    %964 = vmatprep.subr.bf16.mxu0 0
    %965 = vmatpush1.bf16.msra.mxu0 %v826
    %966 = vmatprep.subr.bf16.mxu0 0
    %967 = vmatpush1.bf16.msra.mxu0 %v827
    %968 = vmatprep.subr.bf16.mxu0 0
    %969 = vmatpush1.bf16.msra.mxu0 %v828
    %970 = vmatprep.subr.bf16.mxu0 0
    %971 = vmatpush1.bf16.msra.mxu0 %v829
    %972 = vmatprep.subr.bf16.mxu0 0
    %973 = vmatpush1.bf16.msra.mxu0 %v830
    %974 = vmatprep.subr.bf16.mxu0 0
    %975 = vmatpush1.bf16.msra.mxu0 %v831
    %976 = vmatprep.mubr.bf16.mxu0 %v433
    %977 = vmatmul.mubr.bf16.gmra.mrb[0].mxu0 %v432
    %v978 = vpop.f32.mrb[0].mxu0
    %v979 = vadd.f32 %v238, %v978
    %v980 = vpop.f32.mrb[0].mxu0
    %v981 = vpop.f32.mrb[0].mxu0
    %v982 = vadd.f32 %v238, %v981
    %v983 = vpop.f32.mrb[0].mxu0
    %984 = vmatprep.mubr.bf16.mxu0 %v441
    %985 = vmatmul.mubr.bf16.gmra.mrb[0].mxu0 %v440
    %v986 = vpop.f32.mrb[0].mxu0
    %v987 = vadd.f32 %v238, %v986
    %v988 = vpop.f32.mrb[0].mxu0
    %v989 = vpop.f32.mrb[0].mxu0
    %v990 = vadd.f32 %v238, %v989
    %v991 = vpop.f32.mrb[0].mxu0
    %992 = vmatprep.mubr.bf16.mxu0 %v449
    %993 = vmatmul.mubr.bf16.gmra.mrb[0].mxu0 %v448
    %v994 = vpop.f32.mrb[0].mxu0
    %v995 = vadd.f32 %v238, %v994
    %v996 = vpop.f32.mrb[0].mxu0
    %v997 = vpop.f32.mrb[0].mxu0
    %v998 = vadd.f32 %v238, %v997
    %v999 = vpop.f32.mrb[0].mxu0
    %1000 = vmatprep.mubr.bf16.mxu0 %v457
    %1001 = vmatmul.mubr.bf16.gmra.mrb[0].mxu0 %v456
    %v1002 = vpop.f32.mrb[0].mxu0
    %v1003 = vadd.f32 %v238, %v1002
    %v1004 = vpop.f32.mrb[0].mxu0
    %v1005 = vpop.f32.mrb[0].mxu0
    %v1006 = vadd.f32 %v238, %v1005
    %v1007 = vpop.f32.mrb[0].mxu0
    %1008 = vmatprep.mubr.bf16.mxu0 %v465
    %1009 = vmatmul.mubr.bf16.gmra.mrb[0].mxu0 %v464
    %v1010 = vpop.f32.mrb[0].mxu0
    %v1011 = vadd.f32 %v238, %v1010
    %v1012 = vpop.f32.mrb[0].mxu0
    %v1013 = vpop.f32.mrb[0].mxu0
    %v1014 = vadd.f32 %v238, %v1013
    %v1015 = vpop.f32.mrb[0].mxu0
    %1016 = vmatprep.mubr.bf16.mxu0 %v473
    %1017 = vmatmul.mubr.bf16.gmra.mrb[0].mxu0 %v472
    %v1018 = vpop.f32.mrb[0].mxu0
    %v1019 = vadd.f32 %v238, %v1018
    %v1020 = vpop.f32.mrb[0].mxu0
    %v1021 = vpop.f32.mrb[0].mxu0
    %v1022 = vadd.f32 %v238, %v1021
    %v1023 = vpop.f32.mrb[0].mxu0
    %1024 = vmatprep.mubr.bf16.mxu0 %v481
    %1025 = vmatmul.mubr.bf16.gmra.mrb[0].mxu0 %v480
    %v1026 = vpop.f32.mrb[0].mxu0
    %v1027 = vadd.f32 %v238, %v1026
    %v1028 = vpop.f32.mrb[0].mxu0
    %v1029 = vpop.f32.mrb[0].mxu0
    %v1030 = vadd.f32 %v238, %v1029
    %v1031 = vpop.f32.mrb[0].mxu0
    %1032 = vmatprep.mubr.bf16.mxu0 %v489
    %1033 = vmatmul.mubr.bf16.gmra.mrb[0].mxu0 %v488
    %v1034 = vpop.f32.mrb[0].mxu0
    %v1035 = vadd.f32 %v238, %v1034
    %v1036 = vpop.f32.mrb[0].mxu0
    %v1037 = vpop.f32.mrb[0].mxu0
    %v1038 = vadd.f32 %v238, %v1037
    %v1039 = vpop.f32.mrb[0].mxu0
    %1040 = vdwg.mxu0
    %1041 = vmatprep.subr.bf16.mxu0 0
    %1042 = vmatpush1.bf16.msra.mxu0 %v832
    %1043 = vmatprep.subr.bf16.mxu0 0
    %1044 = vmatpush1.bf16.msra.mxu0 %v833
    %1045 = vmatprep.subr.bf16.mxu0 0
    %1046 = vmatpush1.bf16.msra.mxu0 %v834
    %1047 = vmatprep.subr.bf16.mxu0 0
    %1048 = vmatpush1.bf16.msra.mxu0 %v835
    %1049 = vmatprep.subr.bf16.mxu0 0
    %1050 = vmatpush1.bf16.msra.mxu0 %v836
    %1051 = vmatprep.subr.bf16.mxu0 0
    %1052 = vmatpush1.bf16.msra.mxu0 %v837
    %1053 = vmatprep.subr.bf16.mxu0 0
    %1054 = vmatpush1.bf16.msra.mxu0 %v838
    %1055 = vmatprep.subr.bf16.mxu0 0
    %1056 = vmatpush1.bf16.msra.mxu0 %v839
    %1057 = vmatprep.subr.bf16.mxu0 0
    %1058 = vmatpush1.bf16.msra.mxu0 %v840
    %1059 = vmatprep.subr.bf16.mxu0 0
    %1060 = vmatpush1.bf16.msra.mxu0 %v841
    %1061 = vmatprep.subr.bf16.mxu0 0
    %1062 = vmatpush1.bf16.msra.mxu0 %v842
    %1063 = vmatprep.subr.bf16.mxu0 0
    %1064 = vmatpush1.bf16.msra.mxu0 %v843
    %1065 = vmatprep.subr.bf16.mxu0 0
    %1066 = vmatpush1.bf16.msra.mxu0 %v844
    %1067 = vmatprep.subr.bf16.mxu0 0
    %1068 = vmatpush1.bf16.msra.mxu0 %v845
    %1069 = vmatprep.subr.bf16.mxu0 0
    %1070 = vmatpush1.bf16.msra.mxu0 %v846
    %1071 = vmatprep.subr.bf16.mxu0 0
    %1072 = vmatpush1.bf16.msra.mxu0 %v847
    %1073 = vmatprep.mubr.bf16.mxu0 %v435
    %1074 = vmatmul.mubr.bf16.gmra.mrb[0].mxu0 %v434
    %v1075 = vpop.f32.mrb[0].mxu0
    %v1076 = vadd.f32 %v979, %v1075
    %v1077 = vpop.f32.mrb[0].mxu0
    %v1078 = vpop.f32.mrb[0].mxu0
    %v1079 = vadd.f32 %v982, %v1078
    %v1080 = vpop.f32.mrb[0].mxu0
    %1081 = vmatprep.mubr.bf16.mxu0 %v443
    %1082 = vmatmul.mubr.bf16.gmra.mrb[0].mxu0 %v442
    %v1083 = vpop.f32.mrb[0].mxu0
    %v1084 = vadd.f32 %v987, %v1083
    %v1085 = vpop.f32.mrb[0].mxu0
    %v1086 = vpop.f32.mrb[0].mxu0
    %v1087 = vadd.f32 %v990, %v1086
    %v1088 = vpop.f32.mrb[0].mxu0
    %1089 = vmatprep.mubr.bf16.mxu0 %v451
    %1090 = vmatmul.mubr.bf16.gmra.mrb[0].mxu0 %v450
    %v1091 = vpop.f32.mrb[0].mxu0
    %v1092 = vadd.f32 %v995, %v1091
    %v1093 = vpop.f32.mrb[0].mxu0
    %v1094 = vpop.f32.mrb[0].mxu0
    %v1095 = vadd.f32 %v998, %v1094
    %v1096 = vpop.f32.mrb[0].mxu0
    %1097 = vmatprep.mubr.bf16.mxu0 %v459
    %1098 = vmatmul.mubr.bf16.gmra.mrb[0].mxu0 %v458
    %v1099 = vpop.f32.mrb[0].mxu0
    %v1100 = vadd.f32 %v1003, %v1099
    %v1101 = vpop.f32.mrb[0].mxu0
    %v1102 = vpop.f32.mrb[0].mxu0
    %v1103 = vadd.f32 %v1006, %v1102
    %v1104 = vpop.f32.mrb[0].mxu0
    %1105 = vmatprep.mubr.bf16.mxu0 %v467
    %1106 = vmatmul.mubr.bf16.gmra.mrb[0].mxu0 %v466
    %v1107 = vpop.f32.mrb[0].mxu0
    %v1108 = vadd.f32 %v1011, %v1107
    %v1109 = vpop.f32.mrb[0].mxu0
    %v1110 = vpop.f32.mrb[0].mxu0
    %v1111 = vadd.f32 %v1014, %v1110
    %v1112 = vpop.f32.mrb[0].mxu0
    %1113 = vmatprep.mubr.bf16.mxu0 %v475
    %1114 = vmatmul.mubr.bf16.gmra.mrb[0].mxu0 %v474
    %v1115 = vpop.f32.mrb[0].mxu0
    %v1116 = vadd.f32 %v1019, %v1115
    %v1117 = vpop.f32.mrb[0].mxu0
    %v1118 = vpop.f32.mrb[0].mxu0
    %v1119 = vadd.f32 %v1022, %v1118
    %v1120 = vpop.f32.mrb[0].mxu0
    %1121 = vmatprep.mubr.bf16.mxu0 %v483
    %1122 = vmatmul.mubr.bf16.gmra.mrb[0].mxu0 %v482
    %v1123 = vpop.f32.mrb[0].mxu0
    %v1124 = vadd.f32 %v1027, %v1123
    %v1125 = vpop.f32.mrb[0].mxu0
    %v1126 = vpop.f32.mrb[0].mxu0
    %v1127 = vadd.f32 %v1030, %v1126
    %v1128 = vpop.f32.mrb[0].mxu0
    %1129 = vmatprep.mubr.bf16.mxu0 %v491
    %1130 = vmatmul.mubr.bf16.gmra.mrb[0].mxu0 %v490
    %v1131 = vpop.f32.mrb[0].mxu0
    %v1132 = vadd.f32 %v1035, %v1131
    %v1133 = vpop.f32.mrb[0].mxu0
    %v1134 = vpop.f32.mrb[0].mxu0
    %v1135 = vadd.f32 %v1038, %v1134
    %v1136 = vpop.f32.mrb[0].mxu0
    %1137 = vdwg.mxu0
    %1138 = vmatprep.subr.bf16.mxu0 0
    %1139 = vmatpush1.bf16.msra.mxu0 %v848
    %1140 = vmatprep.subr.bf16.mxu0 0
    %1141 = vmatpush1.bf16.msra.mxu0 %v849
    %1142 = vmatprep.subr.bf16.mxu0 0
    %1143 = vmatpush1.bf16.msra.mxu0 %v850
    %1144 = vmatprep.subr.bf16.mxu0 0
    %1145 = vmatpush1.bf16.msra.mxu0 %v851
    %1146 = vmatprep.subr.bf16.mxu0 0
    %1147 = vmatpush1.bf16.msra.mxu0 %v852
    %1148 = vmatprep.subr.bf16.mxu0 0
    %1149 = vmatpush1.bf16.msra.mxu0 %v853
    %1150 = vmatprep.subr.bf16.mxu0 0
    %1151 = vmatpush1.bf16.msra.mxu0 %v854
    %1152 = vmatprep.subr.bf16.mxu0 0
    %1153 = vmatpush1.bf16.msra.mxu0 %v855
    %1154 = vmatprep.subr.bf16.mxu0 0
    %1155 = vmatpush1.bf16.msra.mxu0 %v856
    %1156 = vmatprep.subr.bf16.mxu0 0
    %1157 = vmatpush1.bf16.msra.mxu0 %v857
    %1158 = vmatprep.subr.bf16.mxu0 0
    %1159 = vmatpush1.bf16.msra.mxu0 %v858
    %1160 = vmatprep.subr.bf16.mxu0 0
    %1161 = vmatpush1.bf16.msra.mxu0 %v859
    %1162 = vmatprep.subr.bf16.mxu0 0
    %1163 = vmatpush1.bf16.msra.mxu0 %v860
    %1164 = vmatprep.subr.bf16.mxu0 0
    %1165 = vmatpush1.bf16.msra.mxu0 %v861
    %1166 = vmatprep.subr.bf16.mxu0 0
    %1167 = vmatpush1.bf16.msra.mxu0 %v862
    %1168 = vmatprep.subr.bf16.mxu0 0
    %1169 = vmatpush1.bf16.msra.mxu0 %v863
    %1170 = vmatprep.mubr.bf16.mxu0 %v437
    %1171 = vmatmul.mubr.bf16.gmra.mrb[0].mxu0 %v436
    %v1172 = vpop.f32.mrb[0].mxu0
    %v1173 = vadd.f32 %v1076, %v1172
    %v1174 = vpop.f32.mrb[0].mxu0
    %v1175 = vpop.f32.mrb[0].mxu0
    %v1176 = vadd.f32 %v1079, %v1175
    %v1177 = vpop.f32.mrb[0].mxu0
    %1178 = vmatprep.mubr.bf16.mxu0 %v445
    %1179 = vmatmul.mubr.bf16.gmra.mrb[0].mxu0 %v444
    %v1180 = vpop.f32.mrb[0].mxu0
    %v1181 = vadd.f32 %v1084, %v1180
    %v1182 = vpop.f32.mrb[0].mxu0
    %v1183 = vpop.f32.mrb[0].mxu0
    %v1184 = vadd.f32 %v1087, %v1183
    %v1185 = vpop.f32.mrb[0].mxu0
    %1186 = vmatprep.mubr.bf16.mxu0 %v453
    %1187 = vmatmul.mubr.bf16.gmra.mrb[0].mxu0 %v452
    %v1188 = vpop.f32.mrb[0].mxu0
    %v1189 = vadd.f32 %v1092, %v1188
    %v1190 = vpop.f32.mrb[0].mxu0
    %v1191 = vpop.f32.mrb[0].mxu0
    %v1192 = vadd.f32 %v1095, %v1191
    %v1193 = vpop.f32.mrb[0].mxu0
    %1194 = vmatprep.mubr.bf16.mxu0 %v461
    %1195 = vmatmul.mubr.bf16.gmra.mrb[0].mxu0 %v460
    %v1196 = vpop.f32.mrb[0].mxu0
    %v1197 = vadd.f32 %v1100, %v1196
    %v1198 = vpop.f32.mrb[0].mxu0
    %v1199 = vpop.f32.mrb[0].mxu0
    %v1200 = vadd.f32 %v1103, %v1199
    %v1201 = vpop.f32.mrb[0].mxu0
    %1202 = vmatprep.mubr.bf16.mxu0 %v469
    %1203 = vmatmul.mubr.bf16.gmra.mrb[0].mxu0 %v468
    %v1204 = vpop.f32.mrb[0].mxu0
    %v1205 = vadd.f32 %v1108, %v1204
    %v1206 = vpop.f32.mrb[0].mxu0
    %v1207 = vpop.f32.mrb[0].mxu0
    %v1208 = vadd.f32 %v1111, %v1207
    %v1209 = vpop.f32.mrb[0].mxu0
    %1210 = vmatprep.mubr.bf16.mxu0 %v477
    %1211 = vmatmul.mubr.bf16.gmra.mrb[0].mxu0 %v476
    %v1212 = vpop.f32.mrb[0].mxu0
    %v1213 = vadd.f32 %v1116, %v1212
    %v1214 = vpop.f32.mrb[0].mxu0
    %v1215 = vpop.f32.mrb[0].mxu0
    %v1216 = vadd.f32 %v1119, %v1215
    %v1217 = vpop.f32.mrb[0].mxu0
    %1218 = vmatprep.mubr.bf16.mxu0 %v485
    %1219 = vmatmul.mubr.bf16.gmra.mrb[0].mxu0 %v484
    %v1220 = vpop.f32.mrb[0].mxu0
    %v1221 = vadd.f32 %v1124, %v1220
    %v1222 = vpop.f32.mrb[0].mxu0
    %v1223 = vpop.f32.mrb[0].mxu0
    %v1224 = vadd.f32 %v1127, %v1223
    %v1225 = vpop.f32.mrb[0].mxu0
    %1226 = vmatprep.mubr.bf16.mxu0 %v493
    %1227 = vmatmul.mubr.bf16.gmra.mrb[0].mxu0 %v492
    %v1228 = vpop.f32.mrb[0].mxu0
    %v1229 = vadd.f32 %v1132, %v1228
    %v1230 = vpop.f32.mrb[0].mxu0
    %v1231 = vpop.f32.mrb[0].mxu0
    %v1232 = vadd.f32 %v1135, %v1231
    %v1233 = vpop.f32.mrb[0].mxu0
    %1234 = vdwg.mxu0
    %1235 = vmatprep.subr.bf16.mxu0 0
    %1236 = vmatpush1.bf16.msra.mxu0 %v864
    %1237 = vmatprep.subr.bf16.mxu0 0
    %1238 = vmatpush1.bf16.msra.mxu0 %v865
    %1239 = vmatprep.subr.bf16.mxu0 0
    %1240 = vmatpush1.bf16.msra.mxu0 %v866
    %1241 = vmatprep.subr.bf16.mxu0 0
    %1242 = vmatpush1.bf16.msra.mxu0 %v867
    %1243 = vmatprep.subr.bf16.mxu0 0
    %1244 = vmatpush1.bf16.msra.mxu0 %v868
    %1245 = vmatprep.subr.bf16.mxu0 0
    %1246 = vmatpush1.bf16.msra.mxu0 %v869
    %1247 = vmatprep.subr.bf16.mxu0 0
    %1248 = vmatpush1.bf16.msra.mxu0 %v870
    %1249 = vmatprep.subr.bf16.mxu0 0
    %1250 = vmatpush1.bf16.msra.mxu0 %v871
    %1251 = vmatprep.subr.bf16.mxu0 0
    %1252 = vmatpush1.bf16.msra.mxu0 %v872
    %1253 = vmatprep.subr.bf16.mxu0 0
    %1254 = vmatpush1.bf16.msra.mxu0 %v873
    %1255 = vmatprep.subr.bf16.mxu0 0
    %1256 = vmatpush1.bf16.msra.mxu0 %v874
    %1257 = vmatprep.subr.bf16.mxu0 0
    %1258 = vmatpush1.bf16.msra.mxu0 %v875
    %1259 = vmatprep.subr.bf16.mxu0 0
    %1260 = vmatpush1.bf16.msra.mxu0 %v876
    %1261 = vmatprep.subr.bf16.mxu0 0
    %1262 = vmatpush1.bf16.msra.mxu0 %v877
    %1263 = vmatprep.subr.bf16.mxu0 0
    %1264 = vmatpush1.bf16.msra.mxu0 %v878
    %1265 = vmatprep.subr.bf16.mxu0 0
    %1266 = vmatpush1.bf16.msra.mxu0 %v879
    %1267 = vmatprep.mubr.bf16.mxu0 %v439
    %1268 = vmatmul.mubr.bf16.gmra.mrb[0].mxu0 %v438
    %v1269 = vpop.f32.mrb[0].mxu0
    %v1270 = vadd.f32 %v1173, %v1269
    %v1271 = vpop.f32.mrb[0].mxu0
    %v1272 = vpop.f32.mrb[0].mxu0
    %v1273 = vadd.f32 %v1176, %v1272
    %v1274 = vpop.f32.mrb[0].mxu0
    %1275 = vmatprep.mubr.bf16.mxu0 %v447
    %1276 = vmatmul.mubr.bf16.gmra.mrb[0].mxu0 %v446
    %v1277 = vpop.f32.mrb[0].mxu0
    %v1278 = vadd.f32 %v1181, %v1277
    %v1279 = vpop.f32.mrb[0].mxu0
    %v1280 = vpop.f32.mrb[0].mxu0
    %v1281 = vadd.f32 %v1184, %v1280
    %v1282 = vpop.f32.mrb[0].mxu0
    %1283 = vmatprep.mubr.bf16.mxu0 %v455
    %1284 = vmatmul.mubr.bf16.gmra.mrb[0].mxu0 %v454
    %v1285 = vpop.f32.mrb[0].mxu0
    %v1286 = vadd.f32 %v1189, %v1285
    %v1287 = vpop.f32.mrb[0].mxu0
    %v1288 = vpop.f32.mrb[0].mxu0
    %v1289 = vadd.f32 %v1192, %v1288
    %v1290 = vpop.f32.mrb[0].mxu0
    %1291 = vmatprep.mubr.bf16.mxu0 %v463
    %1292 = vmatmul.mubr.bf16.gmra.mrb[0].mxu0 %v462
    %v1293 = vpop.f32.mrb[0].mxu0
    %v1294 = vadd.f32 %v1197, %v1293
    %v1295 = vpop.f32.mrb[0].mxu0
    %v1296 = vpop.f32.mrb[0].mxu0
    %v1297 = vadd.f32 %v1200, %v1296
    %v1298 = vpop.f32.mrb[0].mxu0
    %1299 = vmatprep.mubr.bf16.mxu0 %v471
    %1300 = vmatmul.mubr.bf16.gmra.mrb[0].mxu0 %v470
    %v1301 = vpop.f32.mrb[0].mxu0
    %v1302 = vadd.f32 %v1205, %v1301
    %v1303 = vpop.f32.mrb[0].mxu0
    %v1304 = vpop.f32.mrb[0].mxu0
    %v1305 = vadd.f32 %v1208, %v1304
    %v1306 = vpop.f32.mrb[0].mxu0
    %1307 = vmatprep.mubr.bf16.mxu0 %v479
    %1308 = vmatmul.mubr.bf16.gmra.mrb[0].mxu0 %v478
    %v1309 = vpop.f32.mrb[0].mxu0
    %v1310 = vadd.f32 %v1213, %v1309
    %v1311 = vpop.f32.mrb[0].mxu0
    %v1312 = vpop.f32.mrb[0].mxu0
    %v1313 = vadd.f32 %v1216, %v1312
    %v1314 = vpop.f32.mrb[0].mxu0
    %1315 = vmatprep.mubr.bf16.mxu0 %v487
    %1316 = vmatmul.mubr.bf16.gmra.mrb[0].mxu0 %v486
    %v1317 = vpop.f32.mrb[0].mxu0
    %v1318 = vadd.f32 %v1221, %v1317
    %v1319 = vpop.f32.mrb[0].mxu0
    %v1320 = vpop.f32.mrb[0].mxu0
    %v1321 = vadd.f32 %v1224, %v1320
    %v1322 = vpop.f32.mrb[0].mxu0
    %1323 = vmatprep.mubr.bf16.mxu0 %v495
    %1324 = vmatmul.mubr.bf16.gmra.mrb[0].mxu0 %v494
    %v1325 = vpop.f32.mrb[0].mxu0
    %v1326 = vadd.f32 %v1229, %v1325
    %v1327 = vpop.f32.mrb[0].mxu0
    %v1328 = vpop.f32.mrb[0].mxu0
    %v1329 = vadd.f32 %v1232, %v1328
    %v1330 = vpop.f32.mrb[0].mxu0
    %1331 = vdwg.mxu0
    %v1332 = vmax.f32 %v1270, 0.0
    %v1333 = vmax.f32 %v1273, 0.0
    %v1334 = vmax.f32 %v1278, 0.0
    %v1335 = vmax.f32 %v1281, 0.0
    %v1336 = vmax.f32 %v1286, 0.0
    %v1337 = vmax.f32 %v1289, 0.0
    %v1338 = vmax.f32 %v1294, 0.0
    %v1339 = vmax.f32 %v1297, 0.0
    %v1340 = vmax.f32 %v1302, 0.0
    %v1341 = vmax.f32 %v1305, 0.0
    %v1342 = vmax.f32 %v1310, 0.0
    %v1343 = vmax.f32 %v1313, 0.0
    %v1344 = vmax.f32 %v1318, 0.0
    %v1345 = vmax.f32 %v1321, 0.0
    %v1346 = vmax.f32 %v1326, 0.0
    %v1347 = vmax.f32 %v1329, 0.0
    %v1348 = vpack.c.bf16 %v1333, %v1332
    %v1349 = vpack.c.bf16 %v1335, %v1334
    %v1350 = vpack.c.bf16 %v1337, %v1336
    %v1351 = vpack.c.bf16 %v1339, %v1338
    %v1352 = vpack.c.bf16 %v1341, %v1340
    %v1353 = vpack.c.bf16 %v1343, %v1342
    %v1354 = vpack.c.bf16 %v1345, %v1344
    %v1355 = vpack.c.bf16 %v1347, %v1346
    %v1364 = vunpack.c.l.b16 %v1348
    %v1365 = vunpack.c.h.b16 %v1348
    %v1366 = vunpack.c.l.b16 %v1349
    %v1367 = vunpack.c.h.b16 %v1349
    %v1368 = vunpack.c.l.b16 %v1350
    %v1369 = vunpack.c.h.b16 %v1350
    %v1370 = vunpack.c.l.b16 %v1351
    %v1371 = vunpack.c.h.b16 %v1351
    %v1372 = vunpack.c.l.b16 %v1352
    %v1373 = vunpack.c.h.b16 %v1352
    %v1374 = vunpack.c.l.b16 %v1353
    %v1375 = vunpack.c.h.b16 %v1353
    %v1376 = vunpack.c.l.b16 %v1354
    %v1377 = vunpack.c.h.b16 %v1354
    %v1378 = vunpack.c.l.b16 %v1355
    %v1379 = vunpack.c.h.b16 %v1355
    %v1380 = vpack.c.b16 %v1364, %v1364
    %v1381 = vpack.c.b16 %v1365, %v1365
    %v1382 = vpack.c.b16 %v1366, %v1366
    %v1383 = vpack.c.b16 %v1367, %v1367
    %v1384 = vpack.c.b16 %v1368, %v1368
    %v1385 = vpack.c.b16 %v1369, %v1369
    %v1386 = vpack.c.b16 %v1370, %v1370
    %v1387 = vpack.c.b16 %v1371, %v1371
    %v1388 = vpack.c.b16 %v1372, %v1372
    %v1389 = vpack.c.b16 %v1373, %v1373
    %v1390 = vpack.c.b16 %v1374, %v1374
    %v1391 = vpack.c.b16 %v1375, %v1375
    %v1392 = vpack.c.b16 %v1376, %v1376
    %v1393 = vpack.c.b16 %v1377, %v1377
    %v1394 = vpack.c.b16 %v1378, %v1378
    %v1395 = vpack.c.b16 %v1379, %v1379
    %1412 = vst [vmem:[%s3] sm:$0xf] %v1380
    %1413 = vst [vmem:[%s3 + $0x4] sm:$0xf] %v1381
    %1414 = vst [vmem:[%s3 + $0x8] sm:$0xf] %v1382
    %1415 = vst [vmem:[%s3 + $0xc] sm:$0xf] %v1383
    %1416 = vst [vmem:[%s3 + $0x10] sm:$0xf] %v1384
    %1417 = vst [vmem:[%s3 + $0x14] sm:$0xf] %v1385
    %1418 = vst [vmem:[%s3 + $0x18] sm:$0xf] %v1386
    %1419 = vst [vmem:[%s3 + $0x1c] sm:$0xf] %v1387
    %1420 = vst [vmem:[%s3 + $0x20] sm:$0xf] %v1388
    %1421 = vst [vmem:[%s3 + $0x24] sm:$0xf] %v1389
    %1422 = vst [vmem:[%s3 + $0x28] sm:$0xf] %v1390
    %1423 = vst [vmem:[%s3 + $0x2c] sm:$0xf] %v1391
    %1424 = vst [vmem:[%s3 + $0x30] sm:$0xf] %v1392
    %1425 = vst [vmem:[%s3 + $0x34] sm:$0xf] %v1393
    %1426 = vst [vmem:[%s3 + $0x38] sm:$0xf] %v1394
    %1427 = vst [vmem:[%s3 + $0x3c] sm:$0xf] %v1395
    // Predicated region
    $region22: #{forward.6} parent=1 // pred_check
      _
    $region23: #{forward.6} parent=1 // pred_check_branch
      %1429 = sbr.rel (0) target = $region25
    $region24: #{forward.6} parent=1 // pred_region
      _
    $region25: #{forward.6} parent=1 // pred_fallthru
      _
    // Predicated region
    $region26: #{forward.6} parent=1 // pred_check
      _
    $region27: #{forward.6} parent=1 // pred_check_branch
      %1431 = sbr.rel (0) target = $region29
    $region28: #{forward.6} parent=1 // pred_region
      _
    $region29: #{forward.6} parent=1 // pred_fallthru
      _
    %1432 = vsyncpa [#allocation3], 1
    %1433 = vsyncpa [#allocation5], 1

// kernel: forward.7
$region0: #{forward.7}
  #allocation0 [shape = 'u32[]', space=smem, size = 0x4, offset = 0x4, fixed_abs, tag = 'smem constant byte address 0x4 - core index']
  #allocation1 [shape = 'u32[144,128]{1,0:T(1,128)}', space=vmem, size = 0x12000, scoped, tag = 'internal scratch']
  %s0 = inlined_call_operand.vmem [shape: bf16[512,512], index: 0, kind: input, shape index: {}]
  %s1 = inlined_call_operand.vmem [shape: bf16[512,128], index: 1, kind: input, shape index: {}]
  %s2 = inlined_call_operand.vmem [shape: f32[1,128], index: 2, kind: input, shape index: {}]
  %s3 = inlined_call_operand.vmem [shape: bf16[512,128], index: 3, kind: output, shape index: {}]
  %s4 = sld [smem:[#allocation0]]
  $region45: #{forward.7} parent=0
    _
  %s6 = ssub.s32 1, %s4
  %s7 = scalar_select 0, %s6, %s4
  loop: start=0, step=1, limit=4
  $region2: #{forward.7} parent=0 // loop_pre_header
    _
  $region3: #{forward.7} parent=0 // loop_header
    %s9 = sphi 0, %s13
    %p10 = scmp.ge.s32.totalorder %s9, 4
    %s19 = sphi 0, %s21
    %s22 = sphi 0, %s19
    %s23 = sphi 0, %s22
    %s39 = sphi 0, %s23
    %s43 = sphi 0, %s43
    %s45 = sphi 0, %s43
    %s46 = sphi 0, %s45
    %s60 = sphi 0, %s46
    %s64 = sphi 0, %s64
    %s66 = sphi 0, %s64
    %s67 = sphi 0, %s66
    %s81 = sphi 0, %s67
    %s87 = sphi 0, %s89
    %s90 = sphi 0, %s87
    %s91 = sphi 0, %s90
    %s107 = sphi 0, %s91
  $region4: #{forward.7} parent=0 // loop_header_branch
    %12 = sbr.rel (%p10) target = $region8
  $region5: #{forward.7} parent=0 // loop_body
    %s14 = ssub.s32 %s9, 1
    %s15 = ssub.s32 %s9, 2
    %s16 = sadd.s32 %s9, 1
    %s17 = ssub.s32 %s9, %s16
    %p18 = scmp.eq.s32.totalorder %s17, 0
    %s20 = sadd.s32 %s19, 1
    %s21 = scalar_select %p18, %s19, %s20
    %p24 = pneg %p18
    %p25 = scmp.eq.s32.totalorder %s9, 1
    %p26 = por %p24, %p25
    %p27 = scmp.ne.s32.totalorder %s19, %s22
    %p28 = scmp.eq.s32.totalorder %s9, 0
    %p29 = por %p27, %p28
    %p30 = scmp.ne.s32.totalorder %s19, %s22
    %p31 = scmp.eq.s32.totalorder %s14, 1
    %p32 = por %p30, %p31
    %p33 = scmp.ne.s32.totalorder %s22, %s23
    %p34 = scmp.eq.s32.totalorder %s14, 0
    %p35 = por %p33, %p34
    %p36 = scmp.ne.s32.totalorder %s22, %s23
    %p37 = scmp.eq.s32.totalorder %s15, 1
    %p38 = por %p36, %p37
    %p40 = scmp.ne.s32.totalorder %s23, %s39
    %p41 = scmp.eq.s32.totalorder %s15, 0
    %p42 = por %p40, %p41
    %s44 = sadd.s32 %s43, 1
    %p47 = scmp.eq.s32.totalorder %s9, 1
    %p48 = scmp.ne.s32.totalorder %s43, %s45
    %p49 = scmp.eq.s32.totalorder %s9, 0
    %p50 = por %p48, %p49
    %p51 = scmp.ne.s32.totalorder %s43, %s45
    %p52 = scmp.eq.s32.totalorder %s14, 1
    %p53 = por %p51, %p52
    %p54 = scmp.ne.s32.totalorder %s45, %s46
    %p55 = scmp.eq.s32.totalorder %s14, 0
    %p56 = por %p54, %p55
    %p57 = scmp.ne.s32.totalorder %s45, %s46
    %p58 = scmp.eq.s32.totalorder %s15, 1
    %p59 = por %p57, %p58
    %p61 = scmp.ne.s32.totalorder %s46, %s60
    %p62 = scmp.eq.s32.totalorder %s15, 0
    %p63 = por %p61, %p62
    %s65 = sadd.s32 %s64, 1
    %p68 = scmp.eq.s32.totalorder %s9, 1
    %p69 = scmp.ne.s32.totalorder %s64, %s66
    %p70 = scmp.eq.s32.totalorder %s9, 0
    %p71 = por %p69, %p70
    %p72 = scmp.ne.s32.totalorder %s64, %s66
    %p73 = scmp.eq.s32.totalorder %s14, 1
    %p74 = por %p72, %p73
    %p75 = scmp.ne.s32.totalorder %s66, %s67
    %p76 = scmp.eq.s32.totalorder %s14, 0
    %p77 = por %p75, %p76
    %p78 = scmp.ne.s32.totalorder %s66, %s67
    %p79 = scmp.eq.s32.totalorder %s15, 1
    %p80 = por %p78, %p79
    %p82 = scmp.ne.s32.totalorder %s67, %s81
    %p83 = scmp.eq.s32.totalorder %s15, 0
    %p84 = por %p82, %p83
    %s85 = ssub.s32 %s9, %s16
    %p86 = scmp.eq.s32.totalorder %s85, 0
    %s88 = sadd.s32 %s87, 1
    %s89 = scalar_select %p86, %s87, %s88
    %p92 = pneg %p86
    %p93 = scmp.eq.s32.totalorder %s9, 1
    %p94 = por %p92, %p93
    %p95 = scmp.ne.s32.totalorder %s87, %s90
    %p96 = scmp.eq.s32.totalorder %s9, 0
    %p97 = por %p95, %p96
    %p98 = scmp.ne.s32.totalorder %s87, %s90
    %p99 = scmp.eq.s32.totalorder %s14, 1
    %p100 = por %p98, %p99
    %p101 = scmp.ne.s32.totalorder %s90, %s91
    %p102 = scmp.eq.s32.totalorder %s14, 0
    %p103 = por %p101, %p102
    %p104 = scmp.ne.s32.totalorder %s90, %s91
    %p105 = scmp.eq.s32.totalorder %s15, 1
    %p106 = por %p104, %p105
    %p108 = scmp.ne.s32.totalorder %s91, %s107
    %p109 = scmp.eq.s32.totalorder %s15, 0
    %p110 = por %p108, %p109
    %p111 = scmp.le.s32.totalorder 1, %s9
    %p112 = scmp.lt.s32.totalorder %s9, 3
    %p113 = pnand %p111, %p112
    %p114 = pneg %p113
    // Predicated region
    $region9: #{forward.7} parent=5 // pred_check
      _
    $region10: #{forward.7} parent=5 // pred_check_branch
      %116 = sbr.rel (%p113) target = $region12
    $region11: #{forward.7} parent=5 // pred_region
      %s117 = ssub.s32 %s9, 1
      // Predicated region
      $region13: #{forward.7} parent=11 // pred_check
        %p118 = pneg %p56
      $region14: #{forward.7} parent=11 // pred_check_branch
        %120 = sbr.rel (%p118) target = $region16
      $region15: #{forward.7} parent=11 // pred_region
        _
      $region16: #{forward.7} parent=11 // pred_fallthru
        _
      // Predicated region
      $region17: #{forward.7} parent=11 // pred_check
        %p121 = pneg %p77
      $region18: #{forward.7} parent=11 // pred_check_branch
        %123 = sbr.rel (%p121) target = $region20
      $region19: #{forward.7} parent=11 // pred_region
        _
      $region20: #{forward.7} parent=11 // pred_fallthru
        _
    $region12: #{forward.7} parent=5 // pred_fallthru
      _
    %p124 = scmp.lt.s32.totalorder %s9, 2
    // Predicated region
    $region21: #{forward.7} parent=5 // pred_check
      %p125 = pneg %p124
    $region22: #{forward.7} parent=5 // pred_check_branch
      %127 = sbr.rel (%p125) target = $region24
    $region23: #{forward.7} parent=5 // pred_region
      // Predicated region
      $region25: #{forward.7} parent=23 // pred_check
        %p128 = pneg %p29
      $region26: #{forward.7} parent=23 // pred_check_branch
        %130 = sbr.rel (%p128) target = $region28
      $region27: #{forward.7} parent=23 // pred_region
        %s131 = smul.u32 32, %s9
        %p132 = scmp.lt.s32.totalorder %s131, 63
        %s133 = scalar_select %p132, %s131, 63
        %s134 = smul.addr %s133, 4
        %s135 = smul.addr %s134, 4
        %s136 = scalar_lea.vmem %s0, %s135
        %s137 = smul.u32 32, %s9
      $region28: #{forward.7} parent=23 // pred_fallthru
        _
    $region24: #{forward.7} parent=5 // pred_fallthru
      _
    %p138 = scmp.le.s32.totalorder 1, %s9
    %p139 = scmp.lt.s32.totalorder %s9, 3
    %p140 = pnand %p138, %p139
    %p141 = pneg %p140
    // Predicated region
    $region29: #{forward.7} parent=5 // pred_check
      _
    $region30: #{forward.7} parent=5 // pred_check_branch
      %143 = sbr.rel (%p140) target = $region32
    $region31: #{forward.7} parent=5 // pred_region
      %s144 = ssub.s32 %s9, 1
      %s145 = smul.u32 32, %s14
      %p146 = scmp.lt.s32.totalorder %s145, 63
      %s147 = scalar_select %p146, %s145, 63
      %s148 = smul.addr %s147, 4
      %s149 = smul.addr %s148, 4
      %s150 = scalar_lea.vmem %s0, %s149
      %p151 = pneg %p35
      %p152 = pneg %p32
      %p153 = pneg %p56
      %p154 = pneg %p53
      %p155 = pneg %p77
      %p156 = pneg %p74
      %p157 = pneg %p103
      %p158 = pneg %p100
      %s159 = smul.u32 32, %s14
      %p160 = scmp.lt.s32.totalorder %s159, 63
      %s161 = scalar_select %p160, %s159, 63
      %s162 = smul.addr %s161, 4
      %s163 = scalar_lea.vmem %s3, %s162
      %s164 = smul.u32 32, %s14
      %p165 = scmp.lt.s32.totalorder %s164, 63
      %s166 = scalar_select %p165, %s164, 63
      %s167 = smul.addr %s166, 4
      %s168 = smul.addr %s167, 4
      %s169 = scalar_lea.vmem %s0, %s168
      %s170 = smul.u32 32, %s14
      %s171 = smul.u32 32, %s14
      %p172 = scmp.lt.s32.totalorder %s171, 63
      %s173 = scalar_select %p172, %s171, 63
      %s174 = smul.addr %s173, 4
      %s175 = scalar_lea.vmem %s3, %s174
      %s176 = smul.u32 32, %s14
      %v178 = vld [vmem:[%s169] sm:$0xff]
      %v179 = vld [vmem:[%s169 + $0x8] sm:$0xff]
      %v180 = vld [vmem:[%s169 + $0x10] sm:$0xff]
      %v181 = vld [vmem:[%s169 + $0x18] sm:$0xff]
      %v182 = vld [vmem:[%s169 + $0x20] sm:$0xff]
      %v183 = vld [vmem:[%s169 + $0x28] sm:$0xff]
      %v184 = vld [vmem:[%s169 + $0x30] sm:$0xff]
      %v185 = vld [vmem:[%s169 + $0x38] sm:$0xff]
      %v186 = vld [vmem:[%s169 + $0x40] sm:$0xff]
      %v187 = vld [vmem:[%s169 + $0x48] sm:$0xff]
      %v188 = vld [vmem:[%s169 + $0x50] sm:$0xff]
      %v189 = vld [vmem:[%s169 + $0x58] sm:$0xff]
      %v190 = vld [vmem:[%s169 + $0x60] sm:$0xff]
      %v191 = vld [vmem:[%s169 + $0x68] sm:$0xff]
      %v192 = vld [vmem:[%s169 + $0x70] sm:$0xff]
      %v193 = vld [vmem:[%s169 + $0x78] sm:$0xff]
      %v194 = vld [vmem:[%s169 + $0x80] sm:$0xff]
      %v195 = vld [vmem:[%s169 + $0x88] sm:$0xff]
      %v196 = vld [vmem:[%s169 + $0x90] sm:$0xff]
      %v197 = vld [vmem:[%s169 + $0x98] sm:$0xff]
      %v198 = vld [vmem:[%s169 + $0xa0] sm:$0xff]
      %v199 = vld [vmem:[%s169 + $0xa8] sm:$0xff]
      %v200 = vld [vmem:[%s169 + $0xb0] sm:$0xff]
      %v201 = vld [vmem:[%s169 + $0xb8] sm:$0xff]
      %v202 = vld [vmem:[%s169 + $0xc0] sm:$0xff]
      %v203 = vld [vmem:[%s169 + $0xc8] sm:$0xff]
      %v204 = vld [vmem:[%s169 + $0xd0] sm:$0xff]
      %v205 = vld [vmem:[%s169 + $0xd8] sm:$0xff]
      %v206 = vld [vmem:[%s169 + $0xe0] sm:$0xff]
      %v207 = vld [vmem:[%s169 + $0xe8] sm:$0xff]
      %v208 = vld [vmem:[%s169 + $0xf0] sm:$0xff]
      %v209 = vld [vmem:[%s169 + $0xf8] sm:$0xff]
      %v210 = vld [vmem:[%s169 + $0x100] sm:$0xff]
      %v211 = vld [vmem:[%s169 + $0x108] sm:$0xff]
      %v212 = vld [vmem:[%s169 + $0x110] sm:$0xff]
      %v213 = vld [vmem:[%s169 + $0x118] sm:$0xff]
      %v214 = vld [vmem:[%s169 + $0x120] sm:$0xff]
      %v215 = vld [vmem:[%s169 + $0x128] sm:$0xff]
      %v216 = vld [vmem:[%s169 + $0x130] sm:$0xff]
      %v217 = vld [vmem:[%s169 + $0x138] sm:$0xff]
      %v218 = vld [vmem:[%s169 + $0x140] sm:$0xff]
      %v219 = vld [vmem:[%s169 + $0x148] sm:$0xff]
      %v220 = vld [vmem:[%s169 + $0x150] sm:$0xff]
      %v221 = vld [vmem:[%s169 + $0x158] sm:$0xff]
      %v222 = vld [vmem:[%s169 + $0x160] sm:$0xff]
      %v223 = vld [vmem:[%s169 + $0x168] sm:$0xff]
      %v224 = vld [vmem:[%s169 + $0x170] sm:$0xff]
      %v225 = vld [vmem:[%s169 + $0x178] sm:$0xff]
      %v226 = vld [vmem:[%s169 + $0x180] sm:$0xff]
      %v227 = vld [vmem:[%s169 + $0x188] sm:$0xff]
      %v228 = vld [vmem:[%s169 + $0x190] sm:$0xff]
      %v229 = vld [vmem:[%s169 + $0x198] sm:$0xff]
      %v230 = vld [vmem:[%s169 + $0x1a0] sm:$0xff]
      %v231 = vld [vmem:[%s169 + $0x1a8] sm:$0xff]
      %v232 = vld [vmem:[%s169 + $0x1b0] sm:$0xff]
      %v233 = vld [vmem:[%s169 + $0x1b8] sm:$0xff]
      %v234 = vld [vmem:[%s169 + $0x1c0] sm:$0xff]
      %v235 = vld [vmem:[%s169 + $0x1c8] sm:$0xff]
      %v236 = vld [vmem:[%s169 + $0x1d0] sm:$0xff]
      %v237 = vld [vmem:[%s169 + $0x1d8] sm:$0xff]
      %v238 = vld [vmem:[%s169 + $0x1e0] sm:$0xff]
      %v239 = vld [vmem:[%s169 + $0x1e8] sm:$0xff]
      %v240 = vld [vmem:[%s169 + $0x1f0] sm:$0xff]
      %v241 = vld [vmem:[%s169 + $0x1f8] sm:$0xff]
      %v242 = vld [vmem:[%s1] sm:$0xf]
      %v243 = vld [vmem:[%s1 + $0x4] sm:$0xf]
      %v244 = vld [vmem:[%s1 + $0x8] sm:$0xf]
      %v245 = vld [vmem:[%s1 + $0xc] sm:$0xf]
      %v246 = vld [vmem:[%s1 + $0x10] sm:$0xf]
      %v247 = vld [vmem:[%s1 + $0x14] sm:$0xf]
      %v248 = vld [vmem:[%s1 + $0x18] sm:$0xf]
      %v249 = vld [vmem:[%s1 + $0x1c] sm:$0xf]
      %v250 = vld [vmem:[%s1 + $0x20] sm:$0xf]
      %v251 = vld [vmem:[%s1 + $0x24] sm:$0xf]
      %v252 = vld [vmem:[%s1 + $0x28] sm:$0xf]
      %v253 = vld [vmem:[%s1 + $0x2c] sm:$0xf]
      %v254 = vld [vmem:[%s1 + $0x30] sm:$0xf]
      %v255 = vld [vmem:[%s1 + $0x34] sm:$0xf]
      %v256 = vld [vmem:[%s1 + $0x38] sm:$0xf]
      %v257 = vld [vmem:[%s1 + $0x3c] sm:$0xf]
      %v258 = vld [vmem:[%s1 + $0x40] sm:$0xf]
      %v259 = vld [vmem:[%s1 + $0x44] sm:$0xf]
      %v260 = vld [vmem:[%s1 + $0x48] sm:$0xf]
      %v261 = vld [vmem:[%s1 + $0x4c] sm:$0xf]
      %v262 = vld [vmem:[%s1 + $0x50] sm:$0xf]
      %v263 = vld [vmem:[%s1 + $0x54] sm:$0xf]
      %v264 = vld [vmem:[%s1 + $0x58] sm:$0xf]
      %v265 = vld [vmem:[%s1 + $0x5c] sm:$0xf]
      %v266 = vld [vmem:[%s1 + $0x60] sm:$0xf]
      %v267 = vld [vmem:[%s1 + $0x64] sm:$0xf]
      %v268 = vld [vmem:[%s1 + $0x68] sm:$0xf]
      %v269 = vld [vmem:[%s1 + $0x6c] sm:$0xf]
      %v270 = vld [vmem:[%s1 + $0x70] sm:$0xf]
      %v271 = vld [vmem:[%s1 + $0x74] sm:$0xf]
      %v272 = vld [vmem:[%s1 + $0x78] sm:$0xf]
      %v273 = vld [vmem:[%s1 + $0x7c] sm:$0xf]
      %v274 = vld [vmem:[%s1 + $0x80] sm:$0xf]
      %v275 = vld [vmem:[%s1 + $0x84] sm:$0xf]
      %v276 = vld [vmem:[%s1 + $0x88] sm:$0xf]
      %v277 = vld [vmem:[%s1 + $0x8c] sm:$0xf]
      %v278 = vld [vmem:[%s1 + $0x90] sm:$0xf]
      %v279 = vld [vmem:[%s1 + $0x94] sm:$0xf]
      %v280 = vld [vmem:[%s1 + $0x98] sm:$0xf]
      %v281 = vld [vmem:[%s1 + $0x9c] sm:$0xf]
      %v282 = vld [vmem:[%s1 + $0xa0] sm:$0xf]
      %v283 = vld [vmem:[%s1 + $0xa4] sm:$0xf]
      %v284 = vld [vmem:[%s1 + $0xa8] sm:$0xf]
      %v285 = vld [vmem:[%s1 + $0xac] sm:$0xf]
      %v286 = vld [vmem:[%s1 + $0xb0] sm:$0xf]
      %v287 = vld [vmem:[%s1 + $0xb4] sm:$0xf]
      %v288 = vld [vmem:[%s1 + $0xb8] sm:$0xf]
      %v289 = vld [vmem:[%s1 + $0xbc] sm:$0xf]
      %v290 = vld [vmem:[%s1 + $0xc0] sm:$0xf]
      %v291 = vld [vmem:[%s1 + $0xc4] sm:$0xf]
      %v292 = vld [vmem:[%s1 + $0xc8] sm:$0xf]
      %v293 = vld [vmem:[%s1 + $0xcc] sm:$0xf]
      %v294 = vld [vmem:[%s1 + $0xd0] sm:$0xf]
      %v295 = vld [vmem:[%s1 + $0xd4] sm:$0xf]
      %v296 = vld [vmem:[%s1 + $0xd8] sm:$0xf]
      %v297 = vld [vmem:[%s1 + $0xdc] sm:$0xf]
      %v298 = vld [vmem:[%s1 + $0xe0] sm:$0xf]
      %v299 = vld [vmem:[%s1 + $0xe4] sm:$0xf]
      %v300 = vld [vmem:[%s1 + $0xe8] sm:$0xf]
      %v301 = vld [vmem:[%s1 + $0xec] sm:$0xf]
      %v302 = vld [vmem:[%s1 + $0xf0] sm:$0xf]
      %v303 = vld [vmem:[%s1 + $0xf4] sm:$0xf]
      %v304 = vld [vmem:[%s1 + $0xf8] sm:$0xf]
      %v305 = vld [vmem:[%s1 + $0xfc] sm:$0xf]
      %v306 = vld [vmem:[%s2] sm:$0x1]
      %v308 = vlaneseq
      %v309 = vshrl.u32 %v308, 7
      %v310 = vsub.s32 0, %v309
      %v311 = vrot.slane %v306, %v310
      %v377 = vunpack.c.l.b16 %v178
      %v378 = vunpack.c.h.b16 %v178
      %v379 = vunpack.c.l.b16 %v179
      %v380 = vunpack.c.h.b16 %v179
      %v381 = vunpack.c.l.b16 %v180
      %v382 = vunpack.c.h.b16 %v180
      %v383 = vunpack.c.l.b16 %v181
      %v384 = vunpack.c.h.b16 %v181
      %v385 = vunpack.c.l.b16 %v182
      %v386 = vunpack.c.h.b16 %v182
      %v387 = vunpack.c.l.b16 %v183
      %v388 = vunpack.c.h.b16 %v183
      %v389 = vunpack.c.l.b16 %v184
      %v390 = vunpack.c.h.b16 %v184
      %v391 = vunpack.c.l.b16 %v185
      %v392 = vunpack.c.h.b16 %v185
      %v393 = vunpack.c.l.b16 %v186
      %v394 = vunpack.c.h.b16 %v186
      %v395 = vunpack.c.l.b16 %v187
      %v396 = vunpack.c.h.b16 %v187
      %v397 = vunpack.c.l.b16 %v188
      %v398 = vunpack.c.h.b16 %v188
      %v399 = vunpack.c.l.b16 %v189
      %v400 = vunpack.c.h.b16 %v189
      %v401 = vunpack.c.l.b16 %v190
      %v402 = vunpack.c.h.b16 %v190
      %v403 = vunpack.c.l.b16 %v191
      %v404 = vunpack.c.h.b16 %v191
      %v405 = vunpack.c.l.b16 %v192
      %v406 = vunpack.c.h.b16 %v192
      %v407 = vunpack.c.l.b16 %v193
      %v408 = vunpack.c.h.b16 %v193
      %v409 = vunpack.c.l.b16 %v194
      %v410 = vunpack.c.h.b16 %v194
      %v411 = vunpack.c.l.b16 %v195
      %v412 = vunpack.c.h.b16 %v195
      %v413 = vunpack.c.l.b16 %v196
      %v414 = vunpack.c.h.b16 %v196
      %v415 = vunpack.c.l.b16 %v197
      %v416 = vunpack.c.h.b16 %v197
      %v417 = vunpack.c.l.b16 %v198
      %v418 = vunpack.c.h.b16 %v198
      %v419 = vunpack.c.l.b16 %v199
      %v420 = vunpack.c.h.b16 %v199
      %v421 = vunpack.c.l.b16 %v200
      %v422 = vunpack.c.h.b16 %v200
      %v423 = vunpack.c.l.b16 %v201
      %v424 = vunpack.c.h.b16 %v201
      %v425 = vunpack.c.l.b16 %v202
      %v426 = vunpack.c.h.b16 %v202
      %v427 = vunpack.c.l.b16 %v203
      %v428 = vunpack.c.h.b16 %v203
      %v429 = vunpack.c.l.b16 %v204
      %v430 = vunpack.c.h.b16 %v204
      %v431 = vunpack.c.l.b16 %v205
      %v432 = vunpack.c.h.b16 %v205
      %v433 = vunpack.c.l.b16 %v206
      %v434 = vunpack.c.h.b16 %v206
      %v435 = vunpack.c.l.b16 %v207
      %v436 = vunpack.c.h.b16 %v207
      %v437 = vunpack.c.l.b16 %v208
      %v438 = vunpack.c.h.b16 %v208
      %v439 = vunpack.c.l.b16 %v209
      %v440 = vunpack.c.h.b16 %v209
      %v441 = vunpack.c.l.b16 %v210
      %v442 = vunpack.c.h.b16 %v210
      %v443 = vunpack.c.l.b16 %v211
      %v444 = vunpack.c.h.b16 %v211
      %v445 = vunpack.c.l.b16 %v212
      %v446 = vunpack.c.h.b16 %v212
      %v447 = vunpack.c.l.b16 %v213
      %v448 = vunpack.c.h.b16 %v213
      %v449 = vunpack.c.l.b16 %v214
      %v450 = vunpack.c.h.b16 %v214
      %v451 = vunpack.c.l.b16 %v215
      %v452 = vunpack.c.h.b16 %v215
      %v453 = vunpack.c.l.b16 %v216
      %v454 = vunpack.c.h.b16 %v216
      %v455 = vunpack.c.l.b16 %v217
      %v456 = vunpack.c.h.b16 %v217
      %v457 = vunpack.c.l.b16 %v218
      %v458 = vunpack.c.h.b16 %v218
      %v459 = vunpack.c.l.b16 %v219
      %v460 = vunpack.c.h.b16 %v219
      %v461 = vunpack.c.l.b16 %v220
      %v462 = vunpack.c.h.b16 %v220
      %v463 = vunpack.c.l.b16 %v221
      %v464 = vunpack.c.h.b16 %v221
      %v465 = vunpack.c.l.b16 %v222
      %v466 = vunpack.c.h.b16 %v222
      %v467 = vunpack.c.l.b16 %v223
      %v468 = vunpack.c.h.b16 %v223
      %v469 = vunpack.c.l.b16 %v224
      %v470 = vunpack.c.h.b16 %v224
      %v471 = vunpack.c.l.b16 %v225
      %v472 = vunpack.c.h.b16 %v225
      %v473 = vunpack.c.l.b16 %v226
      %v474 = vunpack.c.h.b16 %v226
      %v475 = vunpack.c.l.b16 %v227
      %v476 = vunpack.c.h.b16 %v227
      %v477 = vunpack.c.l.b16 %v228
      %v478 = vunpack.c.h.b16 %v228
      %v479 = vunpack.c.l.b16 %v229
      %v480 = vunpack.c.h.b16 %v229
      %v481 = vunpack.c.l.b16 %v230
      %v482 = vunpack.c.h.b16 %v230
      %v483 = vunpack.c.l.b16 %v231
      %v484 = vunpack.c.h.b16 %v231
      %v485 = vunpack.c.l.b16 %v232
      %v486 = vunpack.c.h.b16 %v232
      %v487 = vunpack.c.l.b16 %v233
      %v488 = vunpack.c.h.b16 %v233
      %v489 = vunpack.c.l.b16 %v234
      %v490 = vunpack.c.h.b16 %v234
      %v491 = vunpack.c.l.b16 %v235
      %v492 = vunpack.c.h.b16 %v235
      %v493 = vunpack.c.l.b16 %v236
      %v494 = vunpack.c.h.b16 %v236
      %v495 = vunpack.c.l.b16 %v237
      %v496 = vunpack.c.h.b16 %v237
      %v497 = vunpack.c.l.b16 %v238
      %v498 = vunpack.c.h.b16 %v238
      %v499 = vunpack.c.l.b16 %v239
      %v500 = vunpack.c.h.b16 %v239
      %v501 = vunpack.c.l.b16 %v240
      %v502 = vunpack.c.h.b16 %v240
      %v503 = vunpack.c.l.b16 %v241
      %v504 = vunpack.c.h.b16 %v241
      %v505 = vpack.c.b16 %v381, %v377
      %v506 = vpack.c.b16 %v382, %v378
      %v507 = vpack.c.b16 %v383, %v379
      %v508 = vpack.c.b16 %v384, %v380
      %v509 = vpack.c.b16 %v389, %v385
      %v510 = vpack.c.b16 %v390, %v386
      %v511 = vpack.c.b16 %v391, %v387
      %v512 = vpack.c.b16 %v392, %v388
      %v513 = vpack.c.b16 %v397, %v393
      %v514 = vpack.c.b16 %v398, %v394
      %v515 = vpack.c.b16 %v399, %v395
      %v516 = vpack.c.b16 %v400, %v396
      %v517 = vpack.c.b16 %v405, %v401
      %v518 = vpack.c.b16 %v406, %v402
      %v519 = vpack.c.b16 %v407, %v403
      %v520 = vpack.c.b16 %v408, %v404
      %v521 = vpack.c.b16 %v413, %v409
      %v522 = vpack.c.b16 %v414, %v410
      %v523 = vpack.c.b16 %v415, %v411
      %v524 = vpack.c.b16 %v416, %v412
      %v525 = vpack.c.b16 %v421, %v417
      %v526 = vpack.c.b16 %v422, %v418
      %v527 = vpack.c.b16 %v423, %v419
      %v528 = vpack.c.b16 %v424, %v420
      %v529 = vpack.c.b16 %v429, %v425
      %v530 = vpack.c.b16 %v430, %v426
      %v531 = vpack.c.b16 %v431, %v427
      %v532 = vpack.c.b16 %v432, %v428
      %v533 = vpack.c.b16 %v437, %v433
      %v534 = vpack.c.b16 %v438, %v434
      %v535 = vpack.c.b16 %v439, %v435
      %v536 = vpack.c.b16 %v440, %v436
      %v537 = vpack.c.b16 %v445, %v441
      %v538 = vpack.c.b16 %v446, %v442
      %v539 = vpack.c.b16 %v447, %v443
      %v540 = vpack.c.b16 %v448, %v444
      %v541 = vpack.c.b16 %v453, %v449
      %v542 = vpack.c.b16 %v454, %v450
      %v543 = vpack.c.b16 %v455, %v451
      %v544 = vpack.c.b16 %v456, %v452
      %v545 = vpack.c.b16 %v461, %v457
      %v546 = vpack.c.b16 %v462, %v458
      %v547 = vpack.c.b16 %v463, %v459
      %v548 = vpack.c.b16 %v464, %v460
      %v549 = vpack.c.b16 %v469, %v465
      %v550 = vpack.c.b16 %v470, %v466
      %v551 = vpack.c.b16 %v471, %v467
      %v552 = vpack.c.b16 %v472, %v468
      %v553 = vpack.c.b16 %v477, %v473
      %v554 = vpack.c.b16 %v478, %v474
      %v555 = vpack.c.b16 %v479, %v475
      %v556 = vpack.c.b16 %v480, %v476
      %v557 = vpack.c.b16 %v485, %v481
      %v558 = vpack.c.b16 %v486, %v482
      %v559 = vpack.c.b16 %v487, %v483
      %v560 = vpack.c.b16 %v488, %v484
      %v561 = vpack.c.b16 %v493, %v489
      %v562 = vpack.c.b16 %v494, %v490
      %v563 = vpack.c.b16 %v495, %v491
      %v564 = vpack.c.b16 %v496, %v492
      %v565 = vpack.c.b16 %v501, %v497
      %v566 = vpack.c.b16 %v502, %v498
      %v567 = vpack.c.b16 %v503, %v499
      %v568 = vpack.c.b16 %v504, %v500
      %v697 = vunpack.c.l.b16 %v242
      %v698 = vunpack.c.l.b16 %v243
      %v699 = vunpack.c.l.b16 %v244
      %v700 = vunpack.c.l.b16 %v245
      %v701 = vunpack.c.l.b16 %v246
      %v702 = vunpack.c.l.b16 %v247
      %v703 = vunpack.c.l.b16 %v248
      %v704 = vunpack.c.l.b16 %v249
      %v705 = vunpack.c.l.b16 %v250
      %v706 = vunpack.c.l.b16 %v251
      %v707 = vunpack.c.l.b16 %v252
      %v708 = vunpack.c.l.b16 %v253
      %v709 = vunpack.c.l.b16 %v254
      %v710 = vunpack.c.l.b16 %v255
      %v711 = vunpack.c.l.b16 %v256
      %v712 = vunpack.c.l.b16 %v257
      %v713 = vunpack.c.l.b16 %v258
      %v714 = vunpack.c.l.b16 %v259
      %v715 = vunpack.c.l.b16 %v260
      %v716 = vunpack.c.l.b16 %v261
      %v717 = vunpack.c.l.b16 %v262
      %v718 = vunpack.c.l.b16 %v263
      %v719 = vunpack.c.l.b16 %v264
      %v720 = vunpack.c.l.b16 %v265
      %v721 = vunpack.c.l.b16 %v266
      %v722 = vunpack.c.l.b16 %v267
      %v723 = vunpack.c.l.b16 %v268
      %v724 = vunpack.c.l.b16 %v269
      %v725 = vunpack.c.l.b16 %v270
      %v726 = vunpack.c.l.b16 %v271
      %v727 = vunpack.c.l.b16 %v272
      %v728 = vunpack.c.l.b16 %v273
      %v729 = vunpack.c.l.b16 %v274
      %v730 = vunpack.c.l.b16 %v275
      %v731 = vunpack.c.l.b16 %v276
      %v732 = vunpack.c.l.b16 %v277
      %v733 = vunpack.c.l.b16 %v278
      %v734 = vunpack.c.l.b16 %v279
      %v735 = vunpack.c.l.b16 %v280
      %v736 = vunpack.c.l.b16 %v281
      %v737 = vunpack.c.l.b16 %v282
      %v738 = vunpack.c.l.b16 %v283
      %v739 = vunpack.c.l.b16 %v284
      %v740 = vunpack.c.l.b16 %v285
      %v741 = vunpack.c.l.b16 %v286
      %v742 = vunpack.c.l.b16 %v287
      %v743 = vunpack.c.l.b16 %v288
      %v744 = vunpack.c.l.b16 %v289
      %v745 = vunpack.c.l.b16 %v290
      %v746 = vunpack.c.l.b16 %v291
      %v747 = vunpack.c.l.b16 %v292
      %v748 = vunpack.c.l.b16 %v293
      %v749 = vunpack.c.l.b16 %v294
      %v750 = vunpack.c.l.b16 %v295
      %v751 = vunpack.c.l.b16 %v296
      %v752 = vunpack.c.l.b16 %v297
      %v753 = vunpack.c.l.b16 %v298
      %v754 = vunpack.c.l.b16 %v299
      %v755 = vunpack.c.l.b16 %v300
      %v756 = vunpack.c.l.b16 %v301
      %v757 = vunpack.c.l.b16 %v302
      %v758 = vunpack.c.l.b16 %v303
      %v759 = vunpack.c.l.b16 %v304
      %v760 = vunpack.c.l.b16 %v305
      %v761 = vpack.c.b16 %v698, %v697
      %v762 = vpack.c.b16 %v700, %v699
      %v763 = vpack.c.b16 %v702, %v701
      %v764 = vpack.c.b16 %v704, %v703
      %v765 = vpack.c.b16 %v706, %v705
      %v766 = vpack.c.b16 %v708, %v707
      %v767 = vpack.c.b16 %v710, %v709
      %v768 = vpack.c.b16 %v712, %v711
      %v769 = vpack.c.b16 %v714, %v713
      %v770 = vpack.c.b16 %v716, %v715
      %v771 = vpack.c.b16 %v718, %v717
      %v772 = vpack.c.b16 %v720, %v719
      %v773 = vpack.c.b16 %v722, %v721
      %v774 = vpack.c.b16 %v724, %v723
      %v775 = vpack.c.b16 %v726, %v725
      %v776 = vpack.c.b16 %v728, %v727
      %v777 = vpack.c.b16 %v730, %v729
      %v778 = vpack.c.b16 %v732, %v731
      %v779 = vpack.c.b16 %v734, %v733
      %v780 = vpack.c.b16 %v736, %v735
      %v781 = vpack.c.b16 %v738, %v737
      %v782 = vpack.c.b16 %v740, %v739
      %v783 = vpack.c.b16 %v742, %v741
      %v784 = vpack.c.b16 %v744, %v743
      %v785 = vpack.c.b16 %v746, %v745
      %v786 = vpack.c.b16 %v748, %v747
      %v787 = vpack.c.b16 %v750, %v749
      %v788 = vpack.c.b16 %v752, %v751
      %v789 = vpack.c.b16 %v754, %v753
      %v790 = vpack.c.b16 %v756, %v755
      %v791 = vpack.c.b16 %v758, %v757
      %v792 = vpack.c.b16 %v760, %v759
      %825 = vmatprep.subr.bf16.mxu0 0
      %826 = vmatpush1.bf16.msra.mxu0 %v761
      %827 = vmatprep.subr.bf16.mxu0 0
      %828 = vmatpush1.bf16.msra.mxu0 %v762
      %829 = vmatprep.subr.bf16.mxu0 0
      %830 = vmatpush1.bf16.msra.mxu0 %v763
      %831 = vmatprep.subr.bf16.mxu0 0
      %832 = vmatpush1.bf16.msra.mxu0 %v764
      %833 = vmatprep.subr.bf16.mxu0 0
      %834 = vmatpush1.bf16.msra.mxu0 %v765
      %835 = vmatprep.subr.bf16.mxu0 0
      %836 = vmatpush1.bf16.msra.mxu0 %v766
      %837 = vmatprep.subr.bf16.mxu0 0
      %838 = vmatpush1.bf16.msra.mxu0 %v767
      %839 = vmatprep.subr.bf16.mxu0 0
      %840 = vmatpush1.bf16.msra.mxu0 %v768
      %841 = vmatprep.subr.bf16.mxu0 0
      %842 = vmatpush1.bf16.msra.mxu0 %v769
      %843 = vmatprep.subr.bf16.mxu0 0
      %844 = vmatpush1.bf16.msra.mxu0 %v770
      %845 = vmatprep.subr.bf16.mxu0 0
      %846 = vmatpush1.bf16.msra.mxu0 %v771
      %847 = vmatprep.subr.bf16.mxu0 0
      %848 = vmatpush1.bf16.msra.mxu0 %v772
      %849 = vmatprep.subr.bf16.mxu0 0
      %850 = vmatpush1.bf16.msra.mxu0 %v773
      %851 = vmatprep.subr.bf16.mxu0 0
      %852 = vmatpush1.bf16.msra.mxu0 %v774
      %853 = vmatprep.subr.bf16.mxu0 0
      %854 = vmatpush1.bf16.msra.mxu0 %v775
      %855 = vmatprep.subr.bf16.mxu0 0
      %856 = vmatpush1.bf16.msra.mxu0 %v776
      %857 = vmatprep.mubr.bf16.mxu0 %v506
      %858 = vmatmul.mubr.bf16.gmra.mrb[0].mxu0 %v505
      %v859 = vpop.f32.mrb[0].mxu0
      %v860 = vadd.f32 %v311, %v859
      %v861 = vpop.f32.mrb[0].mxu0
      %v862 = vpop.f32.mrb[0].mxu0
      %v863 = vadd.f32 %v311, %v862
      %v864 = vpop.f32.mrb[0].mxu0
      %865 = vmatprep.mubr.bf16.mxu0 %v510
      %866 = vmatmul.mubr.bf16.gmra.mrb[0].mxu0 %v509
      %v867 = vpop.f32.mrb[0].mxu0
      %v868 = vadd.f32 %v311, %v867
      %v869 = vpop.f32.mrb[0].mxu0
      %v870 = vpop.f32.mrb[0].mxu0
      %v871 = vadd.f32 %v311, %v870
      %v872 = vpop.f32.mrb[0].mxu0
      %873 = vmatprep.mubr.bf16.mxu0 %v514
      %874 = vmatmul.mubr.bf16.gmra.mrb[0].mxu0 %v513
      %v875 = vpop.f32.mrb[0].mxu0
      %v876 = vadd.f32 %v311, %v875
      %v877 = vpop.f32.mrb[0].mxu0
      %v878 = vpop.f32.mrb[0].mxu0
      %v879 = vadd.f32 %v311, %v878
      %v880 = vpop.f32.mrb[0].mxu0
      %881 = vmatprep.mubr.bf16.mxu0 %v518
      %882 = vmatmul.mubr.bf16.gmra.mrb[0].mxu0 %v517
      %v883 = vpop.f32.mrb[0].mxu0
      %v884 = vadd.f32 %v311, %v883
      %v885 = vpop.f32.mrb[0].mxu0
      %v886 = vpop.f32.mrb[0].mxu0
      %v887 = vadd.f32 %v311, %v886
      %v888 = vpop.f32.mrb[0].mxu0
      %889 = vmatprep.mubr.bf16.mxu0 %v522
      %890 = vmatmul.mubr.bf16.gmra.mrb[0].mxu0 %v521
      %v891 = vpop.f32.mrb[0].mxu0
      %v892 = vadd.f32 %v311, %v891
      %v893 = vpop.f32.mrb[0].mxu0
      %v894 = vpop.f32.mrb[0].mxu0
      %v895 = vadd.f32 %v311, %v894
      %v896 = vpop.f32.mrb[0].mxu0
      %897 = vmatprep.mubr.bf16.mxu0 %v526
      %898 = vmatmul.mubr.bf16.gmra.mrb[0].mxu0 %v525
      %v899 = vpop.f32.mrb[0].mxu0
      %v900 = vadd.f32 %v311, %v899
      %v901 = vpop.f32.mrb[0].mxu0
      %v902 = vpop.f32.mrb[0].mxu0
      %v903 = vadd.f32 %v311, %v902
      %v904 = vpop.f32.mrb[0].mxu0
      %905 = vmatprep.mubr.bf16.mxu0 %v530
      %906 = vmatmul.mubr.bf16.gmra.mrb[0].mxu0 %v529
      %v907 = vpop.f32.mrb[0].mxu0
      %v908 = vadd.f32 %v311, %v907
      %v909 = vpop.f32.mrb[0].mxu0
      %v910 = vpop.f32.mrb[0].mxu0
      %v911 = vadd.f32 %v311, %v910
      %v912 = vpop.f32.mrb[0].mxu0
      %913 = vmatprep.mubr.bf16.mxu0 %v534
      %914 = vmatmul.mubr.bf16.gmra.mrb[0].mxu0 %v533
      %v915 = vpop.f32.mrb[0].mxu0
      %v916 = vadd.f32 %v311, %v915
      %v917 = vpop.f32.mrb[0].mxu0
      %v918 = vpop.f32.mrb[0].mxu0
      %v919 = vadd.f32 %v311, %v918
      %v920 = vpop.f32.mrb[0].mxu0
      %921 = vmatprep.mubr.bf16.mxu0 %v538
      %922 = vmatmul.mubr.bf16.gmra.mrb[0].mxu0 %v537
      %v923 = vpop.f32.mrb[0].mxu0
      %v924 = vadd.f32 %v311, %v923
      %v925 = vpop.f32.mrb[0].mxu0
      %v926 = vpop.f32.mrb[0].mxu0
      %v927 = vadd.f32 %v311, %v926
      %v928 = vpop.f32.mrb[0].mxu0
      %929 = vmatprep.mubr.bf16.mxu0 %v542
      %930 = vmatmul.mubr.bf16.gmra.mrb[0].mxu0 %v541
      %v931 = vpop.f32.mrb[0].mxu0
      %v932 = vadd.f32 %v311, %v931
      %v933 = vpop.f32.mrb[0].mxu0
      %v934 = vpop.f32.mrb[0].mxu0
      %v935 = vadd.f32 %v311, %v934
      %v936 = vpop.f32.mrb[0].mxu0
      %937 = vmatprep.mubr.bf16.mxu0 %v546
      %938 = vmatmul.mubr.bf16.gmra.mrb[0].mxu0 %v545
      %v939 = vpop.f32.mrb[0].mxu0
      %v940 = vadd.f32 %v311, %v939
      %v941 = vpop.f32.mrb[0].mxu0
      %v942 = vpop.f32.mrb[0].mxu0
      %v943 = vadd.f32 %v311, %v942
      %v944 = vpop.f32.mrb[0].mxu0
      %945 = vmatprep.mubr.bf16.mxu0 %v550
      %946 = vmatmul.mubr.bf16.gmra.mrb[0].mxu0 %v549
      %v947 = vpop.f32.mrb[0].mxu0
      %v948 = vadd.f32 %v311, %v947
      %v949 = vpop.f32.mrb[0].mxu0
      %v950 = vpop.f32.mrb[0].mxu0
      %v951 = vadd.f32 %v311, %v950
      %v952 = vpop.f32.mrb[0].mxu0
      %953 = vmatprep.mubr.bf16.mxu0 %v554
      %954 = vmatmul.mubr.bf16.gmra.mrb[0].mxu0 %v553
      %v955 = vpop.f32.mrb[0].mxu0
      %v956 = vadd.f32 %v311, %v955
      %v957 = vpop.f32.mrb[0].mxu0
      %v958 = vpop.f32.mrb[0].mxu0
      %v959 = vadd.f32 %v311, %v958
      %v960 = vpop.f32.mrb[0].mxu0
      %961 = vmatprep.mubr.bf16.mxu0 %v558
      %962 = vmatmul.mubr.bf16.gmra.mrb[0].mxu0 %v557
      %v963 = vpop.f32.mrb[0].mxu0
      %v964 = vadd.f32 %v311, %v963
      %v965 = vpop.f32.mrb[0].mxu0
      %v966 = vpop.f32.mrb[0].mxu0
      %v967 = vadd.f32 %v311, %v966
      %v968 = vpop.f32.mrb[0].mxu0
      %969 = vmatprep.mubr.bf16.mxu0 %v562
      %970 = vmatmul.mubr.bf16.gmra.mrb[0].mxu0 %v561
      %v971 = vpop.f32.mrb[0].mxu0
      %v972 = vadd.f32 %v311, %v971
      %v973 = vpop.f32.mrb[0].mxu0
      %v974 = vpop.f32.mrb[0].mxu0
      %v975 = vadd.f32 %v311, %v974
      %v976 = vpop.f32.mrb[0].mxu0
      %977 = vmatprep.mubr.bf16.mxu0 %v566
      %978 = vmatmul.mubr.bf16.gmra.mrb[0].mxu0 %v565
      %v979 = vpop.f32.mrb[0].mxu0
      %v980 = vadd.f32 %v311, %v979
      %v981 = vpop.f32.mrb[0].mxu0
      %v982 = vpop.f32.mrb[0].mxu0
      %v983 = vadd.f32 %v311, %v982
      %v984 = vpop.f32.mrb[0].mxu0
      %985 = vdwg.mxu0
      %986 = vmatprep.subr.bf16.mxu0 0
      %987 = vmatpush1.bf16.msra.mxu0 %v777
      %988 = vmatprep.subr.bf16.mxu0 0
      %989 = vmatpush1.bf16.msra.mxu0 %v778
      %990 = vmatprep.subr.bf16.mxu0 0
      %991 = vmatpush1.bf16.msra.mxu0 %v779
      %992 = vmatprep.subr.bf16.mxu0 0
      %993 = vmatpush1.bf16.msra.mxu0 %v780
      %994 = vmatprep.subr.bf16.mxu0 0
      %995 = vmatpush1.bf16.msra.mxu0 %v781
      %996 = vmatprep.subr.bf16.mxu0 0
      %997 = vmatpush1.bf16.msra.mxu0 %v782
      %998 = vmatprep.subr.bf16.mxu0 0
      %999 = vmatpush1.bf16.msra.mxu0 %v783
      %1000 = vmatprep.subr.bf16.mxu0 0
      %1001 = vmatpush1.bf16.msra.mxu0 %v784
      %1002 = vmatprep.subr.bf16.mxu0 0
      %1003 = vmatpush1.bf16.msra.mxu0 %v785
      %1004 = vmatprep.subr.bf16.mxu0 0
      %1005 = vmatpush1.bf16.msra.mxu0 %v786
      %1006 = vmatprep.subr.bf16.mxu0 0
      %1007 = vmatpush1.bf16.msra.mxu0 %v787
      %1008 = vmatprep.subr.bf16.mxu0 0
      %1009 = vmatpush1.bf16.msra.mxu0 %v788
      %1010 = vmatprep.subr.bf16.mxu0 0
      %1011 = vmatpush1.bf16.msra.mxu0 %v789
      %1012 = vmatprep.subr.bf16.mxu0 0
      %1013 = vmatpush1.bf16.msra.mxu0 %v790
      %1014 = vmatprep.subr.bf16.mxu0 0
      %1015 = vmatpush1.bf16.msra.mxu0 %v791
      %1016 = vmatprep.subr.bf16.mxu0 0
      %1017 = vmatpush1.bf16.msra.mxu0 %v792
      %1018 = vmatprep.mubr.bf16.mxu0 %v508
      %1019 = vmatmul.mubr.bf16.gmra.mrb[0].mxu0 %v507
      %v1020 = vpop.f32.mrb[0].mxu0
      %v1021 = vadd.f32 %v860, %v1020
      %v1022 = vpop.f32.mrb[0].mxu0
      %v1023 = vpop.f32.mrb[0].mxu0
      %v1024 = vadd.f32 %v863, %v1023
      %v1025 = vpop.f32.mrb[0].mxu0
      %1026 = vmatprep.mubr.bf16.mxu0 %v512
      %1027 = vmatmul.mubr.bf16.gmra.mrb[0].mxu0 %v511
      %v1028 = vpop.f32.mrb[0].mxu0
      %v1029 = vadd.f32 %v868, %v1028
      %v1030 = vpop.f32.mrb[0].mxu0
      %v1031 = vpop.f32.mrb[0].mxu0
      %v1032 = vadd.f32 %v871, %v1031
      %v1033 = vpop.f32.mrb[0].mxu0
      %1034 = vmatprep.mubr.bf16.mxu0 %v516
      %1035 = vmatmul.mubr.bf16.gmra.mrb[0].mxu0 %v515
      %v1036 = vpop.f32.mrb[0].mxu0
      %v1037 = vadd.f32 %v876, %v1036
      %v1038 = vpop.f32.mrb[0].mxu0
      %v1039 = vpop.f32.mrb[0].mxu0
      %v1040 = vadd.f32 %v879, %v1039
      %v1041 = vpop.f32.mrb[0].mxu0
      %1042 = vmatprep.mubr.bf16.mxu0 %v520
      %1043 = vmatmul.mubr.bf16.gmra.mrb[0].mxu0 %v519
      %v1044 = vpop.f32.mrb[0].mxu0
      %v1045 = vadd.f32 %v884, %v1044
      %v1046 = vpop.f32.mrb[0].mxu0
      %v1047 = vpop.f32.mrb[0].mxu0
      %v1048 = vadd.f32 %v887, %v1047
      %v1049 = vpop.f32.mrb[0].mxu0
      %1050 = vmatprep.mubr.bf16.mxu0 %v524
      %1051 = vmatmul.mubr.bf16.gmra.mrb[0].mxu0 %v523
      %v1052 = vpop.f32.mrb[0].mxu0
      %v1053 = vadd.f32 %v892, %v1052
      %v1054 = vpop.f32.mrb[0].mxu0
      %v1055 = vpop.f32.mrb[0].mxu0
      %v1056 = vadd.f32 %v895, %v1055
      %v1057 = vpop.f32.mrb[0].mxu0
      %1058 = vmatprep.mubr.bf16.mxu0 %v528
      %1059 = vmatmul.mubr.bf16.gmra.mrb[0].mxu0 %v527
      %v1060 = vpop.f32.mrb[0].mxu0
      %v1061 = vadd.f32 %v900, %v1060
      %v1062 = vpop.f32.mrb[0].mxu0
      %v1063 = vpop.f32.mrb[0].mxu0
      %v1064 = vadd.f32 %v903, %v1063
      %v1065 = vpop.f32.mrb[0].mxu0
      %1066 = vmatprep.mubr.bf16.mxu0 %v532
      %1067 = vmatmul.mubr.bf16.gmra.mrb[0].mxu0 %v531
      %v1068 = vpop.f32.mrb[0].mxu0
      %v1069 = vadd.f32 %v908, %v1068
      %v1070 = vpop.f32.mrb[0].mxu0
      %v1071 = vpop.f32.mrb[0].mxu0
      %v1072 = vadd.f32 %v911, %v1071
      %v1073 = vpop.f32.mrb[0].mxu0
      %1074 = vmatprep.mubr.bf16.mxu0 %v536
      %1075 = vmatmul.mubr.bf16.gmra.mrb[0].mxu0 %v535
      %v1076 = vpop.f32.mrb[0].mxu0
      %v1077 = vadd.f32 %v916, %v1076
      %v1078 = vpop.f32.mrb[0].mxu0
      %v1079 = vpop.f32.mrb[0].mxu0
      %v1080 = vadd.f32 %v919, %v1079
      %v1081 = vpop.f32.mrb[0].mxu0
      %1082 = vmatprep.mubr.bf16.mxu0 %v540
      %1083 = vmatmul.mubr.bf16.gmra.mrb[0].mxu0 %v539
      %v1084 = vpop.f32.mrb[0].mxu0
      %v1085 = vadd.f32 %v924, %v1084
      %v1086 = vpop.f32.mrb[0].mxu0
      %v1087 = vpop.f32.mrb[0].mxu0
      %v1088 = vadd.f32 %v927, %v1087
      %v1089 = vpop.f32.mrb[0].mxu0
      %1090 = vmatprep.mubr.bf16.mxu0 %v544
      %1091 = vmatmul.mubr.bf16.gmra.mrb[0].mxu0 %v543
      %v1092 = vpop.f32.mrb[0].mxu0
      %v1093 = vadd.f32 %v932, %v1092
      %v1094 = vpop.f32.mrb[0].mxu0
      %v1095 = vpop.f32.mrb[0].mxu0
      %v1096 = vadd.f32 %v935, %v1095
      %v1097 = vpop.f32.mrb[0].mxu0
      %1098 = vmatprep.mubr.bf16.mxu0 %v548
      %1099 = vmatmul.mubr.bf16.gmra.mrb[0].mxu0 %v547
      %v1100 = vpop.f32.mrb[0].mxu0
      %v1101 = vadd.f32 %v940, %v1100
      %v1102 = vpop.f32.mrb[0].mxu0
      %v1103 = vpop.f32.mrb[0].mxu0
      %v1104 = vadd.f32 %v943, %v1103
      %v1105 = vpop.f32.mrb[0].mxu0
      %1106 = vmatprep.mubr.bf16.mxu0 %v552
      %1107 = vmatmul.mubr.bf16.gmra.mrb[0].mxu0 %v551
      %v1108 = vpop.f32.mrb[0].mxu0
      %v1109 = vadd.f32 %v948, %v1108
      %v1110 = vpop.f32.mrb[0].mxu0
      %v1111 = vpop.f32.mrb[0].mxu0
      %v1112 = vadd.f32 %v951, %v1111
      %v1113 = vpop.f32.mrb[0].mxu0
      %1114 = vmatprep.mubr.bf16.mxu0 %v556
      %1115 = vmatmul.mubr.bf16.gmra.mrb[0].mxu0 %v555
      %v1116 = vpop.f32.mrb[0].mxu0
      %v1117 = vadd.f32 %v956, %v1116
      %v1118 = vpop.f32.mrb[0].mxu0
      %v1119 = vpop.f32.mrb[0].mxu0
      %v1120 = vadd.f32 %v959, %v1119
      %v1121 = vpop.f32.mrb[0].mxu0
      %1122 = vmatprep.mubr.bf16.mxu0 %v560
      %1123 = vmatmul.mubr.bf16.gmra.mrb[0].mxu0 %v559
      %v1124 = vpop.f32.mrb[0].mxu0
      %v1125 = vadd.f32 %v964, %v1124
      %v1126 = vpop.f32.mrb[0].mxu0
      %v1127 = vpop.f32.mrb[0].mxu0
      %v1128 = vadd.f32 %v967, %v1127
      %v1129 = vpop.f32.mrb[0].mxu0
      %1130 = vmatprep.mubr.bf16.mxu0 %v564
      %1131 = vmatmul.mubr.bf16.gmra.mrb[0].mxu0 %v563
      %v1132 = vpop.f32.mrb[0].mxu0
      %v1133 = vadd.f32 %v972, %v1132
      %v1134 = vpop.f32.mrb[0].mxu0
      %v1135 = vpop.f32.mrb[0].mxu0
      %v1136 = vadd.f32 %v975, %v1135
      %v1137 = vpop.f32.mrb[0].mxu0
      %1138 = vmatprep.mubr.bf16.mxu0 %v568
      %1139 = vmatmul.mubr.bf16.gmra.mrb[0].mxu0 %v567
      %v1140 = vpop.f32.mrb[0].mxu0
      %v1141 = vadd.f32 %v980, %v1140
      %v1142 = vpop.f32.mrb[0].mxu0
      %v1143 = vpop.f32.mrb[0].mxu0
      %v1144 = vadd.f32 %v983, %v1143
      %v1145 = vpop.f32.mrb[0].mxu0
      %1146 = vdwg.mxu0
      %v1147 = vmax.f32 %v1021, 0.0
      %v1148 = vmax.f32 %v1024, 0.0
      %v1149 = vmax.f32 %v1029, 0.0
      %v1150 = vmax.f32 %v1032, 0.0
      %v1151 = vmax.f32 %v1037, 0.0
      %v1152 = vmax.f32 %v1040, 0.0
      %v1153 = vmax.f32 %v1045, 0.0
      %v1154 = vmax.f32 %v1048, 0.0
      %v1155 = vmax.f32 %v1053, 0.0
      %v1156 = vmax.f32 %v1056, 0.0
      %v1157 = vmax.f32 %v1061, 0.0
      %v1158 = vmax.f32 %v1064, 0.0
      %v1159 = vmax.f32 %v1069, 0.0
      %v1160 = vmax.f32 %v1072, 0.0
      %v1161 = vmax.f32 %v1077, 0.0
      %v1162 = vmax.f32 %v1080, 0.0
      %v1163 = vmax.f32 %v1085, 0.0
      %v1164 = vmax.f32 %v1088, 0.0
      %v1165 = vmax.f32 %v1093, 0.0
      %v1166 = vmax.f32 %v1096, 0.0
      %v1167 = vmax.f32 %v1101, 0.0
      %v1168 = vmax.f32 %v1104, 0.0
      %v1169 = vmax.f32 %v1109, 0.0
      %v1170 = vmax.f32 %v1112, 0.0
      %v1171 = vmax.f32 %v1117, 0.0
      %v1172 = vmax.f32 %v1120, 0.0
      %v1173 = vmax.f32 %v1125, 0.0
      %v1174 = vmax.f32 %v1128, 0.0
      %v1175 = vmax.f32 %v1133, 0.0
      %v1176 = vmax.f32 %v1136, 0.0
      %v1177 = vmax.f32 %v1141, 0.0
      %v1178 = vmax.f32 %v1144, 0.0
      %v1179 = vpack.c.bf16 %v1148, %v1147
      %v1180 = vpack.c.bf16 %v1150, %v1149
      %v1181 = vpack.c.bf16 %v1152, %v1151
      %v1182 = vpack.c.bf16 %v1154, %v1153
      %v1183 = vpack.c.bf16 %v1156, %v1155
      %v1184 = vpack.c.bf16 %v1158, %v1157
      %v1185 = vpack.c.bf16 %v1160, %v1159
      %v1186 = vpack.c.bf16 %v1162, %v1161
      %v1187 = vpack.c.bf16 %v1164, %v1163
      %v1188 = vpack.c.bf16 %v1166, %v1165
      %v1189 = vpack.c.bf16 %v1168, %v1167
      %v1190 = vpack.c.bf16 %v1170, %v1169
      %v1191 = vpack.c.bf16 %v1172, %v1171
      %v1192 = vpack.c.bf16 %v1174, %v1173
      %v1193 = vpack.c.bf16 %v1176, %v1175
      %v1194 = vpack.c.bf16 %v1178, %v1177
      %v1211 = vunpack.c.l.b16 %v1179
      %v1212 = vunpack.c.h.b16 %v1179
      %v1213 = vunpack.c.l.b16 %v1180
      %v1214 = vunpack.c.h.b16 %v1180
      %v1215 = vunpack.c.l.b16 %v1181
      %v1216 = vunpack.c.h.b16 %v1181
      %v1217 = vunpack.c.l.b16 %v1182
      %v1218 = vunpack.c.h.b16 %v1182
      %v1219 = vunpack.c.l.b16 %v1183
      %v1220 = vunpack.c.h.b16 %v1183
      %v1221 = vunpack.c.l.b16 %v1184
      %v1222 = vunpack.c.h.b16 %v1184
      %v1223 = vunpack.c.l.b16 %v1185
      %v1224 = vunpack.c.h.b16 %v1185
      %v1225 = vunpack.c.l.b16 %v1186
      %v1226 = vunpack.c.h.b16 %v1186
      %v1227 = vunpack.c.l.b16 %v1187
      %v1228 = vunpack.c.h.b16 %v1187
      %v1229 = vunpack.c.l.b16 %v1188
      %v1230 = vunpack.c.h.b16 %v1188
      %v1231 = vunpack.c.l.b16 %v1189
      %v1232 = vunpack.c.h.b16 %v1189
      %v1233 = vunpack.c.l.b16 %v1190
      %v1234 = vunpack.c.h.b16 %v1190
      %v1235 = vunpack.c.l.b16 %v1191
      %v1236 = vunpack.c.h.b16 %v1191
      %v1237 = vunpack.c.l.b16 %v1192
      %v1238 = vunpack.c.h.b16 %v1192
      %v1239 = vunpack.c.l.b16 %v1193
      %v1240 = vunpack.c.h.b16 %v1193
      %v1241 = vunpack.c.l.b16 %v1194
      %v1242 = vunpack.c.h.b16 %v1194
      %v1243 = vpack.c.b16 %v1211, %v1211
      %v1244 = vpack.c.b16 %v1212, %v1212
      %v1245 = vpack.c.b16 %v1213, %v1213
      %v1246 = vpack.c.b16 %v1214, %v1214
      %v1247 = vpack.c.b16 %v1215, %v1215
      %v1248 = vpack.c.b16 %v1216, %v1216
      %v1249 = vpack.c.b16 %v1217, %v1217
      %v1250 = vpack.c.b16 %v1218, %v1218
      %v1251 = vpack.c.b16 %v1219, %v1219
      %v1252 = vpack.c.b16 %v1220, %v1220
      %v1253 = vpack.c.b16 %v1221, %v1221
      %v1254 = vpack.c.b16 %v1222, %v1222
      %v1255 = vpack.c.b16 %v1223, %v1223
      %v1256 = vpack.c.b16 %v1224, %v1224
      %v1257 = vpack.c.b16 %v1225, %v1225
      %v1258 = vpack.c.b16 %v1226, %v1226
      %v1259 = vpack.c.b16 %v1227, %v1227
      %v1260 = vpack.c.b16 %v1228, %v1228
      %v1261 = vpack.c.b16 %v1229, %v1229
      %v1262 = vpack.c.b16 %v1230, %v1230
      %v1263 = vpack.c.b16 %v1231, %v1231
      %v1264 = vpack.c.b16 %v1232, %v1232
      %v1265 = vpack.c.b16 %v1233, %v1233
      %v1266 = vpack.c.b16 %v1234, %v1234
      %v1267 = vpack.c.b16 %v1235, %v1235
      %v1268 = vpack.c.b16 %v1236, %v1236
      %v1269 = vpack.c.b16 %v1237, %v1237
      %v1270 = vpack.c.b16 %v1238, %v1238
      %v1271 = vpack.c.b16 %v1239, %v1239
      %v1272 = vpack.c.b16 %v1240, %v1240
      %v1273 = vpack.c.b16 %v1241, %v1241
      %v1274 = vpack.c.b16 %v1242, %v1242
      %1307 = vst [vmem:[%s175] sm:$0xf] %v1243
      %1308 = vst [vmem:[%s175 + $0x4] sm:$0xf] %v1244
      %1309 = vst [vmem:[%s175 + $0x8] sm:$0xf] %v1245
      %1310 = vst [vmem:[%s175 + $0xc] sm:$0xf] %v1246
      %1311 = vst [vmem:[%s175 + $0x10] sm:$0xf] %v1247
      %1312 = vst [vmem:[%s175 + $0x14] sm:$0xf] %v1248
      %1313 = vst [vmem:[%s175 + $0x18] sm:$0xf] %v1249
      %1314 = vst [vmem:[%s175 + $0x1c] sm:$0xf] %v1250
      %1315 = vst [vmem:[%s175 + $0x20] sm:$0xf] %v1251
      %1316 = vst [vmem:[%s175 + $0x24] sm:$0xf] %v1252
      %1317 = vst [vmem:[%s175 + $0x28] sm:$0xf] %v1253
      %1318 = vst [vmem:[%s175 + $0x2c] sm:$0xf] %v1254
      %1319 = vst [vmem:[%s175 + $0x30] sm:$0xf] %v1255
      %1320 = vst [vmem:[%s175 + $0x34] sm:$0xf] %v1256
      %1321 = vst [vmem:[%s175 + $0x38] sm:$0xf] %v1257
      %1322 = vst [vmem:[%s175 + $0x3c] sm:$0xf] %v1258
      %1323 = vst [vmem:[%s175 + $0x40] sm:$0xf] %v1259
      %1324 = vst [vmem:[%s175 + $0x44] sm:$0xf] %v1260
      %1325 = vst [vmem:[%s175 + $0x48] sm:$0xf] %v1261
      %1326 = vst [vmem:[%s175 + $0x4c] sm:$0xf] %v1262
      %1327 = vst [vmem:[%s175 + $0x50] sm:$0xf] %v1263
      %1328 = vst [vmem:[%s175 + $0x54] sm:$0xf] %v1264
      %1329 = vst [vmem:[%s175 + $0x58] sm:$0xf] %v1265
      %1330 = vst [vmem:[%s175 + $0x5c] sm:$0xf] %v1266
      %1331 = vst [vmem:[%s175 + $0x60] sm:$0xf] %v1267
      %1332 = vst [vmem:[%s175 + $0x64] sm:$0xf] %v1268
      %1333 = vst [vmem:[%s175 + $0x68] sm:$0xf] %v1269
      %1334 = vst [vmem:[%s175 + $0x6c] sm:$0xf] %v1270
      %1335 = vst [vmem:[%s175 + $0x70] sm:$0xf] %v1271
      %1336 = vst [vmem:[%s175 + $0x74] sm:$0xf] %v1272
      %1337 = vst [vmem:[%s175 + $0x78] sm:$0xf] %v1273
      %1338 = vst [vmem:[%s175 + $0x7c] sm:$0xf] %v1274
      %s1339 = smul.u32 32, %s14
      %p1340 = scmp.lt.s32.totalorder %s1339, 63
      %s1341 = scalar_select %p1340, %s1339, 63
      %s1342 = smul.addr %s1341, 4
      %s1343 = scalar_lea.vmem %s3, %s1342
      // Predicated region
      $region33: #{forward.7} parent=31 // pred_check
        %p1344 = pneg %p100
      $region34: #{forward.7} parent=31 // pred_check_branch
        %1346 = sbr.rel (%p1344) target = $region36
      $region35: #{forward.7} parent=31 // pred_region
        %s1347 = smul.u32 32, %s14
      $region36: #{forward.7} parent=31 // pred_fallthru
        _
    $region32: #{forward.7} parent=5 // pred_fallthru
      _
    %p1348 = scmp.le.s32.totalorder 2, %s9
    // Predicated region
    $region37: #{forward.7} parent=5 // pred_check
      %p1349 = pneg %p1348
    $region38: #{forward.7} parent=5 // pred_check_branch
      %1351 = sbr.rel (%p1349) target = $region40
    $region39: #{forward.7} parent=5 // pred_region
      %s1352 = ssub.s32 %s9, 2
      // Predicated region
      $region41: #{forward.7} parent=39 // pred_check
        %p1353 = pneg %p106
      $region42: #{forward.7} parent=39 // pred_check_branch
        %1355 = sbr.rel (%p1353) target = $region44
      $region43: #{forward.7} parent=39 // pred_region
        %s1356 = smul.u32 32, %s15
        %p1357 = scmp.lt.s32.totalorder %s1356, 63
        %s1358 = scalar_select %p1357, %s1356, 63
        %s1359 = smul.addr %s1358, 4
        %s1360 = scalar_lea.vmem %s3, %s1359
      $region44: #{forward.7} parent=39 // pred_fallthru
        _
    $region40: #{forward.7} parent=5 // pred_fallthru
      _
  $region6: #{forward.7} parent=0 // loop_footer
    %s13 = sadd.s32 1, %s9
  $region7: #{forward.7} parent=0 // loop_footer_branch
    %8 = sbr.rel target = $region3
  $region8: #{forward.7} parent=0 // loop_exit
    _

// kernel: forward.8
$region0: #{forward.8}
  #allocation0 [shape = 'u32[]', space=smem, size = 0x4, offset = 0x4, fixed_abs, tag = 'smem constant byte address 0x4 - core index']
  #allocation1 [shape = 'u32[144,128]{1,0:T(1,128)}', space=vmem, size = 0x12000, scoped, tag = 'internal scratch']
  %s0 = inlined_call_operand.vmem [shape: bf16[2048,1024], index: 0, kind: input, shape index: {}]
  %s1 = inlined_call_operand.vmem [shape: bf16[1024,128], index: 1, kind: input, shape index: {}]
  %s2 = inlined_call_operand.vmem [shape: f32[1,128], index: 2, kind: input, shape index: {}]
  %s3 = inlined_call_operand.vmem [shape: bf16[2048,128], index: 3, kind: output, shape index: {}]
  %s4 = sld [smem:[#allocation0]]
  $region45: #{forward.8} parent=0
    _
  %s6 = ssub.s32 1, %s4
  %s7 = scalar_select 0, %s6, %s4
  loop: start=0, step=1, limit=4
  $region2: #{forward.8} parent=0 // loop_pre_header
    _
  $region3: #{forward.8} parent=0 // loop_header
    %s9 = sphi 0, %s13
    %p10 = scmp.ge.s32.totalorder %s9, 4
    %s19 = sphi 0, %s21
    %s22 = sphi 0, %s19
    %s23 = sphi 0, %s22
    %s39 = sphi 0, %s23
    %s43 = sphi 0, %s43
    %s45 = sphi 0, %s43
    %s46 = sphi 0, %s45
    %s60 = sphi 0, %s46
    %s64 = sphi 0, %s64
    %s66 = sphi 0, %s64
    %s67 = sphi 0, %s66
    %s81 = sphi 0, %s67
    %s87 = sphi 0, %s89
    %s90 = sphi 0, %s87
    %s91 = sphi 0, %s90
    %s107 = sphi 0, %s91
  $region4: #{forward.8} parent=0 // loop_header_branch
    %12 = sbr.rel (%p10) target = $region8
  $region5: #{forward.8} parent=0 // loop_body
    %s14 = ssub.s32 %s9, 1
    %s15 = ssub.s32 %s9, 2
    %s16 = sadd.s32 %s9, 1
    %s17 = ssub.s32 %s9, %s16
    %p18 = scmp.eq.s32.totalorder %s17, 0
    %s20 = sadd.s32 %s19, 1
    %s21 = scalar_select %p18, %s19, %s20
    %p24 = pneg %p18
    %p25 = scmp.eq.s32.totalorder %s9, 1
    %p26 = por %p24, %p25
    %p27 = scmp.ne.s32.totalorder %s19, %s22
    %p28 = scmp.eq.s32.totalorder %s9, 0
    %p29 = por %p27, %p28
    %p30 = scmp.ne.s32.totalorder %s19, %s22
    %p31 = scmp.eq.s32.totalorder %s14, 1
    %p32 = por %p30, %p31
    %p33 = scmp.ne.s32.totalorder %s22, %s23
    %p34 = scmp.eq.s32.totalorder %s14, 0
    %p35 = por %p33, %p34
    %p36 = scmp.ne.s32.totalorder %s22, %s23
    %p37 = scmp.eq.s32.totalorder %s15, 1
    %p38 = por %p36, %p37
    %p40 = scmp.ne.s32.totalorder %s23, %s39
    %p41 = scmp.eq.s32.totalorder %s15, 0
    %p42 = por %p40, %p41
    %s44 = sadd.s32 %s43, 1
    %p47 = scmp.eq.s32.totalorder %s9, 1
    %p48 = scmp.ne.s32.totalorder %s43, %s45
    %p49 = scmp.eq.s32.totalorder %s9, 0
    %p50 = por %p48, %p49
    %p51 = scmp.ne.s32.totalorder %s43, %s45
    %p52 = scmp.eq.s32.totalorder %s14, 1
    %p53 = por %p51, %p52
    %p54 = scmp.ne.s32.totalorder %s45, %s46
    %p55 = scmp.eq.s32.totalorder %s14, 0
    %p56 = por %p54, %p55
    %p57 = scmp.ne.s32.totalorder %s45, %s46
    %p58 = scmp.eq.s32.totalorder %s15, 1
    %p59 = por %p57, %p58
    %p61 = scmp.ne.s32.totalorder %s46, %s60
    %p62 = scmp.eq.s32.totalorder %s15, 0
    %p63 = por %p61, %p62
    %s65 = sadd.s32 %s64, 1
    %p68 = scmp.eq.s32.totalorder %s9, 1
    %p69 = scmp.ne.s32.totalorder %s64, %s66
    %p70 = scmp.eq.s32.totalorder %s9, 0
    %p71 = por %p69, %p70
    %p72 = scmp.ne.s32.totalorder %s64, %s66
    %p73 = scmp.eq.s32.totalorder %s14, 1
    %p74 = por %p72, %p73
    %p75 = scmp.ne.s32.totalorder %s66, %s67
    %p76 = scmp.eq.s32.totalorder %s14, 0
    %p77 = por %p75, %p76
    %p78 = scmp.ne.s32.totalorder %s66, %s67
    %p79 = scmp.eq.s32.totalorder %s15, 1
    %p80 = por %p78, %p79
    %p82 = scmp.ne.s32.totalorder %s67, %s81
    %p83 = scmp.eq.s32.totalorder %s15, 0
    %p84 = por %p82, %p83
    %s85 = ssub.s32 %s9, %s16
    %p86 = scmp.eq.s32.totalorder %s85, 0
    %s88 = sadd.s32 %s87, 1
    %s89 = scalar_select %p86, %s87, %s88
    %p92 = pneg %p86
    %p93 = scmp.eq.s32.totalorder %s9, 1
    %p94 = por %p92, %p93
    %p95 = scmp.ne.s32.totalorder %s87, %s90
    %p96 = scmp.eq.s32.totalorder %s9, 0
    %p97 = por %p95, %p96
    %p98 = scmp.ne.s32.totalorder %s87, %s90
    %p99 = scmp.eq.s32.totalorder %s14, 1
    %p100 = por %p98, %p99
    %p101 = scmp.ne.s32.totalorder %s90, %s91
    %p102 = scmp.eq.s32.totalorder %s14, 0
    %p103 = por %p101, %p102
    %p104 = scmp.ne.s32.totalorder %s90, %s91
    %p105 = scmp.eq.s32.totalorder %s15, 1
    %p106 = por %p104, %p105
    %p108 = scmp.ne.s32.totalorder %s91, %s107
    %p109 = scmp.eq.s32.totalorder %s15, 0
    %p110 = por %p108, %p109
    %p111 = scmp.le.s32.totalorder 1, %s9
    %p112 = scmp.lt.s32.totalorder %s9, 3
    %p113 = pnand %p111, %p112
    %p114 = pneg %p113
    // Predicated region
    $region9: #{forward.8} parent=5 // pred_check
      _
    $region10: #{forward.8} parent=5 // pred_check_branch
      %116 = sbr.rel (%p113) target = $region12
    $region11: #{forward.8} parent=5 // pred_region
      %s117 = ssub.s32 %s9, 1
      // Predicated region
      $region13: #{forward.8} parent=11 // pred_check
        %p118 = pneg %p56
      $region14: #{forward.8} parent=11 // pred_check_branch
        %120 = sbr.rel (%p118) target = $region16
      $region15: #{forward.8} parent=11 // pred_region
        _
      $region16: #{forward.8} parent=11 // pred_fallthru
        _
      // Predicated region
      $region17: #{forward.8} parent=11 // pred_check
        %p121 = pneg %p77
      $region18: #{forward.8} parent=11 // pred_check_branch
        %123 = sbr.rel (%p121) target = $region20
      $region19: #{forward.8} parent=11 // pred_region
        _
      $region20: #{forward.8} parent=11 // pred_fallthru
        _
    $region12: #{forward.8} parent=5 // pred_fallthru
      _
    %p124 = scmp.lt.s32.totalorder %s9, 2
    // Predicated region
    $region21: #{forward.8} parent=5 // pred_check
      %p125 = pneg %p124
    $region22: #{forward.8} parent=5 // pred_check_branch
      %127 = sbr.rel (%p125) target = $region24
    $region23: #{forward.8} parent=5 // pred_region
      // Predicated region
      $region25: #{forward.8} parent=23 // pred_check
        %p128 = pneg %p29
      $region26: #{forward.8} parent=23 // pred_check_branch
        %130 = sbr.rel (%p128) target = $region28
      $region27: #{forward.8} parent=23 // pred_region
        %s131 = smul.u32 128, %s9
        %p132 = scmp.lt.s32.totalorder %s131, 255
        %s133 = scalar_select %p132, %s131, 255
        %s134 = smul.addr %s133, 8
        %s135 = smul.addr %s134, 4
        %s136 = scalar_lea.vmem %s0, %s135
        %s137 = smul.u32 128, %s9
      $region28: #{forward.8} parent=23 // pred_fallthru
        _
    $region24: #{forward.8} parent=5 // pred_fallthru
      _
    %p138 = scmp.le.s32.totalorder 1, %s9
    %p139 = scmp.lt.s32.totalorder %s9, 3
    %p140 = pnand %p138, %p139
    %p141 = pneg %p140
    // Predicated region
    $region29: #{forward.8} parent=5 // pred_check
      _
    $region30: #{forward.8} parent=5 // pred_check_branch
      %143 = sbr.rel (%p140) target = $region32
    $region31: #{forward.8} parent=5 // pred_region
      %s144 = ssub.s32 %s9, 1
      %s145 = smul.u32 128, %s14
      %p146 = scmp.lt.s32.totalorder %s145, 255
      %s147 = scalar_select %p146, %s145, 255
      %s148 = smul.addr %s147, 8
      %s149 = smul.addr %s148, 4
      %s150 = scalar_lea.vmem %s0, %s149
      %p151 = pneg %p35
      %p152 = pneg %p32
      %p153 = pneg %p56
      %p154 = pneg %p53
      %p155 = pneg %p77
      %p156 = pneg %p74
      %p157 = pneg %p103
      %p158 = pneg %p100
      %s159 = smul.u32 128, %s14
      %p160 = scmp.lt.s32.totalorder %s159, 255
      %s161 = scalar_select %p160, %s159, 255
      %s162 = smul.addr %s161, 4
      %s163 = scalar_lea.vmem %s3, %s162
      %s164 = smul.u32 128, %s14
      %p165 = scmp.lt.s32.totalorder %s164, 255
      %s166 = scalar_select %p165, %s164, 255
      %s167 = smul.addr %s166, 8
      %s168 = smul.addr %s167, 4
      %s169 = scalar_lea.vmem %s0, %s168
      %s170 = smul.u32 128, %s14
      %s171 = smul.u32 128, %s14
      %p172 = scmp.lt.s32.totalorder %s171, 255
      %s173 = scalar_select %p172, %s171, 255
      %s174 = smul.addr %s173, 4
      %s175 = scalar_lea.vmem %s3, %s174
      %s176 = smul.u32 128, %s14
      %v178 = vld [vmem:[%s169] sm:$0xff]
      %v179 = vld [vmem:[%s169 + $0x8] sm:$0xff]
      %v180 = vld [vmem:[%s169 + $0x10] sm:$0xff]
      %v181 = vld [vmem:[%s169 + $0x18] sm:$0xff]
      %v182 = vld [vmem:[%s169 + $0x20] sm:$0xff]
      %v183 = vld [vmem:[%s169 + $0x28] sm:$0xff]
      %v184 = vld [vmem:[%s169 + $0x30] sm:$0xff]
      %v185 = vld [vmem:[%s169 + $0x38] sm:$0xff]
      %v186 = vld [vmem:[%s169 + $0x40] sm:$0xff]
      %v187 = vld [vmem:[%s169 + $0x48] sm:$0xff]
      %v188 = vld [vmem:[%s169 + $0x50] sm:$0xff]
      %v189 = vld [vmem:[%s169 + $0x58] sm:$0xff]
      %v190 = vld [vmem:[%s169 + $0x60] sm:$0xff]
      %v191 = vld [vmem:[%s169 + $0x68] sm:$0xff]
      %v192 = vld [vmem:[%s169 + $0x70] sm:$0xff]
      %v193 = vld [vmem:[%s169 + $0x78] sm:$0xff]
      %v194 = vld [vmem:[%s169 + $0x80] sm:$0xff]
      %v195 = vld [vmem:[%s169 + $0x88] sm:$0xff]
      %v196 = vld [vmem:[%s169 + $0x90] sm:$0xff]
      %v197 = vld [vmem:[%s169 + $0x98] sm:$0xff]
      %v198 = vld [vmem:[%s169 + $0xa0] sm:$0xff]
      %v199 = vld [vmem:[%s169 + $0xa8] sm:$0xff]
      %v200 = vld [vmem:[%s169 + $0xb0] sm:$0xff]
      %v201 = vld [vmem:[%s169 + $0xb8] sm:$0xff]
      %v202 = vld [vmem:[%s169 + $0xc0] sm:$0xff]
      %v203 = vld [vmem:[%s169 + $0xc8] sm:$0xff]
      %v204 = vld [vmem:[%s169 + $0xd0] sm:$0xff]
      %v205 = vld [vmem:[%s169 + $0xd8] sm:$0xff]
      %v206 = vld [vmem:[%s169 + $0xe0] sm:$0xff]
      %v207 = vld [vmem:[%s169 + $0xe8] sm:$0xff]
      %v208 = vld [vmem:[%s169 + $0xf0] sm:$0xff]
      %v209 = vld [vmem:[%s169 + $0xf8] sm:$0xff]
      %v210 = vld [vmem:[%s169 + $0x100] sm:$0xff]
      %v211 = vld [vmem:[%s169 + $0x108] sm:$0xff]
      %v212 = vld [vmem:[%s169 + $0x110] sm:$0xff]
      %v213 = vld [vmem:[%s169 + $0x118] sm:$0xff]
      %v214 = vld [vmem:[%s169 + $0x120] sm:$0xff]
      %v215 = vld [vmem:[%s169 + $0x128] sm:$0xff]
      %v216 = vld [vmem:[%s169 + $0x130] sm:$0xff]
      %v217 = vld [vmem:[%s169 + $0x138] sm:$0xff]
      %v218 = vld [vmem:[%s169 + $0x140] sm:$0xff]
      %v219 = vld [vmem:[%s169 + $0x148] sm:$0xff]
      %v220 = vld [vmem:[%s169 + $0x150] sm:$0xff]
      %v221 = vld [vmem:[%s169 + $0x158] sm:$0xff]
      %v222 = vld [vmem:[%s169 + $0x160] sm:$0xff]
      %v223 = vld [vmem:[%s169 + $0x168] sm:$0xff]
      %v224 = vld [vmem:[%s169 + $0x170] sm:$0xff]
      %v225 = vld [vmem:[%s169 + $0x178] sm:$0xff]
      %v226 = vld [vmem:[%s169 + $0x180] sm:$0xff]
      %v227 = vld [vmem:[%s169 + $0x188] sm:$0xff]
      %v228 = vld [vmem:[%s169 + $0x190] sm:$0xff]
      %v229 = vld [vmem:[%s169 + $0x198] sm:$0xff]
      %v230 = vld [vmem:[%s169 + $0x1a0] sm:$0xff]
      %v231 = vld [vmem:[%s169 + $0x1a8] sm:$0xff]
      %v232 = vld [vmem:[%s169 + $0x1b0] sm:$0xff]
      %v233 = vld [vmem:[%s169 + $0x1b8] sm:$0xff]
      %v234 = vld [vmem:[%s169 + $0x1c0] sm:$0xff]
      %v235 = vld [vmem:[%s169 + $0x1c8] sm:$0xff]
      %v236 = vld [vmem:[%s169 + $0x1d0] sm:$0xff]
      %v237 = vld [vmem:[%s169 + $0x1d8] sm:$0xff]
      %v238 = vld [vmem:[%s169 + $0x1e0] sm:$0xff]
      %v239 = vld [vmem:[%s169 + $0x1e8] sm:$0xff]
      %v240 = vld [vmem:[%s169 + $0x1f0] sm:$0xff]
      %v241 = vld [vmem:[%s169 + $0x1f8] sm:$0xff]
      %v242 = vld [vmem:[%s169 + $0x200] sm:$0xff]
      %v243 = vld [vmem:[%s169 + $0x208] sm:$0xff]
      %v244 = vld [vmem:[%s169 + $0x210] sm:$0xff]
      %v245 = vld [vmem:[%s169 + $0x218] sm:$0xff]
      %v246 = vld [vmem:[%s169 + $0x220] sm:$0xff]
      %v247 = vld [vmem:[%s169 + $0x228] sm:$0xff]
      %v248 = vld [vmem:[%s169 + $0x230] sm:$0xff]
      %v249 = vld [vmem:[%s169 + $0x238] sm:$0xff]
      %v250 = vld [vmem:[%s169 + $0x240] sm:$0xff]
      %v251 = vld [vmem:[%s169 + $0x248] sm:$0xff]
      %v252 = vld [vmem:[%s169 + $0x250] sm:$0xff]
      %v253 = vld [vmem:[%s169 + $0x258] sm:$0xff]
      %v254 = vld [vmem:[%s169 + $0x260] sm:$0xff]
      %v255 = vld [vmem:[%s169 + $0x268] sm:$0xff]
      %v256 = vld [vmem:[%s169 + $0x270] sm:$0xff]
      %v257 = vld [vmem:[%s169 + $0x278] sm:$0xff]
      %v258 = vld [vmem:[%s169 + $0x280] sm:$0xff]
      %v259 = vld [vmem:[%s169 + $0x288] sm:$0xff]
      %v260 = vld [vmem:[%s169 + $0x290] sm:$0xff]
      %v261 = vld [vmem:[%s169 + $0x298] sm:$0xff]
      %v262 = vld [vmem:[%s169 + $0x2a0] sm:$0xff]
      %v263 = vld [vmem:[%s169 + $0x2a8] sm:$0xff]
      %v264 = vld [vmem:[%s169 + $0x2b0] sm:$0xff]
      %v265 = vld [vmem:[%s169 + $0x2b8] sm:$0xff]
      %v266 = vld [vmem:[%s169 + $0x2c0] sm:$0xff]
      %v267 = vld [vmem:[%s169 + $0x2c8] sm:$0xff]
      %v268 = vld [vmem:[%s169 + $0x2d0] sm:$0xff]
      %v269 = vld [vmem:[%s169 + $0x2d8] sm:$0xff]
      %v270 = vld [vmem:[%s169 + $0x2e0] sm:$0xff]
      %v271 = vld [vmem:[%s169 + $0x2e8] sm:$0xff]
      %v272 = vld [vmem:[%s169 + $0x2f0] sm:$0xff]
      %v273 = vld [vmem:[%s169 + $0x2f8] sm:$0xff]
      %v274 = vld [vmem:[%s169 + $0x300] sm:$0xff]
      %v275 = vld [vmem:[%s169 + $0x308] sm:$0xff]
      %v276 = vld [vmem:[%s169 + $0x310] sm:$0xff]
      %v277 = vld [vmem:[%s169 + $0x318] sm:$0xff]
      %v278 = vld [vmem:[%s169 + $0x320] sm:$0xff]
      %v279 = vld [vmem:[%s169 + $0x328] sm:$0xff]
      %v280 = vld [vmem:[%s169 + $0x330] sm:$0xff]
      %v281 = vld [vmem:[%s169 + $0x338] sm:$0xff]
      %v282 = vld [vmem:[%s169 + $0x340] sm:$0xff]
      %v283 = vld [vmem:[%s169 + $0x348] sm:$0xff]
      %v284 = vld [vmem:[%s169 + $0x350] sm:$0xff]
      %v285 = vld [vmem:[%s169 + $0x358] sm:$0xff]
      %v286 = vld [vmem:[%s169 + $0x360] sm:$0xff]
      %v287 = vld [vmem:[%s169 + $0x368] sm:$0xff]
      %v288 = vld [vmem:[%s169 + $0x370] sm:$0xff]
      %v289 = vld [vmem:[%s169 + $0x378] sm:$0xff]
      %v290 = vld [vmem:[%s169 + $0x380] sm:$0xff]
      %v291 = vld [vmem:[%s169 + $0x388] sm:$0xff]
      %v292 = vld [vmem:[%s169 + $0x390] sm:$0xff]
      %v293 = vld [vmem:[%s169 + $0x398] sm:$0xff]
      %v294 = vld [vmem:[%s169 + $0x3a0] sm:$0xff]
      %v295 = vld [vmem:[%s169 + $0x3a8] sm:$0xff]
      %v296 = vld [vmem:[%s169 + $0x3b0] sm:$0xff]
      %v297 = vld [vmem:[%s169 + $0x3b8] sm:$0xff]
      %v298 = vld [vmem:[%s169 + $0x3c0] sm:$0xff]
      %v299 = vld [vmem:[%s169 + $0x3c8] sm:$0xff]
      %v300 = vld [vmem:[%s169 + $0x3d0] sm:$0xff]
      %v301 = vld [vmem:[%s169 + $0x3d8] sm:$0xff]
      %v302 = vld [vmem:[%s169 + $0x3e0] sm:$0xff]
      %v303 = vld [vmem:[%s169 + $0x3e8] sm:$0xff]
      %v304 = vld [vmem:[%s169 + $0x3f0] sm:$0xff]
      %v305 = vld [vmem:[%s169 + $0x3f8] sm:$0xff]
      %v306 = vld [vmem:[%s169 + $0x400] sm:$0xff]
      %v307 = vld [vmem:[%s169 + $0x408] sm:$0xff]
      %v308 = vld [vmem:[%s169 + $0x410] sm:$0xff]
      %v309 = vld [vmem:[%s169 + $0x418] sm:$0xff]
      %v310 = vld [vmem:[%s169 + $0x420] sm:$0xff]
      %v311 = vld [vmem:[%s169 + $0x428] sm:$0xff]
      %v312 = vld [vmem:[%s169 + $0x430] sm:$0xff]
      %v313 = vld [vmem:[%s169 + $0x438] sm:$0xff]
      %v314 = vld [vmem:[%s169 + $0x440] sm:$0xff]
      %v315 = vld [vmem:[%s169 + $0x448] sm:$0xff]
      %v316 = vld [vmem:[%s169 + $0x450] sm:$0xff]
      %v317 = vld [vmem:[%s169 + $0x458] sm:$0xff]
      %v318 = vld [vmem:[%s169 + $0x460] sm:$0xff]
      %v319 = vld [vmem:[%s169 + $0x468] sm:$0xff]
      %v320 = vld [vmem:[%s169 + $0x470] sm:$0xff]
      %v321 = vld [vmem:[%s169 + $0x478] sm:$0xff]
      %v322 = vld [vmem:[%s169 + $0x480] sm:$0xff]
      %v323 = vld [vmem:[%s169 + $0x488] sm:$0xff]
      %v324 = vld [vmem:[%s169 + $0x490] sm:$0xff]
      %v325 = vld [vmem:[%s169 + $0x498] sm:$0xff]
      %v326 = vld [vmem:[%s169 + $0x4a0] sm:$0xff]
      %v327 = vld [vmem:[%s169 + $0x4a8] sm:$0xff]
      %v328 = vld [vmem:[%s169 + $0x4b0] sm:$0xff]
      %v329 = vld [vmem:[%s169 + $0x4b8] sm:$0xff]
      %v330 = vld [vmem:[%s169 + $0x4c0] sm:$0xff]
      %v331 = vld [vmem:[%s169 + $0x4c8] sm:$0xff]
      %v332 = vld [vmem:[%s169 + $0x4d0] sm:$0xff]
      %v333 = vld [vmem:[%s169 + $0x4d8] sm:$0xff]
      %v334 = vld [vmem:[%s169 + $0x4e0] sm:$0xff]
      %v335 = vld [vmem:[%s169 + $0x4e8] sm:$0xff]
      %v336 = vld [vmem:[%s169 + $0x4f0] sm:$0xff]
      %v337 = vld [vmem:[%s169 + $0x4f8] sm:$0xff]
      %v338 = vld [vmem:[%s169 + $0x500] sm:$0xff]
      %v339 = vld [vmem:[%s169 + $0x508] sm:$0xff]
      %v340 = vld [vmem:[%s169 + $0x510] sm:$0xff]
      %v341 = vld [vmem:[%s169 + $0x518] sm:$0xff]
      %v342 = vld [vmem:[%s169 + $0x520] sm:$0xff]
      %v343 = vld [vmem:[%s169 + $0x528] sm:$0xff]
      %v344 = vld [vmem:[%s169 + $0x530] sm:$0xff]
      %v345 = vld [vmem:[%s169 + $0x538] sm:$0xff]
      %v346 = vld [vmem:[%s169 + $0x540] sm:$0xff]
      %v347 = vld [vmem:[%s169 + $0x548] sm:$0xff]
      %v348 = vld [vmem:[%s169 + $0x550] sm:$0xff]
      %v349 = vld [vmem:[%s169 + $0x558] sm:$0xff]
      %v350 = vld [vmem:[%s169 + $0x560] sm:$0xff]
      %v351 = vld [vmem:[%s169 + $0x568] sm:$0xff]
      %v352 = vld [vmem:[%s169 + $0x570] sm:$0xff]
      %v353 = vld [vmem:[%s169 + $0x578] sm:$0xff]
      %v354 = vld [vmem:[%s169 + $0x580] sm:$0xff]
      %v355 = vld [vmem:[%s169 + $0x588] sm:$0xff]
      %v356 = vld [vmem:[%s169 + $0x590] sm:$0xff]
      %v357 = vld [vmem:[%s169 + $0x598] sm:$0xff]
      %v358 = vld [vmem:[%s169 + $0x5a0] sm:$0xff]
      %v359 = vld [vmem:[%s169 + $0x5a8] sm:$0xff]
      %v360 = vld [vmem:[%s169 + $0x5b0] sm:$0xff]
      %v361 = vld [vmem:[%s169 + $0x5b8] sm:$0xff]
      %v362 = vld [vmem:[%s169 + $0x5c0] sm:$0xff]
      %v363 = vld [vmem:[%s169 + $0x5c8] sm:$0xff]
      %v364 = vld [vmem:[%s169 + $0x5d0] sm:$0xff]
      %v365 = vld [vmem:[%s169 + $0x5d8] sm:$0xff]
      %v366 = vld [vmem:[%s169 + $0x5e0] sm:$0xff]
      %v367 = vld [vmem:[%s169 + $0x5e8] sm:$0xff]
      %v368 = vld [vmem:[%s169 + $0x5f0] sm:$0xff]
      %v369 = vld [vmem:[%s169 + $0x5f8] sm:$0xff]
      %v370 = vld [vmem:[%s169 + $0x600] sm:$0xff]
      %v371 = vld [vmem:[%s169 + $0x608] sm:$0xff]
      %v372 = vld [vmem:[%s169 + $0x610] sm:$0xff]
      %v373 = vld [vmem:[%s169 + $0x618] sm:$0xff]
      %v374 = vld [vmem:[%s169 + $0x620] sm:$0xff]
      %v375 = vld [vmem:[%s169 + $0x628] sm:$0xff]
      %v376 = vld [vmem:[%s169 + $0x630] sm:$0xff]
      %v377 = vld [vmem:[%s169 + $0x638] sm:$0xff]
      %v378 = vld [vmem:[%s169 + $0x640] sm:$0xff]
      %v379 = vld [vmem:[%s169 + $0x648] sm:$0xff]
      %v380 = vld [vmem:[%s169 + $0x650] sm:$0xff]
      %v381 = vld [vmem:[%s169 + $0x658] sm:$0xff]
      %v382 = vld [vmem:[%s169 + $0x660] sm:$0xff]
      %v383 = vld [vmem:[%s169 + $0x668] sm:$0xff]
      %v384 = vld [vmem:[%s169 + $0x670] sm:$0xff]
      %v385 = vld [vmem:[%s169 + $0x678] sm:$0xff]
      %v386 = vld [vmem:[%s169 + $0x680] sm:$0xff]
      %v387 = vld [vmem:[%s169 + $0x688] sm:$0xff]
      %v388 = vld [vmem:[%s169 + $0x690] sm:$0xff]
      %v389 = vld [vmem:[%s169 + $0x698] sm:$0xff]
      %v390 = vld [vmem:[%s169 + $0x6a0] sm:$0xff]
      %v391 = vld [vmem:[%s169 + $0x6a8] sm:$0xff]
      %v392 = vld [vmem:[%s169 + $0x6b0] sm:$0xff]
      %v393 = vld [vmem:[%s169 + $0x6b8] sm:$0xff]
      %v394 = vld [vmem:[%s169 + $0x6c0] sm:$0xff]
      %v395 = vld [vmem:[%s169 + $0x6c8] sm:$0xff]
      %v396 = vld [vmem:[%s169 + $0x6d0] sm:$0xff]
      %v397 = vld [vmem:[%s169 + $0x6d8] sm:$0xff]
      %v398 = vld [vmem:[%s169 + $0x6e0] sm:$0xff]
      %v399 = vld [vmem:[%s169 + $0x6e8] sm:$0xff]
      %v400 = vld [vmem:[%s169 + $0x6f0] sm:$0xff]
      %v401 = vld [vmem:[%s169 + $0x6f8] sm:$0xff]
      %v402 = vld [vmem:[%s169 + $0x700] sm:$0xff]
      %v403 = vld [vmem:[%s169 + $0x708] sm:$0xff]
      %v404 = vld [vmem:[%s169 + $0x710] sm:$0xff]
      %v405 = vld [vmem:[%s169 + $0x718] sm:$0xff]
      %v406 = vld [vmem:[%s169 + $0x720] sm:$0xff]
      %v407 = vld [vmem:[%s169 + $0x728] sm:$0xff]
      %v408 = vld [vmem:[%s169 + $0x730] sm:$0xff]
      %v409 = vld [vmem:[%s169 + $0x738] sm:$0xff]
      %v410 = vld [vmem:[%s169 + $0x740] sm:$0xff]
      %v411 = vld [vmem:[%s169 + $0x748] sm:$0xff]
      %v412 = vld [vmem:[%s169 + $0x750] sm:$0xff]
      %v413 = vld [vmem:[%s169 + $0x758] sm:$0xff]
      %v414 = vld [vmem:[%s169 + $0x760] sm:$0xff]
      %v415 = vld [vmem:[%s169 + $0x768] sm:$0xff]
      %v416 = vld [vmem:[%s169 + $0x770] sm:$0xff]
      %v417 = vld [vmem:[%s169 + $0x778] sm:$0xff]
      %v418 = vld [vmem:[%s169 + $0x780] sm:$0xff]
      %v419 = vld [vmem:[%s169 + $0x788] sm:$0xff]
      %v420 = vld [vmem:[%s169 + $0x790] sm:$0xff]
      %v421 = vld [vmem:[%s169 + $0x798] sm:$0xff]
      %v422 = vld [vmem:[%s169 + $0x7a0] sm:$0xff]
      %v423 = vld [vmem:[%s169 + $0x7a8] sm:$0xff]
      %v424 = vld [vmem:[%s169 + $0x7b0] sm:$0xff]
      %v425 = vld [vmem:[%s169 + $0x7b8] sm:$0xff]
      %v426 = vld [vmem:[%s169 + $0x7c0] sm:$0xff]
      %v427 = vld [vmem:[%s169 + $0x7c8] sm:$0xff]
      %v428 = vld [vmem:[%s169 + $0x7d0] sm:$0xff]
      %v429 = vld [vmem:[%s169 + $0x7d8] sm:$0xff]
      %v430 = vld [vmem:[%s169 + $0x7e0] sm:$0xff]
      %v431 = vld [vmem:[%s169 + $0x7e8] sm:$0xff]
      %v432 = vld [vmem:[%s169 + $0x7f0] sm:$0xff]
      %v433 = vld [vmem:[%s169 + $0x7f8] sm:$0xff]
      %v434 = vld [vmem:[%s169 + $0x800] sm:$0xff]
      %v435 = vld [vmem:[%s169 + $0x808] sm:$0xff]
      %v436 = vld [vmem:[%s169 + $0x810] sm:$0xff]
      %v437 = vld [vmem:[%s169 + $0x818] sm:$0xff]
      %v438 = vld [vmem:[%s169 + $0x820] sm:$0xff]
      %v439 = vld [vmem:[%s169 + $0x828] sm:$0xff]
      %v440 = vld [vmem:[%s169 + $0x830] sm:$0xff]
      %v441 = vld [vmem:[%s169 + $0x838] sm:$0xff]
      %v442 = vld [vmem:[%s169 + $0x840] sm:$0xff]
      %v443 = vld [vmem:[%s169 + $0x848] sm:$0xff]
      %v444 = vld [vmem:[%s169 + $0x850] sm:$0xff]
      %v445 = vld [vmem:[%s169 + $0x858] sm:$0xff]
      %v446 = vld [vmem:[%s169 + $0x860] sm:$0xff]
      %v447 = vld [vmem:[%s169 + $0x868] sm:$0xff]
      %v448 = vld [vmem:[%s169 + $0x870] sm:$0xff]
      %v449 = vld [vmem:[%s169 + $0x878] sm:$0xff]
      %v450 = vld [vmem:[%s169 + $0x880] sm:$0xff]
      %v451 = vld [vmem:[%s169 + $0x888] sm:$0xff]
      %v452 = vld [vmem:[%s169 + $0x890] sm:$0xff]
      %v453 = vld [vmem:[%s169 + $0x898] sm:$0xff]
      %v454 = vld [vmem:[%s169 + $0x8a0] sm:$0xff]
      %v455 = vld [vmem:[%s169 + $0x8a8] sm:$0xff]
      %v456 = vld [vmem:[%s169 + $0x8b0] sm:$0xff]
      %v457 = vld [vmem:[%s169 + $0x8b8] sm:$0xff]
      %v458 = vld [vmem:[%s169 + $0x8c0] sm:$0xff]
      %v459 = vld [vmem:[%s169 + $0x8c8] sm:$0xff]
      %v460 = vld [vmem:[%s169 + $0x8d0] sm:$0xff]
      %v461 = vld [vmem:[%s169 + $0x8d8] sm:$0xff]
      %v462 = vld [vmem:[%s169 + $0x8e0] sm:$0xff]
      %v463 = vld [vmem:[%s169 + $0x8e8] sm:$0xff]
      %v464 = vld [vmem:[%s169 + $0x8f0] sm:$0xff]
      %v465 = vld [vmem:[%s169 + $0x8f8] sm:$0xff]
      %v466 = vld [vmem:[%s169 + $0x900] sm:$0xff]
      %v467 = vld [vmem:[%s169 + $0x908] sm:$0xff]
      %v468 = vld [vmem:[%s169 + $0x910] sm:$0xff]
      %v469 = vld [vmem:[%s169 + $0x918] sm:$0xff]
      %v470 = vld [vmem:[%s169 + $0x920] sm:$0xff]
      %v471 = vld [vmem:[%s169 + $0x928] sm:$0xff]
      %v472 = vld [vmem:[%s169 + $0x930] sm:$0xff]
      %v473 = vld [vmem:[%s169 + $0x938] sm:$0xff]
      %v474 = vld [vmem:[%s169 + $0x940] sm:$0xff]
      %v475 = vld [vmem:[%s169 + $0x948] sm:$0xff]
      %v476 = vld [vmem:[%s169 + $0x950] sm:$0xff]
      %v477 = vld [vmem:[%s169 + $0x958] sm:$0xff]
      %v478 = vld [vmem:[%s169 + $0x960] sm:$0xff]
      %v479 = vld [vmem:[%s169 + $0x968] sm:$0xff]
      %v480 = vld [vmem:[%s169 + $0x970] sm:$0xff]
      %v481 = vld [vmem:[%s169 + $0x978] sm:$0xff]
      %v482 = vld [vmem:[%s169 + $0x980] sm:$0xff]
      %v483 = vld [vmem:[%s169 + $0x988] sm:$0xff]
      %v484 = vld [vmem:[%s169 + $0x990] sm:$0xff]
      %v485 = vld [vmem:[%s169 + $0x998] sm:$0xff]
      %v486 = vld [vmem:[%s169 + $0x9a0] sm:$0xff]
      %v487 = vld [vmem:[%s169 + $0x9a8] sm:$0xff]
      %v488 = vld [vmem:[%s169 + $0x9b0] sm:$0xff]
      %v489 = vld [vmem:[%s169 + $0x9b8] sm:$0xff]
      %v490 = vld [vmem:[%s169 + $0x9c0] sm:$0xff]
      %v491 = vld [vmem:[%s169 + $0x9c8] sm:$0xff]
      %v492 = vld [vmem:[%s169 + $0x9d0] sm:$0xff]
      %v493 = vld [vmem:[%s169 + $0x9d8] sm:$0xff]
      %v494 = vld [vmem:[%s169 + $0x9e0] sm:$0xff]
      %v495 = vld [vmem:[%s169 + $0x9e8] sm:$0xff]
      %v496 = vld [vmem:[%s169 + $0x9f0] sm:$0xff]
      %v497 = vld [vmem:[%s169 + $0x9f8] sm:$0xff]
      %v498 = vld [vmem:[%s169 + $0xa00] sm:$0xff]
      %v499 = vld [vmem:[%s169 + $0xa08] sm:$0xff]
      %v500 = vld [vmem:[%s169 + $0xa10] sm:$0xff]
      %v501 = vld [vmem:[%s169 + $0xa18] sm:$0xff]
      %v502 = vld [vmem:[%s169 + $0xa20] sm:$0xff]
      %v503 = vld [vmem:[%s169 + $0xa28] sm:$0xff]
      %v504 = vld [vmem:[%s169 + $0xa30] sm:$0xff]
      %v505 = vld [vmem:[%s169 + $0xa38] sm:$0xff]
      %v506 = vld [vmem:[%s169 + $0xa40] sm:$0xff]
      %v507 = vld [vmem:[%s169 + $0xa48] sm:$0xff]
      %v508 = vld [vmem:[%s169 + $0xa50] sm:$0xff]
      %v509 = vld [vmem:[%s169 + $0xa58] sm:$0xff]
      %v510 = vld [vmem:[%s169 + $0xa60] sm:$0xff]
      %v511 = vld [vmem:[%s169 + $0xa68] sm:$0xff]
      %v512 = vld [vmem:[%s169 + $0xa70] sm:$0xff]
      %v513 = vld [vmem:[%s169 + $0xa78] sm:$0xff]
      %v514 = vld [vmem:[%s169 + $0xa80] sm:$0xff]
      %v515 = vld [vmem:[%s169 + $0xa88] sm:$0xff]
      %v516 = vld [vmem:[%s169 + $0xa90] sm:$0xff]
      %v517 = vld [vmem:[%s169 + $0xa98] sm:$0xff]
      %v518 = vld [vmem:[%s169 + $0xaa0] sm:$0xff]
      %v519 = vld [vmem:[%s169 + $0xaa8] sm:$0xff]
      %v520 = vld [vmem:[%s169 + $0xab0] sm:$0xff]
      %v521 = vld [vmem:[%s169 + $0xab8] sm:$0xff]
      %v522 = vld [vmem:[%s169 + $0xac0] sm:$0xff]
      %v523 = vld [vmem:[%s169 + $0xac8] sm:$0xff]
      %v524 = vld [vmem:[%s169 + $0xad0] sm:$0xff]
      %v525 = vld [vmem:[%s169 + $0xad8] sm:$0xff]
      %v526 = vld [vmem:[%s169 + $0xae0] sm:$0xff]
      %v527 = vld [vmem:[%s169 + $0xae8] sm:$0xff]
      %v528 = vld [vmem:[%s169 + $0xaf0] sm:$0xff]
      %v529 = vld [vmem:[%s169 + $0xaf8] sm:$0xff]
      %v530 = vld [vmem:[%s169 + $0xb00] sm:$0xff]
      %v531 = vld [vmem:[%s169 + $0xb08] sm:$0xff]
      %v532 = vld [vmem:[%s169 + $0xb10] sm:$0xff]
      %v533 = vld [vmem:[%s169 + $0xb18] sm:$0xff]
      %v534 = vld [vmem:[%s169 + $0xb20] sm:$0xff]
      %v535 = vld [vmem:[%s169 + $0xb28] sm:$0xff]
      %v536 = vld [vmem:[%s169 + $0xb30] sm:$0xff]
      %v537 = vld [vmem:[%s169 + $0xb38] sm:$0xff]
      %v538 = vld [vmem:[%s169 + $0xb40] sm:$0xff]
      %v539 = vld [vmem:[%s169 + $0xb48] sm:$0xff]
      %v540 = vld [vmem:[%s169 + $0xb50] sm:$0xff]
      %v541 = vld [vmem:[%s169 + $0xb58] sm:$0xff]
      %v542 = vld [vmem:[%s169 + $0xb60] sm:$0xff]
      %v543 = vld [vmem:[%s169 + $0xb68] sm:$0xff]
      %v544 = vld [vmem:[%s169 + $0xb70] sm:$0xff]
      %v545 = vld [vmem:[%s169 + $0xb78] sm:$0xff]
      %v546 = vld [vmem:[%s169 + $0xb80] sm:$0xff]
      %v547 = vld [vmem:[%s169 + $0xb88] sm:$0xff]
      %v548 = vld [vmem:[%s169 + $0xb90] sm:$0xff]
      %v549 = vld [vmem:[%s169 + $0xb98] sm:$0xff]
      %v550 = vld [vmem:[%s169 + $0xba0] sm:$0xff]
      %v551 = vld [vmem:[%s169 + $0xba8] sm:$0xff]
      %v552 = vld [vmem:[%s169 + $0xbb0] sm:$0xff]
      %v553 = vld [vmem:[%s169 + $0xbb8] sm:$0xff]
      %v554 = vld [vmem:[%s169 + $0xbc0] sm:$0xff]
      %v555 = vld [vmem:[%s169 + $0xbc8] sm:$0xff]
      %v556 = vld [vmem:[%s169 + $0xbd0] sm:$0xff]
      %v557 = vld [vmem:[%s169 + $0xbd8] sm:$0xff]
      %v558 = vld [vmem:[%s169 + $0xbe0] sm:$0xff]
      %v559 = vld [vmem:[%s169 + $0xbe8] sm:$0xff]
      %v560 = vld [vmem:[%s169 + $0xbf0] sm:$0xff]
      %v561 = vld [vmem:[%s169 + $0xbf8] sm:$0xff]
      %v562 = vld [vmem:[%s169 + $0xc00] sm:$0xff]
      %v563 = vld [vmem:[%s169 + $0xc08] sm:$0xff]
      %v564 = vld [vmem:[%s169 + $0xc10] sm:$0xff]
      %v565 = vld [vmem:[%s169 + $0xc18] sm:$0xff]
      %v566 = vld [vmem:[%s169 + $0xc20] sm:$0xff]
      %v567 = vld [vmem:[%s169 + $0xc28] sm:$0xff]
      %v568 = vld [vmem:[%s169 + $0xc30] sm:$0xff]
      %v569 = vld [vmem:[%s169 + $0xc38] sm:$0xff]
      %v570 = vld [vmem:[%s169 + $0xc40] sm:$0xff]
      %v571 = vld [vmem:[%s169 + $0xc48] sm:$0xff]
      %v572 = vld [vmem:[%s169 + $0xc50] sm:$0xff]
      %v573 = vld [vmem:[%s169 + $0xc58] sm:$0xff]
      %v574 = vld [vmem:[%s169 + $0xc60] sm:$0xff]
      %v575 = vld [vmem:[%s169 + $0xc68] sm:$0xff]
      %v576 = vld [vmem:[%s169 + $0xc70] sm:$0xff]
      %v577 = vld [vmem:[%s169 + $0xc78] sm:$0xff]
      %v578 = vld [vmem:[%s169 + $0xc80] sm:$0xff]
      %v579 = vld [vmem:[%s169 + $0xc88] sm:$0xff]
      %v580 = vld [vmem:[%s169 + $0xc90] sm:$0xff]
      %v581 = vld [vmem:[%s169 + $0xc98] sm:$0xff]
      %v582 = vld [vmem:[%s169 + $0xca0] sm:$0xff]
      %v583 = vld [vmem:[%s169 + $0xca8] sm:$0xff]
      %v584 = vld [vmem:[%s169 + $0xcb0] sm:$0xff]
      %v585 = vld [vmem:[%s169 + $0xcb8] sm:$0xff]
      %v586 = vld [vmem:[%s169 + $0xcc0] sm:$0xff]
      %v587 = vld [vmem:[%s169 + $0xcc8] sm:$0xff]
      %v588 = vld [vmem:[%s169 + $0xcd0] sm:$0xff]
      %v589 = vld [vmem:[%s169 + $0xcd8] sm:$0xff]
      %v590 = vld [vmem:[%s169 + $0xce0] sm:$0xff]
      %v591 = vld [vmem:[%s169 + $0xce8] sm:$0xff]
      %v592 = vld [vmem:[%s169 + $0xcf0] sm:$0xff]
      %v593 = vld [vmem:[%s169 + $0xcf8] sm:$0xff]
      %v594 = vld [vmem:[%s169 + $0xd00] sm:$0xff]
      %v595 = vld [vmem:[%s169 + $0xd08] sm:$0xff]
      %v596 = vld [vmem:[%s169 + $0xd10] sm:$0xff]
      %v597 = vld [vmem:[%s169 + $0xd18] sm:$0xff]
      %v598 = vld [vmem:[%s169 + $0xd20] sm:$0xff]
      %v599 = vld [vmem:[%s169 + $0xd28] sm:$0xff]
      %v600 = vld [vmem:[%s169 + $0xd30] sm:$0xff]
      %v601 = vld [vmem:[%s169 + $0xd38] sm:$0xff]
      %v602 = vld [vmem:[%s169 + $0xd40] sm:$0xff]
      %v603 = vld [vmem:[%s169 + $0xd48] sm:$0xff]
      %v604 = vld [vmem:[%s169 + $0xd50] sm:$0xff]
      %v605 = vld [vmem:[%s169 + $0xd58] sm:$0xff]
      %v606 = vld [vmem:[%s169 + $0xd60] sm:$0xff]
      %v607 = vld [vmem:[%s169 + $0xd68] sm:$0xff]
      %v608 = vld [vmem:[%s169 + $0xd70] sm:$0xff]
      %v609 = vld [vmem:[%s169 + $0xd78] sm:$0xff]
      %v610 = vld [vmem:[%s169 + $0xd80] sm:$0xff]
      %v611 = vld [vmem:[%s169 + $0xd88] sm:$0xff]
      %v612 = vld [vmem:[%s169 + $0xd90] sm:$0xff]
      %v613 = vld [vmem:[%s169 + $0xd98] sm:$0xff]
      %v614 = vld [vmem:[%s169 + $0xda0] sm:$0xff]
      %v615 = vld [vmem:[%s169 + $0xda8] sm:$0xff]
      %v616 = vld [vmem:[%s169 + $0xdb0] sm:$0xff]
      %v617 = vld [vmem:[%s169 + $0xdb8] sm:$0xff]
      %v618 = vld [vmem:[%s169 + $0xdc0] sm:$0xff]
      %v619 = vld [vmem:[%s169 + $0xdc8] sm:$0xff]
      %v620 = vld [vmem:[%s169 + $0xdd0] sm:$0xff]
      %v621 = vld [vmem:[%s169 + $0xdd8] sm:$0xff]
      %v622 = vld [vmem:[%s169 + $0xde0] sm:$0xff]
      %v623 = vld [vmem:[%s169 + $0xde8] sm:$0xff]
      %v624 = vld [vmem:[%s169 + $0xdf0] sm:$0xff]
      %v625 = vld [vmem:[%s169 + $0xdf8] sm:$0xff]
      %v626 = vld [vmem:[%s169 + $0xe00] sm:$0xff]
      %v627 = vld [vmem:[%s169 + $0xe08] sm:$0xff]
      %v628 = vld [vmem:[%s169 + $0xe10] sm:$0xff]
      %v629 = vld [vmem:[%s169 + $0xe18] sm:$0xff]
      %v630 = vld [vmem:[%s169 + $0xe20] sm:$0xff]
      %v631 = vld [vmem:[%s169 + $0xe28] sm:$0xff]
      %v632 = vld [vmem:[%s169 + $0xe30] sm:$0xff]
      %v633 = vld [vmem:[%s169 + $0xe38] sm:$0xff]
      %v634 = vld [vmem:[%s169 + $0xe40] sm:$0xff]
      %v635 = vld [vmem:[%s169 + $0xe48] sm:$0xff]
      %v636 = vld [vmem:[%s169 + $0xe50] sm:$0xff]
      %v637 = vld [vmem:[%s169 + $0xe58] sm:$0xff]
      %v638 = vld [vmem:[%s169 + $0xe60] sm:$0xff]
      %v639 = vld [vmem:[%s169 + $0xe68] sm:$0xff]
      %v640 = vld [vmem:[%s169 + $0xe70] sm:$0xff]
      %v641 = vld [vmem:[%s169 + $0xe78] sm:$0xff]
      %v642 = vld [vmem:[%s169 + $0xe80] sm:$0xff]
      %v643 = vld [vmem:[%s169 + $0xe88] sm:$0xff]
      %v644 = vld [vmem:[%s169 + $0xe90] sm:$0xff]
      %v645 = vld [vmem:[%s169 + $0xe98] sm:$0xff]
      %v646 = vld [vmem:[%s169 + $0xea0] sm:$0xff]
      %v647 = vld [vmem:[%s169 + $0xea8] sm:$0xff]
      %v648 = vld [vmem:[%s169 + $0xeb0] sm:$0xff]
      %v649 = vld [vmem:[%s169 + $0xeb8] sm:$0xff]
      %v650 = vld [vmem:[%s169 + $0xec0] sm:$0xff]
      %v651 = vld [vmem:[%s169 + $0xec8] sm:$0xff]
      %v652 = vld [vmem:[%s169 + $0xed0] sm:$0xff]
      %v653 = vld [vmem:[%s169 + $0xed8] sm:$0xff]
      %v654 = vld [vmem:[%s169 + $0xee0] sm:$0xff]
      %v655 = vld [vmem:[%s169 + $0xee8] sm:$0xff]
      %v656 = vld [vmem:[%s169 + $0xef0] sm:$0xff]
      %v657 = vld [vmem:[%s169 + $0xef8] sm:$0xff]
      %v658 = vld [vmem:[%s169 + $0xf00] sm:$0xff]
      %v659 = vld [vmem:[%s169 + $0xf08] sm:$0xff]
      %v660 = vld [vmem:[%s169 + $0xf10] sm:$0xff]
      %v661 = vld [vmem:[%s169 + $0xf18] sm:$0xff]
      %v662 = vld [vmem:[%s169 + $0xf20] sm:$0xff]
      %v663 = vld [vmem:[%s169 + $0xf28] sm:$0xff]
      %v664 = vld [vmem:[%s169 + $0xf30] sm:$0xff]
      %v665 = vld [vmem:[%s169 + $0xf38] sm:$0xff]
      %v666 = vld [vmem:[%s169 + $0xf40] sm:$0xff]
      %v667 = vld [vmem:[%s169 + $0xf48] sm:$0xff]
      %v668 = vld [vmem:[%s169 + $0xf50] sm:$0xff]
      %v669 = vld [vmem:[%s169 + $0xf58] sm:$0xff]
      %v670 = vld [vmem:[%s169 + $0xf60] sm:$0xff]
      %v671 = vld [vmem:[%s169 + $0xf68] sm:$0xff]
      %v672 = vld [vmem:[%s169 + $0xf70] sm:$0xff]
      %v673 = vld [vmem:[%s169 + $0xf78] sm:$0xff]
      %v674 = vld [vmem:[%s169 + $0xf80] sm:$0xff]
      %v675 = vld [vmem:[%s169 + $0xf88] sm:$0xff]
      %v676 = vld [vmem:[%s169 + $0xf90] sm:$0xff]
      %v677 = vld [vmem:[%s169 + $0xf98] sm:$0xff]
      %v678 = vld [vmem:[%s169 + $0xfa0] sm:$0xff]
      %v679 = vld [vmem:[%s169 + $0xfa8] sm:$0xff]
      %v680 = vld [vmem:[%s169 + $0xfb0] sm:$0xff]
      %v681 = vld [vmem:[%s169 + $0xfb8] sm:$0xff]
      %v682 = vld [vmem:[%s169 + $0xfc0] sm:$0xff]
      %v683 = vld [vmem:[%s169 + $0xfc8] sm:$0xff]
      %v684 = vld [vmem:[%s169 + $0xfd0] sm:$0xff]
      %v685 = vld [vmem:[%s169 + $0xfd8] sm:$0xff]
      %v686 = vld [vmem:[%s169 + $0xfe0] sm:$0xff]
      %v687 = vld [vmem:[%s169 + $0xfe8] sm:$0xff]
      %v688 = vld [vmem:[%s169 + $0xff0] sm:$0xff]
      %v689 = vld [vmem:[%s169 + $0xff8] sm:$0xff]
      %v690 = vld [vmem:[%s1] sm:$0xf]
      %v691 = vld [vmem:[%s1 + $0x4] sm:$0xf]
      %v692 = vld [vmem:[%s1 + $0x8] sm:$0xf]
      %v693 = vld [vmem:[%s1 + $0xc] sm:$0xf]
      %v694 = vld [vmem:[%s1 + $0x10] sm:$0xf]
      %v695 = vld [vmem:[%s1 + $0x14] sm:$0xf]
      %v696 = vld [vmem:[%s1 + $0x18] sm:$0xf]
      %v697 = vld [vmem:[%s1 + $0x1c] sm:$0xf]
      %v698 = vld [vmem:[%s1 + $0x20] sm:$0xf]
      %v699 = vld [vmem:[%s1 + $0x24] sm:$0xf]
      %v700 = vld [vmem:[%s1 + $0x28] sm:$0xf]
      %v701 = vld [vmem:[%s1 + $0x2c] sm:$0xf]
      %v702 = vld [vmem:[%s1 + $0x30] sm:$0xf]
      %v703 = vld [vmem:[%s1 + $0x34] sm:$0xf]
      %v704 = vld [vmem:[%s1 + $0x38] sm:$0xf]
      %v705 = vld [vmem:[%s1 + $0x3c] sm:$0xf]
      %v706 = vld [vmem:[%s1 + $0x40] sm:$0xf]
      %v707 = vld [vmem:[%s1 + $0x44] sm:$0xf]
      %v708 = vld [vmem:[%s1 + $0x48] sm:$0xf]
      %v709 = vld [vmem:[%s1 + $0x4c] sm:$0xf]
      %v710 = vld [vmem:[%s1 + $0x50] sm:$0xf]
      %v711 = vld [vmem:[%s1 + $0x54] sm:$0xf]
      %v712 = vld [vmem:[%s1 + $0x58] sm:$0xf]
      %v713 = vld [vmem:[%s1 + $0x5c] sm:$0xf]
      %v714 = vld [vmem:[%s1 + $0x60] sm:$0xf]
      %v715 = vld [vmem:[%s1 + $0x64] sm:$0xf]
      %v716 = vld [vmem:[%s1 + $0x68] sm:$0xf]
      %v717 = vld [vmem:[%s1 + $0x6c] sm:$0xf]
      %v718 = vld [vmem:[%s1 + $0x70] sm:$0xf]
      %v719 = vld [vmem:[%s1 + $0x74] sm:$0xf]
      %v720 = vld [vmem:[%s1 + $0x78] sm:$0xf]
      %v721 = vld [vmem:[%s1 + $0x7c] sm:$0xf]
      %v722 = vld [vmem:[%s1 + $0x80] sm:$0xf]
      %v723 = vld [vmem:[%s1 + $0x84] sm:$0xf]
      %v724 = vld [vmem:[%s1 + $0x88] sm:$0xf]
      %v725 = vld [vmem:[%s1 + $0x8c] sm:$0xf]
      %v726 = vld [vmem:[%s1 + $0x90] sm:$0xf]
      %v727 = vld [vmem:[%s1 + $0x94] sm:$0xf]
      %v728 = vld [vmem:[%s1 + $0x98] sm:$0xf]
      %v729 = vld [vmem:[%s1 + $0x9c] sm:$0xf]
      %v730 = vld [vmem:[%s1 + $0xa0] sm:$0xf]
      %v731 = vld [vmem:[%s1 + $0xa4] sm:$0xf]
      %v732 = vld [vmem:[%s1 + $0xa8] sm:$0xf]
      %v733 = vld [vmem:[%s1 + $0xac] sm:$0xf]
      %v734 = vld [vmem:[%s1 + $0xb0] sm:$0xf]
      %v735 = vld [vmem:[%s1 + $0xb4] sm:$0xf]
      %v736 = vld [vmem:[%s1 + $0xb8] sm:$0xf]
      %v737 = vld [vmem:[%s1 + $0xbc] sm:$0xf]
      %v738 = vld [vmem:[%s1 + $0xc0] sm:$0xf]
      %v739 = vld [vmem:[%s1 + $0xc4] sm:$0xf]
      %v740 = vld [vmem:[%s1 + $0xc8] sm:$0xf]
      %v741 = vld [vmem:[%s1 + $0xcc] sm:$0xf]
      %v742 = vld [vmem:[%s1 + $0xd0] sm:$0xf]
      %v743 = vld [vmem:[%s1 + $0xd4] sm:$0xf]
      %v744 = vld [vmem:[%s1 + $0xd8] sm:$0xf]
      %v745 = vld [vmem:[%s1 + $0xdc] sm:$0xf]
      %v746 = vld [vmem:[%s1 + $0xe0] sm:$0xf]
      %v747 = vld [vmem:[%s1 + $0xe4] sm:$0xf]
      %v748 = vld [vmem:[%s1 + $0xe8] sm:$0xf]
      %v749 = vld [vmem:[%s1 + $0xec] sm:$0xf]
      %v750 = vld [vmem:[%s1 + $0xf0] sm:$0xf]
      %v751 = vld [vmem:[%s1 + $0xf4] sm:$0xf]
      %v752 = vld [vmem:[%s1 + $0xf8] sm:$0xf]
      %v753 = vld [vmem:[%s1 + $0xfc] sm:$0xf]
      %v754 = vld [vmem:[%s1 + $0x100] sm:$0xf]
      %v755 = vld [vmem:[%s1 + $0x104] sm:$0xf]
      %v756 = vld [vmem:[%s1 + $0x108] sm:$0xf]
      %v757 = vld [vmem:[%s1 + $0x10c] sm:$0xf]
      %v758 = vld [vmem:[%s1 + $0x110] sm:$0xf]
      %v759 = vld [vmem:[%s1 + $0x114] sm:$0xf]
      %v760 = vld [vmem:[%s1 + $0x118] sm:$0xf]
      %v761 = vld [vmem:[%s1 + $0x11c] sm:$0xf]
      %v762 = vld [vmem:[%s1 + $0x120] sm:$0xf]
      %v763 = vld [vmem:[%s1 + $0x124] sm:$0xf]
      %v764 = vld [vmem:[%s1 + $0x128] sm:$0xf]
      %v765 = vld [vmem:[%s1 + $0x12c] sm:$0xf]
      %v766 = vld [vmem:[%s1 + $0x130] sm:$0xf]
      %v767 = vld [vmem:[%s1 + $0x134] sm:$0xf]
      %v768 = vld [vmem:[%s1 + $0x138] sm:$0xf]
      %v769 = vld [vmem:[%s1 + $0x13c] sm:$0xf]
      %v770 = vld [vmem:[%s1 + $0x140] sm:$0xf]
      %v771 = vld [vmem:[%s1 + $0x144] sm:$0xf]
      %v772 = vld [vmem:[%s1 + $0x148] sm:$0xf]
      %v773 = vld [vmem:[%s1 + $0x14c] sm:$0xf]
      %v774 = vld [vmem:[%s1 + $0x150] sm:$0xf]
      %v775 = vld [vmem:[%s1 + $0x154] sm:$0xf]
      %v776 = vld [vmem:[%s1 + $0x158] sm:$0xf]
      %v777 = vld [vmem:[%s1 + $0x15c] sm:$0xf]
      %v778 = vld [vmem:[%s1 + $0x160] sm:$0xf]
      %v779 = vld [vmem:[%s1 + $0x164] sm:$0xf]
      %v780 = vld [vmem:[%s1 + $0x168] sm:$0xf]
      %v781 = vld [vmem:[%s1 + $0x16c] sm:$0xf]
      %v782 = vld [vmem:[%s1 + $0x170] sm:$0xf]
      %v783 = vld [vmem:[%s1 + $0x174] sm:$0xf]
      %v784 = vld [vmem:[%s1 + $0x178] sm:$0xf]
      %v785 = vld [vmem:[%s1 + $0x17c] sm:$0xf]
      %v786 = vld [vmem:[%s1 + $0x180] sm:$0xf]
      %v787 = vld [vmem:[%s1 + $0x184] sm:$0xf]
      %v788 = vld [vmem:[%s1 + $0x188] sm:$0xf]
      %v789 = vld [vmem:[%s1 + $0x18c] sm:$0xf]
      %v790 = vld [vmem:[%s1 + $0x190] sm:$0xf]
      %v791 = vld [vmem:[%s1 + $0x194] sm:$0xf]
      %v792 = vld [vmem:[%s1 + $0x198] sm:$0xf]
      %v793 = vld [vmem:[%s1 + $0x19c] sm:$0xf]
      %v794 = vld [vmem:[%s1 + $0x1a0] sm:$0xf]
      %v795 = vld [vmem:[%s1 + $0x1a4] sm:$0xf]
      %v796 = vld [vmem:[%s1 + $0x1a8] sm:$0xf]
      %v797 = vld [vmem:[%s1 + $0x1ac] sm:$0xf]
      %v798 = vld [vmem:[%s1 + $0x1b0] sm:$0xf]
      %v799 = vld [vmem:[%s1 + $0x1b4] sm:$0xf]
      %v800 = vld [vmem:[%s1 + $0x1b8] sm:$0xf]
      %v801 = vld [vmem:[%s1 + $0x1bc] sm:$0xf]
      %v802 = vld [vmem:[%s1 + $0x1c0] sm:$0xf]
      %v803 = vld [vmem:[%s1 + $0x1c4] sm:$0xf]
      %v804 = vld [vmem:[%s1 + $0x1c8] sm:$0xf]
      %v805 = vld [vmem:[%s1 + $0x1cc] sm:$0xf]
      %v806 = vld [vmem:[%s1 + $0x1d0] sm:$0xf]
      %v807 = vld [vmem:[%s1 + $0x1d4] sm:$0xf]
      %v808 = vld [vmem:[%s1 + $0x1d8] sm:$0xf]
      %v809 = vld [vmem:[%s1 + $0x1dc] sm:$0xf]
      %v810 = vld [vmem:[%s1 + $0x1e0] sm:$0xf]
      %v811 = vld [vmem:[%s1 + $0x1e4] sm:$0xf]
      %v812 = vld [vmem:[%s1 + $0x1e8] sm:$0xf]
      %v813 = vld [vmem:[%s1 + $0x1ec] sm:$0xf]
      %v814 = vld [vmem:[%s1 + $0x1f0] sm:$0xf]
      %v815 = vld [vmem:[%s1 + $0x1f4] sm:$0xf]
      %v816 = vld [vmem:[%s1 + $0x1f8] sm:$0xf]
      %v817 = vld [vmem:[%s1 + $0x1fc] sm:$0xf]
      %v818 = vld [vmem:[%s2] sm:$0x1]
      %v820 = vlaneseq
      %v821 = vshrl.u32 %v820, 7
      %v822 = vsub.s32 0, %v821
      %v823 = vrot.slane %v818, %v822
      %v1337 = vunpack.c.l.b16 %v178
      %v1338 = vunpack.c.h.b16 %v178
      %v1339 = vunpack.c.l.b16 %v179
      %v1340 = vunpack.c.h.b16 %v179
      %v1341 = vunpack.c.l.b16 %v180
      %v1342 = vunpack.c.h.b16 %v180
      %v1343 = vunpack.c.l.b16 %v181
      %v1344 = vunpack.c.h.b16 %v181
      %v1345 = vunpack.c.l.b16 %v182
      %v1346 = vunpack.c.h.b16 %v182
      %v1347 = vunpack.c.l.b16 %v183
      %v1348 = vunpack.c.h.b16 %v183
      %v1349 = vunpack.c.l.b16 %v184
      %v1350 = vunpack.c.h.b16 %v184
      %v1351 = vunpack.c.l.b16 %v185
      %v1352 = vunpack.c.h.b16 %v185
      %v1353 = vunpack.c.l.b16 %v186
      %v1354 = vunpack.c.h.b16 %v186
      %v1355 = vunpack.c.l.b16 %v187
      %v1356 = vunpack.c.h.b16 %v187
      %v1357 = vunpack.c.l.b16 %v188
      %v1358 = vunpack.c.h.b16 %v188
      %v1359 = vunpack.c.l.b16 %v189
      %v1360 = vunpack.c.h.b16 %v189
      %v1361 = vunpack.c.l.b16 %v190
      %v1362 = vunpack.c.h.b16 %v190
      %v1363 = vunpack.c.l.b16 %v191
      %v1364 = vunpack.c.h.b16 %v191
      %v1365 = vunpack.c.l.b16 %v192
      %v1366 = vunpack.c.h.b16 %v192
      %v1367 = vunpack.c.l.b16 %v193
      %v1368 = vunpack.c.h.b16 %v193
      %v1369 = vunpack.c.l.b16 %v194
      %v1370 = vunpack.c.h.b16 %v194
      %v1371 = vunpack.c.l.b16 %v195
      %v1372 = vunpack.c.h.b16 %v195
      %v1373 = vunpack.c.l.b16 %v196
      %v1374 = vunpack.c.h.b16 %v196
      %v1375 = vunpack.c.l.b16 %v197
      %v1376 = vunpack.c.h.b16 %v197
      %v1377 = vunpack.c.l.b16 %v198
      %v1378 = vunpack.c.h.b16 %v198
      %v1379 = vunpack.c.l.b16 %v199
      %v1380 = vunpack.c.h.b16 %v199
      %v1381 = vunpack.c.l.b16 %v200
      %v1382 = vunpack.c.h.b16 %v200
      %v1383 = vunpack.c.l.b16 %v201
      %v1384 = vunpack.c.h.b16 %v201
      %v1385 = vunpack.c.l.b16 %v202
      %v1386 = vunpack.c.h.b16 %v202
      %v1387 = vunpack.c.l.b16 %v203
      %v1388 = vunpack.c.h.b16 %v203
      %v1389 = vunpack.c.l.b16 %v204
      %v1390 = vunpack.c.h.b16 %v204
      %v1391 = vunpack.c.l.b16 %v205
      %v1392 = vunpack.c.h.b16 %v205
      %v1393 = vunpack.c.l.b16 %v206
      %v1394 = vunpack.c.h.b16 %v206
      %v1395 = vunpack.c.l.b16 %v207
      %v1396 = vunpack.c.h.b16 %v207
      %v1397 = vunpack.c.l.b16 %v208
      %v1398 = vunpack.c.h.b16 %v208
      %v1399 = vunpack.c.l.b16 %v209
      %v1400 = vunpack.c.h.b16 %v209
      %v1401 = vunpack.c.l.b16 %v210
      %v1402 = vunpack.c.h.b16 %v210
      %v1403 = vunpack.c.l.b16 %v211
      %v1404 = vunpack.c.h.b16 %v211
      %v1405 = vunpack.c.l.b16 %v212
      %v1406 = vunpack.c.h.b16 %v212
      %v1407 = vunpack.c.l.b16 %v213
      %v1408 = vunpack.c.h.b16 %v213
      %v1409 = vunpack.c.l.b16 %v214
      %v1410 = vunpack.c.h.b16 %v214
      %v1411 = vunpack.c.l.b16 %v215
      %v1412 = vunpack.c.h.b16 %v215
      %v1413 = vunpack.c.l.b16 %v216
      %v1414 = vunpack.c.h.b16 %v216
      %v1415 = vunpack.c.l.b16 %v217
      %v1416 = vunpack.c.h.b16 %v217
      %v1417 = vunpack.c.l.b16 %v218
      %v1418 = vunpack.c.h.b16 %v218
      %v1419 = vunpack.c.l.b16 %v219
      %v1420 = vunpack.c.h.b16 %v219
      %v1421 = vunpack.c.l.b16 %v220
      %v1422 = vunpack.c.h.b16 %v220
      %v1423 = vunpack.c.l.b16 %v221
      %v1424 = vunpack.c.h.b16 %v221
      %v1425 = vunpack.c.l.b16 %v222
      %v1426 = vunpack.c.h.b16 %v222
      %v1427 = vunpack.c.l.b16 %v223
      %v1428 = vunpack.c.h.b16 %v223
      %v1429 = vunpack.c.l.b16 %v224
      %v1430 = vunpack.c.h.b16 %v224
      %v1431 = vunpack.c.l.b16 %v225
      %v1432 = vunpack.c.h.b16 %v225
      %v1433 = vunpack.c.l.b16 %v226
      %v1434 = vunpack.c.h.b16 %v226
      %v1435 = vunpack.c.l.b16 %v227
      %v1436 = vunpack.c.h.b16 %v227
      %v1437 = vunpack.c.l.b16 %v228
      %v1438 = vunpack.c.h.b16 %v228
      %v1439 = vunpack.c.l.b16 %v229
      %v1440 = vunpack.c.h.b16 %v229
      %v1441 = vunpack.c.l.b16 %v230
      %v1442 = vunpack.c.h.b16 %v230
      %v1443 = vunpack.c.l.b16 %v231
      %v1444 = vunpack.c.h.b16 %v231
      %v1445 = vunpack.c.l.b16 %v232
      %v1446 = vunpack.c.h.b16 %v232
      %v1447 = vunpack.c.l.b16 %v233
      %v1448 = vunpack.c.h.b16 %v233
      %v1449 = vunpack.c.l.b16 %v234
      %v1450 = vunpack.c.h.b16 %v234
      %v1451 = vunpack.c.l.b16 %v235
      %v1452 = vunpack.c.h.b16 %v235
      %v1453 = vunpack.c.l.b16 %v236
      %v1454 = vunpack.c.h.b16 %v236
      %v1455 = vunpack.c.l.b16 %v237
      %v1456 = vunpack.c.h.b16 %v237
      %v1457 = vunpack.c.l.b16 %v238
      %v1458 = vunpack.c.h.b16 %v238
      %v1459 = vunpack.c.l.b16 %v239
      %v1460 = vunpack.c.h.b16 %v239
      %v1461 = vunpack.c.l.b16 %v240
      %v1462 = vunpack.c.h.b16 %v240
      %v1463 = vunpack.c.l.b16 %v241
      %v1464 = vunpack.c.h.b16 %v241
      %v1465 = vunpack.c.l.b16 %v242
      %v1466 = vunpack.c.h.b16 %v242
      %v1467 = vunpack.c.l.b16 %v243
      %v1468 = vunpack.c.h.b16 %v243
      %v1469 = vunpack.c.l.b16 %v244
      %v1470 = vunpack.c.h.b16 %v244
      %v1471 = vunpack.c.l.b16 %v245
      %v1472 = vunpack.c.h.b16 %v245
      %v1473 = vunpack.c.l.b16 %v246
      %v1474 = vunpack.c.h.b16 %v246
      %v1475 = vunpack.c.l.b16 %v247
      %v1476 = vunpack.c.h.b16 %v247
      %v1477 = vunpack.c.l.b16 %v248
      %v1478 = vunpack.c.h.b16 %v248
      %v1479 = vunpack.c.l.b16 %v249
      %v1480 = vunpack.c.h.b16 %v249
      %v1481 = vunpack.c.l.b16 %v250
      %v1482 = vunpack.c.h.b16 %v250
      %v1483 = vunpack.c.l.b16 %v251
      %v1484 = vunpack.c.h.b16 %v251
      %v1485 = vunpack.c.l.b16 %v252
      %v1486 = vunpack.c.h.b16 %v252
      %v1487 = vunpack.c.l.b16 %v253
      %v1488 = vunpack.c.h.b16 %v253
      %v1489 = vunpack.c.l.b16 %v254
      %v1490 = vunpack.c.h.b16 %v254
      %v1491 = vunpack.c.l.b16 %v255
      %v1492 = vunpack.c.h.b16 %v255
      %v1493 = vunpack.c.l.b16 %v256
      %v1494 = vunpack.c.h.b16 %v256
      %v1495 = vunpack.c.l.b16 %v257
      %v1496 = vunpack.c.h.b16 %v257
      %v1497 = vunpack.c.l.b16 %v258
      %v1498 = vunpack.c.h.b16 %v258
      %v1499 = vunpack.c.l.b16 %v259
      %v1500 = vunpack.c.h.b16 %v259
      %v1501 = vunpack.c.l.b16 %v260
      %v1502 = vunpack.c.h.b16 %v260
      %v1503 = vunpack.c.l.b16 %v261
      %v1504 = vunpack.c.h.b16 %v261
      %v1505 = vunpack.c.l.b16 %v262
      %v1506 = vunpack.c.h.b16 %v262
      %v1507 = vunpack.c.l.b16 %v263
      %v1508 = vunpack.c.h.b16 %v263
      %v1509 = vunpack.c.l.b16 %v264
      %v1510 = vunpack.c.h.b16 %v264
      %v1511 = vunpack.c.l.b16 %v265
      %v1512 = vunpack.c.h.b16 %v265
      %v1513 = vunpack.c.l.b16 %v266
      %v1514 = vunpack.c.h.b16 %v266
      %v1515 = vunpack.c.l.b16 %v267
      %v1516 = vunpack.c.h.b16 %v267
      %v1517 = vunpack.c.l.b16 %v268
      %v1518 = vunpack.c.h.b16 %v268
      %v1519 = vunpack.c.l.b16 %v269
      %v1520 = vunpack.c.h.b16 %v269
      %v1521 = vunpack.c.l.b16 %v270
      %v1522 = vunpack.c.h.b16 %v270
      %v1523 = vunpack.c.l.b16 %v271
      %v1524 = vunpack.c.h.b16 %v271
      %v1525 = vunpack.c.l.b16 %v272
      %v1526 = vunpack.c.h.b16 %v272
      %v1527 = vunpack.c.l.b16 %v273
      %v1528 = vunpack.c.h.b16 %v273
      %v1529 = vunpack.c.l.b16 %v274
      %v1530 = vunpack.c.h.b16 %v274
      %v1531 = vunpack.c.l.b16 %v275
      %v1532 = vunpack.c.h.b16 %v275
      %v1533 = vunpack.c.l.b16 %v276
      %v1534 = vunpack.c.h.b16 %v276
      %v1535 = vunpack.c.l.b16 %v277
      %v1536 = vunpack.c.h.b16 %v277
      %v1537 = vunpack.c.l.b16 %v278
      %v1538 = vunpack.c.h.b16 %v278
      %v1539 = vunpack.c.l.b16 %v279
      %v1540 = vunpack.c.h.b16 %v279
      %v1541 = vunpack.c.l.b16 %v280
      %v1542 = vunpack.c.h.b16 %v280
      %v1543 = vunpack.c.l.b16 %v281
      %v1544 = vunpack.c.h.b16 %v281
      %v1545 = vunpack.c.l.b16 %v282
      %v1546 = vunpack.c.h.b16 %v282
      %v1547 = vunpack.c.l.b16 %v283
      %v1548 = vunpack.c.h.b16 %v283
      %v1549 = vunpack.c.l.b16 %v284
      %v1550 = vunpack.c.h.b16 %v284
      %v1551 = vunpack.c.l.b16 %v285
      %v1552 = vunpack.c.h.b16 %v285
      %v1553 = vunpack.c.l.b16 %v286
      %v1554 = vunpack.c.h.b16 %v286
      %v1555 = vunpack.c.l.b16 %v287
      %v1556 = vunpack.c.h.b16 %v287
      %v1557 = vunpack.c.l.b16 %v288
      %v1558 = vunpack.c.h.b16 %v288
      %v1559 = vunpack.c.l.b16 %v289
      %v1560 = vunpack.c.h.b16 %v289
      %v1561 = vunpack.c.l.b16 %v290
      %v1562 = vunpack.c.h.b16 %v290
      %v1563 = vunpack.c.l.b16 %v291
      %v1564 = vunpack.c.h.b16 %v291
      %v1565 = vunpack.c.l.b16 %v292
      %v1566 = vunpack.c.h.b16 %v292
      %v1567 = vunpack.c.l.b16 %v293
      %v1568 = vunpack.c.h.b16 %v293
      %v1569 = vunpack.c.l.b16 %v294
      %v1570 = vunpack.c.h.b16 %v294
      %v1571 = vunpack.c.l.b16 %v295
      %v1572 = vunpack.c.h.b16 %v295
      %v1573 = vunpack.c.l.b16 %v296
      %v1574 = vunpack.c.h.b16 %v296
      %v1575 = vunpack.c.l.b16 %v297
      %v1576 = vunpack.c.h.b16 %v297
      %v1577 = vunpack.c.l.b16 %v298
      %v1578 = vunpack.c.h.b16 %v298
      %v1579 = vunpack.c.l.b16 %v299
      %v1580 = vunpack.c.h.b16 %v299
      %v1581 = vunpack.c.l.b16 %v300
      %v1582 = vunpack.c.h.b16 %v300
      %v1583 = vunpack.c.l.b16 %v301
      %v1584 = vunpack.c.h.b16 %v301
      %v1585 = vunpack.c.l.b16 %v302
      %v1586 = vunpack.c.h.b16 %v302
      %v1587 = vunpack.c.l.b16 %v303
      %v1588 = vunpack.c.h.b16 %v303
      %v1589 = vunpack.c.l.b16 %v304
      %v1590 = vunpack.c.h.b16 %v304
      %v1591 = vunpack.c.l.b16 %v305
      %v1592 = vunpack.c.h.b16 %v305
      %v1593 = vunpack.c.l.b16 %v306
      %v1594 = vunpack.c.h.b16 %v306
      %v1595 = vunpack.c.l.b16 %v307
      %v1596 = vunpack.c.h.b16 %v307
      %v1597 = vunpack.c.l.b16 %v308
      %v1598 = vunpack.c.h.b16 %v308
      %v1599 = vunpack.c.l.b16 %v309
      %v1600 = vunpack.c.h.b16 %v309
      %v1601 = vunpack.c.l.b16 %v310
      %v1602 = vunpack.c.h.b16 %v310
      %v1603 = vunpack.c.l.b16 %v311
      %v1604 = vunpack.c.h.b16 %v311
      %v1605 = vunpack.c.l.b16 %v312
      %v1606 = vunpack.c.h.b16 %v312
      %v1607 = vunpack.c.l.b16 %v313
      %v1608 = vunpack.c.h.b16 %v313
      %v1609 = vunpack.c.l.b16 %v314
      %v1610 = vunpack.c.h.b16 %v314
      %v1611 = vunpack.c.l.b16 %v315
      %v1612 = vunpack.c.h.b16 %v315
      %v1613 = vunpack.c.l.b16 %v316
      %v1614 = vunpack.c.h.b16 %v316
      %v1615 = vunpack.c.l.b16 %v317
      %v1616 = vunpack.c.h.b16 %v317
      %v1617 = vunpack.c.l.b16 %v318
      %v1618 = vunpack.c.h.b16 %v318
      %v1619 = vunpack.c.l.b16 %v319
      %v1620 = vunpack.c.h.b16 %v319
      %v1621 = vunpack.c.l.b16 %v320
      %v1622 = vunpack.c.h.b16 %v320
      %v1623 = vunpack.c.l.b16 %v321
      %v1624 = vunpack.c.h.b16 %v321
      %v1625 = vunpack.c.l.b16 %v322
      %v1626 = vunpack.c.h.b16 %v322
      %v1627 = vunpack.c.l.b16 %v323
      %v1628 = vunpack.c.h.b16 %v323
      %v1629 = vunpack.c.l.b16 %v324
      %v1630 = vunpack.c.h.b16 %v324
      %v1631 = vunpack.c.l.b16 %v325
      %v1632 = vunpack.c.h.b16 %v325
      %v1633 = vunpack.c.l.b16 %v326
      %v1634 = vunpack.c.h.b16 %v326
      %v1635 = vunpack.c.l.b16 %v327
      %v1636 = vunpack.c.h.b16 %v327
      %v1637 = vunpack.c.l.b16 %v328
      %v1638 = vunpack.c.h.b16 %v328
      %v1639 = vunpack.c.l.b16 %v329
      %v1640 = vunpack.c.h.b16 %v329
      %v1641 = vunpack.c.l.b16 %v330
      %v1642 = vunpack.c.h.b16 %v330
      %v1643 = vunpack.c.l.b16 %v331
      %v1644 = vunpack.c.h.b16 %v331
      %v1645 = vunpack.c.l.b16 %v332
      %v1646 = vunpack.c.h.b16 %v332
      %v1647 = vunpack.c.l.b16 %v333
      %v1648 = vunpack.c.h.b16 %v333
      %v1649 = vunpack.c.l.b16 %v334
      %v1650 = vunpack.c.h.b16 %v334
      %v1651 = vunpack.c.l.b16 %v335
      %v1652 = vunpack.c.h.b16 %v335
      %v1653 = vunpack.c.l.b16 %v336
      %v1654 = vunpack.c.h.b16 %v336
      %v1655 = vunpack.c.l.b16 %v337
      %v1656 = vunpack.c.h.b16 %v337
      %v1657 = vunpack.c.l.b16 %v338
      %v1658 = vunpack.c.h.b16 %v338
      %v1659 = vunpack.c.l.b16 %v339
      %v1660 = vunpack.c.h.b16 %v339
      %v1661 = vunpack.c.l.b16 %v340
      %v1662 = vunpack.c.h.b16 %v340
      %v1663 = vunpack.c.l.b16 %v341
      %v1664 = vunpack.c.h.b16 %v341
      %v1665 = vunpack.c.l.b16 %v342
      %v1666 = vunpack.c.h.b16 %v342
      %v1667 = vunpack.c.l.b16 %v343
      %v1668 = vunpack.c.h.b16 %v343
      %v1669 = vunpack.c.l.b16 %v344
      %v1670 = vunpack.c.h.b16 %v344
      %v1671 = vunpack.c.l.b16 %v345
      %v1672 = vunpack.c.h.b16 %v345
      %v1673 = vunpack.c.l.b16 %v346
      %v1674 = vunpack.c.h.b16 %v346
      %v1675 = vunpack.c.l.b16 %v347
      %v1676 = vunpack.c.h.b16 %v347
      %v1677 = vunpack.c.l.b16 %v348
      %v1678 = vunpack.c.h.b16 %v348
      %v1679 = vunpack.c.l.b16 %v349
      %v1680 = vunpack.c.h.b16 %v349
      %v1681 = vunpack.c.l.b16 %v350
      %v1682 = vunpack.c.h.b16 %v350
      %v1683 = vunpack.c.l.b16 %v351
      %v1684 = vunpack.c.h.b16 %v351
      %v1685 = vunpack.c.l.b16 %v352
      %v1686 = vunpack.c.h.b16 %v352
      %v1687 = vunpack.c.l.b16 %v353
      %v1688 = vunpack.c.h.b16 %v353
      %v1689 = vunpack.c.l.b16 %v354
      %v1690 = vunpack.c.h.b16 %v354
      %v1691 = vunpack.c.l.b16 %v355
      %v1692 = vunpack.c.h.b16 %v355
      %v1693 = vunpack.c.l.b16 %v356
      %v1694 = vunpack.c.h.b16 %v356
      %v1695 = vunpack.c.l.b16 %v357
      %v1696 = vunpack.c.h.b16 %v357
      %v1697 = vunpack.c.l.b16 %v358
      %v1698 = vunpack.c.h.b16 %v358
      %v1699 = vunpack.c.l.b16 %v359
      %v1700 = vunpack.c.h.b16 %v359
      %v1701 = vunpack.c.l.b16 %v360
      %v1702 = vunpack.c.h.b16 %v360
      %v1703 = vunpack.c.l.b16 %v361
      %v1704 = vunpack.c.h.b16 %v361
      %v1705 = vunpack.c.l.b16 %v362
      %v1706 = vunpack.c.h.b16 %v362
      %v1707 = vunpack.c.l.b16 %v363
      %v1708 = vunpack.c.h.b16 %v363
      %v1709 = vunpack.c.l.b16 %v364
      %v1710 = vunpack.c.h.b16 %v364
      %v1711 = vunpack.c.l.b16 %v365
      %v1712 = vunpack.c.h.b16 %v365
      %v1713 = vunpack.c.l.b16 %v366
      %v1714 = vunpack.c.h.b16 %v366
      %v1715 = vunpack.c.l.b16 %v367
      %v1716 = vunpack.c.h.b16 %v367
      %v1717 = vunpack.c.l.b16 %v368
      %v1718 = vunpack.c.h.b16 %v368
      %v1719 = vunpack.c.l.b16 %v369
      %v1720 = vunpack.c.h.b16 %v369
      %v1721 = vunpack.c.l.b16 %v370
      %v1722 = vunpack.c.h.b16 %v370
      %v1723 = vunpack.c.l.b16 %v371
      %v1724 = vunpack.c.h.b16 %v371
      %v1725 = vunpack.c.l.b16 %v372
      %v1726 = vunpack.c.h.b16 %v372
      %v1727 = vunpack.c.l.b16 %v373
      %v1728 = vunpack.c.h.b16 %v373
      %v1729 = vunpack.c.l.b16 %v374
      %v1730 = vunpack.c.h.b16 %v374
      %v1731 = vunpack.c.l.b16 %v375
      %v1732 = vunpack.c.h.b16 %v375
      %v1733 = vunpack.c.l.b16 %v376
      %v1734 = vunpack.c.h.b16 %v376
      %v1735 = vunpack.c.l.b16 %v377
      %v1736 = vunpack.c.h.b16 %v377
      %v1737 = vunpack.c.l.b16 %v378
      %v1738 = vunpack.c.h.b16 %v378
      %v1739 = vunpack.c.l.b16 %v379
      %v1740 = vunpack.c.h.b16 %v379
      %v1741 = vunpack.c.l.b16 %v380
      %v1742 = vunpack.c.h.b16 %v380
      %v1743 = vunpack.c.l.b16 %v381
      %v1744 = vunpack.c.h.b16 %v381
      %v1745 = vunpack.c.l.b16 %v382
      %v1746 = vunpack.c.h.b16 %v382
      %v1747 = vunpack.c.l.b16 %v383
      %v1748 = vunpack.c.h.b16 %v383
      %v1749 = vunpack.c.l.b16 %v384
      %v1750 = vunpack.c.h.b16 %v384
      %v1751 = vunpack.c.l.b16 %v385
      %v1752 = vunpack.c.h.b16 %v385
      %v1753 = vunpack.c.l.b16 %v386
      %v1754 = vunpack.c.h.b16 %v386
      %v1755 = vunpack.c.l.b16 %v387
      %v1756 = vunpack.c.h.b16 %v387
      %v1757 = vunpack.c.l.b16 %v388
      %v1758 = vunpack.c.h.b16 %v388
      %v1759 = vunpack.c.l.b16 %v389
      %v1760 = vunpack.c.h.b16 %v389
      %v1761 = vunpack.c.l.b16 %v390
      %v1762 = vunpack.c.h.b16 %v390
      %v1763 = vunpack.c.l.b16 %v391
      %v1764 = vunpack.c.h.b16 %v391
      %v1765 = vunpack.c.l.b16 %v392
      %v1766 = vunpack.c.h.b16 %v392
      %v1767 = vunpack.c.l.b16 %v393
      %v1768 = vunpack.c.h.b16 %v393
      %v1769 = vunpack.c.l.b16 %v394
      %v1770 = vunpack.c.h.b16 %v394
      %v1771 = vunpack.c.l.b16 %v395
      %v1772 = vunpack.c.h.b16 %v395
      %v1773 = vunpack.c.l.b16 %v396
      %v1774 = vunpack.c.h.b16 %v396
      %v1775 = vunpack.c.l.b16 %v397
      %v1776 = vunpack.c.h.b16 %v397
      %v1777 = vunpack.c.l.b16 %v398
      %v1778 = vunpack.c.h.b16 %v398
      %v1779 = vunpack.c.l.b16 %v399
      %v1780 = vunpack.c.h.b16 %v399
      %v1781 = vunpack.c.l.b16 %v400
      %v1782 = vunpack.c.h.b16 %v400
      %v1783 = vunpack.c.l.b16 %v401
      %v1784 = vunpack.c.h.b16 %v401
      %v1785 = vunpack.c.l.b16 %v402
      %v1786 = vunpack.c.h.b16 %v402
      %v1787 = vunpack.c.l.b16 %v403
      %v1788 = vunpack.c.h.b16 %v403
      %v1789 = vunpack.c.l.b16 %v404
      %v1790 = vunpack.c.h.b16 %v404
      %v1791 = vunpack.c.l.b16 %v405
      %v1792 = vunpack.c.h.b16 %v405
      %v1793 = vunpack.c.l.b16 %v406
      %v1794 = vunpack.c.h.b16 %v406
      %v1795 = vunpack.c.l.b16 %v407
      %v1796 = vunpack.c.h.b16 %v407
      %v1797 = vunpack.c.l.b16 %v408
      %v1798 = vunpack.c.h.b16 %v408
      %v1799 = vunpack.c.l.b16 %v409
      %v1800 = vunpack.c.h.b16 %v409
      %v1801 = vunpack.c.l.b16 %v410
      %v1802 = vunpack.c.h.b16 %v410
      %v1803 = vunpack.c.l.b16 %v411
      %v1804 = vunpack.c.h.b16 %v411
      %v1805 = vunpack.c.l.b16 %v412
      %v1806 = vunpack.c.h.b16 %v412
      %v1807 = vunpack.c.l.b16 %v413
      %v1808 = vunpack.c.h.b16 %v413
      %v1809 = vunpack.c.l.b16 %v414
      %v1810 = vunpack.c.h.b16 %v414
      %v1811 = vunpack.c.l.b16 %v415
      %v1812 = vunpack.c.h.b16 %v415
      %v1813 = vunpack.c.l.b16 %v416
      %v1814 = vunpack.c.h.b16 %v416
      %v1815 = vunpack.c.l.b16 %v417
      %v1816 = vunpack.c.h.b16 %v417
      %v1817 = vunpack.c.l.b16 %v418
      %v1818 = vunpack.c.h.b16 %v418
      %v1819 = vunpack.c.l.b16 %v419
      %v1820 = vunpack.c.h.b16 %v419
      %v1821 = vunpack.c.l.b16 %v420
      %v1822 = vunpack.c.h.b16 %v420
      %v1823 = vunpack.c.l.b16 %v421
      %v1824 = vunpack.c.h.b16 %v421
      %v1825 = vunpack.c.l.b16 %v422
      %v1826 = vunpack.c.h.b16 %v422
      %v1827 = vunpack.c.l.b16 %v423
      %v1828 = vunpack.c.h.b16 %v423
      %v1829 = vunpack.c.l.b16 %v424
      %v1830 = vunpack.c.h.b16 %v424
      %v1831 = vunpack.c.l.b16 %v425
      %v1832 = vunpack.c.h.b16 %v425
      %v1833 = vunpack.c.l.b16 %v426
      %v1834 = vunpack.c.h.b16 %v426
      %v1835 = vunpack.c.l.b16 %v427
      %v1836 = vunpack.c.h.b16 %v427
      %v1837 = vunpack.c.l.b16 %v428
      %v1838 = vunpack.c.h.b16 %v428
      %v1839 = vunpack.c.l.b16 %v429
      %v1840 = vunpack.c.h.b16 %v429
      %v1841 = vunpack.c.l.b16 %v430
      %v1842 = vunpack.c.h.b16 %v430
      %v1843 = vunpack.c.l.b16 %v431
      %v1844 = vunpack.c.h.b16 %v431
      %v1845 = vunpack.c.l.b16 %v432
      %v1846 = vunpack.c.h.b16 %v432
      %v1847 = vunpack.c.l.b16 %v433
      %v1848 = vunpack.c.h.b16 %v433
      %v1849 = vunpack.c.l.b16 %v434
      %v1850 = vunpack.c.h.b16 %v434
      %v1851 = vunpack.c.l.b16 %v435
      %v1852 = vunpack.c.h.b16 %v435
      %v1853 = vunpack.c.l.b16 %v436
      %v1854 = vunpack.c.h.b16 %v436
      %v1855 = vunpack.c.l.b16 %v437
      %v1856 = vunpack.c.h.b16 %v437
      %v1857 = vunpack.c.l.b16 %v438
      %v1858 = vunpack.c.h.b16 %v438
      %v1859 = vunpack.c.l.b16 %v439
      %v1860 = vunpack.c.h.b16 %v439
      %v1861 = vunpack.c.l.b16 %v440
      %v1862 = vunpack.c.h.b16 %v440
      %v1863 = vunpack.c.l.b16 %v441
      %v1864 = vunpack.c.h.b16 %v441
      %v1865 = vunpack.c.l.b16 %v442
      %v1866 = vunpack.c.h.b16 %v442
      %v1867 = vunpack.c.l.b16 %v443
      %v1868 = vunpack.c.h.b16 %v443
      %v1869 = vunpack.c.l.b16 %v444
      %v1870 = vunpack.c.h.b16 %v444
      %v1871 = vunpack.c.l.b16 %v445
      %v1872 = vunpack.c.h.b16 %v445
      %v1873 = vunpack.c.l.b16 %v446
      %v1874 = vunpack.c.h.b16 %v446
      %v1875 = vunpack.c.l.b16 %v447
      %v1876 = vunpack.c.h.b16 %v447
      %v1877 = vunpack.c.l.b16 %v448
      %v1878 = vunpack.c.h.b16 %v448
      %v1879 = vunpack.c.l.b16 %v449
      %v1880 = vunpack.c.h.b16 %v449
      %v1881 = vunpack.c.l.b16 %v450
      %v1882 = vunpack.c.h.b16 %v450
      %v1883 = vunpack.c.l.b16 %v451
      %v1884 = vunpack.c.h.b16 %v451
      %v1885 = vunpack.c.l.b16 %v452
      %v1886 = vunpack.c.h.b16 %v452
      %v1887 = vunpack.c.l.b16 %v453
      %v1888 = vunpack.c.h.b16 %v453
      %v1889 = vunpack.c.l.b16 %v454
      %v1890 = vunpack.c.h.b16 %v454
      %v1891 = vunpack.c.l.b16 %v455
      %v1892 = vunpack.c.h.b16 %v455
      %v1893 = vunpack.c.l.b16 %v456
      %v1894 = vunpack.c.h.b16 %v456
      %v1895 = vunpack.c.l.b16 %v457
      %v1896 = vunpack.c.h.b16 %v457
      %v1897 = vunpack.c.l.b16 %v458
      %v1898 = vunpack.c.h.b16 %v458
      %v1899 = vunpack.c.l.b16 %v459
      %v1900 = vunpack.c.h.b16 %v459
      %v1901 = vunpack.c.l.b16 %v460
      %v1902 = vunpack.c.h.b16 %v460
      %v1903 = vunpack.c.l.b16 %v461
      %v1904 = vunpack.c.h.b16 %v461
      %v1905 = vunpack.c.l.b16 %v462
      %v1906 = vunpack.c.h.b16 %v462
      %v1907 = vunpack.c.l.b16 %v463
      %v1908 = vunpack.c.h.b16 %v463
      %v1909 = vunpack.c.l.b16 %v464
      %v1910 = vunpack.c.h.b16 %v464
      %v1911 = vunpack.c.l.b16 %v465
      %v1912 = vunpack.c.h.b16 %v465
      %v1913 = vunpack.c.l.b16 %v466
      %v1914 = vunpack.c.h.b16 %v466
      %v1915 = vunpack.c.l.b16 %v467
      %v1916 = vunpack.c.h.b16 %v467
      %v1917 = vunpack.c.l.b16 %v468
      %v1918 = vunpack.c.h.b16 %v468
      %v1919 = vunpack.c.l.b16 %v469
      %v1920 = vunpack.c.h.b16 %v469
      %v1921 = vunpack.c.l.b16 %v470
      %v1922 = vunpack.c.h.b16 %v470
      %v1923 = vunpack.c.l.b16 %v471
      %v1924 = vunpack.c.h.b16 %v471
      %v1925 = vunpack.c.l.b16 %v472
      %v1926 = vunpack.c.h.b16 %v472
      %v1927 = vunpack.c.l.b16 %v473
      %v1928 = vunpack.c.h.b16 %v473
      %v1929 = vunpack.c.l.b16 %v474
      %v1930 = vunpack.c.h.b16 %v474
      %v1931 = vunpack.c.l.b16 %v475
      %v1932 = vunpack.c.h.b16 %v475
      %v1933 = vunpack.c.l.b16 %v476
      %v1934 = vunpack.c.h.b16 %v476
      %v1935 = vunpack.c.l.b16 %v477
      %v1936 = vunpack.c.h.b16 %v477
      %v1937 = vunpack.c.l.b16 %v478
      %v1938 = vunpack.c.h.b16 %v478
      %v1939 = vunpack.c.l.b16 %v479
      %v1940 = vunpack.c.h.b16 %v479
      %v1941 = vunpack.c.l.b16 %v480
      %v1942 = vunpack.c.h.b16 %v480
      %v1943 = vunpack.c.l.b16 %v481
      %v1944 = vunpack.c.h.b16 %v481
      %v1945 = vunpack.c.l.b16 %v482
      %v1946 = vunpack.c.h.b16 %v482
      %v1947 = vunpack.c.l.b16 %v483
      %v1948 = vunpack.c.h.b16 %v483
      %v1949 = vunpack.c.l.b16 %v484
      %v1950 = vunpack.c.h.b16 %v484
      %v1951 = vunpack.c.l.b16 %v485
      %v1952 = vunpack.c.h.b16 %v485
      %v1953 = vunpack.c.l.b16 %v486
      %v1954 = vunpack.c.h.b16 %v486
      %v1955 = vunpack.c.l.b16 %v487
      %v1956 = vunpack.c.h.b16 %v487
      %v1957 = vunpack.c.l.b16 %v488
      %v1958 = vunpack.c.h.b16 %v488
      %v1959 = vunpack.c.l.b16 %v489
      %v1960 = vunpack.c.h.b16 %v489
      %v1961 = vunpack.c.l.b16 %v490
      %v1962 = vunpack.c.h.b16 %v490
      %v1963 = vunpack.c.l.b16 %v491
      %v1964 = vunpack.c.h.b16 %v491
      %v1965 = vunpack.c.l.b16 %v492
      %v1966 = vunpack.c.h.b16 %v492
      %v1967 = vunpack.c.l.b16 %v493
      %v1968 = vunpack.c.h.b16 %v493
      %v1969 = vunpack.c.l.b16 %v494
      %v1970 = vunpack.c.h.b16 %v494
      %v1971 = vunpack.c.l.b16 %v495
      %v1972 = vunpack.c.h.b16 %v495
      %v1973 = vunpack.c.l.b16 %v496
      %v1974 = vunpack.c.h.b16 %v496
      %v1975 = vunpack.c.l.b16 %v497
      %v1976 = vunpack.c.h.b16 %v497
      %v1977 = vunpack.c.l.b16 %v498
      %v1978 = vunpack.c.h.b16 %v498
      %v1979 = vunpack.c.l.b16 %v499
      %v1980 = vunpack.c.h.b16 %v499
      %v1981 = vunpack.c.l.b16 %v500
      %v1982 = vunpack.c.h.b16 %v500
      %v1983 = vunpack.c.l.b16 %v501
      %v1984 = vunpack.c.h.b16 %v501
      %v1985 = vunpack.c.l.b16 %v502
      %v1986 = vunpack.c.h.b16 %v502
      %v1987 = vunpack.c.l.b16 %v503
      %v1988 = vunpack.c.h.b16 %v503
      %v1989 = vunpack.c.l.b16 %v504
      %v1990 = vunpack.c.h.b16 %v504
      %v1991 = vunpack.c.l.b16 %v505
      %v1992 = vunpack.c.h.b16 %v505
      %v1993 = vunpack.c.l.b16 %v506
      %v1994 = vunpack.c.h.b16 %v506
      %v1995 = vunpack.c.l.b16 %v507
      %v1996 = vunpack.c.h.b16 %v507
      %v1997 = vunpack.c.l.b16 %v508
      %v1998 = vunpack.c.h.b16 %v508
      %v1999 = vunpack.c.l.b16 %v509
      %v2000 = vunpack.c.h.b16 %v509
      %v2001 = vunpack.c.l.b16 %v510
      %v2002 = vunpack.c.h.b16 %v510
      %v2003 = vunpack.c.l.b16 %v511
      %v2004 = vunpack.c.h.b16 %v511
      %v2005 = vunpack.c.l.b16 %v512
      %v2006 = vunpack.c.h.b16 %v512
      %v2007 = vunpack.c.l.b16 %v513
      %v2008 = vunpack.c.h.b16 %v513
      %v2009 = vunpack.c.l.b16 %v514
      %v2010 = vunpack.c.h.b16 %v514
      %v2011 = vunpack.c.l.b16 %v515
      %v2012 = vunpack.c.h.b16 %v515
      %v2013 = vunpack.c.l.b16 %v516
      %v2014 = vunpack.c.h.b16 %v516
      %v2015 = vunpack.c.l.b16 %v517
      %v2016 = vunpack.c.h.b16 %v517
      %v2017 = vunpack.c.l.b16 %v518
      %v2018 = vunpack.c.h.b16 %v518
      %v2019 = vunpack.c.l.b16 %v519
      %v2020 = vunpack.c.h.b16 %v519
      %v2021 = vunpack.c.l.b16 %v520
      %v2022 = vunpack.c.h.b16 %v520
      %v2023 = vunpack.c.l.b16 %v521
      %v2024 = vunpack.c.h.b16 %v521
      %v2025 = vunpack.c.l.b16 %v522
      %v2026 = vunpack.c.h.b16 %v522
      %v2027 = vunpack.c.l.b16 %v523
      %v2028 = vunpack.c.h.b16 %v523
      %v2029 = vunpack.c.l.b16 %v524
      %v2030 = vunpack.c.h.b16 %v524
      %v2031 = vunpack.c.l.b16 %v525
      %v2032 = vunpack.c.h.b16 %v525
      %v2033 = vunpack.c.l.b16 %v526
      %v2034 = vunpack.c.h.b16 %v526
      %v2035 = vunpack.c.l.b16 %v527
      %v2036 = vunpack.c.h.b16 %v527
      %v2037 = vunpack.c.l.b16 %v528
      %v2038 = vunpack.c.h.b16 %v528
      %v2039 = vunpack.c.l.b16 %v529
      %v2040 = vunpack.c.h.b16 %v529
      %v2041 = vunpack.c.l.b16 %v530
      %v2042 = vunpack.c.h.b16 %v530
      %v2043 = vunpack.c.l.b16 %v531
      %v2044 = vunpack.c.h.b16 %v531
      %v2045 = vunpack.c.l.b16 %v532
      %v2046 = vunpack.c.h.b16 %v532
      %v2047 = vunpack.c.l.b16 %v533
      %v2048 = vunpack.c.h.b16 %v533
      %v2049 = vunpack.c.l.b16 %v534
      %v2050 = vunpack.c.h.b16 %v534
      %v2051 = vunpack.c.l.b16 %v535
      %v2052 = vunpack.c.h.b16 %v535
      %v2053 = vunpack.c.l.b16 %v536
      %v2054 = vunpack.c.h.b16 %v536
      %v2055 = vunpack.c.l.b16 %v537
      %v2056 = vunpack.c.h.b16 %v537
      %v2057 = vunpack.c.l.b16 %v538
      %v2058 = vunpack.c.h.b16 %v538
      %v2059 = vunpack.c.l.b16 %v539
      %v2060 = vunpack.c.h.b16 %v539
      %v2061 = vunpack.c.l.b16 %v540
      %v2062 = vunpack.c.h.b16 %v540
      %v2063 = vunpack.c.l.b16 %v541
      %v2064 = vunpack.c.h.b16 %v541
      %v2065 = vunpack.c.l.b16 %v542
      %v2066 = vunpack.c.h.b16 %v542
      %v2067 = vunpack.c.l.b16 %v543
      %v2068 = vunpack.c.h.b16 %v543
      %v2069 = vunpack.c.l.b16 %v544
      %v2070 = vunpack.c.h.b16 %v544
      %v2071 = vunpack.c.l.b16 %v545
      %v2072 = vunpack.c.h.b16 %v545
      %v2073 = vunpack.c.l.b16 %v546
      %v2074 = vunpack.c.h.b16 %v546
      %v2075 = vunpack.c.l.b16 %v547
      %v2076 = vunpack.c.h.b16 %v547
      %v2077 = vunpack.c.l.b16 %v548
      %v2078 = vunpack.c.h.b16 %v548
      %v2079 = vunpack.c.l.b16 %v549
      %v2080 = vunpack.c.h.b16 %v549
      %v2081 = vunpack.c.l.b16 %v550
      %v2082 = vunpack.c.h.b16 %v550
      %v2083 = vunpack.c.l.b16 %v551
      %v2084 = vunpack.c.h.b16 %v551
      %v2085 = vunpack.c.l.b16 %v552
      %v2086 = vunpack.c.h.b16 %v552
      %v2087 = vunpack.c.l.b16 %v553
      %v2088 = vunpack.c.h.b16 %v553
      %v2089 = vunpack.c.l.b16 %v554
      %v2090 = vunpack.c.h.b16 %v554
      %v2091 = vunpack.c.l.b16 %v555
      %v2092 = vunpack.c.h.b16 %v555
      %v2093 = vunpack.c.l.b16 %v556
      %v2094 = vunpack.c.h.b16 %v556
      %v2095 = vunpack.c.l.b16 %v557
      %v2096 = vunpack.c.h.b16 %v557
      %v2097 = vunpack.c.l.b16 %v558
      %v2098 = vunpack.c.h.b16 %v558
      %v2099 = vunpack.c.l.b16 %v559
      %v2100 = vunpack.c.h.b16 %v559
      %v2101 = vunpack.c.l.b16 %v560
      %v2102 = vunpack.c.h.b16 %v560
      %v2103 = vunpack.c.l.b16 %v561
      %v2104 = vunpack.c.h.b16 %v561
      %v2105 = vunpack.c.l.b16 %v562
      %v2106 = vunpack.c.h.b16 %v562
      %v2107 = vunpack.c.l.b16 %v563
      %v2108 = vunpack.c.h.b16 %v563
      %v2109 = vunpack.c.l.b16 %v564
      %v2110 = vunpack.c.h.b16 %v564
      %v2111 = vunpack.c.l.b16 %v565
      %v2112 = vunpack.c.h.b16 %v565
      %v2113 = vunpack.c.l.b16 %v566
      %v2114 = vunpack.c.h.b16 %v566
      %v2115 = vunpack.c.l.b16 %v567
      %v2116 = vunpack.c.h.b16 %v567
      %v2117 = vunpack.c.l.b16 %v568
      %v2118 = vunpack.c.h.b16 %v568
      %v2119 = vunpack.c.l.b16 %v569
      %v2120 = vunpack.c.h.b16 %v569
      %v2121 = vunpack.c.l.b16 %v570
      %v2122 = vunpack.c.h.b16 %v570
      %v2123 = vunpack.c.l.b16 %v571
      %v2124 = vunpack.c.h.b16 %v571
      %v2125 = vunpack.c.l.b16 %v572
      %v2126 = vunpack.c.h.b16 %v572
      %v2127 = vunpack.c.l.b16 %v573
      %v2128 = vunpack.c.h.b16 %v573
      %v2129 = vunpack.c.l.b16 %v574
      %v2130 = vunpack.c.h.b16 %v574
      %v2131 = vunpack.c.l.b16 %v575
      %v2132 = vunpack.c.h.b16 %v575
      %v2133 = vunpack.c.l.b16 %v576
      %v2134 = vunpack.c.h.b16 %v576
      %v2135 = vunpack.c.l.b16 %v577
      %v2136 = vunpack.c.h.b16 %v577
      %v2137 = vunpack.c.l.b16 %v578
      %v2138 = vunpack.c.h.b16 %v578
      %v2139 = vunpack.c.l.b16 %v579
      %v2140 = vunpack.c.h.b16 %v579
      %v2141 = vunpack.c.l.b16 %v580
      %v2142 = vunpack.c.h.b16 %v580
      %v2143 = vunpack.c.l.b16 %v581
      %v2144 = vunpack.c.h.b16 %v581
      %v2145 = vunpack.c.l.b16 %v582
      %v2146 = vunpack.c.h.b16 %v582
      %v2147 = vunpack.c.l.b16 %v583
      %v2148 = vunpack.c.h.b16 %v583
      %v2149 = vunpack.c.l.b16 %v584
      %v2150 = vunpack.c.h.b16 %v584
      %v2151 = vunpack.c.l.b16 %v585
      %v2152 = vunpack.c.h.b16 %v585
      %v2153 = vunpack.c.l.b16 %v586
      %v2154 = vunpack.c.h.b16 %v586
      %v2155 = vunpack.c.l.b16 %v587
      %v2156 = vunpack.c.h.b16 %v587
      %v2157 = vunpack.c.l.b16 %v588
      %v2158 = vunpack.c.h.b16 %v588
      %v2159 = vunpack.c.l.b16 %v589
      %v2160 = vunpack.c.h.b16 %v589
      %v2161 = vunpack.c.l.b16 %v590
      %v2162 = vunpack.c.h.b16 %v590
      %v2163 = vunpack.c.l.b16 %v591
      %v2164 = vunpack.c.h.b16 %v591
      %v2165 = vunpack.c.l.b16 %v592
      %v2166 = vunpack.c.h.b16 %v592
      %v2167 = vunpack.c.l.b16 %v593
      %v2168 = vunpack.c.h.b16 %v593
      %v2169 = vunpack.c.l.b16 %v594
      %v2170 = vunpack.c.h.b16 %v594
      %v2171 = vunpack.c.l.b16 %v595
      %v2172 = vunpack.c.h.b16 %v595
      %v2173 = vunpack.c.l.b16 %v596
      %v2174 = vunpack.c.h.b16 %v596
      %v2175 = vunpack.c.l.b16 %v597
      %v2176 = vunpack.c.h.b16 %v597
      %v2177 = vunpack.c.l.b16 %v598
      %v2178 = vunpack.c.h.b16 %v598
      %v2179 = vunpack.c.l.b16 %v599
      %v2180 = vunpack.c.h.b16 %v599
      %v2181 = vunpack.c.l.b16 %v600
      %v2182 = vunpack.c.h.b16 %v600
      %v2183 = vunpack.c.l.b16 %v601
      %v2184 = vunpack.c.h.b16 %v601
      %v2185 = vunpack.c.l.b16 %v602
      %v2186 = vunpack.c.h.b16 %v602
      %v2187 = vunpack.c.l.b16 %v603
      %v2188 = vunpack.c.h.b16 %v603
      %v2189 = vunpack.c.l.b16 %v604
      %v2190 = vunpack.c.h.b16 %v604
      %v2191 = vunpack.c.l.b16 %v605
      %v2192 = vunpack.c.h.b16 %v605
      %v2193 = vunpack.c.l.b16 %v606
      %v2194 = vunpack.c.h.b16 %v606
      %v2195 = vunpack.c.l.b16 %v607
      %v2196 = vunpack.c.h.b16 %v607
      %v2197 = vunpack.c.l.b16 %v608
      %v2198 = vunpack.c.h.b16 %v608
      %v2199 = vunpack.c.l.b16 %v609
      %v2200 = vunpack.c.h.b16 %v609
      %v2201 = vunpack.c.l.b16 %v610
      %v2202 = vunpack.c.h.b16 %v610
      %v2203 = vunpack.c.l.b16 %v611
      %v2204 = vunpack.c.h.b16 %v611
      %v2205 = vunpack.c.l.b16 %v612
      %v2206 = vunpack.c.h.b16 %v612
      %v2207 = vunpack.c.l.b16 %v613
      %v2208 = vunpack.c.h.b16 %v613
      %v2209 = vunpack.c.l.b16 %v614
      %v2210 = vunpack.c.h.b16 %v614
      %v2211 = vunpack.c.l.b16 %v615
      %v2212 = vunpack.c.h.b16 %v615
      %v2213 = vunpack.c.l.b16 %v616
      %v2214 = vunpack.c.h.b16 %v616
      %v2215 = vunpack.c.l.b16 %v617
      %v2216 = vunpack.c.h.b16 %v617
      %v2217 = vunpack.c.l.b16 %v618
      %v2218 = vunpack.c.h.b16 %v618
      %v2219 = vunpack.c.l.b16 %v619
      %v2220 = vunpack.c.h.b16 %v619
      %v2221 = vunpack.c.l.b16 %v620
      %v2222 = vunpack.c.h.b16 %v620
      %v2223 = vunpack.c.l.b16 %v621
      %v2224 = vunpack.c.h.b16 %v621
      %v2225 = vunpack.c.l.b16 %v622
      %v2226 = vunpack.c.h.b16 %v622
      %v2227 = vunpack.c.l.b16 %v623
      %v2228 = vunpack.c.h.b16 %v623
      %v2229 = vunpack.c.l.b16 %v624
      %v2230 = vunpack.c.h.b16 %v624
      %v2231 = vunpack.c.l.b16 %v625
      %v2232 = vunpack.c.h.b16 %v625
      %v2233 = vunpack.c.l.b16 %v626
      %v2234 = vunpack.c.h.b16 %v626
      %v2235 = vunpack.c.l.b16 %v627
      %v2236 = vunpack.c.h.b16 %v627
      %v2237 = vunpack.c.l.b16 %v628
      %v2238 = vunpack.c.h.b16 %v628
      %v2239 = vunpack.c.l.b16 %v629
      %v2240 = vunpack.c.h.b16 %v629
      %v2241 = vunpack.c.l.b16 %v630
      %v2242 = vunpack.c.h.b16 %v630
      %v2243 = vunpack.c.l.b16 %v631
      %v2244 = vunpack.c.h.b16 %v631
      %v2245 = vunpack.c.l.b16 %v632
      %v2246 = vunpack.c.h.b16 %v632
      %v2247 = vunpack.c.l.b16 %v633
      %v2248 = vunpack.c.h.b16 %v633
      %v2249 = vunpack.c.l.b16 %v634
      %v2250 = vunpack.c.h.b16 %v634
      %v2251 = vunpack.c.l.b16 %v635
      %v2252 = vunpack.c.h.b16 %v635
      %v2253 = vunpack.c.l.b16 %v636
      %v2254 = vunpack.c.h.b16 %v636
      %v2255 = vunpack.c.l.b16 %v637
      %v2256 = vunpack.c.h.b16 %v637
      %v2257 = vunpack.c.l.b16 %v638
      %v2258 = vunpack.c.h.b16 %v638
      %v2259 = vunpack.c.l.b16 %v639
      %v2260 = vunpack.c.h.b16 %v639
      %v2261 = vunpack.c.l.b16 %v640
      %v2262 = vunpack.c.h.b16 %v640
      %v2263 = vunpack.c.l.b16 %v641
      %v2264 = vunpack.c.h.b16 %v641
      %v2265 = vunpack.c.l.b16 %v642
      %v2266 = vunpack.c.h.b16 %v642
      %v2267 = vunpack.c.l.b16 %v643
      %v2268 = vunpack.c.h.b16 %v643
      %v2269 = vunpack.c.l.b16 %v644
      %v2270 = vunpack.c.h.b16 %v644
      %v2271 = vunpack.c.l.b16 %v645
      %v2272 = vunpack.c.h.b16 %v645
      %v2273 = vunpack.c.l.b16 %v646
      %v2274 = vunpack.c.h.b16 %v646
      %v2275 = vunpack.c.l.b16 %v647
      %v2276 = vunpack.c.h.b16 %v647
      %v2277 = vunpack.c.l.b16 %v648
      %v2278 = vunpack.c.h.b16 %v648
      %v2279 = vunpack.c.l.b16 %v649
      %v2280 = vunpack.c.h.b16 %v649
      %v2281 = vunpack.c.l.b16 %v650
      %v2282 = vunpack.c.h.b16 %v650
      %v2283 = vunpack.c.l.b16 %v651
      %v2284 = vunpack.c.h.b16 %v651
      %v2285 = vunpack.c.l.b16 %v652
      %v2286 = vunpack.c.h.b16 %v652
      %v2287 = vunpack.c.l.b16 %v653
      %v2288 = vunpack.c.h.b16 %v653
      %v2289 = vunpack.c.l.b16 %v654
      %v2290 = vunpack.c.h.b16 %v654
      %v2291 = vunpack.c.l.b16 %v655
      %v2292 = vunpack.c.h.b16 %v655
      %v2293 = vunpack.c.l.b16 %v656
      %v2294 = vunpack.c.h.b16 %v656
      %v2295 = vunpack.c.l.b16 %v657
      %v2296 = vunpack.c.h.b16 %v657
      %v2297 = vunpack.c.l.b16 %v658
      %v2298 = vunpack.c.h.b16 %v658
      %v2299 = vunpack.c.l.b16 %v659
      %v2300 = vunpack.c.h.b16 %v659
      %v2301 = vunpack.c.l.b16 %v660
      %v2302 = vunpack.c.h.b16 %v660
      %v2303 = vunpack.c.l.b16 %v661
      %v2304 = vunpack.c.h.b16 %v661
      %v2305 = vunpack.c.l.b16 %v662
      %v2306 = vunpack.c.h.b16 %v662
      %v2307 = vunpack.c.l.b16 %v663
      %v2308 = vunpack.c.h.b16 %v663
      %v2309 = vunpack.c.l.b16 %v664
      %v2310 = vunpack.c.h.b16 %v664
      %v2311 = vunpack.c.l.b16 %v665
      %v2312 = vunpack.c.h.b16 %v665
      %v2313 = vunpack.c.l.b16 %v666
      %v2314 = vunpack.c.h.b16 %v666
      %v2315 = vunpack.c.l.b16 %v667
      %v2316 = vunpack.c.h.b16 %v667
      %v2317 = vunpack.c.l.b16 %v668
      %v2318 = vunpack.c.h.b16 %v668
      %v2319 = vunpack.c.l.b16 %v669
      %v2320 = vunpack.c.h.b16 %v669
      %v2321 = vunpack.c.l.b16 %v670
      %v2322 = vunpack.c.h.b16 %v670
      %v2323 = vunpack.c.l.b16 %v671
      %v2324 = vunpack.c.h.b16 %v671
      %v2325 = vunpack.c.l.b16 %v672
      %v2326 = vunpack.c.h.b16 %v672
      %v2327 = vunpack.c.l.b16 %v673
      %v2328 = vunpack.c.h.b16 %v673
      %v2329 = vunpack.c.l.b16 %v674
      %v2330 = vunpack.c.h.b16 %v674
      %v2331 = vunpack.c.l.b16 %v675
      %v2332 = vunpack.c.h.b16 %v675
      %v2333 = vunpack.c.l.b16 %v676
      %v2334 = vunpack.c.h.b16 %v676
      %v2335 = vunpack.c.l.b16 %v677
      %v2336 = vunpack.c.h.b16 %v677
      %v2337 = vunpack.c.l.b16 %v678
      %v2338 = vunpack.c.h.b16 %v678
      %v2339 = vunpack.c.l.b16 %v679
      %v2340 = vunpack.c.h.b16 %v679
      %v2341 = vunpack.c.l.b16 %v680
      %v2342 = vunpack.c.h.b16 %v680
      %v2343 = vunpack.c.l.b16 %v681
      %v2344 = vunpack.c.h.b16 %v681
      %v2345 = vunpack.c.l.b16 %v682
      %v2346 = vunpack.c.h.b16 %v682
      %v2347 = vunpack.c.l.b16 %v683
      %v2348 = vunpack.c.h.b16 %v683
      %v2349 = vunpack.c.l.b16 %v684
      %v2350 = vunpack.c.h.b16 %v684
      %v2351 = vunpack.c.l.b16 %v685
      %v2352 = vunpack.c.h.b16 %v685
      %v2353 = vunpack.c.l.b16 %v686
      %v2354 = vunpack.c.h.b16 %v686
      %v2355 = vunpack.c.l.b16 %v687
      %v2356 = vunpack.c.h.b16 %v687
      %v2357 = vunpack.c.l.b16 %v688
      %v2358 = vunpack.c.h.b16 %v688
      %v2359 = vunpack.c.l.b16 %v689
      %v2360 = vunpack.c.h.b16 %v689
      %v2361 = vpack.c.b16 %v1345, %v1337
      %v2362 = vpack.c.b16 %v1346, %v1338
      %v2363 = vpack.c.b16 %v1347, %v1339
      %v2364 = vpack.c.b16 %v1348, %v1340
      %v2365 = vpack.c.b16 %v1349, %v1341
      %v2366 = vpack.c.b16 %v1350, %v1342
      %v2367 = vpack.c.b16 %v1351, %v1343
      %v2368 = vpack.c.b16 %v1352, %v1344
      %v2369 = vpack.c.b16 %v1361, %v1353
      %v2370 = vpack.c.b16 %v1362, %v1354
      %v2371 = vpack.c.b16 %v1363, %v1355
      %v2372 = vpack.c.b16 %v1364, %v1356
      %v2373 = vpack.c.b16 %v1365, %v1357
      %v2374 = vpack.c.b16 %v1366, %v1358
      %v2375 = vpack.c.b16 %v1367, %v1359
      %v2376 = vpack.c.b16 %v1368, %v1360
      %v2377 = vpack.c.b16 %v1377, %v1369
      %v2378 = vpack.c.b16 %v1378, %v1370
      %v2379 = vpack.c.b16 %v1379, %v1371
      %v2380 = vpack.c.b16 %v1380, %v1372
      %v2381 = vpack.c.b16 %v1381, %v1373
      %v2382 = vpack.c.b16 %v1382, %v1374
      %v2383 = vpack.c.b16 %v1383, %v1375
      %v2384 = vpack.c.b16 %v1384, %v1376
      %v2385 = vpack.c.b16 %v1393, %v1385
      %v2386 = vpack.c.b16 %v1394, %v1386
      %v2387 = vpack.c.b16 %v1395, %v1387
      %v2388 = vpack.c.b16 %v1396, %v1388
      %v2389 = vpack.c.b16 %v1397, %v1389
      %v2390 = vpack.c.b16 %v1398, %v1390
      %v2391 = vpack.c.b16 %v1399, %v1391
      %v2392 = vpack.c.b16 %v1400, %v1392
      %v2393 = vpack.c.b16 %v1409, %v1401
      %v2394 = vpack.c.b16 %v1410, %v1402
      %v2395 = vpack.c.b16 %v1411, %v1403
      %v2396 = vpack.c.b16 %v1412, %v1404
      %v2397 = vpack.c.b16 %v1413, %v1405
      %v2398 = vpack.c.b16 %v1414, %v1406
      %v2399 = vpack.c.b16 %v1415, %v1407
      %v2400 = vpack.c.b16 %v1416, %v1408
      %v2401 = vpack.c.b16 %v1425, %v1417
      %v2402 = vpack.c.b16 %v1426, %v1418
      %v2403 = vpack.c.b16 %v1427, %v1419
      %v2404 = vpack.c.b16 %v1428, %v1420
      %v2405 = vpack.c.b16 %v1429, %v1421
      %v2406 = vpack.c.b16 %v1430, %v1422
      %v2407 = vpack.c.b16 %v1431, %v1423
      %v2408 = vpack.c.b16 %v1432, %v1424
      %v2409 = vpack.c.b16 %v1441, %v1433
      %v2410 = vpack.c.b16 %v1442, %v1434
      %v2411 = vpack.c.b16 %v1443, %v1435
      %v2412 = vpack.c.b16 %v1444, %v1436
      %v2413 = vpack.c.b16 %v1445, %v1437
      %v2414 = vpack.c.b16 %v1446, %v1438
      %v2415 = vpack.c.b16 %v1447, %v1439
      %v2416 = vpack.c.b16 %v1448, %v1440
      %v2417 = vpack.c.b16 %v1457, %v1449
      %v2418 = vpack.c.b16 %v1458, %v1450
      %v2419 = vpack.c.b16 %v1459, %v1451
      %v2420 = vpack.c.b16 %v1460, %v1452
      %v2421 = vpack.c.b16 %v1461, %v1453
      %v2422 = vpack.c.b16 %v1462, %v1454
      %v2423 = vpack.c.b16 %v1463, %v1455
      %v2424 = vpack.c.b16 %v1464, %v1456
      %v2425 = vpack.c.b16 %v1473, %v1465
      %v2426 = vpack.c.b16 %v1474, %v1466
      %v2427 = vpack.c.b16 %v1475, %v1467
      %v2428 = vpack.c.b16 %v1476, %v1468
      %v2429 = vpack.c.b16 %v1477, %v1469
      %v2430 = vpack.c.b16 %v1478, %v1470
      %v2431 = vpack.c.b16 %v1479, %v1471
      %v2432 = vpack.c.b16 %v1480, %v1472
      %v2433 = vpack.c.b16 %v1489, %v1481
      %v2434 = vpack.c.b16 %v1490, %v1482
      %v2435 = vpack.c.b16 %v1491, %v1483
      %v2436 = vpack.c.b16 %v1492, %v1484
      %v2437 = vpack.c.b16 %v1493, %v1485
      %v2438 = vpack.c.b16 %v1494, %v1486
      %v2439 = vpack.c.b16 %v1495, %v1487
      %v2440 = vpack.c.b16 %v1496, %v1488
      %v2441 = vpack.c.b16 %v1505, %v1497
      %v2442 = vpack.c.b16 %v1506, %v1498
      %v2443 = vpack.c.b16 %v1507, %v1499
      %v2444 = vpack.c.b16 %v1508, %v1500
      %v2445 = vpack.c.b16 %v1509, %v1501
      %v2446 = vpack.c.b16 %v1510, %v1502
      %v2447 = vpack.c.b16 %v1511, %v1503
      %v2448 = vpack.c.b16 %v1512, %v1504
      %v2449 = vpack.c.b16 %v1521, %v1513
      %v2450 = vpack.c.b16 %v1522, %v1514
      %v2451 = vpack.c.b16 %v1523, %v1515
      %v2452 = vpack.c.b16 %v1524, %v1516
      %v2453 = vpack.c.b16 %v1525, %v1517
      %v2454 = vpack.c.b16 %v1526, %v1518
      %v2455 = vpack.c.b16 %v1527, %v1519
      %v2456 = vpack.c.b16 %v1528, %v1520
      %v2457 = vpack.c.b16 %v1537, %v1529
      %v2458 = vpack.c.b16 %v1538, %v1530
      %v2459 = vpack.c.b16 %v1539, %v1531
      %v2460 = vpack.c.b16 %v1540, %v1532
      %v2461 = vpack.c.b16 %v1541, %v1533
      %v2462 = vpack.c.b16 %v1542, %v1534
      %v2463 = vpack.c.b16 %v1543, %v1535
      %v2464 = vpack.c.b16 %v1544, %v1536
      %v2465 = vpack.c.b16 %v1553, %v1545
      %v2466 = vpack.c.b16 %v1554, %v1546
      %v2467 = vpack.c.b16 %v1555, %v1547
      %v2468 = vpack.c.b16 %v1556, %v1548
      %v2469 = vpack.c.b16 %v1557, %v1549
      %v2470 = vpack.c.b16 %v1558, %v1550
      %v2471 = vpack.c.b16 %v1559, %v1551
      %v2472 = vpack.c.b16 %v1560, %v1552
      %v2473 = vpack.c.b16 %v1569, %v1561
      %v2474 = vpack.c.b16 %v1570, %v1562
      %v2475 = vpack.c.b16 %v1571, %v1563
      %v2476 = vpack.c.b16 %v1572, %v1564
      %v2477 = vpack.c.b16 %v1573, %v1565
      %v2478 = vpack.c.b16 %v1574, %v1566
      %v2479 = vpack.c.b16 %v1575, %v1567
      %v2480 = vpack.c.b16 %v1576, %v1568
      %v2481 = vpack.c.b16 %v1585, %v1577
      %v2482 = vpack.c.b16 %v1586, %v1578
      %v2483 = vpack.c.b16 %v1587, %v1579
      %v2484 = vpack.c.b16 %v1588, %v1580
      %v2485 = vpack.c.b16 %v1589, %v1581
      %v2486 = vpack.c.b16 %v1590, %v1582
      %v2487 = vpack.c.b16 %v1591, %v1583
      %v2488 = vpack.c.b16 %v1592, %v1584
      %v2489 = vpack.c.b16 %v1601, %v1593
      %v2490 = vpack.c.b16 %v1602, %v1594
      %v2491 = vpack.c.b16 %v1603, %v1595
      %v2492 = vpack.c.b16 %v1604, %v1596
      %v2493 = vpack.c.b16 %v1605, %v1597
      %v2494 = vpack.c.b16 %v1606, %v1598
      %v2495 = vpack.c.b16 %v1607, %v1599
      %v2496 = vpack.c.b16 %v1608, %v1600
      %v2497 = vpack.c.b16 %v1617, %v1609
      %v2498 = vpack.c.b16 %v1618, %v1610
      %v2499 = vpack.c.b16 %v1619, %v1611
      %v2500 = vpack.c.b16 %v1620, %v1612
      %v2501 = vpack.c.b16 %v1621, %v1613
      %v2502 = vpack.c.b16 %v1622, %v1614
      %v2503 = vpack.c.b16 %v1623, %v1615
      %v2504 = vpack.c.b16 %v1624, %v1616
      %v2505 = vpack.c.b16 %v1633, %v1625
      %v2506 = vpack.c.b16 %v1634, %v1626
      %v2507 = vpack.c.b16 %v1635, %v1627
      %v2508 = vpack.c.b16 %v1636, %v1628
      %v2509 = vpack.c.b16 %v1637, %v1629
      %v2510 = vpack.c.b16 %v1638, %v1630
      %v2511 = vpack.c.b16 %v1639, %v1631
      %v2512 = vpack.c.b16 %v1640, %v1632
      %v2513 = vpack.c.b16 %v1649, %v1641
      %v2514 = vpack.c.b16 %v1650, %v1642
      %v2515 = vpack.c.b16 %v1651, %v1643
      %v2516 = vpack.c.b16 %v1652, %v1644
      %v2517 = vpack.c.b16 %v1653, %v1645
      %v2518 = vpack.c.b16 %v1654, %v1646
      %v2519 = vpack.c.b16 %v1655, %v1647
      %v2520 = vpack.c.b16 %v1656, %v1648
      %v2521 = vpack.c.b16 %v1665, %v1657
      %v2522 = vpack.c.b16 %v1666, %v1658
      %v2523 = vpack.c.b16 %v1667, %v1659
      %v2524 = vpack.c.b16 %v1668, %v1660
      %v2525 = vpack.c.b16 %v1669, %v1661
      %v2526 = vpack.c.b16 %v1670, %v1662
      %v2527 = vpack.c.b16 %v1671, %v1663
      %v2528 = vpack.c.b16 %v1672, %v1664
      %v2529 = vpack.c.b16 %v1681, %v1673
      %v2530 = vpack.c.b16 %v1682, %v1674
      %v2531 = vpack.c.b16 %v1683, %v1675
      %v2532 = vpack.c.b16 %v1684, %v1676
      %v2533 = vpack.c.b16 %v1685, %v1677
      %v2534 = vpack.c.b16 %v1686, %v1678
      %v2535 = vpack.c.b16 %v1687, %v1679
      %v2536 = vpack.c.b16 %v1688, %v1680
      %v2537 = vpack.c.b16 %v1697, %v1689
      %v2538 = vpack.c.b16 %v1698, %v1690
      %v2539 = vpack.c.b16 %v1699, %v1691
      %v2540 = vpack.c.b16 %v1700, %v1692
      %v2541 = vpack.c.b16 %v1701, %v1693
      %v2542 = vpack.c.b16 %v1702, %v1694
      %v2543 = vpack.c.b16 %v1703, %v1695
      %v2544 = vpack.c.b16 %v1704, %v1696
      %v2545 = vpack.c.b16 %v1713, %v1705
      %v2546 = vpack.c.b16 %v1714, %v1706
      %v2547 = vpack.c.b16 %v1715, %v1707
      %v2548 = vpack.c.b16 %v1716, %v1708
      %v2549 = vpack.c.b16 %v1717, %v1709
      %v2550 = vpack.c.b16 %v1718, %v1710
      %v2551 = vpack.c.b16 %v1719, %v1711
      %v2552 = vpack.c.b16 %v1720, %v1712
      %v2553 = vpack.c.b16 %v1729, %v1721
      %v2554 = vpack.c.b16 %v1730, %v1722
      %v2555 = vpack.c.b16 %v1731, %v1723
      %v2556 = vpack.c.b16 %v1732, %v1724
      %v2557 = vpack.c.b16 %v1733, %v1725
      %v2558 = vpack.c.b16 %v1734, %v1726
      %v2559 = vpack.c.b16 %v1735, %v1727
      %v2560 = vpack.c.b16 %v1736, %v1728
      %v2561 = vpack.c.b16 %v1745, %v1737
      %v2562 = vpack.c.b16 %v1746, %v1738
      %v2563 = vpack.c.b16 %v1747, %v1739
      %v2564 = vpack.c.b16 %v1748, %v1740
      %v2565 = vpack.c.b16 %v1749, %v1741
      %v2566 = vpack.c.b16 %v1750, %v1742
      %v2567 = vpack.c.b16 %v1751, %v1743
      %v2568 = vpack.c.b16 %v1752, %v1744
      %v2569 = vpack.c.b16 %v1761, %v1753
      %v2570 = vpack.c.b16 %v1762, %v1754
      %v2571 = vpack.c.b16 %v1763, %v1755
      %v2572 = vpack.c.b16 %v1764, %v1756
      %v2573 = vpack.c.b16 %v1765, %v1757
      %v2574 = vpack.c.b16 %v1766, %v1758
      %v2575 = vpack.c.b16 %v1767, %v1759
      %v2576 = vpack.c.b16 %v1768, %v1760
      %v2577 = vpack.c.b16 %v1777, %v1769
      %v2578 = vpack.c.b16 %v1778, %v1770
      %v2579 = vpack.c.b16 %v1779, %v1771
      %v2580 = vpack.c.b16 %v1780, %v1772
      %v2581 = vpack.c.b16 %v1781, %v1773
      %v2582 = vpack.c.b16 %v1782, %v1774
      %v2583 = vpack.c.b16 %v1783, %v1775
      %v2584 = vpack.c.b16 %v1784, %v1776
      %v2585 = vpack.c.b16 %v1793, %v1785
      %v2586 = vpack.c.b16 %v1794, %v1786
      %v2587 = vpack.c.b16 %v1795, %v1787
      %v2588 = vpack.c.b16 %v1796, %v1788
      %v2589 = vpack.c.b16 %v1797, %v1789
      %v2590 = vpack.c.b16 %v1798, %v1790
      %v2591 = vpack.c.b16 %v1799, %v1791
      %v2592 = vpack.c.b16 %v1800, %v1792
      %v2593 = vpack.c.b16 %v1809, %v1801
      %v2594 = vpack.c.b16 %v1810, %v1802
      %v2595 = vpack.c.b16 %v1811, %v1803
      %v2596 = vpack.c.b16 %v1812, %v1804
      %v2597 = vpack.c.b16 %v1813, %v1805
      %v2598 = vpack.c.b16 %v1814, %v1806
      %v2599 = vpack.c.b16 %v1815, %v1807
      %v2600 = vpack.c.b16 %v1816, %v1808
      %v2601 = vpack.c.b16 %v1825, %v1817
      %v2602 = vpack.c.b16 %v1826, %v1818
      %v2603 = vpack.c.b16 %v1827, %v1819
      %v2604 = vpack.c.b16 %v1828, %v1820
      %v2605 = vpack.c.b16 %v1829, %v1821
      %v2606 = vpack.c.b16 %v1830, %v1822
      %v2607 = vpack.c.b16 %v1831, %v1823
      %v2608 = vpack.c.b16 %v1832, %v1824
      %v2609 = vpack.c.b16 %v1841, %v1833
      %v2610 = vpack.c.b16 %v1842, %v1834
      %v2611 = vpack.c.b16 %v1843, %v1835
      %v2612 = vpack.c.b16 %v1844, %v1836
      %v2613 = vpack.c.b16 %v1845, %v1837
      %v2614 = vpack.c.b16 %v1846, %v1838
      %v2615 = vpack.c.b16 %v1847, %v1839
      %v2616 = vpack.c.b16 %v1848, %v1840
      %v2617 = vpack.c.b16 %v1857, %v1849
      %v2618 = vpack.c.b16 %v1858, %v1850
      %v2619 = vpack.c.b16 %v1859, %v1851
      %v2620 = vpack.c.b16 %v1860, %v1852
      %v2621 = vpack.c.b16 %v1861, %v1853
      %v2622 = vpack.c.b16 %v1862, %v1854
      %v2623 = vpack.c.b16 %v1863, %v1855
      %v2624 = vpack.c.b16 %v1864, %v1856
      %v2625 = vpack.c.b16 %v1873, %v1865
      %v2626 = vpack.c.b16 %v1874, %v1866
      %v2627 = vpack.c.b16 %v1875, %v1867
      %v2628 = vpack.c.b16 %v1876, %v1868
      %v2629 = vpack.c.b16 %v1877, %v1869
      %v2630 = vpack.c.b16 %v1878, %v1870
      %v2631 = vpack.c.b16 %v1879, %v1871
      %v2632 = vpack.c.b16 %v1880, %v1872
      %v2633 = vpack.c.b16 %v1889, %v1881
      %v2634 = vpack.c.b16 %v1890, %v1882
      %v2635 = vpack.c.b16 %v1891, %v1883
      %v2636 = vpack.c.b16 %v1892, %v1884
      %v2637 = vpack.c.b16 %v1893, %v1885
      %v2638 = vpack.c.b16 %v1894, %v1886
      %v2639 = vpack.c.b16 %v1895, %v1887
      %v2640 = vpack.c.b16 %v1896, %v1888
      %v2641 = vpack.c.b16 %v1905, %v1897
      %v2642 = vpack.c.b16 %v1906, %v1898
      %v2643 = vpack.c.b16 %v1907, %v1899
      %v2644 = vpack.c.b16 %v1908, %v1900
      %v2645 = vpack.c.b16 %v1909, %v1901
      %v2646 = vpack.c.b16 %v1910, %v1902
      %v2647 = vpack.c.b16 %v1911, %v1903
      %v2648 = vpack.c.b16 %v1912, %v1904
      %v2649 = vpack.c.b16 %v1921, %v1913
      %v2650 = vpack.c.b16 %v1922, %v1914
      %v2651 = vpack.c.b16 %v1923, %v1915
      %v2652 = vpack.c.b16 %v1924, %v1916
      %v2653 = vpack.c.b16 %v1925, %v1917
      %v2654 = vpack.c.b16 %v1926, %v1918
      %v2655 = vpack.c.b16 %v1927, %v1919
      %v2656 = vpack.c.b16 %v1928, %v1920
      %v2657 = vpack.c.b16 %v1937, %v1929
      %v2658 = vpack.c.b16 %v1938, %v1930
      %v2659 = vpack.c.b16 %v1939, %v1931
      %v2660 = vpack.c.b16 %v1940, %v1932
      %v2661 = vpack.c.b16 %v1941, %v1933
      %v2662 = vpack.c.b16 %v1942, %v1934
      %v2663 = vpack.c.b16 %v1943, %v1935
      %v2664 = vpack.c.b16 %v1944, %v1936
      %v2665 = vpack.c.b16 %v1953, %v1945
      %v2666 = vpack.c.b16 %v1954, %v1946
      %v2667 = vpack.c.b16 %v1955, %v1947
      %v2668 = vpack.c.b16 %v1956, %v1948
      %v2669 = vpack.c.b16 %v1957, %v1949
      %v2670 = vpack.c.b16 %v1958, %v1950
      %v2671 = vpack.c.b16 %v1959, %v1951
      %v2672 = vpack.c.b16 %v1960, %v1952
      %v2673 = vpack.c.b16 %v1969, %v1961
      %v2674 = vpack.c.b16 %v1970, %v1962
      %v2675 = vpack.c.b16 %v1971, %v1963
      %v2676 = vpack.c.b16 %v1972, %v1964
      %v2677 = vpack.c.b16 %v1973, %v1965
      %v2678 = vpack.c.b16 %v1974, %v1966
      %v2679 = vpack.c.b16 %v1975, %v1967
      %v2680 = vpack.c.b16 %v1976, %v1968
      %v2681 = vpack.c.b16 %v1985, %v1977
      %v2682 = vpack.c.b16 %v1986, %v1978
      %v2683 = vpack.c.b16 %v1987, %v1979
      %v2684 = vpack.c.b16 %v1988, %v1980
      %v2685 = vpack.c.b16 %v1989, %v1981
      %v2686 = vpack.c.b16 %v1990, %v1982
      %v2687 = vpack.c.b16 %v1991, %v1983
      %v2688 = vpack.c.b16 %v1992, %v1984
      %v2689 = vpack.c.b16 %v2001, %v1993
      %v2690 = vpack.c.b16 %v2002, %v1994
      %v2691 = vpack.c.b16 %v2003, %v1995
      %v2692 = vpack.c.b16 %v2004, %v1996
      %v2693 = vpack.c.b16 %v2005, %v1997
      %v2694 = vpack.c.b16 %v2006, %v1998
      %v2695 = vpack.c.b16 %v2007, %v1999
      %v2696 = vpack.c.b16 %v2008, %v2000
      %v2697 = vpack.c.b16 %v2017, %v2009
      %v2698 = vpack.c.b16 %v2018, %v2010
      %v2699 = vpack.c.b16 %v2019, %v2011
      %v2700 = vpack.c.b16 %v2020, %v2012
      %v2701 = vpack.c.b16 %v2021, %v2013
      %v2702 = vpack.c.b16 %v2022, %v2014
      %v2703 = vpack.c.b16 %v2023, %v2015
      %v2704 = vpack.c.b16 %v2024, %v2016
      %v2705 = vpack.c.b16 %v2033, %v2025
      %v2706 = vpack.c.b16 %v2034, %v2026
      %v2707 = vpack.c.b16 %v2035, %v2027
      %v2708 = vpack.c.b16 %v2036, %v2028
      %v2709 = vpack.c.b16 %v2037, %v2029
      %v2710 = vpack.c.b16 %v2038, %v2030
      %v2711 = vpack.c.b16 %v2039, %v2031
      %v2712 = vpack.c.b16 %v2040, %v2032
      %v2713 = vpack.c.b16 %v2049, %v2041
      %v2714 = vpack.c.b16 %v2050, %v2042
      %v2715 = vpack.c.b16 %v2051, %v2043
      %v2716 = vpack.c.b16 %v2052, %v2044
      %v2717 = vpack.c.b16 %v2053, %v2045
      %v2718 = vpack.c.b16 %v2054, %v2046
      %v2719 = vpack.c.b16 %v2055, %v2047
      %v2720 = vpack.c.b16 %v2056, %v2048
      %v2721 = vpack.c.b16 %v2065, %v2057
      %v2722 = vpack.c.b16 %v2066, %v2058
      %v2723 = vpack.c.b16 %v2067, %v2059
      %v2724 = vpack.c.b16 %v2068, %v2060
      %v2725 = vpack.c.b16 %v2069, %v2061
      %v2726 = vpack.c.b16 %v2070, %v2062
      %v2727 = vpack.c.b16 %v2071, %v2063
      %v2728 = vpack.c.b16 %v2072, %v2064
      %v2729 = vpack.c.b16 %v2081, %v2073
      %v2730 = vpack.c.b16 %v2082, %v2074
      %v2731 = vpack.c.b16 %v2083, %v2075
      %v2732 = vpack.c.b16 %v2084, %v2076
      %v2733 = vpack.c.b16 %v2085, %v2077
      %v2734 = vpack.c.b16 %v2086, %v2078
      %v2735 = vpack.c.b16 %v2087, %v2079
      %v2736 = vpack.c.b16 %v2088, %v2080
      %v2737 = vpack.c.b16 %v2097, %v2089
      %v2738 = vpack.c.b16 %v2098, %v2090
      %v2739 = vpack.c.b16 %v2099, %v2091
      %v2740 = vpack.c.b16 %v2100, %v2092
      %v2741 = vpack.c.b16 %v2101, %v2093
      %v2742 = vpack.c.b16 %v2102, %v2094
      %v2743 = vpack.c.b16 %v2103, %v2095
      %v2744 = vpack.c.b16 %v2104, %v2096
      %v2745 = vpack.c.b16 %v2113, %v2105
      %v2746 = vpack.c.b16 %v2114, %v2106
      %v2747 = vpack.c.b16 %v2115, %v2107
      %v2748 = vpack.c.b16 %v2116, %v2108
      %v2749 = vpack.c.b16 %v2117, %v2109
      %v2750 = vpack.c.b16 %v2118, %v2110
      %v2751 = vpack.c.b16 %v2119, %v2111
      %v2752 = vpack.c.b16 %v2120, %v2112
      %v2753 = vpack.c.b16 %v2129, %v2121
      %v2754 = vpack.c.b16 %v2130, %v2122
      %v2755 = vpack.c.b16 %v2131, %v2123
      %v2756 = vpack.c.b16 %v2132, %v2124
      %v2757 = vpack.c.b16 %v2133, %v2125
      %v2758 = vpack.c.b16 %v2134, %v2126
      %v2759 = vpack.c.b16 %v2135, %v2127
      %v2760 = vpack.c.b16 %v2136, %v2128
      %v2761 = vpack.c.b16 %v2145, %v2137
      %v2762 = vpack.c.b16 %v2146, %v2138
      %v2763 = vpack.c.b16 %v2147, %v2139
      %v2764 = vpack.c.b16 %v2148, %v2140
      %v2765 = vpack.c.b16 %v2149, %v2141
      %v2766 = vpack.c.b16 %v2150, %v2142
      %v2767 = vpack.c.b16 %v2151, %v2143
      %v2768 = vpack.c.b16 %v2152, %v2144
      %v2769 = vpack.c.b16 %v2161, %v2153
      %v2770 = vpack.c.b16 %v2162, %v2154
      %v2771 = vpack.c.b16 %v2163, %v2155
      %v2772 = vpack.c.b16 %v2164, %v2156
      %v2773 = vpack.c.b16 %v2165, %v2157
      %v2774 = vpack.c.b16 %v2166, %v2158
      %v2775 = vpack.c.b16 %v2167, %v2159
      %v2776 = vpack.c.b16 %v2168, %v2160
      %v2777 = vpack.c.b16 %v2177, %v2169
      %v2778 = vpack.c.b16 %v2178, %v2170
      %v2779 = vpack.c.b16 %v2179, %v2171
      %v2780 = vpack.c.b16 %v2180, %v2172
      %v2781 = vpack.c.b16 %v2181, %v2173
      %v2782 = vpack.c.b16 %v2182, %v2174
      %v2783 = vpack.c.b16 %v2183, %v2175
      %v2784 = vpack.c.b16 %v2184, %v2176
      %v2785 = vpack.c.b16 %v2193, %v2185
      %v2786 = vpack.c.b16 %v2194, %v2186
      %v2787 = vpack.c.b16 %v2195, %v2187
      %v2788 = vpack.c.b16 %v2196, %v2188
      %v2789 = vpack.c.b16 %v2197, %v2189
      %v2790 = vpack.c.b16 %v2198, %v2190
      %v2791 = vpack.c.b16 %v2199, %v2191
      %v2792 = vpack.c.b16 %v2200, %v2192
      %v2793 = vpack.c.b16 %v2209, %v2201
      %v2794 = vpack.c.b16 %v2210, %v2202
      %v2795 = vpack.c.b16 %v2211, %v2203
      %v2796 = vpack.c.b16 %v2212, %v2204
      %v2797 = vpack.c.b16 %v2213, %v2205
      %v2798 = vpack.c.b16 %v2214, %v2206
      %v2799 = vpack.c.b16 %v2215, %v2207
      %v2800 = vpack.c.b16 %v2216, %v2208
      %v2801 = vpack.c.b16 %v2225, %v2217
      %v2802 = vpack.c.b16 %v2226, %v2218
      %v2803 = vpack.c.b16 %v2227, %v2219
      %v2804 = vpack.c.b16 %v2228, %v2220
      %v2805 = vpack.c.b16 %v2229, %v2221
      %v2806 = vpack.c.b16 %v2230, %v2222
      %v2807 = vpack.c.b16 %v2231, %v2223
      %v2808 = vpack.c.b16 %v2232, %v2224
      %v2809 = vpack.c.b16 %v2241, %v2233
      %v2810 = vpack.c.b16 %v2242, %v2234
      %v2811 = vpack.c.b16 %v2243, %v2235
      %v2812 = vpack.c.b16 %v2244, %v2236
      %v2813 = vpack.c.b16 %v2245, %v2237
      %v2814 = vpack.c.b16 %v2246, %v2238
      %v2815 = vpack.c.b16 %v2247, %v2239
      %v2816 = vpack.c.b16 %v2248, %v2240
      %v2817 = vpack.c.b16 %v2257, %v2249
      %v2818 = vpack.c.b16 %v2258, %v2250
      %v2819 = vpack.c.b16 %v2259, %v2251
      %v2820 = vpack.c.b16 %v2260, %v2252
      %v2821 = vpack.c.b16 %v2261, %v2253
      %v2822 = vpack.c.b16 %v2262, %v2254
      %v2823 = vpack.c.b16 %v2263, %v2255
      %v2824 = vpack.c.b16 %v2264, %v2256
      %v2825 = vpack.c.b16 %v2273, %v2265
      %v2826 = vpack.c.b16 %v2274, %v2266
      %v2827 = vpack.c.b16 %v2275, %v2267
      %v2828 = vpack.c.b16 %v2276, %v2268
      %v2829 = vpack.c.b16 %v2277, %v2269
      %v2830 = vpack.c.b16 %v2278, %v2270
      %v2831 = vpack.c.b16 %v2279, %v2271
      %v2832 = vpack.c.b16 %v2280, %v2272
      %v2833 = vpack.c.b16 %v2289, %v2281
      %v2834 = vpack.c.b16 %v2290, %v2282
      %v2835 = vpack.c.b16 %v2291, %v2283
      %v2836 = vpack.c.b16 %v2292, %v2284
      %v2837 = vpack.c.b16 %v2293, %v2285
      %v2838 = vpack.c.b16 %v2294, %v2286
      %v2839 = vpack.c.b16 %v2295, %v2287
      %v2840 = vpack.c.b16 %v2296, %v2288
      %v2841 = vpack.c.b16 %v2305, %v2297
      %v2842 = vpack.c.b16 %v2306, %v2298
      %v2843 = vpack.c.b16 %v2307, %v2299
      %v2844 = vpack.c.b16 %v2308, %v2300
      %v2845 = vpack.c.b16 %v2309, %v2301
      %v2846 = vpack.c.b16 %v2310, %v2302
      %v2847 = vpack.c.b16 %v2311, %v2303
      %v2848 = vpack.c.b16 %v2312, %v2304
      %v2849 = vpack.c.b16 %v2321, %v2313
      %v2850 = vpack.c.b16 %v2322, %v2314
      %v2851 = vpack.c.b16 %v2323, %v2315
      %v2852 = vpack.c.b16 %v2324, %v2316
      %v2853 = vpack.c.b16 %v2325, %v2317
      %v2854 = vpack.c.b16 %v2326, %v2318
      %v2855 = vpack.c.b16 %v2327, %v2319
      %v2856 = vpack.c.b16 %v2328, %v2320
      %v2857 = vpack.c.b16 %v2337, %v2329
      %v2858 = vpack.c.b16 %v2338, %v2330
      %v2859 = vpack.c.b16 %v2339, %v2331
      %v2860 = vpack.c.b16 %v2340, %v2332
      %v2861 = vpack.c.b16 %v2341, %v2333
      %v2862 = vpack.c.b16 %v2342, %v2334
      %v2863 = vpack.c.b16 %v2343, %v2335
      %v2864 = vpack.c.b16 %v2344, %v2336
      %v2865 = vpack.c.b16 %v2353, %v2345
      %v2866 = vpack.c.b16 %v2354, %v2346
      %v2867 = vpack.c.b16 %v2355, %v2347
      %v2868 = vpack.c.b16 %v2356, %v2348
      %v2869 = vpack.c.b16 %v2357, %v2349
      %v2870 = vpack.c.b16 %v2358, %v2350
      %v2871 = vpack.c.b16 %v2359, %v2351
      %v2872 = vpack.c.b16 %v2360, %v2352
      %v3513 = vunpack.c.l.b16 %v690
      %v3514 = vunpack.c.l.b16 %v691
      %v3515 = vunpack.c.l.b16 %v692
      %v3516 = vunpack.c.l.b16 %v693
      %v3517 = vunpack.c.l.b16 %v694
      %v3518 = vunpack.c.l.b16 %v695
      %v3519 = vunpack.c.l.b16 %v696
      %v3520 = vunpack.c.l.b16 %v697
      %v3521 = vunpack.c.l.b16 %v698
      %v3522 = vunpack.c.l.b16 %v699
      %v3523 = vunpack.c.l.b16 %v700
      %v3524 = vunpack.c.l.b16 %v701
      %v3525 = vunpack.c.l.b16 %v702
      %v3526 = vunpack.c.l.b16 %v703
      %v3527 = vunpack.c.l.b16 %v704
      %v3528 = vunpack.c.l.b16 %v705
      %v3529 = vunpack.c.l.b16 %v706
      %v3530 = vunpack.c.l.b16 %v707
      %v3531 = vunpack.c.l.b16 %v708
      %v3532 = vunpack.c.l.b16 %v709
      %v3533 = vunpack.c.l.b16 %v710
      %v3534 = vunpack.c.l.b16 %v711
      %v3535 = vunpack.c.l.b16 %v712
      %v3536 = vunpack.c.l.b16 %v713
      %v3537 = vunpack.c.l.b16 %v714
      %v3538 = vunpack.c.l.b16 %v715
      %v3539 = vunpack.c.l.b16 %v716
      %v3540 = vunpack.c.l.b16 %v717
      %v3541 = vunpack.c.l.b16 %v718
      %v3542 = vunpack.c.l.b16 %v719
      %v3543 = vunpack.c.l.b16 %v720
      %v3544 = vunpack.c.l.b16 %v721
      %v3545 = vunpack.c.l.b16 %v722
      %v3546 = vunpack.c.l.b16 %v723
      %v3547 = vunpack.c.l.b16 %v724
      %v3548 = vunpack.c.l.b16 %v725
      %v3549 = vunpack.c.l.b16 %v726
      %v3550 = vunpack.c.l.b16 %v727
      %v3551 = vunpack.c.l.b16 %v728
      %v3552 = vunpack.c.l.b16 %v729
      %v3553 = vunpack.c.l.b16 %v730
      %v3554 = vunpack.c.l.b16 %v731
      %v3555 = vunpack.c.l.b16 %v732
      %v3556 = vunpack.c.l.b16 %v733
      %v3557 = vunpack.c.l.b16 %v734
      %v3558 = vunpack.c.l.b16 %v735
      %v3559 = vunpack.c.l.b16 %v736
      %v3560 = vunpack.c.l.b16 %v737
      %v3561 = vunpack.c.l.b16 %v738
      %v3562 = vunpack.c.l.b16 %v739
      %v3563 = vunpack.c.l.b16 %v740
      %v3564 = vunpack.c.l.b16 %v741
      %v3565 = vunpack.c.l.b16 %v742
      %v3566 = vunpack.c.l.b16 %v743
      %v3567 = vunpack.c.l.b16 %v744
      %v3568 = vunpack.c.l.b16 %v745
      %v3569 = vunpack.c.l.b16 %v746
      %v3570 = vunpack.c.l.b16 %v747
      %v3571 = vunpack.c.l.b16 %v748
      %v3572 = vunpack.c.l.b16 %v749
      %v3573 = vunpack.c.l.b16 %v750
      %v3574 = vunpack.c.l.b16 %v751
      %v3575 = vunpack.c.l.b16 %v752
      %v3576 = vunpack.c.l.b16 %v753
      %v3577 = vunpack.c.l.b16 %v754
      %v3578 = vunpack.c.l.b16 %v755
      %v3579 = vunpack.c.l.b16 %v756
      %v3580 = vunpack.c.l.b16 %v757
      %v3581 = vunpack.c.l.b16 %v758
      %v3582 = vunpack.c.l.b16 %v759
      %v3583 = vunpack.c.l.b16 %v760
      %v3584 = vunpack.c.l.b16 %v761
      %v3585 = vunpack.c.l.b16 %v762
      %v3586 = vunpack.c.l.b16 %v763
      %v3587 = vunpack.c.l.b16 %v764
      %v3588 = vunpack.c.l.b16 %v765
      %v3589 = vunpack.c.l.b16 %v766
      %v3590 = vunpack.c.l.b16 %v767
      %v3591 = vunpack.c.l.b16 %v768
      %v3592 = vunpack.c.l.b16 %v769
      %v3593 = vunpack.c.l.b16 %v770
      %v3594 = vunpack.c.l.b16 %v771
      %v3595 = vunpack.c.l.b16 %v772
      %v3596 = vunpack.c.l.b16 %v773
      %v3597 = vunpack.c.l.b16 %v774
      %v3598 = vunpack.c.l.b16 %v775
      %v3599 = vunpack.c.l.b16 %v776
      %v3600 = vunpack.c.l.b16 %v777
      %v3601 = vunpack.c.l.b16 %v778
      %v3602 = vunpack.c.l.b16 %v779
      %v3603 = vunpack.c.l.b16 %v780
      %v3604 = vunpack.c.l.b16 %v781
      %v3605 = vunpack.c.l.b16 %v782
      %v3606 = vunpack.c.l.b16 %v783
      %v3607 = vunpack.c.l.b16 %v784
      %v3608 = vunpack.c.l.b16 %v785
      %v3609 = vunpack.c.l.b16 %v786
      %v3610 = vunpack.c.l.b16 %v787
      %v3611 = vunpack.c.l.b16 %v788
      %v3612 = vunpack.c.l.b16 %v789
      %v3613 = vunpack.c.l.b16 %v790
      %v3614 = vunpack.c.l.b16 %v791
      %v3615 = vunpack.c.l.b16 %v792
      %v3616 = vunpack.c.l.b16 %v793
      %v3617 = vunpack.c.l.b16 %v794
      %v3618 = vunpack.c.l.b16 %v795
      %v3619 = vunpack.c.l.b16 %v796
      %v3620 = vunpack.c.l.b16 %v797
      %v3621 = vunpack.c.l.b16 %v798
      %v3622 = vunpack.c.l.b16 %v799
      %v3623 = vunpack.c.l.b16 %v800
      %v3624 = vunpack.c.l.b16 %v801
      %v3625 = vunpack.c.l.b16 %v802
      %v3626 = vunpack.c.l.b16 %v803
      %v3627 = vunpack.c.l.b16 %v804
      %v3628 = vunpack.c.l.b16 %v805
      %v3629 = vunpack.c.l.b16 %v806
      %v3630 = vunpack.c.l.b16 %v807
      %v3631 = vunpack.c.l.b16 %v808
      %v3632 = vunpack.c.l.b16 %v809
      %v3633 = vunpack.c.l.b16 %v810
      %v3634 = vunpack.c.l.b16 %v811
      %v3635 = vunpack.c.l.b16 %v812
      %v3636 = vunpack.c.l.b16 %v813
      %v3637 = vunpack.c.l.b16 %v814
      %v3638 = vunpack.c.l.b16 %v815
      %v3639 = vunpack.c.l.b16 %v816
      %v3640 = vunpack.c.l.b16 %v817
      %v3641 = vpack.c.b16 %v3514, %v3513
      %v3642 = vpack.c.b16 %v3516, %v3515
      %v3643 = vpack.c.b16 %v3518, %v3517
      %v3644 = vpack.c.b16 %v3520, %v3519
      %v3645 = vpack.c.b16 %v3522, %v3521
      %v3646 = vpack.c.b16 %v3524, %v3523
      %v3647 = vpack.c.b16 %v3526, %v3525
      %v3648 = vpack.c.b16 %v3528, %v3527
      %v3649 = vpack.c.b16 %v3530, %v3529
      %v3650 = vpack.c.b16 %v3532, %v3531
      %v3651 = vpack.c.b16 %v3534, %v3533
      %v3652 = vpack.c.b16 %v3536, %v3535
      %v3653 = vpack.c.b16 %v3538, %v3537
      %v3654 = vpack.c.b16 %v3540, %v3539
      %v3655 = vpack.c.b16 %v3542, %v3541
      %v3656 = vpack.c.b16 %v3544, %v3543
      %v3657 = vpack.c.b16 %v3546, %v3545
      %v3658 = vpack.c.b16 %v3548, %v3547
      %v3659 = vpack.c.b16 %v3550, %v3549
      %v3660 = vpack.c.b16 %v3552, %v3551
      %v3661 = vpack.c.b16 %v3554, %v3553
      %v3662 = vpack.c.b16 %v3556, %v3555
      %v3663 = vpack.c.b16 %v3558, %v3557
      %v3664 = vpack.c.b16 %v3560, %v3559
      %v3665 = vpack.c.b16 %v3562, %v3561
      %v3666 = vpack.c.b16 %v3564, %v3563
      %v3667 = vpack.c.b16 %v3566, %v3565
      %v3668 = vpack.c.b16 %v3568, %v3567
      %v3669 = vpack.c.b16 %v3570, %v3569
      %v3670 = vpack.c.b16 %v3572, %v3571
      %v3671 = vpack.c.b16 %v3574, %v3573
      %v3672 = vpack.c.b16 %v3576, %v3575
      %v3673 = vpack.c.b16 %v3578, %v3577
      %v3674 = vpack.c.b16 %v3580, %v3579
      %v3675 = vpack.c.b16 %v3582, %v3581
      %v3676 = vpack.c.b16 %v3584, %v3583
      %v3677 = vpack.c.b16 %v3586, %v3585
      %v3678 = vpack.c.b16 %v3588, %v3587
      %v3679 = vpack.c.b16 %v3590, %v3589
      %v3680 = vpack.c.b16 %v3592, %v3591
      %v3681 = vpack.c.b16 %v3594, %v3593
      %v3682 = vpack.c.b16 %v3596, %v3595
      %v3683 = vpack.c.b16 %v3598, %v3597
      %v3684 = vpack.c.b16 %v3600, %v3599
      %v3685 = vpack.c.b16 %v3602, %v3601
      %v3686 = vpack.c.b16 %v3604, %v3603
      %v3687 = vpack.c.b16 %v3606, %v3605
      %v3688 = vpack.c.b16 %v3608, %v3607
      %v3689 = vpack.c.b16 %v3610, %v3609
      %v3690 = vpack.c.b16 %v3612, %v3611
      %v3691 = vpack.c.b16 %v3614, %v3613
      %v3692 = vpack.c.b16 %v3616, %v3615
      %v3693 = vpack.c.b16 %v3618, %v3617
      %v3694 = vpack.c.b16 %v3620, %v3619
      %v3695 = vpack.c.b16 %v3622, %v3621
      %v3696 = vpack.c.b16 %v3624, %v3623
      %v3697 = vpack.c.b16 %v3626, %v3625
      %v3698 = vpack.c.b16 %v3628, %v3627
      %v3699 = vpack.c.b16 %v3630, %v3629
      %v3700 = vpack.c.b16 %v3632, %v3631
      %v3701 = vpack.c.b16 %v3634, %v3633
      %v3702 = vpack.c.b16 %v3636, %v3635
      %v3703 = vpack.c.b16 %v3638, %v3637
      %v3704 = vpack.c.b16 %v3640, %v3639
      %3769 = vmatprep.subr.bf16.mxu0 0
      %3770 = vmatpush1.bf16.msra.mxu0 %v3641
      %3771 = vmatprep.subr.bf16.mxu0 0
      %3772 = vmatpush1.bf16.msra.mxu0 %v3642
      %3773 = vmatprep.subr.bf16.mxu0 0
      %3774 = vmatpush1.bf16.msra.mxu0 %v3643
      %3775 = vmatprep.subr.bf16.mxu0 0
      %3776 = vmatpush1.bf16.msra.mxu0 %v3644
      %3777 = vmatprep.subr.bf16.mxu0 0
      %3778 = vmatpush1.bf16.msra.mxu0 %v3645
      %3779 = vmatprep.subr.bf16.mxu0 0
      %3780 = vmatpush1.bf16.msra.mxu0 %v3646
      %3781 = vmatprep.subr.bf16.mxu0 0
      %3782 = vmatpush1.bf16.msra.mxu0 %v3647
      %3783 = vmatprep.subr.bf16.mxu0 0
      %3784 = vmatpush1.bf16.msra.mxu0 %v3648
      %3785 = vmatprep.subr.bf16.mxu0 0
      %3786 = vmatpush1.bf16.msra.mxu0 %v3649
      %3787 = vmatprep.subr.bf16.mxu0 0
      %3788 = vmatpush1.bf16.msra.mxu0 %v3650
      %3789 = vmatprep.subr.bf16.mxu0 0
      %3790 = vmatpush1.bf16.msra.mxu0 %v3651
      %3791 = vmatprep.subr.bf16.mxu0 0
      %3792 = vmatpush1.bf16.msra.mxu0 %v3652
      %3793 = vmatprep.subr.bf16.mxu0 0
      %3794 = vmatpush1.bf16.msra.mxu0 %v3653
      %3795 = vmatprep.subr.bf16.mxu0 0
      %3796 = vmatpush1.bf16.msra.mxu0 %v3654
      %3797 = vmatprep.subr.bf16.mxu0 0
      %3798 = vmatpush1.bf16.msra.mxu0 %v3655
      %3799 = vmatprep.subr.bf16.mxu0 0
      %3800 = vmatpush1.bf16.msra.mxu0 %v3656
      %3801 = vmatprep.mubr.bf16.mxu0 %v2362
      %3802 = vmatmul.mubr.bf16.gmra.mrb[0].mxu0 %v2361
      %v3803 = vpop.f32.mrb[0].mxu0
      %v3804 = vadd.f32 %v823, %v3803
      %v3805 = vpop.f32.mrb[0].mxu0
      %v3806 = vpop.f32.mrb[0].mxu0
      %v3807 = vadd.f32 %v823, %v3806
      %v3808 = vpop.f32.mrb[0].mxu0
      %3809 = vmatprep.mubr.bf16.mxu0 %v2370
      %3810 = vmatmul.mubr.bf16.gmra.mrb[0].mxu0 %v2369
      %v3811 = vpop.f32.mrb[0].mxu0
      %v3812 = vadd.f32 %v823, %v3811
      %v3813 = vpop.f32.mrb[0].mxu0
      %v3814 = vpop.f32.mrb[0].mxu0
      %v3815 = vadd.f32 %v823, %v3814
      %v3816 = vpop.f32.mrb[0].mxu0
      %3817 = vmatprep.mubr.bf16.mxu0 %v2378
      %3818 = vmatmul.mubr.bf16.gmra.mrb[0].mxu0 %v2377
      %v3819 = vpop.f32.mrb[0].mxu0
      %v3820 = vadd.f32 %v823, %v3819
      %v3821 = vpop.f32.mrb[0].mxu0
      %v3822 = vpop.f32.mrb[0].mxu0
      %v3823 = vadd.f32 %v823, %v3822
      %v3824 = vpop.f32.mrb[0].mxu0
      %3825 = vmatprep.mubr.bf16.mxu0 %v2386
      %3826 = vmatmul.mubr.bf16.gmra.mrb[0].mxu0 %v2385
      %v3827 = vpop.f32.mrb[0].mxu0
      %v3828 = vadd.f32 %v823, %v3827
      %v3829 = vpop.f32.mrb[0].mxu0
      %v3830 = vpop.f32.mrb[0].mxu0
      %v3831 = vadd.f32 %v823, %v3830
      %v3832 = vpop.f32.mrb[0].mxu0
      %3833 = vmatprep.mubr.bf16.mxu0 %v2394
      %3834 = vmatmul.mubr.bf16.gmra.mrb[0].mxu0 %v2393
      %v3835 = vpop.f32.mrb[0].mxu0
      %v3836 = vadd.f32 %v823, %v3835
      %v3837 = vpop.f32.mrb[0].mxu0
      %v3838 = vpop.f32.mrb[0].mxu0
      %v3839 = vadd.f32 %v823, %v3838
      %v3840 = vpop.f32.mrb[0].mxu0
      %3841 = vmatprep.mubr.bf16.mxu0 %v2402
      %3842 = vmatmul.mubr.bf16.gmra.mrb[0].mxu0 %v2401
      %v3843 = vpop.f32.mrb[0].mxu0
      %v3844 = vadd.f32 %v823, %v3843
      %v3845 = vpop.f32.mrb[0].mxu0
      %v3846 = vpop.f32.mrb[0].mxu0
      %v3847 = vadd.f32 %v823, %v3846
      %v3848 = vpop.f32.mrb[0].mxu0
      %3849 = vmatprep.mubr.bf16.mxu0 %v2410
      %3850 = vmatmul.mubr.bf16.gmra.mrb[0].mxu0 %v2409
      %v3851 = vpop.f32.mrb[0].mxu0
      %v3852 = vadd.f32 %v823, %v3851
      %v3853 = vpop.f32.mrb[0].mxu0
      %v3854 = vpop.f32.mrb[0].mxu0
      %v3855 = vadd.f32 %v823, %v3854
      %v3856 = vpop.f32.mrb[0].mxu0
      %3857 = vmatprep.mubr.bf16.mxu0 %v2418
      %3858 = vmatmul.mubr.bf16.gmra.mrb[0].mxu0 %v2417
      %v3859 = vpop.f32.mrb[0].mxu0
      %v3860 = vadd.f32 %v823, %v3859
      %v3861 = vpop.f32.mrb[0].mxu0
      %v3862 = vpop.f32.mrb[0].mxu0
      %v3863 = vadd.f32 %v823, %v3862
      %v3864 = vpop.f32.mrb[0].mxu0
      %3865 = vmatprep.mubr.bf16.mxu0 %v2426
      %3866 = vmatmul.mubr.bf16.gmra.mrb[0].mxu0 %v2425
      %v3867 = vpop.f32.mrb[0].mxu0
      %v3868 = vadd.f32 %v823, %v3867
      %v3869 = vpop.f32.mrb[0].mxu0
      %v3870 = vpop.f32.mrb[0].mxu0
      %v3871 = vadd.f32 %v823, %v3870
      %v3872 = vpop.f32.mrb[0].mxu0
      %3873 = vmatprep.mubr.bf16.mxu0 %v2434
      %3874 = vmatmul.mubr.bf16.gmra.mrb[0].mxu0 %v2433
      %v3875 = vpop.f32.mrb[0].mxu0
      %v3876 = vadd.f32 %v823, %v3875
      %v3877 = vpop.f32.mrb[0].mxu0
      %v3878 = vpop.f32.mrb[0].mxu0
      %v3879 = vadd.f32 %v823, %v3878
      %v3880 = vpop.f32.mrb[0].mxu0
      %3881 = vmatprep.mubr.bf16.mxu0 %v2442
      %3882 = vmatmul.mubr.bf16.gmra.mrb[0].mxu0 %v2441
      %v3883 = vpop.f32.mrb[0].mxu0
      %v3884 = vadd.f32 %v823, %v3883
      %v3885 = vpop.f32.mrb[0].mxu0
      %v3886 = vpop.f32.mrb[0].mxu0
      %v3887 = vadd.f32 %v823, %v3886
      %v3888 = vpop.f32.mrb[0].mxu0
      %3889 = vmatprep.mubr.bf16.mxu0 %v2450
      %3890 = vmatmul.mubr.bf16.gmra.mrb[0].mxu0 %v2449
      %v3891 = vpop.f32.mrb[0].mxu0
      %v3892 = vadd.f32 %v823, %v3891
      %v3893 = vpop.f32.mrb[0].mxu0
      %v3894 = vpop.f32.mrb[0].mxu0
      %v3895 = vadd.f32 %v823, %v3894
      %v3896 = vpop.f32.mrb[0].mxu0
      %3897 = vmatprep.mubr.bf16.mxu0 %v2458
      %3898 = vmatmul.mubr.bf16.gmra.mrb[0].mxu0 %v2457
      %v3899 = vpop.f32.mrb[0].mxu0
      %v3900 = vadd.f32 %v823, %v3899
      %v3901 = vpop.f32.mrb[0].mxu0
      %v3902 = vpop.f32.mrb[0].mxu0
      %v3903 = vadd.f32 %v823, %v3902
      %v3904 = vpop.f32.mrb[0].mxu0
      %3905 = vmatprep.mubr.bf16.mxu0 %v2466
      %3906 = vmatmul.mubr.bf16.gmra.mrb[0].mxu0 %v2465
      %v3907 = vpop.f32.mrb[0].mxu0
      %v3908 = vadd.f32 %v823, %v3907
      %v3909 = vpop.f32.mrb[0].mxu0
      %v3910 = vpop.f32.mrb[0].mxu0
      %v3911 = vadd.f32 %v823, %v3910
      %v3912 = vpop.f32.mrb[0].mxu0
      %3913 = vmatprep.mubr.bf16.mxu0 %v2474
      %3914 = vmatmul.mubr.bf16.gmra.mrb[0].mxu0 %v2473
      %v3915 = vpop.f32.mrb[0].mxu0
      %v3916 = vadd.f32 %v823, %v3915
      %v3917 = vpop.f32.mrb[0].mxu0
      %v3918 = vpop.f32.mrb[0].mxu0
      %v3919 = vadd.f32 %v823, %v3918
      %v3920 = vpop.f32.mrb[0].mxu0
      %3921 = vmatprep.mubr.bf16.mxu0 %v2482
      %3922 = vmatmul.mubr.bf16.gmra.mrb[0].mxu0 %v2481
      %v3923 = vpop.f32.mrb[0].mxu0
      %v3924 = vadd.f32 %v823, %v3923
      %v3925 = vpop.f32.mrb[0].mxu0
      %v3926 = vpop.f32.mrb[0].mxu0
      %v3927 = vadd.f32 %v823, %v3926
      %v3928 = vpop.f32.mrb[0].mxu0
      %3929 = vmatprep.mubr.bf16.mxu0 %v2490
      %3930 = vmatmul.mubr.bf16.gmra.mrb[0].mxu0 %v2489
      %v3931 = vpop.f32.mrb[0].mxu0
      %v3932 = vadd.f32 %v823, %v3931
      %v3933 = vpop.f32.mrb[0].mxu0
      %v3934 = vpop.f32.mrb[0].mxu0
      %v3935 = vadd.f32 %v823, %v3934
      %v3936 = vpop.f32.mrb[0].mxu0
      %3937 = vmatprep.mubr.bf16.mxu0 %v2498
      %3938 = vmatmul.mubr.bf16.gmra.mrb[0].mxu0 %v2497
      %v3939 = vpop.f32.mrb[0].mxu0
      %v3940 = vadd.f32 %v823, %v3939
      %v3941 = vpop.f32.mrb[0].mxu0
      %v3942 = vpop.f32.mrb[0].mxu0
      %v3943 = vadd.f32 %v823, %v3942
      %v3944 = vpop.f32.mrb[0].mxu0
      %3945 = vmatprep.mubr.bf16.mxu0 %v2506
      %3946 = vmatmul.mubr.bf16.gmra.mrb[0].mxu0 %v2505
      %v3947 = vpop.f32.mrb[0].mxu0
      %v3948 = vadd.f32 %v823, %v3947
      %v3949 = vpop.f32.mrb[0].mxu0
      %v3950 = vpop.f32.mrb[0].mxu0
      %v3951 = vadd.f32 %v823, %v3950
      %v3952 = vpop.f32.mrb[0].mxu0
      %3953 = vmatprep.mubr.bf16.mxu0 %v2514
      %3954 = vmatmul.mubr.bf16.gmra.mrb[0].mxu0 %v2513
      %v3955 = vpop.f32.mrb[0].mxu0
      %v3956 = vadd.f32 %v823, %v3955
      %v3957 = vpop.f32.mrb[0].mxu0
      %v3958 = vpop.f32.mrb[0].mxu0
      %v3959 = vadd.f32 %v823, %v3958
      %v3960 = vpop.f32.mrb[0].mxu0
      %3961 = vmatprep.mubr.bf16.mxu0 %v2522
      %3962 = vmatmul.mubr.bf16.gmra.mrb[0].mxu0 %v2521
      %v3963 = vpop.f32.mrb[0].mxu0
      %v3964 = vadd.f32 %v823, %v3963
      %v3965 = vpop.f32.mrb[0].mxu0
      %v3966 = vpop.f32.mrb[0].mxu0
      %v3967 = vadd.f32 %v823, %v3966
      %v3968 = vpop.f32.mrb[0].mxu0
      %3969 = vmatprep.mubr.bf16.mxu0 %v2530
      %3970 = vmatmul.mubr.bf16.gmra.mrb[0].mxu0 %v2529
      %v3971 = vpop.f32.mrb[0].mxu0
      %v3972 = vadd.f32 %v823, %v3971
      %v3973 = vpop.f32.mrb[0].mxu0
      %v3974 = vpop.f32.mrb[0].mxu0
      %v3975 = vadd.f32 %v823, %v3974
      %v3976 = vpop.f32.mrb[0].mxu0
      %3977 = vmatprep.mubr.bf16.mxu0 %v2538
      %3978 = vmatmul.mubr.bf16.gmra.mrb[0].mxu0 %v2537
      %v3979 = vpop.f32.mrb[0].mxu0
      %v3980 = vadd.f32 %v823, %v3979
      %v3981 = vpop.f32.mrb[0].mxu0
      %v3982 = vpop.f32.mrb[0].mxu0
      %v3983 = vadd.f32 %v823, %v3982
      %v3984 = vpop.f32.mrb[0].mxu0
      %3985 = vmatprep.mubr.bf16.mxu0 %v2546
      %3986 = vmatmul.mubr.bf16.gmra.mrb[0].mxu0 %v2545
      %v3987 = vpop.f32.mrb[0].mxu0
      %v3988 = vadd.f32 %v823, %v3987
      %v3989 = vpop.f32.mrb[0].mxu0
      %v3990 = vpop.f32.mrb[0].mxu0
      %v3991 = vadd.f32 %v823, %v3990
      %v3992 = vpop.f32.mrb[0].mxu0
      %3993 = vmatprep.mubr.bf16.mxu0 %v2554
      %3994 = vmatmul.mubr.bf16.gmra.mrb[0].mxu0 %v2553
      %v3995 = vpop.f32.mrb[0].mxu0
      %v3996 = vadd.f32 %v823, %v3995
      %v3997 = vpop.f32.mrb[0].mxu0
      %v3998 = vpop.f32.mrb[0].mxu0
      %v3999 = vadd.f32 %v823, %v3998
      %v4000 = vpop.f32.mrb[0].mxu0
      %4001 = vmatprep.mubr.bf16.mxu0 %v2562
      %4002 = vmatmul.mubr.bf16.gmra.mrb[0].mxu0 %v2561
      %v4003 = vpop.f32.mrb[0].mxu0
      %v4004 = vadd.f32 %v823, %v4003
      %v4005 = vpop.f32.mrb[0].mxu0
      %v4006 = vpop.f32.mrb[0].mxu0
      %v4007 = vadd.f32 %v823, %v4006
      %v4008 = vpop.f32.mrb[0].mxu0
      %4009 = vmatprep.mubr.bf16.mxu0 %v2570
      %4010 = vmatmul.mubr.bf16.gmra.mrb[0].mxu0 %v2569
      %v4011 = vpop.f32.mrb[0].mxu0
      %v4012 = vadd.f32 %v823, %v4011
      %v4013 = vpop.f32.mrb[0].mxu0
      %v4014 = vpop.f32.mrb[0].mxu0
      %v4015 = vadd.f32 %v823, %v4014
      %v4016 = vpop.f32.mrb[0].mxu0
      %4017 = vmatprep.mubr.bf16.mxu0 %v2578
      %4018 = vmatmul.mubr.bf16.gmra.mrb[0].mxu0 %v2577
      %v4019 = vpop.f32.mrb[0].mxu0
      %v4020 = vadd.f32 %v823, %v4019
      %v4021 = vpop.f32.mrb[0].mxu0
      %v4022 = vpop.f32.mrb[0].mxu0
      %v4023 = vadd.f32 %v823, %v4022
      %v4024 = vpop.f32.mrb[0].mxu0
      %4025 = vmatprep.mubr.bf16.mxu0 %v2586
      %4026 = vmatmul.mubr.bf16.gmra.mrb[0].mxu0 %v2585
      %v4027 = vpop.f32.mrb[0].mxu0
      %v4028 = vadd.f32 %v823, %v4027
      %v4029 = vpop.f32.mrb[0].mxu0
      %v4030 = vpop.f32.mrb[0].mxu0
      %v4031 = vadd.f32 %v823, %v4030
      %v4032 = vpop.f32.mrb[0].mxu0
      %4033 = vmatprep.mubr.bf16.mxu0 %v2594
      %4034 = vmatmul.mubr.bf16.gmra.mrb[0].mxu0 %v2593
      %v4035 = vpop.f32.mrb[0].mxu0
      %v4036 = vadd.f32 %v823, %v4035
      %v4037 = vpop.f32.mrb[0].mxu0
      %v4038 = vpop.f32.mrb[0].mxu0
      %v4039 = vadd.f32 %v823, %v4038
      %v4040 = vpop.f32.mrb[0].mxu0
      %4041 = vmatprep.mubr.bf16.mxu0 %v2602
      %4042 = vmatmul.mubr.bf16.gmra.mrb[0].mxu0 %v2601
      %v4043 = vpop.f32.mrb[0].mxu0
      %v4044 = vadd.f32 %v823, %v4043
      %v4045 = vpop.f32.mrb[0].mxu0
      %v4046 = vpop.f32.mrb[0].mxu0
      %v4047 = vadd.f32 %v823, %v4046
      %v4048 = vpop.f32.mrb[0].mxu0
      %4049 = vmatprep.mubr.bf16.mxu0 %v2610
      %4050 = vmatmul.mubr.bf16.gmra.mrb[0].mxu0 %v2609
      %v4051 = vpop.f32.mrb[0].mxu0
      %v4052 = vadd.f32 %v823, %v4051
      %v4053 = vpop.f32.mrb[0].mxu0
      %v4054 = vpop.f32.mrb[0].mxu0
      %v4055 = vadd.f32 %v823, %v4054
      %v4056 = vpop.f32.mrb[0].mxu0
      %4057 = vmatprep.mubr.bf16.mxu0 %v2618
      %4058 = vmatmul.mubr.bf16.gmra.mrb[0].mxu0 %v2617
      %v4059 = vpop.f32.mrb[0].mxu0
      %v4060 = vadd.f32 %v823, %v4059
      %v4061 = vpop.f32.mrb[0].mxu0
      %v4062 = vpop.f32.mrb[0].mxu0
      %v4063 = vadd.f32 %v823, %v4062
      %v4064 = vpop.f32.mrb[0].mxu0
      %4065 = vmatprep.mubr.bf16.mxu0 %v2626
      %4066 = vmatmul.mubr.bf16.gmra.mrb[0].mxu0 %v2625
      %v4067 = vpop.f32.mrb[0].mxu0
      %v4068 = vadd.f32 %v823, %v4067
      %v4069 = vpop.f32.mrb[0].mxu0
      %v4070 = vpop.f32.mrb[0].mxu0
      %v4071 = vadd.f32 %v823, %v4070
      %v4072 = vpop.f32.mrb[0].mxu0
      %4073 = vmatprep.mubr.bf16.mxu0 %v2634
      %4074 = vmatmul.mubr.bf16.gmra.mrb[0].mxu0 %v2633
      %v4075 = vpop.f32.mrb[0].mxu0
      %v4076 = vadd.f32 %v823, %v4075
      %v4077 = vpop.f32.mrb[0].mxu0
      %v4078 = vpop.f32.mrb[0].mxu0
      %v4079 = vadd.f32 %v823, %v4078
      %v4080 = vpop.f32.mrb[0].mxu0
      %4081 = vmatprep.mubr.bf16.mxu0 %v2642
      %4082 = vmatmul.mubr.bf16.gmra.mrb[0].mxu0 %v2641
      %v4083 = vpop.f32.mrb[0].mxu0
      %v4084 = vadd.f32 %v823, %v4083
      %v4085 = vpop.f32.mrb[0].mxu0
      %v4086 = vpop.f32.mrb[0].mxu0
      %v4087 = vadd.f32 %v823, %v4086
      %v4088 = vpop.f32.mrb[0].mxu0
      %4089 = vmatprep.mubr.bf16.mxu0 %v2650
      %4090 = vmatmul.mubr.bf16.gmra.mrb[0].mxu0 %v2649
      %v4091 = vpop.f32.mrb[0].mxu0
      %v4092 = vadd.f32 %v823, %v4091
      %v4093 = vpop.f32.mrb[0].mxu0
      %v4094 = vpop.f32.mrb[0].mxu0
      %v4095 = vadd.f32 %v823, %v4094
      %v4096 = vpop.f32.mrb[0].mxu0
      %4097 = vmatprep.mubr.bf16.mxu0 %v2658
      %4098 = vmatmul.mubr.bf16.gmra.mrb[0].mxu0 %v2657
      %v4099 = vpop.f32.mrb[0].mxu0
      %v4100 = vadd.f32 %v823, %v4099
      %v4101 = vpop.f32.mrb[0].mxu0
      %v4102 = vpop.f32.mrb[0].mxu0
      %v4103 = vadd.f32 %v823, %v4102
      %v4104 = vpop.f32.mrb[0].mxu0
      %4105 = vmatprep.mubr.bf16.mxu0 %v2666
      %4106 = vmatmul.mubr.bf16.gmra.mrb[0].mxu0 %v2665
      %v4107 = vpop.f32.mrb[0].mxu0
      %v4108 = vadd.f32 %v823, %v4107
      %v4109 = vpop.f32.mrb[0].mxu0
      %v4110 = vpop.f32.mrb[0].mxu0
      %v4111 = vadd.f32 %v823, %v4110
      %v4112 = vpop.f32.mrb[0].mxu0
      %4113 = vmatprep.mubr.bf16.mxu0 %v2674
      %4114 = vmatmul.mubr.bf16.gmra.mrb[0].mxu0 %v2673
      %v4115 = vpop.f32.mrb[0].mxu0
      %v4116 = vadd.f32 %v823, %v4115
      %v4117 = vpop.f32.mrb[0].mxu0
      %v4118 = vpop.f32.mrb[0].mxu0
      %v4119 = vadd.f32 %v823, %v4118
      %v4120 = vpop.f32.mrb[0].mxu0
      %4121 = vmatprep.mubr.bf16.mxu0 %v2682
      %4122 = vmatmul.mubr.bf16.gmra.mrb[0].mxu0 %v2681
      %v4123 = vpop.f32.mrb[0].mxu0
      %v4124 = vadd.f32 %v823, %v4123
      %v4125 = vpop.f32.mrb[0].mxu0
      %v4126 = vpop.f32.mrb[0].mxu0
      %v4127 = vadd.f32 %v823, %v4126
      %v4128 = vpop.f32.mrb[0].mxu0
      %4129 = vmatprep.mubr.bf16.mxu0 %v2690
      %4130 = vmatmul.mubr.bf16.gmra.mrb[0].mxu0 %v2689
      %v4131 = vpop.f32.mrb[0].mxu0
      %v4132 = vadd.f32 %v823, %v4131
      %v4133 = vpop.f32.mrb[0].mxu0
      %v4134 = vpop.f32.mrb[0].mxu0
      %v4135 = vadd.f32 %v823, %v4134
      %v4136 = vpop.f32.mrb[0].mxu0
      %4137 = vmatprep.mubr.bf16.mxu0 %v2698
      %4138 = vmatmul.mubr.bf16.gmra.mrb[0].mxu0 %v2697
      %v4139 = vpop.f32.mrb[0].mxu0
      %v4140 = vadd.f32 %v823, %v4139
      %v4141 = vpop.f32.mrb[0].mxu0
      %v4142 = vpop.f32.mrb[0].mxu0
      %v4143 = vadd.f32 %v823, %v4142
      %v4144 = vpop.f32.mrb[0].mxu0
      %4145 = vmatprep.mubr.bf16.mxu0 %v2706
      %4146 = vmatmul.mubr.bf16.gmra.mrb[0].mxu0 %v2705
      %v4147 = vpop.f32.mrb[0].mxu0
      %v4148 = vadd.f32 %v823, %v4147
      %v4149 = vpop.f32.mrb[0].mxu0
      %v4150 = vpop.f32.mrb[0].mxu0
      %v4151 = vadd.f32 %v823, %v4150
      %v4152 = vpop.f32.mrb[0].mxu0
      %4153 = vmatprep.mubr.bf16.mxu0 %v2714
      %4154 = vmatmul.mubr.bf16.gmra.mrb[0].mxu0 %v2713
      %v4155 = vpop.f32.mrb[0].mxu0
      %v4156 = vadd.f32 %v823, %v4155
      %v4157 = vpop.f32.mrb[0].mxu0
      %v4158 = vpop.f32.mrb[0].mxu0
      %v4159 = vadd.f32 %v823, %v4158
      %v4160 = vpop.f32.mrb[0].mxu0
      %4161 = vmatprep.mubr.bf16.mxu0 %v2722
      %4162 = vmatmul.mubr.bf16.gmra.mrb[0].mxu0 %v2721
      %v4163 = vpop.f32.mrb[0].mxu0
      %v4164 = vadd.f32 %v823, %v4163
      %v4165 = vpop.f32.mrb[0].mxu0
      %v4166 = vpop.f32.mrb[0].mxu0
      %v4167 = vadd.f32 %v823, %v4166
      %v4168 = vpop.f32.mrb[0].mxu0
      %4169 = vmatprep.mubr.bf16.mxu0 %v2730
      %4170 = vmatmul.mubr.bf16.gmra.mrb[0].mxu0 %v2729
      %v4171 = vpop.f32.mrb[0].mxu0
      %v4172 = vadd.f32 %v823, %v4171
      %v4173 = vpop.f32.mrb[0].mxu0
      %v4174 = vpop.f32.mrb[0].mxu0
      %v4175 = vadd.f32 %v823, %v4174
      %v4176 = vpop.f32.mrb[0].mxu0
      %4177 = vmatprep.mubr.bf16.mxu0 %v2738
      %4178 = vmatmul.mubr.bf16.gmra.mrb[0].mxu0 %v2737
      %v4179 = vpop.f32.mrb[0].mxu0
      %v4180 = vadd.f32 %v823, %v4179
      %v4181 = vpop.f32.mrb[0].mxu0
      %v4182 = vpop.f32.mrb[0].mxu0
      %v4183 = vadd.f32 %v823, %v4182
      %v4184 = vpop.f32.mrb[0].mxu0
      %4185 = vmatprep.mubr.bf16.mxu0 %v2746
      %4186 = vmatmul.mubr.bf16.gmra.mrb[0].mxu0 %v2745
      %v4187 = vpop.f32.mrb[0].mxu0
      %v4188 = vadd.f32 %v823, %v4187
      %v4189 = vpop.f32.mrb[0].mxu0
      %v4190 = vpop.f32.mrb[0].mxu0
      %v4191 = vadd.f32 %v823, %v4190
      %v4192 = vpop.f32.mrb[0].mxu0
      %4193 = vmatprep.mubr.bf16.mxu0 %v2754
      %4194 = vmatmul.mubr.bf16.gmra.mrb[0].mxu0 %v2753
      %v4195 = vpop.f32.mrb[0].mxu0
      %v4196 = vadd.f32 %v823, %v4195
      %v4197 = vpop.f32.mrb[0].mxu0
      %v4198 = vpop.f32.mrb[0].mxu0
      %v4199 = vadd.f32 %v823, %v4198
      %v4200 = vpop.f32.mrb[0].mxu0
      %4201 = vmatprep.mubr.bf16.mxu0 %v2762
      %4202 = vmatmul.mubr.bf16.gmra.mrb[0].mxu0 %v2761
      %v4203 = vpop.f32.mrb[0].mxu0
      %v4204 = vadd.f32 %v823, %v4203
      %v4205 = vpop.f32.mrb[0].mxu0
      %v4206 = vpop.f32.mrb[0].mxu0
      %v4207 = vadd.f32 %v823, %v4206
      %v4208 = vpop.f32.mrb[0].mxu0
      %4209 = vmatprep.mubr.bf16.mxu0 %v2770
      %4210 = vmatmul.mubr.bf16.gmra.mrb[0].mxu0 %v2769
      %v4211 = vpop.f32.mrb[0].mxu0
      %v4212 = vadd.f32 %v823, %v4211
      %v4213 = vpop.f32.mrb[0].mxu0
      %v4214 = vpop.f32.mrb[0].mxu0
      %v4215 = vadd.f32 %v823, %v4214
      %v4216 = vpop.f32.mrb[0].mxu0
      %4217 = vmatprep.mubr.bf16.mxu0 %v2778
      %4218 = vmatmul.mubr.bf16.gmra.mrb[0].mxu0 %v2777
      %v4219 = vpop.f32.mrb[0].mxu0
      %v4220 = vadd.f32 %v823, %v4219
      %v4221 = vpop.f32.mrb[0].mxu0
      %v4222 = vpop.f32.mrb[0].mxu0
      %v4223 = vadd.f32 %v823, %v4222
      %v4224 = vpop.f32.mrb[0].mxu0
      %4225 = vmatprep.mubr.bf16.mxu0 %v2786
      %4226 = vmatmul.mubr.bf16.gmra.mrb[0].mxu0 %v2785
      %v4227 = vpop.f32.mrb[0].mxu0
      %v4228 = vadd.f32 %v823, %v4227
      %v4229 = vpop.f32.mrb[0].mxu0
      %v4230 = vpop.f32.mrb[0].mxu0
      %v4231 = vadd.f32 %v823, %v4230
      %v4232 = vpop.f32.mrb[0].mxu0
      %4233 = vmatprep.mubr.bf16.mxu0 %v2794
      %4234 = vmatmul.mubr.bf16.gmra.mrb[0].mxu0 %v2793
      %v4235 = vpop.f32.mrb[0].mxu0
      %v4236 = vadd.f32 %v823, %v4235
      %v4237 = vpop.f32.mrb[0].mxu0
      %v4238 = vpop.f32.mrb[0].mxu0
      %v4239 = vadd.f32 %v823, %v4238
      %v4240 = vpop.f32.mrb[0].mxu0
      %4241 = vmatprep.mubr.bf16.mxu0 %v2802
      %4242 = vmatmul.mubr.bf16.gmra.mrb[0].mxu0 %v2801
      %v4243 = vpop.f32.mrb[0].mxu0
      %v4244 = vadd.f32 %v823, %v4243
      %v4245 = vpop.f32.mrb[0].mxu0
      %v4246 = vpop.f32.mrb[0].mxu0
      %v4247 = vadd.f32 %v823, %v4246
      %v4248 = vpop.f32.mrb[0].mxu0
      %4249 = vmatprep.mubr.bf16.mxu0 %v2810
      %4250 = vmatmul.mubr.bf16.gmra.mrb[0].mxu0 %v2809
      %v4251 = vpop.f32.mrb[0].mxu0
      %v4252 = vadd.f32 %v823, %v4251
      %v4253 = vpop.f32.mrb[0].mxu0
      %v4254 = vpop.f32.mrb[0].mxu0
      %v4255 = vadd.f32 %v823, %v4254
      %v4256 = vpop.f32.mrb[0].mxu0
      %4257 = vmatprep.mubr.bf16.mxu0 %v2818
      %4258 = vmatmul.mubr.bf16.gmra.mrb[0].mxu0 %v2817
      %v4259 = vpop.f32.mrb[0].mxu0
      %v4260 = vadd.f32 %v823, %v4259
      %v4261 = vpop.f32.mrb[0].mxu0
      %v4262 = vpop.f32.mrb[0].mxu0
      %v4263 = vadd.f32 %v823, %v4262
      %v4264 = vpop.f32.mrb[0].mxu0
      %4265 = vmatprep.mubr.bf16.mxu0 %v2826
      %4266 = vmatmul.mubr.bf16.gmra.mrb[0].mxu0 %v2825
      %v4267 = vpop.f32.mrb[0].mxu0
      %v4268 = vadd.f32 %v823, %v4267
      %v4269 = vpop.f32.mrb[0].mxu0
      %v4270 = vpop.f32.mrb[0].mxu0
      %v4271 = vadd.f32 %v823, %v4270
      %v4272 = vpop.f32.mrb[0].mxu0
      %4273 = vmatprep.mubr.bf16.mxu0 %v2834
      %4274 = vmatmul.mubr.bf16.gmra.mrb[0].mxu0 %v2833
      %v4275 = vpop.f32.mrb[0].mxu0
      %v4276 = vadd.f32 %v823, %v4275
      %v4277 = vpop.f32.mrb[0].mxu0
      %v4278 = vpop.f32.mrb[0].mxu0
      %v4279 = vadd.f32 %v823, %v4278
      %v4280 = vpop.f32.mrb[0].mxu0
      %4281 = vmatprep.mubr.bf16.mxu0 %v2842
      %4282 = vmatmul.mubr.bf16.gmra.mrb[0].mxu0 %v2841
      %v4283 = vpop.f32.mrb[0].mxu0
      %v4284 = vadd.f32 %v823, %v4283
      %v4285 = vpop.f32.mrb[0].mxu0
      %v4286 = vpop.f32.mrb[0].mxu0
      %v4287 = vadd.f32 %v823, %v4286
      %v4288 = vpop.f32.mrb[0].mxu0
      %4289 = vmatprep.mubr.bf16.mxu0 %v2850
      %4290 = vmatmul.mubr.bf16.gmra.mrb[0].mxu0 %v2849
      %v4291 = vpop.f32.mrb[0].mxu0
      %v4292 = vadd.f32 %v823, %v4291
      %v4293 = vpop.f32.mrb[0].mxu0
      %v4294 = vpop.f32.mrb[0].mxu0
      %v4295 = vadd.f32 %v823, %v4294
      %v4296 = vpop.f32.mrb[0].mxu0
      %4297 = vmatprep.mubr.bf16.mxu0 %v2858
      %4298 = vmatmul.mubr.bf16.gmra.mrb[0].mxu0 %v2857
      %v4299 = vpop.f32.mrb[0].mxu0
      %v4300 = vadd.f32 %v823, %v4299
      %v4301 = vpop.f32.mrb[0].mxu0
      %v4302 = vpop.f32.mrb[0].mxu0
      %v4303 = vadd.f32 %v823, %v4302
      %v4304 = vpop.f32.mrb[0].mxu0
      %4305 = vmatprep.mubr.bf16.mxu0 %v2866
      %4306 = vmatmul.mubr.bf16.gmra.mrb[0].mxu0 %v2865
      %v4307 = vpop.f32.mrb[0].mxu0
      %v4308 = vadd.f32 %v823, %v4307
      %v4309 = vpop.f32.mrb[0].mxu0
      %v4310 = vpop.f32.mrb[0].mxu0
      %v4311 = vadd.f32 %v823, %v4310
      %v4312 = vpop.f32.mrb[0].mxu0
      %4313 = vdwg.mxu0
      %4314 = vmatprep.subr.bf16.mxu0 0
      %4315 = vmatpush1.bf16.msra.mxu0 %v3657
      %4316 = vmatprep.subr.bf16.mxu0 0
      %4317 = vmatpush1.bf16.msra.mxu0 %v3658
      %4318 = vmatprep.subr.bf16.mxu0 0
      %4319 = vmatpush1.bf16.msra.mxu0 %v3659
      %4320 = vmatprep.subr.bf16.mxu0 0
      %4321 = vmatpush1.bf16.msra.mxu0 %v3660
      %4322 = vmatprep.subr.bf16.mxu0 0
      %4323 = vmatpush1.bf16.msra.mxu0 %v3661
      %4324 = vmatprep.subr.bf16.mxu0 0
      %4325 = vmatpush1.bf16.msra.mxu0 %v3662
      %4326 = vmatprep.subr.bf16.mxu0 0
      %4327 = vmatpush1.bf16.msra.mxu0 %v3663
      %4328 = vmatprep.subr.bf16.mxu0 0
      %4329 = vmatpush1.bf16.msra.mxu0 %v3664
      %4330 = vmatprep.subr.bf16.mxu0 0
      %4331 = vmatpush1.bf16.msra.mxu0 %v3665
      %4332 = vmatprep.subr.bf16.mxu0 0
      %4333 = vmatpush1.bf16.msra.mxu0 %v3666
      %4334 = vmatprep.subr.bf16.mxu0 0
      %4335 = vmatpush1.bf16.msra.mxu0 %v3667
      %4336 = vmatprep.subr.bf16.mxu0 0
      %4337 = vmatpush1.bf16.msra.mxu0 %v3668
      %4338 = vmatprep.subr.bf16.mxu0 0
      %4339 = vmatpush1.bf16.msra.mxu0 %v3669
      %4340 = vmatprep.subr.bf16.mxu0 0
      %4341 = vmatpush1.bf16.msra.mxu0 %v3670
      %4342 = vmatprep.subr.bf16.mxu0 0
      %4343 = vmatpush1.bf16.msra.mxu0 %v3671
      %4344 = vmatprep.subr.bf16.mxu0 0
      %4345 = vmatpush1.bf16.msra.mxu0 %v3672
      %4346 = vmatprep.mubr.bf16.mxu0 %v2364
      %4347 = vmatmul.mubr.bf16.gmra.mrb[0].mxu0 %v2363
      %v4348 = vpop.f32.mrb[0].mxu0
      %v4349 = vadd.f32 %v3804, %v4348
      %v4350 = vpop.f32.mrb[0].mxu0
      %v4351 = vpop.f32.mrb[0].mxu0
      %v4352 = vadd.f32 %v3807, %v4351
      %v4353 = vpop.f32.mrb[0].mxu0
      %4354 = vmatprep.mubr.bf16.mxu0 %v2372
      %4355 = vmatmul.mubr.bf16.gmra.mrb[0].mxu0 %v2371
      %v4356 = vpop.f32.mrb[0].mxu0
      %v4357 = vadd.f32 %v3812, %v4356
      %v4358 = vpop.f32.mrb[0].mxu0
      %v4359 = vpop.f32.mrb[0].mxu0
      %v4360 = vadd.f32 %v3815, %v4359
      %v4361 = vpop.f32.mrb[0].mxu0
      %4362 = vmatprep.mubr.bf16.mxu0 %v2380
      %4363 = vmatmul.mubr.bf16.gmra.mrb[0].mxu0 %v2379
      %v4364 = vpop.f32.mrb[0].mxu0
      %v4365 = vadd.f32 %v3820, %v4364
      %v4366 = vpop.f32.mrb[0].mxu0
      %v4367 = vpop.f32.mrb[0].mxu0
      %v4368 = vadd.f32 %v3823, %v4367
      %v4369 = vpop.f32.mrb[0].mxu0
      %4370 = vmatprep.mubr.bf16.mxu0 %v2388
      %4371 = vmatmul.mubr.bf16.gmra.mrb[0].mxu0 %v2387
      %v4372 = vpop.f32.mrb[0].mxu0
      %v4373 = vadd.f32 %v3828, %v4372
      %v4374 = vpop.f32.mrb[0].mxu0
      %v4375 = vpop.f32.mrb[0].mxu0
      %v4376 = vadd.f32 %v3831, %v4375
      %v4377 = vpop.f32.mrb[0].mxu0
      %4378 = vmatprep.mubr.bf16.mxu0 %v2396
      %4379 = vmatmul.mubr.bf16.gmra.mrb[0].mxu0 %v2395
      %v4380 = vpop.f32.mrb[0].mxu0
      %v4381 = vadd.f32 %v3836, %v4380
      %v4382 = vpop.f32.mrb[0].mxu0
      %v4383 = vpop.f32.mrb[0].mxu0
      %v4384 = vadd.f32 %v3839, %v4383
      %v4385 = vpop.f32.mrb[0].mxu0
      %4386 = vmatprep.mubr.bf16.mxu0 %v2404
      %4387 = vmatmul.mubr.bf16.gmra.mrb[0].mxu0 %v2403
      %v4388 = vpop.f32.mrb[0].mxu0
      %v4389 = vadd.f32 %v3844, %v4388
      %v4390 = vpop.f32.mrb[0].mxu0
      %v4391 = vpop.f32.mrb[0].mxu0
      %v4392 = vadd.f32 %v3847, %v4391
      %v4393 = vpop.f32.mrb[0].mxu0
      %4394 = vmatprep.mubr.bf16.mxu0 %v2412
      %4395 = vmatmul.mubr.bf16.gmra.mrb[0].mxu0 %v2411
      %v4396 = vpop.f32.mrb[0].mxu0
      %v4397 = vadd.f32 %v3852, %v4396
      %v4398 = vpop.f32.mrb[0].mxu0
      %v4399 = vpop.f32.mrb[0].mxu0
      %v4400 = vadd.f32 %v3855, %v4399
      %v4401 = vpop.f32.mrb[0].mxu0
      %4402 = vmatprep.mubr.bf16.mxu0 %v2420
      %4403 = vmatmul.mubr.bf16.gmra.mrb[0].mxu0 %v2419
      %v4404 = vpop.f32.mrb[0].mxu0
      %v4405 = vadd.f32 %v3860, %v4404
      %v4406 = vpop.f32.mrb[0].mxu0
      %v4407 = vpop.f32.mrb[0].mxu0
      %v4408 = vadd.f32 %v3863, %v4407
      %v4409 = vpop.f32.mrb[0].mxu0
      %4410 = vmatprep.mubr.bf16.mxu0 %v2428
      %4411 = vmatmul.mubr.bf16.gmra.mrb[0].mxu0 %v2427
      %v4412 = vpop.f32.mrb[0].mxu0
      %v4413 = vadd.f32 %v3868, %v4412
      %v4414 = vpop.f32.mrb[0].mxu0
      %v4415 = vpop.f32.mrb[0].mxu0
      %v4416 = vadd.f32 %v3871, %v4415
      %v4417 = vpop.f32.mrb[0].mxu0
      %4418 = vmatprep.mubr.bf16.mxu0 %v2436
      %4419 = vmatmul.mubr.bf16.gmra.mrb[0].mxu0 %v2435
      %v4420 = vpop.f32.mrb[0].mxu0
      %v4421 = vadd.f32 %v3876, %v4420
      %v4422 = vpop.f32.mrb[0].mxu0
      %v4423 = vpop.f32.mrb[0].mxu0
      %v4424 = vadd.f32 %v3879, %v4423
      %v4425 = vpop.f32.mrb[0].mxu0
      %4426 = vmatprep.mubr.bf16.mxu0 %v2444
      %4427 = vmatmul.mubr.bf16.gmra.mrb[0].mxu0 %v2443
      %v4428 = vpop.f32.mrb[0].mxu0
      %v4429 = vadd.f32 %v3884, %v4428
      %v4430 = vpop.f32.mrb[0].mxu0
      %v4431 = vpop.f32.mrb[0].mxu0
      %v4432 = vadd.f32 %v3887, %v4431
      %v4433 = vpop.f32.mrb[0].mxu0
      %4434 = vmatprep.mubr.bf16.mxu0 %v2452
      %4435 = vmatmul.mubr.bf16.gmra.mrb[0].mxu0 %v2451
      %v4436 = vpop.f32.mrb[0].mxu0
      %v4437 = vadd.f32 %v3892, %v4436
      %v4438 = vpop.f32.mrb[0].mxu0
      %v4439 = vpop.f32.mrb[0].mxu0
      %v4440 = vadd.f32 %v3895, %v4439
      %v4441 = vpop.f32.mrb[0].mxu0
      %4442 = vmatprep.mubr.bf16.mxu0 %v2460
      %4443 = vmatmul.mubr.bf16.gmra.mrb[0].mxu0 %v2459
      %v4444 = vpop.f32.mrb[0].mxu0
      %v4445 = vadd.f32 %v3900, %v4444
      %v4446 = vpop.f32.mrb[0].mxu0
      %v4447 = vpop.f32.mrb[0].mxu0
      %v4448 = vadd.f32 %v3903, %v4447
      %v4449 = vpop.f32.mrb[0].mxu0
      %4450 = vmatprep.mubr.bf16.mxu0 %v2468
      %4451 = vmatmul.mubr.bf16.gmra.mrb[0].mxu0 %v2467
      %v4452 = vpop.f32.mrb[0].mxu0
      %v4453 = vadd.f32 %v3908, %v4452
      %v4454 = vpop.f32.mrb[0].mxu0
      %v4455 = vpop.f32.mrb[0].mxu0
      %v4456 = vadd.f32 %v3911, %v4455
      %v4457 = vpop.f32.mrb[0].mxu0
      %4458 = vmatprep.mubr.bf16.mxu0 %v2476
      %4459 = vmatmul.mubr.bf16.gmra.mrb[0].mxu0 %v2475
      %v4460 = vpop.f32.mrb[0].mxu0
      %v4461 = vadd.f32 %v3916, %v4460
      %v4462 = vpop.f32.mrb[0].mxu0
      %v4463 = vpop.f32.mrb[0].mxu0
      %v4464 = vadd.f32 %v3919, %v4463
      %v4465 = vpop.f32.mrb[0].mxu0
      %4466 = vmatprep.mubr.bf16.mxu0 %v2484
      %4467 = vmatmul.mubr.bf16.gmra.mrb[0].mxu0 %v2483
      %v4468 = vpop.f32.mrb[0].mxu0
      %v4469 = vadd.f32 %v3924, %v4468
      %v4470 = vpop.f32.mrb[0].mxu0
      %v4471 = vpop.f32.mrb[0].mxu0
      %v4472 = vadd.f32 %v3927, %v4471
      %v4473 = vpop.f32.mrb[0].mxu0
      %4474 = vmatprep.mubr.bf16.mxu0 %v2492
      %4475 = vmatmul.mubr.bf16.gmra.mrb[0].mxu0 %v2491
      %v4476 = vpop.f32.mrb[0].mxu0
      %v4477 = vadd.f32 %v3932, %v4476
      %v4478 = vpop.f32.mrb[0].mxu0
      %v4479 = vpop.f32.mrb[0].mxu0
      %v4480 = vadd.f32 %v3935, %v4479
      %v4481 = vpop.f32.mrb[0].mxu0
      %4482 = vmatprep.mubr.bf16.mxu0 %v2500
      %4483 = vmatmul.mubr.bf16.gmra.mrb[0].mxu0 %v2499
      %v4484 = vpop.f32.mrb[0].mxu0
      %v4485 = vadd.f32 %v3940, %v4484
      %v4486 = vpop.f32.mrb[0].mxu0
      %v4487 = vpop.f32.mrb[0].mxu0
      %v4488 = vadd.f32 %v3943, %v4487
      %v4489 = vpop.f32.mrb[0].mxu0
      %4490 = vmatprep.mubr.bf16.mxu0 %v2508
      %4491 = vmatmul.mubr.bf16.gmra.mrb[0].mxu0 %v2507
      %v4492 = vpop.f32.mrb[0].mxu0
      %v4493 = vadd.f32 %v3948, %v4492
      %v4494 = vpop.f32.mrb[0].mxu0
      %v4495 = vpop.f32.mrb[0].mxu0
      %v4496 = vadd.f32 %v3951, %v4495
      %v4497 = vpop.f32.mrb[0].mxu0
      %4498 = vmatprep.mubr.bf16.mxu0 %v2516
      %4499 = vmatmul.mubr.bf16.gmra.mrb[0].mxu0 %v2515
      %v4500 = vpop.f32.mrb[0].mxu0
      %v4501 = vadd.f32 %v3956, %v4500
      %v4502 = vpop.f32.mrb[0].mxu0
      %v4503 = vpop.f32.mrb[0].mxu0
      %v4504 = vadd.f32 %v3959, %v4503
      %v4505 = vpop.f32.mrb[0].mxu0
      %4506 = vmatprep.mubr.bf16.mxu0 %v2524
      %4507 = vmatmul.mubr.bf16.gmra.mrb[0].mxu0 %v2523
      %v4508 = vpop.f32.mrb[0].mxu0
      %v4509 = vadd.f32 %v3964, %v4508
      %v4510 = vpop.f32.mrb[0].mxu0
      %v4511 = vpop.f32.mrb[0].mxu0
      %v4512 = vadd.f32 %v3967, %v4511
      %v4513 = vpop.f32.mrb[0].mxu0
      %4514 = vmatprep.mubr.bf16.mxu0 %v2532
      %4515 = vmatmul.mubr.bf16.gmra.mrb[0].mxu0 %v2531
      %v4516 = vpop.f32.mrb[0].mxu0
      %v4517 = vadd.f32 %v3972, %v4516
      %v4518 = vpop.f32.mrb[0].mxu0
      %v4519 = vpop.f32.mrb[0].mxu0
      %v4520 = vadd.f32 %v3975, %v4519
      %v4521 = vpop.f32.mrb[0].mxu0
      %4522 = vmatprep.mubr.bf16.mxu0 %v2540
      %4523 = vmatmul.mubr.bf16.gmra.mrb[0].mxu0 %v2539
      %v4524 = vpop.f32.mrb[0].mxu0
      %v4525 = vadd.f32 %v3980, %v4524
      %v4526 = vpop.f32.mrb[0].mxu0
      %v4527 = vpop.f32.mrb[0].mxu0
      %v4528 = vadd.f32 %v3983, %v4527
      %v4529 = vpop.f32.mrb[0].mxu0
      %4530 = vmatprep.mubr.bf16.mxu0 %v2548
      %4531 = vmatmul.mubr.bf16.gmra.mrb[0].mxu0 %v2547
      %v4532 = vpop.f32.mrb[0].mxu0
      %v4533 = vadd.f32 %v3988, %v4532
      %v4534 = vpop.f32.mrb[0].mxu0
      %v4535 = vpop.f32.mrb[0].mxu0
      %v4536 = vadd.f32 %v3991, %v4535
      %v4537 = vpop.f32.mrb[0].mxu0
      %4538 = vmatprep.mubr.bf16.mxu0 %v2556
      %4539 = vmatmul.mubr.bf16.gmra.mrb[0].mxu0 %v2555
      %v4540 = vpop.f32.mrb[0].mxu0
      %v4541 = vadd.f32 %v3996, %v4540
      %v4542 = vpop.f32.mrb[0].mxu0
      %v4543 = vpop.f32.mrb[0].mxu0
      %v4544 = vadd.f32 %v3999, %v4543
      %v4545 = vpop.f32.mrb[0].mxu0
      %4546 = vmatprep.mubr.bf16.mxu0 %v2564
      %4547 = vmatmul.mubr.bf16.gmra.mrb[0].mxu0 %v2563
      %v4548 = vpop.f32.mrb[0].mxu0
      %v4549 = vadd.f32 %v4004, %v4548
      %v4550 = vpop.f32.mrb[0].mxu0
      %v4551 = vpop.f32.mrb[0].mxu0
      %v4552 = vadd.f32 %v4007, %v4551
      %v4553 = vpop.f32.mrb[0].mxu0
      %4554 = vmatprep.mubr.bf16.mxu0 %v2572
      %4555 = vmatmul.mubr.bf16.gmra.mrb[0].mxu0 %v2571
      %v4556 = vpop.f32.mrb[0].mxu0
      %v4557 = vadd.f32 %v4012, %v4556
      %v4558 = vpop.f32.mrb[0].mxu0
      %v4559 = vpop.f32.mrb[0].mxu0
      %v4560 = vadd.f32 %v4015, %v4559
      %v4561 = vpop.f32.mrb[0].mxu0
      %4562 = vmatprep.mubr.bf16.mxu0 %v2580
      %4563 = vmatmul.mubr.bf16.gmra.mrb[0].mxu0 %v2579
      %v4564 = vpop.f32.mrb[0].mxu0
      %v4565 = vadd.f32 %v4020, %v4564
      %v4566 = vpop.f32.mrb[0].mxu0
      %v4567 = vpop.f32.mrb[0].mxu0
      %v4568 = vadd.f32 %v4023, %v4567
      %v4569 = vpop.f32.mrb[0].mxu0
      %4570 = vmatprep.mubr.bf16.mxu0 %v2588
      %4571 = vmatmul.mubr.bf16.gmra.mrb[0].mxu0 %v2587
      %v4572 = vpop.f32.mrb[0].mxu0
      %v4573 = vadd.f32 %v4028, %v4572
      %v4574 = vpop.f32.mrb[0].mxu0
      %v4575 = vpop.f32.mrb[0].mxu0
      %v4576 = vadd.f32 %v4031, %v4575
      %v4577 = vpop.f32.mrb[0].mxu0
      %4578 = vmatprep.mubr.bf16.mxu0 %v2596
      %4579 = vmatmul.mubr.bf16.gmra.mrb[0].mxu0 %v2595
      %v4580 = vpop.f32.mrb[0].mxu0
      %v4581 = vadd.f32 %v4036, %v4580
      %v4582 = vpop.f32.mrb[0].mxu0
      %v4583 = vpop.f32.mrb[0].mxu0
      %v4584 = vadd.f32 %v4039, %v4583
      %v4585 = vpop.f32.mrb[0].mxu0
      %4586 = vmatprep.mubr.bf16.mxu0 %v2604
      %4587 = vmatmul.mubr.bf16.gmra.mrb[0].mxu0 %v2603
      %v4588 = vpop.f32.mrb[0].mxu0
      %v4589 = vadd.f32 %v4044, %v4588
      %v4590 = vpop.f32.mrb[0].mxu0
      %v4591 = vpop.f32.mrb[0].mxu0
      %v4592 = vadd.f32 %v4047, %v4591
      %v4593 = vpop.f32.mrb[0].mxu0
      %4594 = vmatprep.mubr.bf16.mxu0 %v2612
      %4595 = vmatmul.mubr.bf16.gmra.mrb[0].mxu0 %v2611
      %v4596 = vpop.f32.mrb[0].mxu0
      %v4597 = vadd.f32 %v4052, %v4596
      %v4598 = vpop.f32.mrb[0].mxu0
      %v4599 = vpop.f32.mrb[0].mxu0
      %v4600 = vadd.f32 %v4055, %v4599
      %v4601 = vpop.f32.mrb[0].mxu0
      %4602 = vmatprep.mubr.bf16.mxu0 %v2620
      %4603 = vmatmul.mubr.bf16.gmra.mrb[0].mxu0 %v2619
      %v4604 = vpop.f32.mrb[0].mxu0
      %v4605 = vadd.f32 %v4060, %v4604
      %v4606 = vpop.f32.mrb[0].mxu0
      %v4607 = vpop.f32.mrb[0].mxu0
      %v4608 = vadd.f32 %v4063, %v4607
      %v4609 = vpop.f32.mrb[0].mxu0
      %4610 = vmatprep.mubr.bf16.mxu0 %v2628
      %4611 = vmatmul.mubr.bf16.gmra.mrb[0].mxu0 %v2627
      %v4612 = vpop.f32.mrb[0].mxu0
      %v4613 = vadd.f32 %v4068, %v4612
      %v4614 = vpop.f32.mrb[0].mxu0
      %v4615 = vpop.f32.mrb[0].mxu0
      %v4616 = vadd.f32 %v4071, %v4615
      %v4617 = vpop.f32.mrb[0].mxu0
      %4618 = vmatprep.mubr.bf16.mxu0 %v2636
      %4619 = vmatmul.mubr.bf16.gmra.mrb[0].mxu0 %v2635
      %v4620 = vpop.f32.mrb[0].mxu0
      %v4621 = vadd.f32 %v4076, %v4620
      %v4622 = vpop.f32.mrb[0].mxu0
      %v4623 = vpop.f32.mrb[0].mxu0
      %v4624 = vadd.f32 %v4079, %v4623
      %v4625 = vpop.f32.mrb[0].mxu0
      %4626 = vmatprep.mubr.bf16.mxu0 %v2644
      %4627 = vmatmul.mubr.bf16.gmra.mrb[0].mxu0 %v2643
      %v4628 = vpop.f32.mrb[0].mxu0
      %v4629 = vadd.f32 %v4084, %v4628
      %v4630 = vpop.f32.mrb[0].mxu0
      %v4631 = vpop.f32.mrb[0].mxu0
      %v4632 = vadd.f32 %v4087, %v4631
      %v4633 = vpop.f32.mrb[0].mxu0
      %4634 = vmatprep.mubr.bf16.mxu0 %v2652
      %4635 = vmatmul.mubr.bf16.gmra.mrb[0].mxu0 %v2651
      %v4636 = vpop.f32.mrb[0].mxu0
      %v4637 = vadd.f32 %v4092, %v4636
      %v4638 = vpop.f32.mrb[0].mxu0
      %v4639 = vpop.f32.mrb[0].mxu0
      %v4640 = vadd.f32 %v4095, %v4639
      %v4641 = vpop.f32.mrb[0].mxu0
      %4642 = vmatprep.mubr.bf16.mxu0 %v2660
      %4643 = vmatmul.mubr.bf16.gmra.mrb[0].mxu0 %v2659
      %v4644 = vpop.f32.mrb[0].mxu0
      %v4645 = vadd.f32 %v4100, %v4644
      %v4646 = vpop.f32.mrb[0].mxu0
      %v4647 = vpop.f32.mrb[0].mxu0
      %v4648 = vadd.f32 %v4103, %v4647
      %v4649 = vpop.f32.mrb[0].mxu0
      %4650 = vmatprep.mubr.bf16.mxu0 %v2668
      %4651 = vmatmul.mubr.bf16.gmra.mrb[0].mxu0 %v2667
      %v4652 = vpop.f32.mrb[0].mxu0
      %v4653 = vadd.f32 %v4108, %v4652
      %v4654 = vpop.f32.mrb[0].mxu0
      %v4655 = vpop.f32.mrb[0].mxu0
      %v4656 = vadd.f32 %v4111, %v4655
      %v4657 = vpop.f32.mrb[0].mxu0
      %4658 = vmatprep.mubr.bf16.mxu0 %v2676
      %4659 = vmatmul.mubr.bf16.gmra.mrb[0].mxu0 %v2675
      %v4660 = vpop.f32.mrb[0].mxu0
      %v4661 = vadd.f32 %v4116, %v4660
      %v4662 = vpop.f32.mrb[0].mxu0
      %v4663 = vpop.f32.mrb[0].mxu0
      %v4664 = vadd.f32 %v4119, %v4663
      %v4665 = vpop.f32.mrb[0].mxu0
      %4666 = vmatprep.mubr.bf16.mxu0 %v2684
      %4667 = vmatmul.mubr.bf16.gmra.mrb[0].mxu0 %v2683
      %v4668 = vpop.f32.mrb[0].mxu0
      %v4669 = vadd.f32 %v4124, %v4668
      %v4670 = vpop.f32.mrb[0].mxu0
      %v4671 = vpop.f32.mrb[0].mxu0
      %v4672 = vadd.f32 %v4127, %v4671
      %v4673 = vpop.f32.mrb[0].mxu0
      %4674 = vmatprep.mubr.bf16.mxu0 %v2692
      %4675 = vmatmul.mubr.bf16.gmra.mrb[0].mxu0 %v2691
      %v4676 = vpop.f32.mrb[0].mxu0
      %v4677 = vadd.f32 %v4132, %v4676
      %v4678 = vpop.f32.mrb[0].mxu0
      %v4679 = vpop.f32.mrb[0].mxu0
      %v4680 = vadd.f32 %v4135, %v4679
      %v4681 = vpop.f32.mrb[0].mxu0
      %4682 = vmatprep.mubr.bf16.mxu0 %v2700
      %4683 = vmatmul.mubr.bf16.gmra.mrb[0].mxu0 %v2699
      %v4684 = vpop.f32.mrb[0].mxu0
      %v4685 = vadd.f32 %v4140, %v4684
      %v4686 = vpop.f32.mrb[0].mxu0
      %v4687 = vpop.f32.mrb[0].mxu0
      %v4688 = vadd.f32 %v4143, %v4687
      %v4689 = vpop.f32.mrb[0].mxu0
      %4690 = vmatprep.mubr.bf16.mxu0 %v2708
      %4691 = vmatmul.mubr.bf16.gmra.mrb[0].mxu0 %v2707
      %v4692 = vpop.f32.mrb[0].mxu0
      %v4693 = vadd.f32 %v4148, %v4692
      %v4694 = vpop.f32.mrb[0].mxu0
      %v4695 = vpop.f32.mrb[0].mxu0
      %v4696 = vadd.f32 %v4151, %v4695
      %v4697 = vpop.f32.mrb[0].mxu0
      %4698 = vmatprep.mubr.bf16.mxu0 %v2716
      %4699 = vmatmul.mubr.bf16.gmra.mrb[0].mxu0 %v2715
      %v4700 = vpop.f32.mrb[0].mxu0
      %v4701 = vadd.f32 %v4156, %v4700
      %v4702 = vpop.f32.mrb[0].mxu0
      %v4703 = vpop.f32.mrb[0].mxu0
      %v4704 = vadd.f32 %v4159, %v4703
      %v4705 = vpop.f32.mrb[0].mxu0
      %4706 = vmatprep.mubr.bf16.mxu0 %v2724
      %4707 = vmatmul.mubr.bf16.gmra.mrb[0].mxu0 %v2723
      %v4708 = vpop.f32.mrb[0].mxu0
      %v4709 = vadd.f32 %v4164, %v4708
      %v4710 = vpop.f32.mrb[0].mxu0
      %v4711 = vpop.f32.mrb[0].mxu0
      %v4712 = vadd.f32 %v4167, %v4711
      %v4713 = vpop.f32.mrb[0].mxu0
      %4714 = vmatprep.mubr.bf16.mxu0 %v2732
      %4715 = vmatmul.mubr.bf16.gmra.mrb[0].mxu0 %v2731
      %v4716 = vpop.f32.mrb[0].mxu0
      %v4717 = vadd.f32 %v4172, %v4716
      %v4718 = vpop.f32.mrb[0].mxu0
      %v4719 = vpop.f32.mrb[0].mxu0
      %v4720 = vadd.f32 %v4175, %v4719
      %v4721 = vpop.f32.mrb[0].mxu0
      %4722 = vmatprep.mubr.bf16.mxu0 %v2740
      %4723 = vmatmul.mubr.bf16.gmra.mrb[0].mxu0 %v2739
      %v4724 = vpop.f32.mrb[0].mxu0
      %v4725 = vadd.f32 %v4180, %v4724
      %v4726 = vpop.f32.mrb[0].mxu0
      %v4727 = vpop.f32.mrb[0].mxu0
      %v4728 = vadd.f32 %v4183, %v4727
      %v4729 = vpop.f32.mrb[0].mxu0
      %4730 = vmatprep.mubr.bf16.mxu0 %v2748
      %4731 = vmatmul.mubr.bf16.gmra.mrb[0].mxu0 %v2747
      %v4732 = vpop.f32.mrb[0].mxu0
      %v4733 = vadd.f32 %v4188, %v4732
      %v4734 = vpop.f32.mrb[0].mxu0
      %v4735 = vpop.f32.mrb[0].mxu0
      %v4736 = vadd.f32 %v4191, %v4735
      %v4737 = vpop.f32.mrb[0].mxu0
      %4738 = vmatprep.mubr.bf16.mxu0 %v2756
      %4739 = vmatmul.mubr.bf16.gmra.mrb[0].mxu0 %v2755
      %v4740 = vpop.f32.mrb[0].mxu0
      %v4741 = vadd.f32 %v4196, %v4740
      %v4742 = vpop.f32.mrb[0].mxu0
      %v4743 = vpop.f32.mrb[0].mxu0
      %v4744 = vadd.f32 %v4199, %v4743
      %v4745 = vpop.f32.mrb[0].mxu0
      %4746 = vmatprep.mubr.bf16.mxu0 %v2764
      %4747 = vmatmul.mubr.bf16.gmra.mrb[0].mxu0 %v2763
      %v4748 = vpop.f32.mrb[0].mxu0
      %v4749 = vadd.f32 %v4204, %v4748
      %v4750 = vpop.f32.mrb[0].mxu0
      %v4751 = vpop.f32.mrb[0].mxu0
      %v4752 = vadd.f32 %v4207, %v4751
      %v4753 = vpop.f32.mrb[0].mxu0
      %4754 = vmatprep.mubr.bf16.mxu0 %v2772
      %4755 = vmatmul.mubr.bf16.gmra.mrb[0].mxu0 %v2771
      %v4756 = vpop.f32.mrb[0].mxu0
      %v4757 = vadd.f32 %v4212, %v4756
      %v4758 = vpop.f32.mrb[0].mxu0
      %v4759 = vpop.f32.mrb[0].mxu0
      %v4760 = vadd.f32 %v4215, %v4759
      %v4761 = vpop.f32.mrb[0].mxu0
      %4762 = vmatprep.mubr.bf16.mxu0 %v2780
      %4763 = vmatmul.mubr.bf16.gmra.mrb[0].mxu0 %v2779
      %v4764 = vpop.f32.mrb[0].mxu0
      %v4765 = vadd.f32 %v4220, %v4764
      %v4766 = vpop.f32.mrb[0].mxu0
      %v4767 = vpop.f32.mrb[0].mxu0
      %v4768 = vadd.f32 %v4223, %v4767
      %v4769 = vpop.f32.mrb[0].mxu0
      %4770 = vmatprep.mubr.bf16.mxu0 %v2788
      %4771 = vmatmul.mubr.bf16.gmra.mrb[0].mxu0 %v2787
      %v4772 = vpop.f32.mrb[0].mxu0
      %v4773 = vadd.f32 %v4228, %v4772
      %v4774 = vpop.f32.mrb[0].mxu0
      %v4775 = vpop.f32.mrb[0].mxu0
      %v4776 = vadd.f32 %v4231, %v4775
      %v4777 = vpop.f32.mrb[0].mxu0
      %4778 = vmatprep.mubr.bf16.mxu0 %v2796
      %4779 = vmatmul.mubr.bf16.gmra.mrb[0].mxu0 %v2795
      %v4780 = vpop.f32.mrb[0].mxu0
      %v4781 = vadd.f32 %v4236, %v4780
      %v4782 = vpop.f32.mrb[0].mxu0
      %v4783 = vpop.f32.mrb[0].mxu0
      %v4784 = vadd.f32 %v4239, %v4783
      %v4785 = vpop.f32.mrb[0].mxu0
      %4786 = vmatprep.mubr.bf16.mxu0 %v2804
      %4787 = vmatmul.mubr.bf16.gmra.mrb[0].mxu0 %v2803
      %v4788 = vpop.f32.mrb[0].mxu0
      %v4789 = vadd.f32 %v4244, %v4788
      %v4790 = vpop.f32.mrb[0].mxu0
      %v4791 = vpop.f32.mrb[0].mxu0
      %v4792 = vadd.f32 %v4247, %v4791
      %v4793 = vpop.f32.mrb[0].mxu0
      %4794 = vmatprep.mubr.bf16.mxu0 %v2812
      %4795 = vmatmul.mubr.bf16.gmra.mrb[0].mxu0 %v2811
      %v4796 = vpop.f32.mrb[0].mxu0
      %v4797 = vadd.f32 %v4252, %v4796
      %v4798 = vpop.f32.mrb[0].mxu0
      %v4799 = vpop.f32.mrb[0].mxu0
      %v4800 = vadd.f32 %v4255, %v4799
      %v4801 = vpop.f32.mrb[0].mxu0
      %4802 = vmatprep.mubr.bf16.mxu0 %v2820
      %4803 = vmatmul.mubr.bf16.gmra.mrb[0].mxu0 %v2819
      %v4804 = vpop.f32.mrb[0].mxu0
      %v4805 = vadd.f32 %v4260, %v4804
      %v4806 = vpop.f32.mrb[0].mxu0
      %v4807 = vpop.f32.mrb[0].mxu0
      %v4808 = vadd.f32 %v4263, %v4807
      %v4809 = vpop.f32.mrb[0].mxu0
      %4810 = vmatprep.mubr.bf16.mxu0 %v2828
      %4811 = vmatmul.mubr.bf16.gmra.mrb[0].mxu0 %v2827
      %v4812 = vpop.f32.mrb[0].mxu0
      %v4813 = vadd.f32 %v4268, %v4812
      %v4814 = vpop.f32.mrb[0].mxu0
      %v4815 = vpop.f32.mrb[0].mxu0
      %v4816 = vadd.f32 %v4271, %v4815
      %v4817 = vpop.f32.mrb[0].mxu0
      %4818 = vmatprep.mubr.bf16.mxu0 %v2836
      %4819 = vmatmul.mubr.bf16.gmra.mrb[0].mxu0 %v2835
      %v4820 = vpop.f32.mrb[0].mxu0
      %v4821 = vadd.f32 %v4276, %v4820
      %v4822 = vpop.f32.mrb[0].mxu0
      %v4823 = vpop.f32.mrb[0].mxu0
      %v4824 = vadd.f32 %v4279, %v4823
      %v4825 = vpop.f32.mrb[0].mxu0
      %4826 = vmatprep.mubr.bf16.mxu0 %v2844
      %4827 = vmatmul.mubr.bf16.gmra.mrb[0].mxu0 %v2843
      %v4828 = vpop.f32.mrb[0].mxu0
      %v4829 = vadd.f32 %v4284, %v4828
      %v4830 = vpop.f32.mrb[0].mxu0
      %v4831 = vpop.f32.mrb[0].mxu0
      %v4832 = vadd.f32 %v4287, %v4831
      %v4833 = vpop.f32.mrb[0].mxu0
      %4834 = vmatprep.mubr.bf16.mxu0 %v2852
      %4835 = vmatmul.mubr.bf16.gmra.mrb[0].mxu0 %v2851
      %v4836 = vpop.f32.mrb[0].mxu0
      %v4837 = vadd.f32 %v4292, %v4836
      %v4838 = vpop.f32.mrb[0].mxu0
      %v4839 = vpop.f32.mrb[0].mxu0
      %v4840 = vadd.f32 %v4295, %v4839
      %v4841 = vpop.f32.mrb[0].mxu0
      %4842 = vmatprep.mubr.bf16.mxu0 %v2860
      %4843 = vmatmul.mubr.bf16.gmra.mrb[0].mxu0 %v2859
      %v4844 = vpop.f32.mrb[0].mxu0
      %v4845 = vadd.f32 %v4300, %v4844
      %v4846 = vpop.f32.mrb[0].mxu0
      %v4847 = vpop.f32.mrb[0].mxu0
      %v4848 = vadd.f32 %v4303, %v4847
      %v4849 = vpop.f32.mrb[0].mxu0
      %4850 = vmatprep.mubr.bf16.mxu0 %v2868
      %4851 = vmatmul.mubr.bf16.gmra.mrb[0].mxu0 %v2867
      %v4852 = vpop.f32.mrb[0].mxu0
      %v4853 = vadd.f32 %v4308, %v4852
      %v4854 = vpop.f32.mrb[0].mxu0
      %v4855 = vpop.f32.mrb[0].mxu0
      %v4856 = vadd.f32 %v4311, %v4855
      %v4857 = vpop.f32.mrb[0].mxu0
      %4858 = vdwg.mxu0
      %4859 = vmatprep.subr.bf16.mxu0 0
      %4860 = vmatpush1.bf16.msra.mxu0 %v3673
      %4861 = vmatprep.subr.bf16.mxu0 0
      %4862 = vmatpush1.bf16.msra.mxu0 %v3674
      %4863 = vmatprep.subr.bf16.mxu0 0
      %4864 = vmatpush1.bf16.msra.mxu0 %v3675
      %4865 = vmatprep.subr.bf16.mxu0 0
      %4866 = vmatpush1.bf16.msra.mxu0 %v3676
      %4867 = vmatprep.subr.bf16.mxu0 0
      %4868 = vmatpush1.bf16.msra.mxu0 %v3677
      %4869 = vmatprep.subr.bf16.mxu0 0
      %4870 = vmatpush1.bf16.msra.mxu0 %v3678
      %4871 = vmatprep.subr.bf16.mxu0 0
      %4872 = vmatpush1.bf16.msra.mxu0 %v3679
      %4873 = vmatprep.subr.bf16.mxu0 0
      %4874 = vmatpush1.bf16.msra.mxu0 %v3680
      %4875 = vmatprep.subr.bf16.mxu0 0
      %4876 = vmatpush1.bf16.msra.mxu0 %v3681
      %4877 = vmatprep.subr.bf16.mxu0 0
      %4878 = vmatpush1.bf16.msra.mxu0 %v3682
      %4879 = vmatprep.subr.bf16.mxu0 0
      %4880 = vmatpush1.bf16.msra.mxu0 %v3683
      %4881 = vmatprep.subr.bf16.mxu0 0
      %4882 = vmatpush1.bf16.msra.mxu0 %v3684
      %4883 = vmatprep.subr.bf16.mxu0 0
      %4884 = vmatpush1.bf16.msra.mxu0 %v3685
      %4885 = vmatprep.subr.bf16.mxu0 0
      %4886 = vmatpush1.bf16.msra.mxu0 %v3686
      %4887 = vmatprep.subr.bf16.mxu0 0
      %4888 = vmatpush1.bf16.msra.mxu0 %v3687
      %4889 = vmatprep.subr.bf16.mxu0 0
      %4890 = vmatpush1.bf16.msra.mxu0 %v3688
      %4891 = vmatprep.mubr.bf16.mxu0 %v2366
      %4892 = vmatmul.mubr.bf16.gmra.mrb[0].mxu0 %v2365
      %v4893 = vpop.f32.mrb[0].mxu0
      %v4894 = vadd.f32 %v4349, %v4893
      %v4895 = vpop.f32.mrb[0].mxu0
      %v4896 = vpop.f32.mrb[0].mxu0
      %v4897 = vadd.f32 %v4352, %v4896
      %v4898 = vpop.f32.mrb[0].mxu0
      %4899 = vmatprep.mubr.bf16.mxu0 %v2374
      %4900 = vmatmul.mubr.bf16.gmra.mrb[0].mxu0 %v2373
      %v4901 = vpop.f32.mrb[0].mxu0
      %v4902 = vadd.f32 %v4357, %v4901
      %v4903 = vpop.f32.mrb[0].mxu0
      %v4904 = vpop.f32.mrb[0].mxu0
      %v4905 = vadd.f32 %v4360, %v4904
      %v4906 = vpop.f32.mrb[0].mxu0
      %4907 = vmatprep.mubr.bf16.mxu0 %v2382
      %4908 = vmatmul.mubr.bf16.gmra.mrb[0].mxu0 %v2381
      %v4909 = vpop.f32.mrb[0].mxu0
      %v4910 = vadd.f32 %v4365, %v4909
      %v4911 = vpop.f32.mrb[0].mxu0
      %v4912 = vpop.f32.mrb[0].mxu0
      %v4913 = vadd.f32 %v4368, %v4912
      %v4914 = vpop.f32.mrb[0].mxu0
      %4915 = vmatprep.mubr.bf16.mxu0 %v2390
      %4916 = vmatmul.mubr.bf16.gmra.mrb[0].mxu0 %v2389
      %v4917 = vpop.f32.mrb[0].mxu0
      %v4918 = vadd.f32 %v4373, %v4917
      %v4919 = vpop.f32.mrb[0].mxu0
      %v4920 = vpop.f32.mrb[0].mxu0
      %v4921 = vadd.f32 %v4376, %v4920
      %v4922 = vpop.f32.mrb[0].mxu0
      %4923 = vmatprep.mubr.bf16.mxu0 %v2398
      %4924 = vmatmul.mubr.bf16.gmra.mrb[0].mxu0 %v2397
      %v4925 = vpop.f32.mrb[0].mxu0
      %v4926 = vadd.f32 %v4381, %v4925
      %v4927 = vpop.f32.mrb[0].mxu0
      %v4928 = vpop.f32.mrb[0].mxu0
      %v4929 = vadd.f32 %v4384, %v4928
      %v4930 = vpop.f32.mrb[0].mxu0
      %4931 = vmatprep.mubr.bf16.mxu0 %v2406
      %4932 = vmatmul.mubr.bf16.gmra.mrb[0].mxu0 %v2405
      %v4933 = vpop.f32.mrb[0].mxu0
      %v4934 = vadd.f32 %v4389, %v4933
      %v4935 = vpop.f32.mrb[0].mxu0
      %v4936 = vpop.f32.mrb[0].mxu0
      %v4937 = vadd.f32 %v4392, %v4936
      %v4938 = vpop.f32.mrb[0].mxu0
      %4939 = vmatprep.mubr.bf16.mxu0 %v2414
      %4940 = vmatmul.mubr.bf16.gmra.mrb[0].mxu0 %v2413
      %v4941 = vpop.f32.mrb[0].mxu0
      %v4942 = vadd.f32 %v4397, %v4941
      %v4943 = vpop.f32.mrb[0].mxu0
      %v4944 = vpop.f32.mrb[0].mxu0
      %v4945 = vadd.f32 %v4400, %v4944
      %v4946 = vpop.f32.mrb[0].mxu0
      %4947 = vmatprep.mubr.bf16.mxu0 %v2422
      %4948 = vmatmul.mubr.bf16.gmra.mrb[0].mxu0 %v2421
      %v4949 = vpop.f32.mrb[0].mxu0
      %v4950 = vadd.f32 %v4405, %v4949
      %v4951 = vpop.f32.mrb[0].mxu0
      %v4952 = vpop.f32.mrb[0].mxu0
      %v4953 = vadd.f32 %v4408, %v4952
      %v4954 = vpop.f32.mrb[0].mxu0
      %4955 = vmatprep.mubr.bf16.mxu0 %v2430
      %4956 = vmatmul.mubr.bf16.gmra.mrb[0].mxu0 %v2429
      %v4957 = vpop.f32.mrb[0].mxu0
      %v4958 = vadd.f32 %v4413, %v4957
      %v4959 = vpop.f32.mrb[0].mxu0
      %v4960 = vpop.f32.mrb[0].mxu0
      %v4961 = vadd.f32 %v4416, %v4960
      %v4962 = vpop.f32.mrb[0].mxu0
      %4963 = vmatprep.mubr.bf16.mxu0 %v2438
      %4964 = vmatmul.mubr.bf16.gmra.mrb[0].mxu0 %v2437
      %v4965 = vpop.f32.mrb[0].mxu0
      %v4966 = vadd.f32 %v4421, %v4965
      %v4967 = vpop.f32.mrb[0].mxu0
      %v4968 = vpop.f32.mrb[0].mxu0
      %v4969 = vadd.f32 %v4424, %v4968
      %v4970 = vpop.f32.mrb[0].mxu0
      %4971 = vmatprep.mubr.bf16.mxu0 %v2446
      %4972 = vmatmul.mubr.bf16.gmra.mrb[0].mxu0 %v2445
      %v4973 = vpop.f32.mrb[0].mxu0
      %v4974 = vadd.f32 %v4429, %v4973
      %v4975 = vpop.f32.mrb[0].mxu0
      %v4976 = vpop.f32.mrb[0].mxu0
      %v4977 = vadd.f32 %v4432, %v4976
      %v4978 = vpop.f32.mrb[0].mxu0
      %4979 = vmatprep.mubr.bf16.mxu0 %v2454
      %4980 = vmatmul.mubr.bf16.gmra.mrb[0].mxu0 %v2453
      %v4981 = vpop.f32.mrb[0].mxu0
      %v4982 = vadd.f32 %v4437, %v4981
      %v4983 = vpop.f32.mrb[0].mxu0
      %v4984 = vpop.f32.mrb[0].mxu0
      %v4985 = vadd.f32 %v4440, %v4984
      %v4986 = vpop.f32.mrb[0].mxu0
      %4987 = vmatprep.mubr.bf16.mxu0 %v2462
      %4988 = vmatmul.mubr.bf16.gmra.mrb[0].mxu0 %v2461
      %v4989 = vpop.f32.mrb[0].mxu0
      %v4990 = vadd.f32 %v4445, %v4989
      %v4991 = vpop.f32.mrb[0].mxu0
      %v4992 = vpop.f32.mrb[0].mxu0
      %v4993 = vadd.f32 %v4448, %v4992
      %v4994 = vpop.f32.mrb[0].mxu0
      %4995 = vmatprep.mubr.bf16.mxu0 %v2470
      %4996 = vmatmul.mubr.bf16.gmra.mrb[0].mxu0 %v2469
      %v4997 = vpop.f32.mrb[0].mxu0
      %v4998 = vadd.f32 %v4453, %v4997
      %v4999 = vpop.f32.mrb[0].mxu0
      %v5000 = vpop.f32.mrb[0].mxu0
      %v5001 = vadd.f32 %v4456, %v5000
      %v5002 = vpop.f32.mrb[0].mxu0
      %5003 = vmatprep.mubr.bf16.mxu0 %v2478
      %5004 = vmatmul.mubr.bf16.gmra.mrb[0].mxu0 %v2477
      %v5005 = vpop.f32.mrb[0].mxu0
      %v5006 = vadd.f32 %v4461, %v5005
      %v5007 = vpop.f32.mrb[0].mxu0
      %v5008 = vpop.f32.mrb[0].mxu0
      %v5009 = vadd.f32 %v4464, %v5008
      %v5010 = vpop.f32.mrb[0].mxu0
      %5011 = vmatprep.mubr.bf16.mxu0 %v2486
      %5012 = vmatmul.mubr.bf16.gmra.mrb[0].mxu0 %v2485
      %v5013 = vpop.f32.mrb[0].mxu0
      %v5014 = vadd.f32 %v4469, %v5013
      %v5015 = vpop.f32.mrb[0].mxu0
      %v5016 = vpop.f32.mrb[0].mxu0
      %v5017 = vadd.f32 %v4472, %v5016
      %v5018 = vpop.f32.mrb[0].mxu0
      %5019 = vmatprep.mubr.bf16.mxu0 %v2494
      %5020 = vmatmul.mubr.bf16.gmra.mrb[0].mxu0 %v2493
      %v5021 = vpop.f32.mrb[0].mxu0
      %v5022 = vadd.f32 %v4477, %v5021
      %v5023 = vpop.f32.mrb[0].mxu0
      %v5024 = vpop.f32.mrb[0].mxu0
      %v5025 = vadd.f32 %v4480, %v5024
      %v5026 = vpop.f32.mrb[0].mxu0
      %5027 = vmatprep.mubr.bf16.mxu0 %v2502
      %5028 = vmatmul.mubr.bf16.gmra.mrb[0].mxu0 %v2501
      %v5029 = vpop.f32.mrb[0].mxu0
      %v5030 = vadd.f32 %v4485, %v5029
      %v5031 = vpop.f32.mrb[0].mxu0
      %v5032 = vpop.f32.mrb[0].mxu0
      %v5033 = vadd.f32 %v4488, %v5032
      %v5034 = vpop.f32.mrb[0].mxu0
      %5035 = vmatprep.mubr.bf16.mxu0 %v2510
      %5036 = vmatmul.mubr.bf16.gmra.mrb[0].mxu0 %v2509
      %v5037 = vpop.f32.mrb[0].mxu0
      %v5038 = vadd.f32 %v4493, %v5037
      %v5039 = vpop.f32.mrb[0].mxu0
      %v5040 = vpop.f32.mrb[0].mxu0
      %v5041 = vadd.f32 %v4496, %v5040
      %v5042 = vpop.f32.mrb[0].mxu0
      %5043 = vmatprep.mubr.bf16.mxu0 %v2518
      %5044 = vmatmul.mubr.bf16.gmra.mrb[0].mxu0 %v2517
      %v5045 = vpop.f32.mrb[0].mxu0
      %v5046 = vadd.f32 %v4501, %v5045
      %v5047 = vpop.f32.mrb[0].mxu0
      %v5048 = vpop.f32.mrb[0].mxu0
      %v5049 = vadd.f32 %v4504, %v5048
      %v5050 = vpop.f32.mrb[0].mxu0
      %5051 = vmatprep.mubr.bf16.mxu0 %v2526
      %5052 = vmatmul.mubr.bf16.gmra.mrb[0].mxu0 %v2525
      %v5053 = vpop.f32.mrb[0].mxu0
      %v5054 = vadd.f32 %v4509, %v5053
      %v5055 = vpop.f32.mrb[0].mxu0
      %v5056 = vpop.f32.mrb[0].mxu0
      %v5057 = vadd.f32 %v4512, %v5056
      %v5058 = vpop.f32.mrb[0].mxu0
      %5059 = vmatprep.mubr.bf16.mxu0 %v2534
      %5060 = vmatmul.mubr.bf16.gmra.mrb[0].mxu0 %v2533
      %v5061 = vpop.f32.mrb[0].mxu0
      %v5062 = vadd.f32 %v4517, %v5061
      %v5063 = vpop.f32.mrb[0].mxu0
      %v5064 = vpop.f32.mrb[0].mxu0
      %v5065 = vadd.f32 %v4520, %v5064
      %v5066 = vpop.f32.mrb[0].mxu0
      %5067 = vmatprep.mubr.bf16.mxu0 %v2542
      %5068 = vmatmul.mubr.bf16.gmra.mrb[0].mxu0 %v2541
      %v5069 = vpop.f32.mrb[0].mxu0
      %v5070 = vadd.f32 %v4525, %v5069
      %v5071 = vpop.f32.mrb[0].mxu0
      %v5072 = vpop.f32.mrb[0].mxu0
      %v5073 = vadd.f32 %v4528, %v5072
      %v5074 = vpop.f32.mrb[0].mxu0
      %5075 = vmatprep.mubr.bf16.mxu0 %v2550
      %5076 = vmatmul.mubr.bf16.gmra.mrb[0].mxu0 %v2549
      %v5077 = vpop.f32.mrb[0].mxu0
      %v5078 = vadd.f32 %v4533, %v5077
      %v5079 = vpop.f32.mrb[0].mxu0
      %v5080 = vpop.f32.mrb[0].mxu0
      %v5081 = vadd.f32 %v4536, %v5080
      %v5082 = vpop.f32.mrb[0].mxu0
      %5083 = vmatprep.mubr.bf16.mxu0 %v2558
      %5084 = vmatmul.mubr.bf16.gmra.mrb[0].mxu0 %v2557
      %v5085 = vpop.f32.mrb[0].mxu0
      %v5086 = vadd.f32 %v4541, %v5085
      %v5087 = vpop.f32.mrb[0].mxu0
      %v5088 = vpop.f32.mrb[0].mxu0
      %v5089 = vadd.f32 %v4544, %v5088
      %v5090 = vpop.f32.mrb[0].mxu0
      %5091 = vmatprep.mubr.bf16.mxu0 %v2566
      %5092 = vmatmul.mubr.bf16.gmra.mrb[0].mxu0 %v2565
      %v5093 = vpop.f32.mrb[0].mxu0
      %v5094 = vadd.f32 %v4549, %v5093
      %v5095 = vpop.f32.mrb[0].mxu0
      %v5096 = vpop.f32.mrb[0].mxu0
      %v5097 = vadd.f32 %v4552, %v5096
      %v5098 = vpop.f32.mrb[0].mxu0
      %5099 = vmatprep.mubr.bf16.mxu0 %v2574
      %5100 = vmatmul.mubr.bf16.gmra.mrb[0].mxu0 %v2573
      %v5101 = vpop.f32.mrb[0].mxu0
      %v5102 = vadd.f32 %v4557, %v5101
      %v5103 = vpop.f32.mrb[0].mxu0
      %v5104 = vpop.f32.mrb[0].mxu0
      %v5105 = vadd.f32 %v4560, %v5104
      %v5106 = vpop.f32.mrb[0].mxu0
      %5107 = vmatprep.mubr.bf16.mxu0 %v2582
      %5108 = vmatmul.mubr.bf16.gmra.mrb[0].mxu0 %v2581
      %v5109 = vpop.f32.mrb[0].mxu0
      %v5110 = vadd.f32 %v4565, %v5109
      %v5111 = vpop.f32.mrb[0].mxu0
      %v5112 = vpop.f32.mrb[0].mxu0
      %v5113 = vadd.f32 %v4568, %v5112
      %v5114 = vpop.f32.mrb[0].mxu0
      %5115 = vmatprep.mubr.bf16.mxu0 %v2590
      %5116 = vmatmul.mubr.bf16.gmra.mrb[0].mxu0 %v2589
      %v5117 = vpop.f32.mrb[0].mxu0
      %v5118 = vadd.f32 %v4573, %v5117
      %v5119 = vpop.f32.mrb[0].mxu0
      %v5120 = vpop.f32.mrb[0].mxu0
      %v5121 = vadd.f32 %v4576, %v5120
      %v5122 = vpop.f32.mrb[0].mxu0
      %5123 = vmatprep.mubr.bf16.mxu0 %v2598
      %5124 = vmatmul.mubr.bf16.gmra.mrb[0].mxu0 %v2597
      %v5125 = vpop.f32.mrb[0].mxu0
      %v5126 = vadd.f32 %v4581, %v5125
      %v5127 = vpop.f32.mrb[0].mxu0
      %v5128 = vpop.f32.mrb[0].mxu0
      %v5129 = vadd.f32 %v4584, %v5128
      %v5130 = vpop.f32.mrb[0].mxu0
      %5131 = vmatprep.mubr.bf16.mxu0 %v2606
      %5132 = vmatmul.mubr.bf16.gmra.mrb[0].mxu0 %v2605
      %v5133 = vpop.f32.mrb[0].mxu0
      %v5134 = vadd.f32 %v4589, %v5133
      %v5135 = vpop.f32.mrb[0].mxu0
      %v5136 = vpop.f32.mrb[0].mxu0
      %v5137 = vadd.f32 %v4592, %v5136
      %v5138 = vpop.f32.mrb[0].mxu0
      %5139 = vmatprep.mubr.bf16.mxu0 %v2614
      %5140 = vmatmul.mubr.bf16.gmra.mrb[0].mxu0 %v2613
      %v5141 = vpop.f32.mrb[0].mxu0
      %v5142 = vadd.f32 %v4597, %v5141
      %v5143 = vpop.f32.mrb[0].mxu0
      %v5144 = vpop.f32.mrb[0].mxu0
      %v5145 = vadd.f32 %v4600, %v5144
      %v5146 = vpop.f32.mrb[0].mxu0
      %5147 = vmatprep.mubr.bf16.mxu0 %v2622
      %5148 = vmatmul.mubr.bf16.gmra.mrb[0].mxu0 %v2621
      %v5149 = vpop.f32.mrb[0].mxu0
      %v5150 = vadd.f32 %v4605, %v5149
      %v5151 = vpop.f32.mrb[0].mxu0
      %v5152 = vpop.f32.mrb[0].mxu0
      %v5153 = vadd.f32 %v4608, %v5152
      %v5154 = vpop.f32.mrb[0].mxu0
      %5155 = vmatprep.mubr.bf16.mxu0 %v2630
      %5156 = vmatmul.mubr.bf16.gmra.mrb[0].mxu0 %v2629
      %v5157 = vpop.f32.mrb[0].mxu0
      %v5158 = vadd.f32 %v4613, %v5157
      %v5159 = vpop.f32.mrb[0].mxu0
      %v5160 = vpop.f32.mrb[0].mxu0
      %v5161 = vadd.f32 %v4616, %v5160
      %v5162 = vpop.f32.mrb[0].mxu0
      %5163 = vmatprep.mubr.bf16.mxu0 %v2638
      %5164 = vmatmul.mubr.bf16.gmra.mrb[0].mxu0 %v2637
      %v5165 = vpop.f32.mrb[0].mxu0
      %v5166 = vadd.f32 %v4621, %v5165
      %v5167 = vpop.f32.mrb[0].mxu0
      %v5168 = vpop.f32.mrb[0].mxu0
      %v5169 = vadd.f32 %v4624, %v5168
      %v5170 = vpop.f32.mrb[0].mxu0
      %5171 = vmatprep.mubr.bf16.mxu0 %v2646
      %5172 = vmatmul.mubr.bf16.gmra.mrb[0].mxu0 %v2645
      %v5173 = vpop.f32.mrb[0].mxu0
      %v5174 = vadd.f32 %v4629, %v5173
      %v5175 = vpop.f32.mrb[0].mxu0
      %v5176 = vpop.f32.mrb[0].mxu0
      %v5177 = vadd.f32 %v4632, %v5176
      %v5178 = vpop.f32.mrb[0].mxu0
      %5179 = vmatprep.mubr.bf16.mxu0 %v2654
      %5180 = vmatmul.mubr.bf16.gmra.mrb[0].mxu0 %v2653
      %v5181 = vpop.f32.mrb[0].mxu0
      %v5182 = vadd.f32 %v4637, %v5181
      %v5183 = vpop.f32.mrb[0].mxu0
      %v5184 = vpop.f32.mrb[0].mxu0
      %v5185 = vadd.f32 %v4640, %v5184
      %v5186 = vpop.f32.mrb[0].mxu0
      %5187 = vmatprep.mubr.bf16.mxu0 %v2662
      %5188 = vmatmul.mubr.bf16.gmra.mrb[0].mxu0 %v2661
      %v5189 = vpop.f32.mrb[0].mxu0
      %v5190 = vadd.f32 %v4645, %v5189
      %v5191 = vpop.f32.mrb[0].mxu0
      %v5192 = vpop.f32.mrb[0].mxu0
      %v5193 = vadd.f32 %v4648, %v5192
      %v5194 = vpop.f32.mrb[0].mxu0
      %5195 = vmatprep.mubr.bf16.mxu0 %v2670
      %5196 = vmatmul.mubr.bf16.gmra.mrb[0].mxu0 %v2669
      %v5197 = vpop.f32.mrb[0].mxu0
      %v5198 = vadd.f32 %v4653, %v5197
      %v5199 = vpop.f32.mrb[0].mxu0
      %v5200 = vpop.f32.mrb[0].mxu0
      %v5201 = vadd.f32 %v4656, %v5200
      %v5202 = vpop.f32.mrb[0].mxu0
      %5203 = vmatprep.mubr.bf16.mxu0 %v2678
      %5204 = vmatmul.mubr.bf16.gmra.mrb[0].mxu0 %v2677
      %v5205 = vpop.f32.mrb[0].mxu0
      %v5206 = vadd.f32 %v4661, %v5205
      %v5207 = vpop.f32.mrb[0].mxu0
      %v5208 = vpop.f32.mrb[0].mxu0
      %v5209 = vadd.f32 %v4664, %v5208
      %v5210 = vpop.f32.mrb[0].mxu0
      %5211 = vmatprep.mubr.bf16.mxu0 %v2686
      %5212 = vmatmul.mubr.bf16.gmra.mrb[0].mxu0 %v2685
      %v5213 = vpop.f32.mrb[0].mxu0
      %v5214 = vadd.f32 %v4669, %v5213
      %v5215 = vpop.f32.mrb[0].mxu0
      %v5216 = vpop.f32.mrb[0].mxu0
      %v5217 = vadd.f32 %v4672, %v5216
      %v5218 = vpop.f32.mrb[0].mxu0
      %5219 = vmatprep.mubr.bf16.mxu0 %v2694
      %5220 = vmatmul.mubr.bf16.gmra.mrb[0].mxu0 %v2693
      %v5221 = vpop.f32.mrb[0].mxu0
      %v5222 = vadd.f32 %v4677, %v5221
      %v5223 = vpop.f32.mrb[0].mxu0
      %v5224 = vpop.f32.mrb[0].mxu0
      %v5225 = vadd.f32 %v4680, %v5224
      %v5226 = vpop.f32.mrb[0].mxu0
      %5227 = vmatprep.mubr.bf16.mxu0 %v2702
      %5228 = vmatmul.mubr.bf16.gmra.mrb[0].mxu0 %v2701
      %v5229 = vpop.f32.mrb[0].mxu0
      %v5230 = vadd.f32 %v4685, %v5229
      %v5231 = vpop.f32.mrb[0].mxu0
      %v5232 = vpop.f32.mrb[0].mxu0
      %v5233 = vadd.f32 %v4688, %v5232
      %v5234 = vpop.f32.mrb[0].mxu0
      %5235 = vmatprep.mubr.bf16.mxu0 %v2710
      %5236 = vmatmul.mubr.bf16.gmra.mrb[0].mxu0 %v2709
      %v5237 = vpop.f32.mrb[0].mxu0
      %v5238 = vadd.f32 %v4693, %v5237
      %v5239 = vpop.f32.mrb[0].mxu0
      %v5240 = vpop.f32.mrb[0].mxu0
      %v5241 = vadd.f32 %v4696, %v5240
      %v5242 = vpop.f32.mrb[0].mxu0
      %5243 = vmatprep.mubr.bf16.mxu0 %v2718
      %5244 = vmatmul.mubr.bf16.gmra.mrb[0].mxu0 %v2717
      %v5245 = vpop.f32.mrb[0].mxu0
      %v5246 = vadd.f32 %v4701, %v5245
      %v5247 = vpop.f32.mrb[0].mxu0
      %v5248 = vpop.f32.mrb[0].mxu0
      %v5249 = vadd.f32 %v4704, %v5248
      %v5250 = vpop.f32.mrb[0].mxu0
      %5251 = vmatprep.mubr.bf16.mxu0 %v2726
      %5252 = vmatmul.mubr.bf16.gmra.mrb[0].mxu0 %v2725
      %v5253 = vpop.f32.mrb[0].mxu0
      %v5254 = vadd.f32 %v4709, %v5253
      %v5255 = vpop.f32.mrb[0].mxu0
      %v5256 = vpop.f32.mrb[0].mxu0
      %v5257 = vadd.f32 %v4712, %v5256
      %v5258 = vpop.f32.mrb[0].mxu0
      %5259 = vmatprep.mubr.bf16.mxu0 %v2734
      %5260 = vmatmul.mubr.bf16.gmra.mrb[0].mxu0 %v2733
      %v5261 = vpop.f32.mrb[0].mxu0
      %v5262 = vadd.f32 %v4717, %v5261
      %v5263 = vpop.f32.mrb[0].mxu0
      %v5264 = vpop.f32.mrb[0].mxu0
      %v5265 = vadd.f32 %v4720, %v5264
      %v5266 = vpop.f32.mrb[0].mxu0
      %5267 = vmatprep.mubr.bf16.mxu0 %v2742
      %5268 = vmatmul.mubr.bf16.gmra.mrb[0].mxu0 %v2741
      %v5269 = vpop.f32.mrb[0].mxu0
      %v5270 = vadd.f32 %v4725, %v5269
      %v5271 = vpop.f32.mrb[0].mxu0
      %v5272 = vpop.f32.mrb[0].mxu0
      %v5273 = vadd.f32 %v4728, %v5272
      %v5274 = vpop.f32.mrb[0].mxu0
      %5275 = vmatprep.mubr.bf16.mxu0 %v2750
      %5276 = vmatmul.mubr.bf16.gmra.mrb[0].mxu0 %v2749
      %v5277 = vpop.f32.mrb[0].mxu0
      %v5278 = vadd.f32 %v4733, %v5277
      %v5279 = vpop.f32.mrb[0].mxu0
      %v5280 = vpop.f32.mrb[0].mxu0
      %v5281 = vadd.f32 %v4736, %v5280
      %v5282 = vpop.f32.mrb[0].mxu0
      %5283 = vmatprep.mubr.bf16.mxu0 %v2758
      %5284 = vmatmul.mubr.bf16.gmra.mrb[0].mxu0 %v2757
      %v5285 = vpop.f32.mrb[0].mxu0
      %v5286 = vadd.f32 %v4741, %v5285
      %v5287 = vpop.f32.mrb[0].mxu0
      %v5288 = vpop.f32.mrb[0].mxu0
      %v5289 = vadd.f32 %v4744, %v5288
      %v5290 = vpop.f32.mrb[0].mxu0
      %5291 = vmatprep.mubr.bf16.mxu0 %v2766
      %5292 = vmatmul.mubr.bf16.gmra.mrb[0].mxu0 %v2765
      %v5293 = vpop.f32.mrb[0].mxu0
      %v5294 = vadd.f32 %v4749, %v5293
      %v5295 = vpop.f32.mrb[0].mxu0
      %v5296 = vpop.f32.mrb[0].mxu0
      %v5297 = vadd.f32 %v4752, %v5296
      %v5298 = vpop.f32.mrb[0].mxu0
      %5299 = vmatprep.mubr.bf16.mxu0 %v2774
      %5300 = vmatmul.mubr.bf16.gmra.mrb[0].mxu0 %v2773
      %v5301 = vpop.f32.mrb[0].mxu0
      %v5302 = vadd.f32 %v4757, %v5301
      %v5303 = vpop.f32.mrb[0].mxu0
      %v5304 = vpop.f32.mrb[0].mxu0
      %v5305 = vadd.f32 %v4760, %v5304
      %v5306 = vpop.f32.mrb[0].mxu0
      %5307 = vmatprep.mubr.bf16.mxu0 %v2782
      %5308 = vmatmul.mubr.bf16.gmra.mrb[0].mxu0 %v2781
      %v5309 = vpop.f32.mrb[0].mxu0
      %v5310 = vadd.f32 %v4765, %v5309
      %v5311 = vpop.f32.mrb[0].mxu0
      %v5312 = vpop.f32.mrb[0].mxu0
      %v5313 = vadd.f32 %v4768, %v5312
      %v5314 = vpop.f32.mrb[0].mxu0
      %5315 = vmatprep.mubr.bf16.mxu0 %v2790
      %5316 = vmatmul.mubr.bf16.gmra.mrb[0].mxu0 %v2789
      %v5317 = vpop.f32.mrb[0].mxu0
      %v5318 = vadd.f32 %v4773, %v5317
      %v5319 = vpop.f32.mrb[0].mxu0
      %v5320 = vpop.f32.mrb[0].mxu0
      %v5321 = vadd.f32 %v4776, %v5320
      %v5322 = vpop.f32.mrb[0].mxu0
      %5323 = vmatprep.mubr.bf16.mxu0 %v2798
      %5324 = vmatmul.mubr.bf16.gmra.mrb[0].mxu0 %v2797
      %v5325 = vpop.f32.mrb[0].mxu0
      %v5326 = vadd.f32 %v4781, %v5325
      %v5327 = vpop.f32.mrb[0].mxu0
      %v5328 = vpop.f32.mrb[0].mxu0
      %v5329 = vadd.f32 %v4784, %v5328
      %v5330 = vpop.f32.mrb[0].mxu0
      %5331 = vmatprep.mubr.bf16.mxu0 %v2806
      %5332 = vmatmul.mubr.bf16.gmra.mrb[0].mxu0 %v2805
      %v5333 = vpop.f32.mrb[0].mxu0
      %v5334 = vadd.f32 %v4789, %v5333
      %v5335 = vpop.f32.mrb[0].mxu0
      %v5336 = vpop.f32.mrb[0].mxu0
      %v5337 = vadd.f32 %v4792, %v5336
      %v5338 = vpop.f32.mrb[0].mxu0
      %5339 = vmatprep.mubr.bf16.mxu0 %v2814
      %5340 = vmatmul.mubr.bf16.gmra.mrb[0].mxu0 %v2813
      %v5341 = vpop.f32.mrb[0].mxu0
      %v5342 = vadd.f32 %v4797, %v5341
      %v5343 = vpop.f32.mrb[0].mxu0
      %v5344 = vpop.f32.mrb[0].mxu0
      %v5345 = vadd.f32 %v4800, %v5344
      %v5346 = vpop.f32.mrb[0].mxu0
      %5347 = vmatprep.mubr.bf16.mxu0 %v2822
      %5348 = vmatmul.mubr.bf16.gmra.mrb[0].mxu0 %v2821
      %v5349 = vpop.f32.mrb[0].mxu0
      %v5350 = vadd.f32 %v4805, %v5349
      %v5351 = vpop.f32.mrb[0].mxu0
      %v5352 = vpop.f32.mrb[0].mxu0
      %v5353 = vadd.f32 %v4808, %v5352
      %v5354 = vpop.f32.mrb[0].mxu0
      %5355 = vmatprep.mubr.bf16.mxu0 %v2830
      %5356 = vmatmul.mubr.bf16.gmra.mrb[0].mxu0 %v2829
      %v5357 = vpop.f32.mrb[0].mxu0
      %v5358 = vadd.f32 %v4813, %v5357
      %v5359 = vpop.f32.mrb[0].mxu0
      %v5360 = vpop.f32.mrb[0].mxu0
      %v5361 = vadd.f32 %v4816, %v5360
      %v5362 = vpop.f32.mrb[0].mxu0
      %5363 = vmatprep.mubr.bf16.mxu0 %v2838
      %5364 = vmatmul.mubr.bf16.gmra.mrb[0].mxu0 %v2837
      %v5365 = vpop.f32.mrb[0].mxu0
      %v5366 = vadd.f32 %v4821, %v5365
      %v5367 = vpop.f32.mrb[0].mxu0
      %v5368 = vpop.f32.mrb[0].mxu0
      %v5369 = vadd.f32 %v4824, %v5368
      %v5370 = vpop.f32.mrb[0].mxu0
      %5371 = vmatprep.mubr.bf16.mxu0 %v2846
      %5372 = vmatmul.mubr.bf16.gmra.mrb[0].mxu0 %v2845
      %v5373 = vpop.f32.mrb[0].mxu0
      %v5374 = vadd.f32 %v4829, %v5373
      %v5375 = vpop.f32.mrb[0].mxu0
      %v5376 = vpop.f32.mrb[0].mxu0
      %v5377 = vadd.f32 %v4832, %v5376
      %v5378 = vpop.f32.mrb[0].mxu0
      %5379 = vmatprep.mubr.bf16.mxu0 %v2854
      %5380 = vmatmul.mubr.bf16.gmra.mrb[0].mxu0 %v2853
      %v5381 = vpop.f32.mrb[0].mxu0
      %v5382 = vadd.f32 %v4837, %v5381
      %v5383 = vpop.f32.mrb[0].mxu0
      %v5384 = vpop.f32.mrb[0].mxu0
      %v5385 = vadd.f32 %v4840, %v5384
      %v5386 = vpop.f32.mrb[0].mxu0
      %5387 = vmatprep.mubr.bf16.mxu0 %v2862
      %5388 = vmatmul.mubr.bf16.gmra.mrb[0].mxu0 %v2861
      %v5389 = vpop.f32.mrb[0].mxu0
      %v5390 = vadd.f32 %v4845, %v5389
      %v5391 = vpop.f32.mrb[0].mxu0
      %v5392 = vpop.f32.mrb[0].mxu0
      %v5393 = vadd.f32 %v4848, %v5392
      %v5394 = vpop.f32.mrb[0].mxu0
      %5395 = vmatprep.mubr.bf16.mxu0 %v2870
      %5396 = vmatmul.mubr.bf16.gmra.mrb[0].mxu0 %v2869
      %v5397 = vpop.f32.mrb[0].mxu0
      %v5398 = vadd.f32 %v4853, %v5397
      %v5399 = vpop.f32.mrb[0].mxu0
      %v5400 = vpop.f32.mrb[0].mxu0
      %v5401 = vadd.f32 %v4856, %v5400
      %v5402 = vpop.f32.mrb[0].mxu0
      %5403 = vdwg.mxu0
      %5404 = vmatprep.subr.bf16.mxu0 0
      %5405 = vmatpush1.bf16.msra.mxu0 %v3689
      %5406 = vmatprep.subr.bf16.mxu0 0
      %5407 = vmatpush1.bf16.msra.mxu0 %v3690
      %5408 = vmatprep.subr.bf16.mxu0 0
      %5409 = vmatpush1.bf16.msra.mxu0 %v3691
      %5410 = vmatprep.subr.bf16.mxu0 0
      %5411 = vmatpush1.bf16.msra.mxu0 %v3692
      %5412 = vmatprep.subr.bf16.mxu0 0
      %5413 = vmatpush1.bf16.msra.mxu0 %v3693
      %5414 = vmatprep.subr.bf16.mxu0 0
      %5415 = vmatpush1.bf16.msra.mxu0 %v3694
      %5416 = vmatprep.subr.bf16.mxu0 0
      %5417 = vmatpush1.bf16.msra.mxu0 %v3695
      %5418 = vmatprep.subr.bf16.mxu0 0
      %5419 = vmatpush1.bf16.msra.mxu0 %v3696
      %5420 = vmatprep.subr.bf16.mxu0 0
      %5421 = vmatpush1.bf16.msra.mxu0 %v3697
      %5422 = vmatprep.subr.bf16.mxu0 0
      %5423 = vmatpush1.bf16.msra.mxu0 %v3698
      %5424 = vmatprep.subr.bf16.mxu0 0
      %5425 = vmatpush1.bf16.msra.mxu0 %v3699
      %5426 = vmatprep.subr.bf16.mxu0 0
      %5427 = vmatpush1.bf16.msra.mxu0 %v3700
      %5428 = vmatprep.subr.bf16.mxu0 0
      %5429 = vmatpush1.bf16.msra.mxu0 %v3701
      %5430 = vmatprep.subr.bf16.mxu0 0
      %5431 = vmatpush1.bf16.msra.mxu0 %v3702
      %5432 = vmatprep.subr.bf16.mxu0 0
      %5433 = vmatpush1.bf16.msra.mxu0 %v3703
      %5434 = vmatprep.subr.bf16.mxu0 0
      %5435 = vmatpush1.bf16.msra.mxu0 %v3704
      %5436 = vmatprep.mubr.bf16.mxu0 %v2368
      %5437 = vmatmul.mubr.bf16.gmra.mrb[0].mxu0 %v2367
      %v5438 = vpop.f32.mrb[0].mxu0
      %v5439 = vadd.f32 %v4894, %v5438
      %v5440 = vpop.f32.mrb[0].mxu0
      %v5441 = vpop.f32.mrb[0].mxu0
      %v5442 = vadd.f32 %v4897, %v5441
      %v5443 = vpop.f32.mrb[0].mxu0
      %5444 = vmatprep.mubr.bf16.mxu0 %v2376
      %5445 = vmatmul.mubr.bf16.gmra.mrb[0].mxu0 %v2375
      %v5446 = vpop.f32.mrb[0].mxu0
      %v5447 = vadd.f32 %v4902, %v5446
      %v5448 = vpop.f32.mrb[0].mxu0
      %v5449 = vpop.f32.mrb[0].mxu0
      %v5450 = vadd.f32 %v4905, %v5449
      %v5451 = vpop.f32.mrb[0].mxu0
      %5452 = vmatprep.mubr.bf16.mxu0 %v2384
      %5453 = vmatmul.mubr.bf16.gmra.mrb[0].mxu0 %v2383
      %v5454 = vpop.f32.mrb[0].mxu0
      %v5455 = vadd.f32 %v4910, %v5454
      %v5456 = vpop.f32.mrb[0].mxu0
      %v5457 = vpop.f32.mrb[0].mxu0
      %v5458 = vadd.f32 %v4913, %v5457
      %v5459 = vpop.f32.mrb[0].mxu0
      %5460 = vmatprep.mubr.bf16.mxu0 %v2392
      %5461 = vmatmul.mubr.bf16.gmra.mrb[0].mxu0 %v2391
      %v5462 = vpop.f32.mrb[0].mxu0
      %v5463 = vadd.f32 %v4918, %v5462
      %v5464 = vpop.f32.mrb[0].mxu0
      %v5465 = vpop.f32.mrb[0].mxu0
      %v5466 = vadd.f32 %v4921, %v5465
      %v5467 = vpop.f32.mrb[0].mxu0
      %5468 = vmatprep.mubr.bf16.mxu0 %v2400
      %5469 = vmatmul.mubr.bf16.gmra.mrb[0].mxu0 %v2399
      %v5470 = vpop.f32.mrb[0].mxu0
      %v5471 = vadd.f32 %v4926, %v5470
      %v5472 = vpop.f32.mrb[0].mxu0
      %v5473 = vpop.f32.mrb[0].mxu0
      %v5474 = vadd.f32 %v4929, %v5473
      %v5475 = vpop.f32.mrb[0].mxu0
      %5476 = vmatprep.mubr.bf16.mxu0 %v2408
      %5477 = vmatmul.mubr.bf16.gmra.mrb[0].mxu0 %v2407
      %v5478 = vpop.f32.mrb[0].mxu0
      %v5479 = vadd.f32 %v4934, %v5478
      %v5480 = vpop.f32.mrb[0].mxu0
      %v5481 = vpop.f32.mrb[0].mxu0
      %v5482 = vadd.f32 %v4937, %v5481
      %v5483 = vpop.f32.mrb[0].mxu0
      %5484 = vmatprep.mubr.bf16.mxu0 %v2416
      %5485 = vmatmul.mubr.bf16.gmra.mrb[0].mxu0 %v2415
      %v5486 = vpop.f32.mrb[0].mxu0
      %v5487 = vadd.f32 %v4942, %v5486
      %v5488 = vpop.f32.mrb[0].mxu0
      %v5489 = vpop.f32.mrb[0].mxu0
      %v5490 = vadd.f32 %v4945, %v5489
      %v5491 = vpop.f32.mrb[0].mxu0
      %5492 = vmatprep.mubr.bf16.mxu0 %v2424
      %5493 = vmatmul.mubr.bf16.gmra.mrb[0].mxu0 %v2423
      %v5494 = vpop.f32.mrb[0].mxu0
      %v5495 = vadd.f32 %v4950, %v5494
      %v5496 = vpop.f32.mrb[0].mxu0
      %v5497 = vpop.f32.mrb[0].mxu0
      %v5498 = vadd.f32 %v4953, %v5497
      %v5499 = vpop.f32.mrb[0].mxu0
      %5500 = vmatprep.mubr.bf16.mxu0 %v2432
      %5501 = vmatmul.mubr.bf16.gmra.mrb[0].mxu0 %v2431
      %v5502 = vpop.f32.mrb[0].mxu0
      %v5503 = vadd.f32 %v4958, %v5502
      %v5504 = vpop.f32.mrb[0].mxu0
      %v5505 = vpop.f32.mrb[0].mxu0
      %v5506 = vadd.f32 %v4961, %v5505
      %v5507 = vpop.f32.mrb[0].mxu0
      %5508 = vmatprep.mubr.bf16.mxu0 %v2440
      %5509 = vmatmul.mubr.bf16.gmra.mrb[0].mxu0 %v2439
      %v5510 = vpop.f32.mrb[0].mxu0
      %v5511 = vadd.f32 %v4966, %v5510
      %v5512 = vpop.f32.mrb[0].mxu0
      %v5513 = vpop.f32.mrb[0].mxu0
      %v5514 = vadd.f32 %v4969, %v5513
      %v5515 = vpop.f32.mrb[0].mxu0
      %5516 = vmatprep.mubr.bf16.mxu0 %v2448
      %5517 = vmatmul.mubr.bf16.gmra.mrb[0].mxu0 %v2447
      %v5518 = vpop.f32.mrb[0].mxu0
      %v5519 = vadd.f32 %v4974, %v5518
      %v5520 = vpop.f32.mrb[0].mxu0
      %v5521 = vpop.f32.mrb[0].mxu0
      %v5522 = vadd.f32 %v4977, %v5521
      %v5523 = vpop.f32.mrb[0].mxu0
      %5524 = vmatprep.mubr.bf16.mxu0 %v2456
      %5525 = vmatmul.mubr.bf16.gmra.mrb[0].mxu0 %v2455
      %v5526 = vpop.f32.mrb[0].mxu0
      %v5527 = vadd.f32 %v4982, %v5526
      %v5528 = vpop.f32.mrb[0].mxu0
      %v5529 = vpop.f32.mrb[0].mxu0
      %v5530 = vadd.f32 %v4985, %v5529
      %v5531 = vpop.f32.mrb[0].mxu0
      %5532 = vmatprep.mubr.bf16.mxu0 %v2464
      %5533 = vmatmul.mubr.bf16.gmra.mrb[0].mxu0 %v2463
      %v5534 = vpop.f32.mrb[0].mxu0
      %v5535 = vadd.f32 %v4990, %v5534
      %v5536 = vpop.f32.mrb[0].mxu0
      %v5537 = vpop.f32.mrb[0].mxu0
      %v5538 = vadd.f32 %v4993, %v5537
      %v5539 = vpop.f32.mrb[0].mxu0
      %5540 = vmatprep.mubr.bf16.mxu0 %v2472
      %5541 = vmatmul.mubr.bf16.gmra.mrb[0].mxu0 %v2471
      %v5542 = vpop.f32.mrb[0].mxu0
      %v5543 = vadd.f32 %v4998, %v5542
      %v5544 = vpop.f32.mrb[0].mxu0
      %v5545 = vpop.f32.mrb[0].mxu0
      %v5546 = vadd.f32 %v5001, %v5545
      %v5547 = vpop.f32.mrb[0].mxu0
      %5548 = vmatprep.mubr.bf16.mxu0 %v2480
      %5549 = vmatmul.mubr.bf16.gmra.mrb[0].mxu0 %v2479
      %v5550 = vpop.f32.mrb[0].mxu0
      %v5551 = vadd.f32 %v5006, %v5550
      %v5552 = vpop.f32.mrb[0].mxu0
      %v5553 = vpop.f32.mrb[0].mxu0
      %v5554 = vadd.f32 %v5009, %v5553
      %v5555 = vpop.f32.mrb[0].mxu0
      %5556 = vmatprep.mubr.bf16.mxu0 %v2488
      %5557 = vmatmul.mubr.bf16.gmra.mrb[0].mxu0 %v2487
      %v5558 = vpop.f32.mrb[0].mxu0
      %v5559 = vadd.f32 %v5014, %v5558
      %v5560 = vpop.f32.mrb[0].mxu0
      %v5561 = vpop.f32.mrb[0].mxu0
      %v5562 = vadd.f32 %v5017, %v5561
      %v5563 = vpop.f32.mrb[0].mxu0
      %5564 = vmatprep.mubr.bf16.mxu0 %v2496
      %5565 = vmatmul.mubr.bf16.gmra.mrb[0].mxu0 %v2495
      %v5566 = vpop.f32.mrb[0].mxu0
      %v5567 = vadd.f32 %v5022, %v5566
      %v5568 = vpop.f32.mrb[0].mxu0
      %v5569 = vpop.f32.mrb[0].mxu0
      %v5570 = vadd.f32 %v5025, %v5569
      %v5571 = vpop.f32.mrb[0].mxu0
      %5572 = vmatprep.mubr.bf16.mxu0 %v2504
      %5573 = vmatmul.mubr.bf16.gmra.mrb[0].mxu0 %v2503
      %v5574 = vpop.f32.mrb[0].mxu0
      %v5575 = vadd.f32 %v5030, %v5574
      %v5576 = vpop.f32.mrb[0].mxu0
      %v5577 = vpop.f32.mrb[0].mxu0
      %v5578 = vadd.f32 %v5033, %v5577
      %v5579 = vpop.f32.mrb[0].mxu0
      %5580 = vmatprep.mubr.bf16.mxu0 %v2512
      %5581 = vmatmul.mubr.bf16.gmra.mrb[0].mxu0 %v2511
      %v5582 = vpop.f32.mrb[0].mxu0
      %v5583 = vadd.f32 %v5038, %v5582
      %v5584 = vpop.f32.mrb[0].mxu0
      %v5585 = vpop.f32.mrb[0].mxu0
      %v5586 = vadd.f32 %v5041, %v5585
      %v5587 = vpop.f32.mrb[0].mxu0
      %5588 = vmatprep.mubr.bf16.mxu0 %v2520
      %5589 = vmatmul.mubr.bf16.gmra.mrb[0].mxu0 %v2519
      %v5590 = vpop.f32.mrb[0].mxu0
      %v5591 = vadd.f32 %v5046, %v5590
      %v5592 = vpop.f32.mrb[0].mxu0
      %v5593 = vpop.f32.mrb[0].mxu0
      %v5594 = vadd.f32 %v5049, %v5593
      %v5595 = vpop.f32.mrb[0].mxu0
      %5596 = vmatprep.mubr.bf16.mxu0 %v2528
      %5597 = vmatmul.mubr.bf16.gmra.mrb[0].mxu0 %v2527
      %v5598 = vpop.f32.mrb[0].mxu0
      %v5599 = vadd.f32 %v5054, %v5598
      %v5600 = vpop.f32.mrb[0].mxu0
      %v5601 = vpop.f32.mrb[0].mxu0
      %v5602 = vadd.f32 %v5057, %v5601
      %v5603 = vpop.f32.mrb[0].mxu0
      %5604 = vmatprep.mubr.bf16.mxu0 %v2536
      %5605 = vmatmul.mubr.bf16.gmra.mrb[0].mxu0 %v2535
      %v5606 = vpop.f32.mrb[0].mxu0
      %v5607 = vadd.f32 %v5062, %v5606
      %v5608 = vpop.f32.mrb[0].mxu0
      %v5609 = vpop.f32.mrb[0].mxu0
      %v5610 = vadd.f32 %v5065, %v5609
      %v5611 = vpop.f32.mrb[0].mxu0
      %5612 = vmatprep.mubr.bf16.mxu0 %v2544
      %5613 = vmatmul.mubr.bf16.gmra.mrb[0].mxu0 %v2543
      %v5614 = vpop.f32.mrb[0].mxu0
      %v5615 = vadd.f32 %v5070, %v5614
      %v5616 = vpop.f32.mrb[0].mxu0
      %v5617 = vpop.f32.mrb[0].mxu0
      %v5618 = vadd.f32 %v5073, %v5617
      %v5619 = vpop.f32.mrb[0].mxu0
      %5620 = vmatprep.mubr.bf16.mxu0 %v2552
      %5621 = vmatmul.mubr.bf16.gmra.mrb[0].mxu0 %v2551
      %v5622 = vpop.f32.mrb[0].mxu0
      %v5623 = vadd.f32 %v5078, %v5622
      %v5624 = vpop.f32.mrb[0].mxu0
      %v5625 = vpop.f32.mrb[0].mxu0
      %v5626 = vadd.f32 %v5081, %v5625
      %v5627 = vpop.f32.mrb[0].mxu0
      %5628 = vmatprep.mubr.bf16.mxu0 %v2560
      %5629 = vmatmul.mubr.bf16.gmra.mrb[0].mxu0 %v2559
      %v5630 = vpop.f32.mrb[0].mxu0
      %v5631 = vadd.f32 %v5086, %v5630
      %v5632 = vpop.f32.mrb[0].mxu0
      %v5633 = vpop.f32.mrb[0].mxu0
      %v5634 = vadd.f32 %v5089, %v5633
      %v5635 = vpop.f32.mrb[0].mxu0
      %5636 = vmatprep.mubr.bf16.mxu0 %v2568
      %5637 = vmatmul.mubr.bf16.gmra.mrb[0].mxu0 %v2567
      %v5638 = vpop.f32.mrb[0].mxu0
      %v5639 = vadd.f32 %v5094, %v5638
      %v5640 = vpop.f32.mrb[0].mxu0
      %v5641 = vpop.f32.mrb[0].mxu0
      %v5642 = vadd.f32 %v5097, %v5641
      %v5643 = vpop.f32.mrb[0].mxu0
      %5644 = vmatprep.mubr.bf16.mxu0 %v2576
      %5645 = vmatmul.mubr.bf16.gmra.mrb[0].mxu0 %v2575
      %v5646 = vpop.f32.mrb[0].mxu0
      %v5647 = vadd.f32 %v5102, %v5646
      %v5648 = vpop.f32.mrb[0].mxu0
      %v5649 = vpop.f32.mrb[0].mxu0
      %v5650 = vadd.f32 %v5105, %v5649
      %v5651 = vpop.f32.mrb[0].mxu0
      %5652 = vmatprep.mubr.bf16.mxu0 %v2584
      %5653 = vmatmul.mubr.bf16.gmra.mrb[0].mxu0 %v2583
      %v5654 = vpop.f32.mrb[0].mxu0
      %v5655 = vadd.f32 %v5110, %v5654
      %v5656 = vpop.f32.mrb[0].mxu0
      %v5657 = vpop.f32.mrb[0].mxu0
      %v5658 = vadd.f32 %v5113, %v5657
      %v5659 = vpop.f32.mrb[0].mxu0
      %5660 = vmatprep.mubr.bf16.mxu0 %v2592
      %5661 = vmatmul.mubr.bf16.gmra.mrb[0].mxu0 %v2591
      %v5662 = vpop.f32.mrb[0].mxu0
      %v5663 = vadd.f32 %v5118, %v5662
      %v5664 = vpop.f32.mrb[0].mxu0
      %v5665 = vpop.f32.mrb[0].mxu0
      %v5666 = vadd.f32 %v5121, %v5665
      %v5667 = vpop.f32.mrb[0].mxu0
      %5668 = vmatprep.mubr.bf16.mxu0 %v2600
      %5669 = vmatmul.mubr.bf16.gmra.mrb[0].mxu0 %v2599
      %v5670 = vpop.f32.mrb[0].mxu0
      %v5671 = vadd.f32 %v5126, %v5670
      %v5672 = vpop.f32.mrb[0].mxu0
      %v5673 = vpop.f32.mrb[0].mxu0
      %v5674 = vadd.f32 %v5129, %v5673
      %v5675 = vpop.f32.mrb[0].mxu0
      %5676 = vmatprep.mubr.bf16.mxu0 %v2608
      %5677 = vmatmul.mubr.bf16.gmra.mrb[0].mxu0 %v2607
      %v5678 = vpop.f32.mrb[0].mxu0
      %v5679 = vadd.f32 %v5134, %v5678
      %v5680 = vpop.f32.mrb[0].mxu0
      %v5681 = vpop.f32.mrb[0].mxu0
      %v5682 = vadd.f32 %v5137, %v5681
      %v5683 = vpop.f32.mrb[0].mxu0
      %5684 = vmatprep.mubr.bf16.mxu0 %v2616
      %5685 = vmatmul.mubr.bf16.gmra.mrb[0].mxu0 %v2615
      %v5686 = vpop.f32.mrb[0].mxu0
      %v5687 = vadd.f32 %v5142, %v5686
      %v5688 = vpop.f32.mrb[0].mxu0
      %v5689 = vpop.f32.mrb[0].mxu0
      %v5690 = vadd.f32 %v5145, %v5689
      %v5691 = vpop.f32.mrb[0].mxu0
      %5692 = vmatprep.mubr.bf16.mxu0 %v2624
      %5693 = vmatmul.mubr.bf16.gmra.mrb[0].mxu0 %v2623
      %v5694 = vpop.f32.mrb[0].mxu0
      %v5695 = vadd.f32 %v5150, %v5694
      %v5696 = vpop.f32.mrb[0].mxu0
      %v5697 = vpop.f32.mrb[0].mxu0
      %v5698 = vadd.f32 %v5153, %v5697
      %v5699 = vpop.f32.mrb[0].mxu0
      %5700 = vmatprep.mubr.bf16.mxu0 %v2632
      %5701 = vmatmul.mubr.bf16.gmra.mrb[0].mxu0 %v2631
      %v5702 = vpop.f32.mrb[0].mxu0
      %v5703 = vadd.f32 %v5158, %v5702
      %v5704 = vpop.f32.mrb[0].mxu0
      %v5705 = vpop.f32.mrb[0].mxu0
      %v5706 = vadd.f32 %v5161, %v5705
      %v5707 = vpop.f32.mrb[0].mxu0
      %5708 = vmatprep.mubr.bf16.mxu0 %v2640
      %5709 = vmatmul.mubr.bf16.gmra.mrb[0].mxu0 %v2639
      %v5710 = vpop.f32.mrb[0].mxu0
      %v5711 = vadd.f32 %v5166, %v5710
      %v5712 = vpop.f32.mrb[0].mxu0
      %v5713 = vpop.f32.mrb[0].mxu0
      %v5714 = vadd.f32 %v5169, %v5713
      %v5715 = vpop.f32.mrb[0].mxu0
      %5716 = vmatprep.mubr.bf16.mxu0 %v2648
      %5717 = vmatmul.mubr.bf16.gmra.mrb[0].mxu0 %v2647
      %v5718 = vpop.f32.mrb[0].mxu0
      %v5719 = vadd.f32 %v5174, %v5718
      %v5720 = vpop.f32.mrb[0].mxu0
      %v5721 = vpop.f32.mrb[0].mxu0
      %v5722 = vadd.f32 %v5177, %v5721
      %v5723 = vpop.f32.mrb[0].mxu0
      %5724 = vmatprep.mubr.bf16.mxu0 %v2656
      %5725 = vmatmul.mubr.bf16.gmra.mrb[0].mxu0 %v2655
      %v5726 = vpop.f32.mrb[0].mxu0
      %v5727 = vadd.f32 %v5182, %v5726
      %v5728 = vpop.f32.mrb[0].mxu0
      %v5729 = vpop.f32.mrb[0].mxu0
      %v5730 = vadd.f32 %v5185, %v5729
      %v5731 = vpop.f32.mrb[0].mxu0
      %5732 = vmatprep.mubr.bf16.mxu0 %v2664
      %5733 = vmatmul.mubr.bf16.gmra.mrb[0].mxu0 %v2663
      %v5734 = vpop.f32.mrb[0].mxu0
      %v5735 = vadd.f32 %v5190, %v5734
      %v5736 = vpop.f32.mrb[0].mxu0
      %v5737 = vpop.f32.mrb[0].mxu0
      %v5738 = vadd.f32 %v5193, %v5737
      %v5739 = vpop.f32.mrb[0].mxu0
      %5740 = vmatprep.mubr.bf16.mxu0 %v2672
      %5741 = vmatmul.mubr.bf16.gmra.mrb[0].mxu0 %v2671
      %v5742 = vpop.f32.mrb[0].mxu0
      %v5743 = vadd.f32 %v5198, %v5742
      %v5744 = vpop.f32.mrb[0].mxu0
      %v5745 = vpop.f32.mrb[0].mxu0
      %v5746 = vadd.f32 %v5201, %v5745
      %v5747 = vpop.f32.mrb[0].mxu0
      %5748 = vmatprep.mubr.bf16.mxu0 %v2680
      %5749 = vmatmul.mubr.bf16.gmra.mrb[0].mxu0 %v2679
      %v5750 = vpop.f32.mrb[0].mxu0
      %v5751 = vadd.f32 %v5206, %v5750
      %v5752 = vpop.f32.mrb[0].mxu0
      %v5753 = vpop.f32.mrb[0].mxu0
      %v5754 = vadd.f32 %v5209, %v5753
      %v5755 = vpop.f32.mrb[0].mxu0
      %5756 = vmatprep.mubr.bf16.mxu0 %v2688
      %5757 = vmatmul.mubr.bf16.gmra.mrb[0].mxu0 %v2687
      %v5758 = vpop.f32.mrb[0].mxu0
      %v5759 = vadd.f32 %v5214, %v5758
      %v5760 = vpop.f32.mrb[0].mxu0
      %v5761 = vpop.f32.mrb[0].mxu0
      %v5762 = vadd.f32 %v5217, %v5761
      %v5763 = vpop.f32.mrb[0].mxu0
      %5764 = vmatprep.mubr.bf16.mxu0 %v2696
      %5765 = vmatmul.mubr.bf16.gmra.mrb[0].mxu0 %v2695
      %v5766 = vpop.f32.mrb[0].mxu0
      %v5767 = vadd.f32 %v5222, %v5766
      %v5768 = vpop.f32.mrb[0].mxu0
      %v5769 = vpop.f32.mrb[0].mxu0
      %v5770 = vadd.f32 %v5225, %v5769
      %v5771 = vpop.f32.mrb[0].mxu0
      %5772 = vmatprep.mubr.bf16.mxu0 %v2704
      %5773 = vmatmul.mubr.bf16.gmra.mrb[0].mxu0 %v2703
      %v5774 = vpop.f32.mrb[0].mxu0
      %v5775 = vadd.f32 %v5230, %v5774
      %v5776 = vpop.f32.mrb[0].mxu0
      %v5777 = vpop.f32.mrb[0].mxu0
      %v5778 = vadd.f32 %v5233, %v5777
      %v5779 = vpop.f32.mrb[0].mxu0
      %5780 = vmatprep.mubr.bf16.mxu0 %v2712
      %5781 = vmatmul.mubr.bf16.gmra.mrb[0].mxu0 %v2711
      %v5782 = vpop.f32.mrb[0].mxu0
      %v5783 = vadd.f32 %v5238, %v5782
      %v5784 = vpop.f32.mrb[0].mxu0
      %v5785 = vpop.f32.mrb[0].mxu0
      %v5786 = vadd.f32 %v5241, %v5785
      %v5787 = vpop.f32.mrb[0].mxu0
      %5788 = vmatprep.mubr.bf16.mxu0 %v2720
      %5789 = vmatmul.mubr.bf16.gmra.mrb[0].mxu0 %v2719
      %v5790 = vpop.f32.mrb[0].mxu0
      %v5791 = vadd.f32 %v5246, %v5790
      %v5792 = vpop.f32.mrb[0].mxu0
      %v5793 = vpop.f32.mrb[0].mxu0
      %v5794 = vadd.f32 %v5249, %v5793
      %v5795 = vpop.f32.mrb[0].mxu0
      %5796 = vmatprep.mubr.bf16.mxu0 %v2728
      %5797 = vmatmul.mubr.bf16.gmra.mrb[0].mxu0 %v2727
      %v5798 = vpop.f32.mrb[0].mxu0
      %v5799 = vadd.f32 %v5254, %v5798
      %v5800 = vpop.f32.mrb[0].mxu0
      %v5801 = vpop.f32.mrb[0].mxu0
      %v5802 = vadd.f32 %v5257, %v5801
      %v5803 = vpop.f32.mrb[0].mxu0
      %5804 = vmatprep.mubr.bf16.mxu0 %v2736
      %5805 = vmatmul.mubr.bf16.gmra.mrb[0].mxu0 %v2735
      %v5806 = vpop.f32.mrb[0].mxu0
      %v5807 = vadd.f32 %v5262, %v5806
      %v5808 = vpop.f32.mrb[0].mxu0
      %v5809 = vpop.f32.mrb[0].mxu0
      %v5810 = vadd.f32 %v5265, %v5809
      %v5811 = vpop.f32.mrb[0].mxu0
      %5812 = vmatprep.mubr.bf16.mxu0 %v2744
      %5813 = vmatmul.mubr.bf16.gmra.mrb[0].mxu0 %v2743
      %v5814 = vpop.f32.mrb[0].mxu0
      %v5815 = vadd.f32 %v5270, %v5814
      %v5816 = vpop.f32.mrb[0].mxu0
      %v5817 = vpop.f32.mrb[0].mxu0
      %v5818 = vadd.f32 %v5273, %v5817
      %v5819 = vpop.f32.mrb[0].mxu0
      %5820 = vmatprep.mubr.bf16.mxu0 %v2752
      %5821 = vmatmul.mubr.bf16.gmra.mrb[0].mxu0 %v2751
      %v5822 = vpop.f32.mrb[0].mxu0
      %v5823 = vadd.f32 %v5278, %v5822
      %v5824 = vpop.f32.mrb[0].mxu0
      %v5825 = vpop.f32.mrb[0].mxu0
      %v5826 = vadd.f32 %v5281, %v5825
      %v5827 = vpop.f32.mrb[0].mxu0
      %5828 = vmatprep.mubr.bf16.mxu0 %v2760
      %5829 = vmatmul.mubr.bf16.gmra.mrb[0].mxu0 %v2759
      %v5830 = vpop.f32.mrb[0].mxu0
      %v5831 = vadd.f32 %v5286, %v5830
      %v5832 = vpop.f32.mrb[0].mxu0
      %v5833 = vpop.f32.mrb[0].mxu0
      %v5834 = vadd.f32 %v5289, %v5833
      %v5835 = vpop.f32.mrb[0].mxu0
      %5836 = vmatprep.mubr.bf16.mxu0 %v2768
      %5837 = vmatmul.mubr.bf16.gmra.mrb[0].mxu0 %v2767
      %v5838 = vpop.f32.mrb[0].mxu0
      %v5839 = vadd.f32 %v5294, %v5838
      %v5840 = vpop.f32.mrb[0].mxu0
      %v5841 = vpop.f32.mrb[0].mxu0
      %v5842 = vadd.f32 %v5297, %v5841
      %v5843 = vpop.f32.mrb[0].mxu0
      %5844 = vmatprep.mubr.bf16.mxu0 %v2776
      %5845 = vmatmul.mubr.bf16.gmra.mrb[0].mxu0 %v2775
      %v5846 = vpop.f32.mrb[0].mxu0
      %v5847 = vadd.f32 %v5302, %v5846
      %v5848 = vpop.f32.mrb[0].mxu0
      %v5849 = vpop.f32.mrb[0].mxu0
      %v5850 = vadd.f32 %v5305, %v5849
      %v5851 = vpop.f32.mrb[0].mxu0
      %5852 = vmatprep.mubr.bf16.mxu0 %v2784
      %5853 = vmatmul.mubr.bf16.gmra.mrb[0].mxu0 %v2783
      %v5854 = vpop.f32.mrb[0].mxu0
      %v5855 = vadd.f32 %v5310, %v5854
      %v5856 = vpop.f32.mrb[0].mxu0
      %v5857 = vpop.f32.mrb[0].mxu0
      %v5858 = vadd.f32 %v5313, %v5857
      %v5859 = vpop.f32.mrb[0].mxu0
      %5860 = vmatprep.mubr.bf16.mxu0 %v2792
      %5861 = vmatmul.mubr.bf16.gmra.mrb[0].mxu0 %v2791
      %v5862 = vpop.f32.mrb[0].mxu0
      %v5863 = vadd.f32 %v5318, %v5862
      %v5864 = vpop.f32.mrb[0].mxu0
      %v5865 = vpop.f32.mrb[0].mxu0
      %v5866 = vadd.f32 %v5321, %v5865
      %v5867 = vpop.f32.mrb[0].mxu0
      %5868 = vmatprep.mubr.bf16.mxu0 %v2800
      %5869 = vmatmul.mubr.bf16.gmra.mrb[0].mxu0 %v2799
      %v5870 = vpop.f32.mrb[0].mxu0
      %v5871 = vadd.f32 %v5326, %v5870
      %v5872 = vpop.f32.mrb[0].mxu0
      %v5873 = vpop.f32.mrb[0].mxu0
      %v5874 = vadd.f32 %v5329, %v5873
      %v5875 = vpop.f32.mrb[0].mxu0
      %5876 = vmatprep.mubr.bf16.mxu0 %v2808
      %5877 = vmatmul.mubr.bf16.gmra.mrb[0].mxu0 %v2807
      %v5878 = vpop.f32.mrb[0].mxu0
      %v5879 = vadd.f32 %v5334, %v5878
      %v5880 = vpop.f32.mrb[0].mxu0
      %v5881 = vpop.f32.mrb[0].mxu0
      %v5882 = vadd.f32 %v5337, %v5881
      %v5883 = vpop.f32.mrb[0].mxu0
      %5884 = vmatprep.mubr.bf16.mxu0 %v2816
      %5885 = vmatmul.mubr.bf16.gmra.mrb[0].mxu0 %v2815
      %v5886 = vpop.f32.mrb[0].mxu0
      %v5887 = vadd.f32 %v5342, %v5886
      %v5888 = vpop.f32.mrb[0].mxu0
      %v5889 = vpop.f32.mrb[0].mxu0
      %v5890 = vadd.f32 %v5345, %v5889
      %v5891 = vpop.f32.mrb[0].mxu0
      %5892 = vmatprep.mubr.bf16.mxu0 %v2824
      %5893 = vmatmul.mubr.bf16.gmra.mrb[0].mxu0 %v2823
      %v5894 = vpop.f32.mrb[0].mxu0
      %v5895 = vadd.f32 %v5350, %v5894
      %v5896 = vpop.f32.mrb[0].mxu0
      %v5897 = vpop.f32.mrb[0].mxu0
      %v5898 = vadd.f32 %v5353, %v5897
      %v5899 = vpop.f32.mrb[0].mxu0
      %5900 = vmatprep.mubr.bf16.mxu0 %v2832
      %5901 = vmatmul.mubr.bf16.gmra.mrb[0].mxu0 %v2831
      %v5902 = vpop.f32.mrb[0].mxu0
      %v5903 = vadd.f32 %v5358, %v5902
      %v5904 = vpop.f32.mrb[0].mxu0
      %v5905 = vpop.f32.mrb[0].mxu0
      %v5906 = vadd.f32 %v5361, %v5905
      %v5907 = vpop.f32.mrb[0].mxu0
      %5908 = vmatprep.mubr.bf16.mxu0 %v2840
      %5909 = vmatmul.mubr.bf16.gmra.mrb[0].mxu0 %v2839
      %v5910 = vpop.f32.mrb[0].mxu0
      %v5911 = vadd.f32 %v5366, %v5910
      %v5912 = vpop.f32.mrb[0].mxu0
      %v5913 = vpop.f32.mrb[0].mxu0
      %v5914 = vadd.f32 %v5369, %v5913
      %v5915 = vpop.f32.mrb[0].mxu0
      %5916 = vmatprep.mubr.bf16.mxu0 %v2848
      %5917 = vmatmul.mubr.bf16.gmra.mrb[0].mxu0 %v2847
      %v5918 = vpop.f32.mrb[0].mxu0
      %v5919 = vadd.f32 %v5374, %v5918
      %v5920 = vpop.f32.mrb[0].mxu0
      %v5921 = vpop.f32.mrb[0].mxu0
      %v5922 = vadd.f32 %v5377, %v5921
      %v5923 = vpop.f32.mrb[0].mxu0
      %5924 = vmatprep.mubr.bf16.mxu0 %v2856
      %5925 = vmatmul.mubr.bf16.gmra.mrb[0].mxu0 %v2855
      %v5926 = vpop.f32.mrb[0].mxu0
      %v5927 = vadd.f32 %v5382, %v5926
      %v5928 = vpop.f32.mrb[0].mxu0
      %v5929 = vpop.f32.mrb[0].mxu0
      %v5930 = vadd.f32 %v5385, %v5929
      %v5931 = vpop.f32.mrb[0].mxu0
      %5932 = vmatprep.mubr.bf16.mxu0 %v2864
      %5933 = vmatmul.mubr.bf16.gmra.mrb[0].mxu0 %v2863
      %v5934 = vpop.f32.mrb[0].mxu0
      %v5935 = vadd.f32 %v5390, %v5934
      %v5936 = vpop.f32.mrb[0].mxu0
      %v5937 = vpop.f32.mrb[0].mxu0
      %v5938 = vadd.f32 %v5393, %v5937
      %v5939 = vpop.f32.mrb[0].mxu0
      %5940 = vmatprep.mubr.bf16.mxu0 %v2872
      %5941 = vmatmul.mubr.bf16.gmra.mrb[0].mxu0 %v2871
      %v5942 = vpop.f32.mrb[0].mxu0
      %v5943 = vadd.f32 %v5398, %v5942
      %v5944 = vpop.f32.mrb[0].mxu0
      %v5945 = vpop.f32.mrb[0].mxu0
      %v5946 = vadd.f32 %v5401, %v5945
      %v5947 = vpop.f32.mrb[0].mxu0
      %5948 = vdwg.mxu0
      %v5949 = vmax.f32 %v5439, 0.0
      %v5950 = vmax.f32 %v5442, 0.0
      %v5951 = vmax.f32 %v5447, 0.0
      %v5952 = vmax.f32 %v5450, 0.0
      %v5953 = vmax.f32 %v5455, 0.0
      %v5954 = vmax.f32 %v5458, 0.0
      %v5955 = vmax.f32 %v5463, 0.0
      %v5956 = vmax.f32 %v5466, 0.0
      %v5957 = vmax.f32 %v5471, 0.0
      %v5958 = vmax.f32 %v5474, 0.0
      %v5959 = vmax.f32 %v5479, 0.0
      %v5960 = vmax.f32 %v5482, 0.0
      %v5961 = vmax.f32 %v5487, 0.0
      %v5962 = vmax.f32 %v5490, 0.0
      %v5963 = vmax.f32 %v5495, 0.0
      %v5964 = vmax.f32 %v5498, 0.0
      %v5965 = vmax.f32 %v5503, 0.0
      %v5966 = vmax.f32 %v5506, 0.0
      %v5967 = vmax.f32 %v5511, 0.0
      %v5968 = vmax.f32 %v5514, 0.0
      %v5969 = vmax.f32 %v5519, 0.0
      %v5970 = vmax.f32 %v5522, 0.0
      %v5971 = vmax.f32 %v5527, 0.0
      %v5972 = vmax.f32 %v5530, 0.0
      %v5973 = vmax.f32 %v5535, 0.0
      %v5974 = vmax.f32 %v5538, 0.0
      %v5975 = vmax.f32 %v5543, 0.0
      %v5976 = vmax.f32 %v5546, 0.0
      %v5977 = vmax.f32 %v5551, 0.0
      %v5978 = vmax.f32 %v5554, 0.0
      %v5979 = vmax.f32 %v5559, 0.0
      %v5980 = vmax.f32 %v5562, 0.0
      %v5981 = vmax.f32 %v5567, 0.0
      %v5982 = vmax.f32 %v5570, 0.0
      %v5983 = vmax.f32 %v5575, 0.0
      %v5984 = vmax.f32 %v5578, 0.0
      %v5985 = vmax.f32 %v5583, 0.0
      %v5986 = vmax.f32 %v5586, 0.0
      %v5987 = vmax.f32 %v5591, 0.0
      %v5988 = vmax.f32 %v5594, 0.0
      %v5989 = vmax.f32 %v5599, 0.0
      %v5990 = vmax.f32 %v5602, 0.0
      %v5991 = vmax.f32 %v5607, 0.0
      %v5992 = vmax.f32 %v5610, 0.0
      %v5993 = vmax.f32 %v5615, 0.0
      %v5994 = vmax.f32 %v5618, 0.0
      %v5995 = vmax.f32 %v5623, 0.0
      %v5996 = vmax.f32 %v5626, 0.0
      %v5997 = vmax.f32 %v5631, 0.0
      %v5998 = vmax.f32 %v5634, 0.0
      %v5999 = vmax.f32 %v5639, 0.0
      %v6000 = vmax.f32 %v5642, 0.0
      %v6001 = vmax.f32 %v5647, 0.0
      %v6002 = vmax.f32 %v5650, 0.0
      %v6003 = vmax.f32 %v5655, 0.0
      %v6004 = vmax.f32 %v5658, 0.0
      %v6005 = vmax.f32 %v5663, 0.0
      %v6006 = vmax.f32 %v5666, 0.0
      %v6007 = vmax.f32 %v5671, 0.0
      %v6008 = vmax.f32 %v5674, 0.0
      %v6009 = vmax.f32 %v5679, 0.0
      %v6010 = vmax.f32 %v5682, 0.0
      %v6011 = vmax.f32 %v5687, 0.0
      %v6012 = vmax.f32 %v5690, 0.0
      %v6013 = vmax.f32 %v5695, 0.0
      %v6014 = vmax.f32 %v5698, 0.0
      %v6015 = vmax.f32 %v5703, 0.0
      %v6016 = vmax.f32 %v5706, 0.0
      %v6017 = vmax.f32 %v5711, 0.0
      %v6018 = vmax.f32 %v5714, 0.0
      %v6019 = vmax.f32 %v5719, 0.0
      %v6020 = vmax.f32 %v5722, 0.0
      %v6021 = vmax.f32 %v5727, 0.0
      %v6022 = vmax.f32 %v5730, 0.0
      %v6023 = vmax.f32 %v5735, 0.0
      %v6024 = vmax.f32 %v5738, 0.0
      %v6025 = vmax.f32 %v5743, 0.0
      %v6026 = vmax.f32 %v5746, 0.0
      %v6027 = vmax.f32 %v5751, 0.0
      %v6028 = vmax.f32 %v5754, 0.0
      %v6029 = vmax.f32 %v5759, 0.0
      %v6030 = vmax.f32 %v5762, 0.0
      %v6031 = vmax.f32 %v5767, 0.0
      %v6032 = vmax.f32 %v5770, 0.0
      %v6033 = vmax.f32 %v5775, 0.0
      %v6034 = vmax.f32 %v5778, 0.0
      %v6035 = vmax.f32 %v5783, 0.0
      %v6036 = vmax.f32 %v5786, 0.0
      %v6037 = vmax.f32 %v5791, 0.0
      %v6038 = vmax.f32 %v5794, 0.0
      %v6039 = vmax.f32 %v5799, 0.0
      %v6040 = vmax.f32 %v5802, 0.0
      %v6041 = vmax.f32 %v5807, 0.0
      %v6042 = vmax.f32 %v5810, 0.0
      %v6043 = vmax.f32 %v5815, 0.0
      %v6044 = vmax.f32 %v5818, 0.0
      %v6045 = vmax.f32 %v5823, 0.0
      %v6046 = vmax.f32 %v5826, 0.0
      %v6047 = vmax.f32 %v5831, 0.0
      %v6048 = vmax.f32 %v5834, 0.0
      %v6049 = vmax.f32 %v5839, 0.0
      %v6050 = vmax.f32 %v5842, 0.0
      %v6051 = vmax.f32 %v5847, 0.0
      %v6052 = vmax.f32 %v5850, 0.0
      %v6053 = vmax.f32 %v5855, 0.0
      %v6054 = vmax.f32 %v5858, 0.0
      %v6055 = vmax.f32 %v5863, 0.0
      %v6056 = vmax.f32 %v5866, 0.0
      %v6057 = vmax.f32 %v5871, 0.0
      %v6058 = vmax.f32 %v5874, 0.0
      %v6059 = vmax.f32 %v5879, 0.0
      %v6060 = vmax.f32 %v5882, 0.0
      %v6061 = vmax.f32 %v5887, 0.0
      %v6062 = vmax.f32 %v5890, 0.0
      %v6063 = vmax.f32 %v5895, 0.0
      %v6064 = vmax.f32 %v5898, 0.0
      %v6065 = vmax.f32 %v5903, 0.0
      %v6066 = vmax.f32 %v5906, 0.0
      %v6067 = vmax.f32 %v5911, 0.0
      %v6068 = vmax.f32 %v5914, 0.0
      %v6069 = vmax.f32 %v5919, 0.0
      %v6070 = vmax.f32 %v5922, 0.0
      %v6071 = vmax.f32 %v5927, 0.0
      %v6072 = vmax.f32 %v5930, 0.0
      %v6073 = vmax.f32 %v5935, 0.0
      %v6074 = vmax.f32 %v5938, 0.0
      %v6075 = vmax.f32 %v5943, 0.0
      %v6076 = vmax.f32 %v5946, 0.0
      %v6077 = vpack.c.bf16 %v5950, %v5949
      %v6078 = vpack.c.bf16 %v5952, %v5951
      %v6079 = vpack.c.bf16 %v5954, %v5953
      %v6080 = vpack.c.bf16 %v5956, %v5955
      %v6081 = vpack.c.bf16 %v5958, %v5957
      %v6082 = vpack.c.bf16 %v5960, %v5959
      %v6083 = vpack.c.bf16 %v5962, %v5961
      %v6084 = vpack.c.bf16 %v5964, %v5963
      %v6085 = vpack.c.bf16 %v5966, %v5965
      %v6086 = vpack.c.bf16 %v5968, %v5967
      %v6087 = vpack.c.bf16 %v5970, %v5969
      %v6088 = vpack.c.bf16 %v5972, %v5971
      %v6089 = vpack.c.bf16 %v5974, %v5973
      %v6090 = vpack.c.bf16 %v5976, %v5975
      %v6091 = vpack.c.bf16 %v5978, %v5977
      %v6092 = vpack.c.bf16 %v5980, %v5979
      %v6093 = vpack.c.bf16 %v5982, %v5981
      %v6094 = vpack.c.bf16 %v5984, %v5983
      %v6095 = vpack.c.bf16 %v5986, %v5985
      %v6096 = vpack.c.bf16 %v5988, %v5987
      %v6097 = vpack.c.bf16 %v5990, %v5989
      %v6098 = vpack.c.bf16 %v5992, %v5991
      %v6099 = vpack.c.bf16 %v5994, %v5993
      %v6100 = vpack.c.bf16 %v5996, %v5995
      %v6101 = vpack.c.bf16 %v5998, %v5997
      %v6102 = vpack.c.bf16 %v6000, %v5999
      %v6103 = vpack.c.bf16 %v6002, %v6001
      %v6104 = vpack.c.bf16 %v6004, %v6003
      %v6105 = vpack.c.bf16 %v6006, %v6005
      %v6106 = vpack.c.bf16 %v6008, %v6007
      %v6107 = vpack.c.bf16 %v6010, %v6009
      %v6108 = vpack.c.bf16 %v6012, %v6011
      %v6109 = vpack.c.bf16 %v6014, %v6013
      %v6110 = vpack.c.bf16 %v6016, %v6015
      %v6111 = vpack.c.bf16 %v6018, %v6017
      %v6112 = vpack.c.bf16 %v6020, %v6019
      %v6113 = vpack.c.bf16 %v6022, %v6021
      %v6114 = vpack.c.bf16 %v6024, %v6023
      %v6115 = vpack.c.bf16 %v6026, %v6025
      %v6116 = vpack.c.bf16 %v6028, %v6027
      %v6117 = vpack.c.bf16 %v6030, %v6029
      %v6118 = vpack.c.bf16 %v6032, %v6031
      %v6119 = vpack.c.bf16 %v6034, %v6033
      %v6120 = vpack.c.bf16 %v6036, %v6035
      %v6121 = vpack.c.bf16 %v6038, %v6037
      %v6122 = vpack.c.bf16 %v6040, %v6039
      %v6123 = vpack.c.bf16 %v6042, %v6041
      %v6124 = vpack.c.bf16 %v6044, %v6043
      %v6125 = vpack.c.bf16 %v6046, %v6045
      %v6126 = vpack.c.bf16 %v6048, %v6047
      %v6127 = vpack.c.bf16 %v6050, %v6049
      %v6128 = vpack.c.bf16 %v6052, %v6051
      %v6129 = vpack.c.bf16 %v6054, %v6053
      %v6130 = vpack.c.bf16 %v6056, %v6055
      %v6131 = vpack.c.bf16 %v6058, %v6057
      %v6132 = vpack.c.bf16 %v6060, %v6059
      %v6133 = vpack.c.bf16 %v6062, %v6061
      %v6134 = vpack.c.bf16 %v6064, %v6063
      %v6135 = vpack.c.bf16 %v6066, %v6065
      %v6136 = vpack.c.bf16 %v6068, %v6067
      %v6137 = vpack.c.bf16 %v6070, %v6069
      %v6138 = vpack.c.bf16 %v6072, %v6071
      %v6139 = vpack.c.bf16 %v6074, %v6073
      %v6140 = vpack.c.bf16 %v6076, %v6075
      %v6205 = vunpack.c.l.b16 %v6077
      %v6206 = vunpack.c.h.b16 %v6077
      %v6207 = vunpack.c.l.b16 %v6078
      %v6208 = vunpack.c.h.b16 %v6078
      %v6209 = vunpack.c.l.b16 %v6079
      %v6210 = vunpack.c.h.b16 %v6079
      %v6211 = vunpack.c.l.b16 %v6080
      %v6212 = vunpack.c.h.b16 %v6080
      %v6213 = vunpack.c.l.b16 %v6081
      %v6214 = vunpack.c.h.b16 %v6081
      %v6215 = vunpack.c.l.b16 %v6082
      %v6216 = vunpack.c.h.b16 %v6082
      %v6217 = vunpack.c.l.b16 %v6083
      %v6218 = vunpack.c.h.b16 %v6083
      %v6219 = vunpack.c.l.b16 %v6084
      %v6220 = vunpack.c.h.b16 %v6084
      %v6221 = vunpack.c.l.b16 %v6085
      %v6222 = vunpack.c.h.b16 %v6085
      %v6223 = vunpack.c.l.b16 %v6086
      %v6224 = vunpack.c.h.b16 %v6086
      %v6225 = vunpack.c.l.b16 %v6087
      %v6226 = vunpack.c.h.b16 %v6087
      %v6227 = vunpack.c.l.b16 %v6088
      %v6228 = vunpack.c.h.b16 %v6088
      %v6229 = vunpack.c.l.b16 %v6089
      %v6230 = vunpack.c.h.b16 %v6089
      %v6231 = vunpack.c.l.b16 %v6090
      %v6232 = vunpack.c.h.b16 %v6090
      %v6233 = vunpack.c.l.b16 %v6091
      %v6234 = vunpack.c.h.b16 %v6091
      %v6235 = vunpack.c.l.b16 %v6092
      %v6236 = vunpack.c.h.b16 %v6092
      %v6237 = vunpack.c.l.b16 %v6093
      %v6238 = vunpack.c.h.b16 %v6093
      %v6239 = vunpack.c.l.b16 %v6094
      %v6240 = vunpack.c.h.b16 %v6094
      %v6241 = vunpack.c.l.b16 %v6095
      %v6242 = vunpack.c.h.b16 %v6095
      %v6243 = vunpack.c.l.b16 %v6096
      %v6244 = vunpack.c.h.b16 %v6096
      %v6245 = vunpack.c.l.b16 %v6097
      %v6246 = vunpack.c.h.b16 %v6097
      %v6247 = vunpack.c.l.b16 %v6098
      %v6248 = vunpack.c.h.b16 %v6098
      %v6249 = vunpack.c.l.b16 %v6099
      %v6250 = vunpack.c.h.b16 %v6099
      %v6251 = vunpack.c.l.b16 %v6100
      %v6252 = vunpack.c.h.b16 %v6100
      %v6253 = vunpack.c.l.b16 %v6101
      %v6254 = vunpack.c.h.b16 %v6101
      %v6255 = vunpack.c.l.b16 %v6102
      %v6256 = vunpack.c.h.b16 %v6102
      %v6257 = vunpack.c.l.b16 %v6103
      %v6258 = vunpack.c.h.b16 %v6103
      %v6259 = vunpack.c.l.b16 %v6104
      %v6260 = vunpack.c.h.b16 %v6104
      %v6261 = vunpack.c.l.b16 %v6105
      %v6262 = vunpack.c.h.b16 %v6105
      %v6263 = vunpack.c.l.b16 %v6106
      %v6264 = vunpack.c.h.b16 %v6106
      %v6265 = vunpack.c.l.b16 %v6107
      %v6266 = vunpack.c.h.b16 %v6107
      %v6267 = vunpack.c.l.b16 %v6108
      %v6268 = vunpack.c.h.b16 %v6108
      %v6269 = vunpack.c.l.b16 %v6109
      %v6270 = vunpack.c.h.b16 %v6109
      %v6271 = vunpack.c.l.b16 %v6110
      %v6272 = vunpack.c.h.b16 %v6110
      %v6273 = vunpack.c.l.b16 %v6111
      %v6274 = vunpack.c.h.b16 %v6111
      %v6275 = vunpack.c.l.b16 %v6112
      %v6276 = vunpack.c.h.b16 %v6112
      %v6277 = vunpack.c.l.b16 %v6113
      %v6278 = vunpack.c.h.b16 %v6113
      %v6279 = vunpack.c.l.b16 %v6114
      %v6280 = vunpack.c.h.b16 %v6114
      %v6281 = vunpack.c.l.b16 %v6115
      %v6282 = vunpack.c.h.b16 %v6115
      %v6283 = vunpack.c.l.b16 %v6116
      %v6284 = vunpack.c.h.b16 %v6116
      %v6285 = vunpack.c.l.b16 %v6117
      %v6286 = vunpack.c.h.b16 %v6117
      %v6287 = vunpack.c.l.b16 %v6118
      %v6288 = vunpack.c.h.b16 %v6118
      %v6289 = vunpack.c.l.b16 %v6119
      %v6290 = vunpack.c.h.b16 %v6119
      %v6291 = vunpack.c.l.b16 %v6120
      %v6292 = vunpack.c.h.b16 %v6120
      %v6293 = vunpack.c.l.b16 %v6121
      %v6294 = vunpack.c.h.b16 %v6121
      %v6295 = vunpack.c.l.b16 %v6122
      %v6296 = vunpack.c.h.b16 %v6122
      %v6297 = vunpack.c.l.b16 %v6123
      %v6298 = vunpack.c.h.b16 %v6123
      %v6299 = vunpack.c.l.b16 %v6124
      %v6300 = vunpack.c.h.b16 %v6124
      %v6301 = vunpack.c.l.b16 %v6125
      %v6302 = vunpack.c.h.b16 %v6125
      %v6303 = vunpack.c.l.b16 %v6126
      %v6304 = vunpack.c.h.b16 %v6126
      %v6305 = vunpack.c.l.b16 %v6127
      %v6306 = vunpack.c.h.b16 %v6127
      %v6307 = vunpack.c.l.b16 %v6128
      %v6308 = vunpack.c.h.b16 %v6128
      %v6309 = vunpack.c.l.b16 %v6129
      %v6310 = vunpack.c.h.b16 %v6129
      %v6311 = vunpack.c.l.b16 %v6130
      %v6312 = vunpack.c.h.b16 %v6130
      %v6313 = vunpack.c.l.b16 %v6131
      %v6314 = vunpack.c.h.b16 %v6131
      %v6315 = vunpack.c.l.b16 %v6132
      %v6316 = vunpack.c.h.b16 %v6132
      %v6317 = vunpack.c.l.b16 %v6133
      %v6318 = vunpack.c.h.b16 %v6133
      %v6319 = vunpack.c.l.b16 %v6134
      %v6320 = vunpack.c.h.b16 %v6134
      %v6321 = vunpack.c.l.b16 %v6135
      %v6322 = vunpack.c.h.b16 %v6135
      %v6323 = vunpack.c.l.b16 %v6136
      %v6324 = vunpack.c.h.b16 %v6136
      %v6325 = vunpack.c.l.b16 %v6137
      %v6326 = vunpack.c.h.b16 %v6137
      %v6327 = vunpack.c.l.b16 %v6138
      %v6328 = vunpack.c.h.b16 %v6138
      %v6329 = vunpack.c.l.b16 %v6139
      %v6330 = vunpack.c.h.b16 %v6139
      %v6331 = vunpack.c.l.b16 %v6140
      %v6332 = vunpack.c.h.b16 %v6140
      %v6333 = vpack.c.b16 %v6205, %v6205
      %v6334 = vpack.c.b16 %v6206, %v6206
      %v6335 = vpack.c.b16 %v6207, %v6207
      %v6336 = vpack.c.b16 %v6208, %v6208
      %v6337 = vpack.c.b16 %v6209, %v6209
      %v6338 = vpack.c.b16 %v6210, %v6210
      %v6339 = vpack.c.b16 %v6211, %v6211
      %v6340 = vpack.c.b16 %v6212, %v6212
      %v6341 = vpack.c.b16 %v6213, %v6213
      %v6342 = vpack.c.b16 %v6214, %v6214
      %v6343 = vpack.c.b16 %v6215, %v6215
      %v6344 = vpack.c.b16 %v6216, %v6216
      %v6345 = vpack.c.b16 %v6217, %v6217
      %v6346 = vpack.c.b16 %v6218, %v6218
      %v6347 = vpack.c.b16 %v6219, %v6219
      %v6348 = vpack.c.b16 %v6220, %v6220
      %v6349 = vpack.c.b16 %v6221, %v6221
      %v6350 = vpack.c.b16 %v6222, %v6222
      %v6351 = vpack.c.b16 %v6223, %v6223
      %v6352 = vpack.c.b16 %v6224, %v6224
      %v6353 = vpack.c.b16 %v6225, %v6225
      %v6354 = vpack.c.b16 %v6226, %v6226
      %v6355 = vpack.c.b16 %v6227, %v6227
      %v6356 = vpack.c.b16 %v6228, %v6228
      %v6357 = vpack.c.b16 %v6229, %v6229
      %v6358 = vpack.c.b16 %v6230, %v6230
      %v6359 = vpack.c.b16 %v6231, %v6231
      %v6360 = vpack.c.b16 %v6232, %v6232
      %v6361 = vpack.c.b16 %v6233, %v6233
      %v6362 = vpack.c.b16 %v6234, %v6234
      %v6363 = vpack.c.b16 %v6235, %v6235
      %v6364 = vpack.c.b16 %v6236, %v6236
      %v6365 = vpack.c.b16 %v6237, %v6237
      %v6366 = vpack.c.b16 %v6238, %v6238
      %v6367 = vpack.c.b16 %v6239, %v6239
      %v6368 = vpack.c.b16 %v6240, %v6240
      %v6369 = vpack.c.b16 %v6241, %v6241
      %v6370 = vpack.c.b16 %v6242, %v6242
      %v6371 = vpack.c.b16 %v6243, %v6243
      %v6372 = vpack.c.b16 %v6244, %v6244
      %v6373 = vpack.c.b16 %v6245, %v6245
      %v6374 = vpack.c.b16 %v6246, %v6246
      %v6375 = vpack.c.b16 %v6247, %v6247
      %v6376 = vpack.c.b16 %v6248, %v6248
      %v6377 = vpack.c.b16 %v6249, %v6249
      %v6378 = vpack.c.b16 %v6250, %v6250
      %v6379 = vpack.c.b16 %v6251, %v6251
      %v6380 = vpack.c.b16 %v6252, %v6252
      %v6381 = vpack.c.b16 %v6253, %v6253
      %v6382 = vpack.c.b16 %v6254, %v6254
      %v6383 = vpack.c.b16 %v6255, %v6255
      %v6384 = vpack.c.b16 %v6256, %v6256
      %v6385 = vpack.c.b16 %v6257, %v6257
      %v6386 = vpack.c.b16 %v6258, %v6258
      %v6387 = vpack.c.b16 %v6259, %v6259
      %v6388 = vpack.c.b16 %v6260, %v6260
      %v6389 = vpack.c.b16 %v6261, %v6261
      %v6390 = vpack.c.b16 %v6262, %v6262
      %v6391 = vpack.c.b16 %v6263, %v6263
      %v6392 = vpack.c.b16 %v6264, %v6264
      %v6393 = vpack.c.b16 %v6265, %v6265
      %v6394 = vpack.c.b16 %v6266, %v6266
      %v6395 = vpack.c.b16 %v6267, %v6267
      %v6396 = vpack.c.b16 %v6268, %v6268
      %v6397 = vpack.c.b16 %v6269, %v6269
      %v6398 = vpack.c.b16 %v6270, %v6270
      %v6399 = vpack.c.b16 %v6271, %v6271
      %v6400 = vpack.c.b16 %v6272, %v6272
      %v6401 = vpack.c.b16 %v6273, %v6273
      %v6402 = vpack.c.b16 %v6274, %v6274
      %v6403 = vpack.c.b16 %v6275, %v6275
      %v6404 = vpack.c.b16 %v6276, %v6276
      %v6405 = vpack.c.b16 %v6277, %v6277
      %v6406 = vpack.c.b16 %v6278, %v6278
      %v6407 = vpack.c.b16 %v6279, %v6279
      %v6408 = vpack.c.b16 %v6280, %v6280
      %v6409 = vpack.c.b16 %v6281, %v6281
      %v6410 = vpack.c.b16 %v6282, %v6282
      %v6411 = vpack.c.b16 %v6283, %v6283
      %v6412 = vpack.c.b16 %v6284, %v6284
      %v6413 = vpack.c.b16 %v6285, %v6285
      %v6414 = vpack.c.b16 %v6286, %v6286
      %v6415 = vpack.c.b16 %v6287, %v6287
      %v6416 = vpack.c.b16 %v6288, %v6288
      %v6417 = vpack.c.b16 %v6289, %v6289
      %v6418 = vpack.c.b16 %v6290, %v6290
      %v6419 = vpack.c.b16 %v6291, %v6291
      %v6420 = vpack.c.b16 %v6292, %v6292
      %v6421 = vpack.c.b16 %v6293, %v6293
      %v6422 = vpack.c.b16 %v6294, %v6294
      %v6423 = vpack.c.b16 %v6295, %v6295
      %v6424 = vpack.c.b16 %v6296, %v6296
      %v6425 = vpack.c.b16 %v6297, %v6297
      %v6426 = vpack.c.b16 %v6298, %v6298
      %v6427 = vpack.c.b16 %v6299, %v6299
      %v6428 = vpack.c.b16 %v6300, %v6300
      %v6429 = vpack.c.b16 %v6301, %v6301
      %v6430 = vpack.c.b16 %v6302, %v6302
      %v6431 = vpack.c.b16 %v6303, %v6303
      %v6432 = vpack.c.b16 %v6304, %v6304
      %v6433 = vpack.c.b16 %v6305, %v6305
      %v6434 = vpack.c.b16 %v6306, %v6306
      %v6435 = vpack.c.b16 %v6307, %v6307
      %v6436 = vpack.c.b16 %v6308, %v6308
      %v6437 = vpack.c.b16 %v6309, %v6309
      %v6438 = vpack.c.b16 %v6310, %v6310
      %v6439 = vpack.c.b16 %v6311, %v6311
      %v6440 = vpack.c.b16 %v6312, %v6312
      %v6441 = vpack.c.b16 %v6313, %v6313
      %v6442 = vpack.c.b16 %v6314, %v6314
      %v6443 = vpack.c.b16 %v6315, %v6315
      %v6444 = vpack.c.b16 %v6316, %v6316
      %v6445 = vpack.c.b16 %v6317, %v6317
      %v6446 = vpack.c.b16 %v6318, %v6318
      %v6447 = vpack.c.b16 %v6319, %v6319
      %v6448 = vpack.c.b16 %v6320, %v6320
      %v6449 = vpack.c.b16 %v6321, %v6321
      %v6450 = vpack.c.b16 %v6322, %v6322
      %v6451 = vpack.c.b16 %v6323, %v6323
      %v6452 = vpack.c.b16 %v6324, %v6324
      %v6453 = vpack.c.b16 %v6325, %v6325
      %v6454 = vpack.c.b16 %v6326, %v6326
      %v6455 = vpack.c.b16 %v6327, %v6327
      %v6456 = vpack.c.b16 %v6328, %v6328
      %v6457 = vpack.c.b16 %v6329, %v6329
      %v6458 = vpack.c.b16 %v6330, %v6330
      %v6459 = vpack.c.b16 %v6331, %v6331
      %v6460 = vpack.c.b16 %v6332, %v6332
      %6589 = vst [vmem:[%s175] sm:$0xf] %v6333
      %6590 = vst [vmem:[%s175 + $0x4] sm:$0xf] %v6334
      %6591 = vst [vmem:[%s175 + $0x8] sm:$0xf] %v6335
      %6592 = vst [vmem:[%s175 + $0xc] sm:$0xf] %v6336
      %6593 = vst [vmem:[%s175 + $0x10] sm:$0xf] %v6337
      %6594 = vst [vmem:[%s175 + $0x14] sm:$0xf] %v6338
      %6595 = vst [vmem:[%s175 + $0x18] sm:$0xf] %v6339
      %6596 = vst [vmem:[%s175 + $0x1c] sm:$0xf] %v6340
      %6597 = vst [vmem:[%s175 + $0x20] sm:$0xf] %v6341
      %6598 = vst [vmem:[%s175 + $0x24] sm:$0xf] %v6342
      %6599 = vst [vmem:[%s175 + $0x28] sm:$0xf] %v6343
      %6600 = vst [vmem:[%s175 + $0x2c] sm:$0xf] %v6344
      %6601 = vst [vmem:[%s175 + $0x30] sm:$0xf] %v6345
      %6602 = vst [vmem:[%s175 + $0x34] sm:$0xf] %v6346
      %6603 = vst [vmem:[%s175 + $0x38] sm:$0xf] %v6347
      %6604 = vst [vmem:[%s175 + $0x3c] sm:$0xf] %v6348
      %6605 = vst [vmem:[%s175 + $0x40] sm:$0xf] %v6349
      %6606 = vst [vmem:[%s175 + $0x44] sm:$0xf] %v6350
      %6607 = vst [vmem:[%s175 + $0x48] sm:$0xf] %v6351
      %6608 = vst [vmem:[%s175 + $0x4c] sm:$0xf] %v6352
      %6609 = vst [vmem:[%s175 + $0x50] sm:$0xf] %v6353
      %6610 = vst [vmem:[%s175 + $0x54] sm:$0xf] %v6354
      %6611 = vst [vmem:[%s175 + $0x58] sm:$0xf] %v6355
      %6612 = vst [vmem:[%s175 + $0x5c] sm:$0xf] %v6356
      %6613 = vst [vmem:[%s175 + $0x60] sm:$0xf] %v6357
      %6614 = vst [vmem:[%s175 + $0x64] sm:$0xf] %v6358
      %6615 = vst [vmem:[%s175 + $0x68] sm:$0xf] %v6359
      %6616 = vst [vmem:[%s175 + $0x6c] sm:$0xf] %v6360
      %6617 = vst [vmem:[%s175 + $0x70] sm:$0xf] %v6361
      %6618 = vst [vmem:[%s175 + $0x74] sm:$0xf] %v6362
      %6619 = vst [vmem:[%s175 + $0x78] sm:$0xf] %v6363
      %6620 = vst [vmem:[%s175 + $0x7c] sm:$0xf] %v6364
      %6621 = vst [vmem:[%s175 + $0x80] sm:$0xf] %v6365
      %6622 = vst [vmem:[%s175 + $0x84] sm:$0xf] %v6366
      %6623 = vst [vmem:[%s175 + $0x88] sm:$0xf] %v6367
      %6624 = vst [vmem:[%s175 + $0x8c] sm:$0xf] %v6368
      %6625 = vst [vmem:[%s175 + $0x90] sm:$0xf] %v6369
      %6626 = vst [vmem:[%s175 + $0x94] sm:$0xf] %v6370
      %6627 = vst [vmem:[%s175 + $0x98] sm:$0xf] %v6371
      %6628 = vst [vmem:[%s175 + $0x9c] sm:$0xf] %v6372
      %6629 = vst [vmem:[%s175 + $0xa0] sm:$0xf] %v6373
      %6630 = vst [vmem:[%s175 + $0xa4] sm:$0xf] %v6374
      %6631 = vst [vmem:[%s175 + $0xa8] sm:$0xf] %v6375
      %6632 = vst [vmem:[%s175 + $0xac] sm:$0xf] %v6376
      %6633 = vst [vmem:[%s175 + $0xb0] sm:$0xf] %v6377
      %6634 = vst [vmem:[%s175 + $0xb4] sm:$0xf] %v6378
      %6635 = vst [vmem:[%s175 + $0xb8] sm:$0xf] %v6379
      %6636 = vst [vmem:[%s175 + $0xbc] sm:$0xf] %v6380
      %6637 = vst [vmem:[%s175 + $0xc0] sm:$0xf] %v6381
      %6638 = vst [vmem:[%s175 + $0xc4] sm:$0xf] %v6382
      %6639 = vst [vmem:[%s175 + $0xc8] sm:$0xf] %v6383
      %6640 = vst [vmem:[%s175 + $0xcc] sm:$0xf] %v6384
      %6641 = vst [vmem:[%s175 + $0xd0] sm:$0xf] %v6385
      %6642 = vst [vmem:[%s175 + $0xd4] sm:$0xf] %v6386
      %6643 = vst [vmem:[%s175 + $0xd8] sm:$0xf] %v6387
      %6644 = vst [vmem:[%s175 + $0xdc] sm:$0xf] %v6388
      %6645 = vst [vmem:[%s175 + $0xe0] sm:$0xf] %v6389
      %6646 = vst [vmem:[%s175 + $0xe4] sm:$0xf] %v6390
      %6647 = vst [vmem:[%s175 + $0xe8] sm:$0xf] %v6391
      %6648 = vst [vmem:[%s175 + $0xec] sm:$0xf] %v6392
      %6649 = vst [vmem:[%s175 + $0xf0] sm:$0xf] %v6393
      %6650 = vst [vmem:[%s175 + $0xf4] sm:$0xf] %v6394
      %6651 = vst [vmem:[%s175 + $0xf8] sm:$0xf] %v6395
      %6652 = vst [vmem:[%s175 + $0xfc] sm:$0xf] %v6396
      %6653 = vst [vmem:[%s175 + $0x100] sm:$0xf] %v6397
      %6654 = vst [vmem:[%s175 + $0x104] sm:$0xf] %v6398
      %6655 = vst [vmem:[%s175 + $0x108] sm:$0xf] %v6399
      %6656 = vst [vmem:[%s175 + $0x10c] sm:$0xf] %v6400
      %6657 = vst [vmem:[%s175 + $0x110] sm:$0xf] %v6401
      %6658 = vst [vmem:[%s175 + $0x114] sm:$0xf] %v6402
      %6659 = vst [vmem:[%s175 + $0x118] sm:$0xf] %v6403
      %6660 = vst [vmem:[%s175 + $0x11c] sm:$0xf] %v6404
      %6661 = vst [vmem:[%s175 + $0x120] sm:$0xf] %v6405
      %6662 = vst [vmem:[%s175 + $0x124] sm:$0xf] %v6406
      %6663 = vst [vmem:[%s175 + $0x128] sm:$0xf] %v6407
      %6664 = vst [vmem:[%s175 + $0x12c] sm:$0xf] %v6408
      %6665 = vst [vmem:[%s175 + $0x130] sm:$0xf] %v6409
      %6666 = vst [vmem:[%s175 + $0x134] sm:$0xf] %v6410
      %6667 = vst [vmem:[%s175 + $0x138] sm:$0xf] %v6411
      %6668 = vst [vmem:[%s175 + $0x13c] sm:$0xf] %v6412
      %6669 = vst [vmem:[%s175 + $0x140] sm:$0xf] %v6413
      %6670 = vst [vmem:[%s175 + $0x144] sm:$0xf] %v6414
      %6671 = vst [vmem:[%s175 + $0x148] sm:$0xf] %v6415
      %6672 = vst [vmem:[%s175 + $0x14c] sm:$0xf] %v6416
      %6673 = vst [vmem:[%s175 + $0x150] sm:$0xf] %v6417
      %6674 = vst [vmem:[%s175 + $0x154] sm:$0xf] %v6418
      %6675 = vst [vmem:[%s175 + $0x158] sm:$0xf] %v6419
      %6676 = vst [vmem:[%s175 + $0x15c] sm:$0xf] %v6420
      %6677 = vst [vmem:[%s175 + $0x160] sm:$0xf] %v6421
      %6678 = vst [vmem:[%s175 + $0x164] sm:$0xf] %v6422
      %6679 = vst [vmem:[%s175 + $0x168] sm:$0xf] %v6423
      %6680 = vst [vmem:[%s175 + $0x16c] sm:$0xf] %v6424
      %6681 = vst [vmem:[%s175 + $0x170] sm:$0xf] %v6425
      %6682 = vst [vmem:[%s175 + $0x174] sm:$0xf] %v6426
      %6683 = vst [vmem:[%s175 + $0x178] sm:$0xf] %v6427
      %6684 = vst [vmem:[%s175 + $0x17c] sm:$0xf] %v6428
      %6685 = vst [vmem:[%s175 + $0x180] sm:$0xf] %v6429
      %6686 = vst [vmem:[%s175 + $0x184] sm:$0xf] %v6430
      %6687 = vst [vmem:[%s175 + $0x188] sm:$0xf] %v6431
      %6688 = vst [vmem:[%s175 + $0x18c] sm:$0xf] %v6432
      %6689 = vst [vmem:[%s175 + $0x190] sm:$0xf] %v6433
      %6690 = vst [vmem:[%s175 + $0x194] sm:$0xf] %v6434
      %6691 = vst [vmem:[%s175 + $0x198] sm:$0xf] %v6435
      %6692 = vst [vmem:[%s175 + $0x19c] sm:$0xf] %v6436
      %6693 = vst [vmem:[%s175 + $0x1a0] sm:$0xf] %v6437
      %6694 = vst [vmem:[%s175 + $0x1a4] sm:$0xf] %v6438
      %6695 = vst [vmem:[%s175 + $0x1a8] sm:$0xf] %v6439
      %6696 = vst [vmem:[%s175 + $0x1ac] sm:$0xf] %v6440
      %6697 = vst [vmem:[%s175 + $0x1b0] sm:$0xf] %v6441
      %6698 = vst [vmem:[%s175 + $0x1b4] sm:$0xf] %v6442
      %6699 = vst [vmem:[%s175 + $0x1b8] sm:$0xf] %v6443
      %6700 = vst [vmem:[%s175 + $0x1bc] sm:$0xf] %v6444
      %6701 = vst [vmem:[%s175 + $0x1c0] sm:$0xf] %v6445
      %6702 = vst [vmem:[%s175 + $0x1c4] sm:$0xf] %v6446
      %6703 = vst [vmem:[%s175 + $0x1c8] sm:$0xf] %v6447
      %6704 = vst [vmem:[%s175 + $0x1cc] sm:$0xf] %v6448
      %6705 = vst [vmem:[%s175 + $0x1d0] sm:$0xf] %v6449
      %6706 = vst [vmem:[%s175 + $0x1d4] sm:$0xf] %v6450
      %6707 = vst [vmem:[%s175 + $0x1d8] sm:$0xf] %v6451
      %6708 = vst [vmem:[%s175 + $0x1dc] sm:$0xf] %v6452
      %6709 = vst [vmem:[%s175 + $0x1e0] sm:$0xf] %v6453
      %6710 = vst [vmem:[%s175 + $0x1e4] sm:$0xf] %v6454
      %6711 = vst [vmem:[%s175 + $0x1e8] sm:$0xf] %v6455
      %6712 = vst [vmem:[%s175 + $0x1ec] sm:$0xf] %v6456
      %6713 = vst [vmem:[%s175 + $0x1f0] sm:$0xf] %v6457
      %6714 = vst [vmem:[%s175 + $0x1f4] sm:$0xf] %v6458
      %6715 = vst [vmem:[%s175 + $0x1f8] sm:$0xf] %v6459
      %6716 = vst [vmem:[%s175 + $0x1fc] sm:$0xf] %v6460
      %s6717 = smul.u32 128, %s14
      %p6718 = scmp.lt.s32.totalorder %s6717, 255
      %s6719 = scalar_select %p6718, %s6717, 255
      %s6720 = smul.addr %s6719, 4
      %s6721 = scalar_lea.vmem %s3, %s6720
      // Predicated region
      $region33: #{forward.8} parent=31 // pred_check
        %p6722 = pneg %p100
      $region34: #{forward.8} parent=31 // pred_check_branch
        %6724 = sbr.rel (%p6722) target = $region36
      $region35: #{forward.8} parent=31 // pred_region
        %s6725 = smul.u32 128, %s14
      $region36: #{forward.8} parent=31 // pred_fallthru
        _
    $region32: #{forward.8} parent=5 // pred_fallthru
      _
    %p6726 = scmp.le.s32.totalorder 2, %s9
    // Predicated region
    $region37: #{forward.8} parent=5 // pred_check
      %p6727 = pneg %p6726
    $region38: #{forward.8} parent=5 // pred_check_branch
      %6729 = sbr.rel (%p6727) target = $region40
    $region39: #{forward.8} parent=5 // pred_region
      %s6730 = ssub.s32 %s9, 2
      // Predicated region
      $region41: #{forward.8} parent=39 // pred_check
        %p6731 = pneg %p106
      $region42: #{forward.8} parent=39 // pred_check_branch
        %6733 = sbr.rel (%p6731) target = $region44
      $region43: #{forward.8} parent=39 // pred_region
        %s6734 = smul.u32 128, %s15
        %p6735 = scmp.lt.s32.totalorder %s6734, 255
        %s6736 = scalar_select %p6735, %s6734, 255
        %s6737 = smul.addr %s6736, 4
        %s6738 = scalar_lea.vmem %s3, %s6737
      $region44: #{forward.8} parent=39 // pred_fallthru
        _
    $region40: #{forward.8} parent=5 // pred_fallthru
      _
  $region6: #{forward.8} parent=0 // loop_footer
    %s13 = sadd.s32 1, %s9
  $region7: #{forward.8} parent=0 // loop_footer_branch
    %8 = sbr.rel target = $region3
  $region8: #{forward.8} parent=0 // loop_exit
    _

// kernel: forward.9
$region0: #{forward.9}
  #allocation0 [shape = 'u32[]', space=smem, size = 0x4, offset = 0x4, fixed_abs, tag = 'smem constant byte address 0x4 - core index']
  #allocation1 [shape = 'u32[144,128]{1,0:T(1,128)}', space=vmem, size = 0x12000, scoped, tag = 'internal scratch']
  %s0 = inlined_call_operand.vmem [shape: bf16[8192,128], index: 0, kind: input, shape index: {}]
  %s1 = inlined_call_operand.vmem [shape: bf16[128,128], index: 1, kind: input, shape index: {}]
  %s2 = inlined_call_operand.vmem [shape: f32[1,128], index: 2, kind: input, shape index: {}]
  %s3 = inlined_call_operand.vmem [shape: bf16[8192,128], index: 3, kind: output, shape index: {}]
  %s4 = sld [smem:[#allocation0]]
  $region45: #{forward.9} parent=0
    _
  %s6 = ssub.s32 1, %s4
  %s7 = scalar_select 0, %s6, %s4
  loop: start=0, step=1, limit=6
  $region2: #{forward.9} parent=0 // loop_pre_header
    _
  $region3: #{forward.9} parent=0 // loop_header
    %s9 = sphi 0, %s13
    %p10 = scmp.ge.s32.totalorder %s9, 6
    %s19 = sphi 0, %s21
    %s22 = sphi 0, %s19
    %s23 = sphi 0, %s22
    %s39 = sphi 0, %s23
    %s43 = sphi 0, %s43
    %s45 = sphi 0, %s43
    %s46 = sphi 0, %s45
    %s60 = sphi 0, %s46
    %s64 = sphi 0, %s64
    %s66 = sphi 0, %s64
    %s67 = sphi 0, %s66
    %s81 = sphi 0, %s67
    %s87 = sphi 0, %s89
    %s90 = sphi 0, %s87
    %s91 = sphi 0, %s90
    %s107 = sphi 0, %s91
  $region4: #{forward.9} parent=0 // loop_header_branch
    %12 = sbr.rel (%p10) target = $region8
  $region5: #{forward.9} parent=0 // loop_body
    %s14 = ssub.s32 %s9, 1
    %s15 = ssub.s32 %s9, 2
    %s16 = sadd.s32 %s9, 1
    %s17 = ssub.s32 %s9, %s16
    %p18 = scmp.eq.s32.totalorder %s17, 0
    %s20 = sadd.s32 %s19, 1
    %s21 = scalar_select %p18, %s19, %s20
    %p24 = pneg %p18
    %p25 = scmp.eq.s32.totalorder %s9, 3
    %p26 = por %p24, %p25
    %p27 = scmp.ne.s32.totalorder %s19, %s22
    %p28 = scmp.eq.s32.totalorder %s9, 0
    %p29 = por %p27, %p28
    %p30 = scmp.ne.s32.totalorder %s19, %s22
    %p31 = scmp.eq.s32.totalorder %s14, 3
    %p32 = por %p30, %p31
    %p33 = scmp.ne.s32.totalorder %s22, %s23
    %p34 = scmp.eq.s32.totalorder %s14, 0
    %p35 = por %p33, %p34
    %p36 = scmp.ne.s32.totalorder %s22, %s23
    %p37 = scmp.eq.s32.totalorder %s15, 3
    %p38 = por %p36, %p37
    %p40 = scmp.ne.s32.totalorder %s23, %s39
    %p41 = scmp.eq.s32.totalorder %s15, 0
    %p42 = por %p40, %p41
    %s44 = sadd.s32 %s43, 1
    %p47 = scmp.eq.s32.totalorder %s9, 3
    %p48 = scmp.ne.s32.totalorder %s43, %s45
    %p49 = scmp.eq.s32.totalorder %s9, 0
    %p50 = por %p48, %p49
    %p51 = scmp.ne.s32.totalorder %s43, %s45
    %p52 = scmp.eq.s32.totalorder %s14, 3
    %p53 = por %p51, %p52
    %p54 = scmp.ne.s32.totalorder %s45, %s46
    %p55 = scmp.eq.s32.totalorder %s14, 0
    %p56 = por %p54, %p55
    %p57 = scmp.ne.s32.totalorder %s45, %s46
    %p58 = scmp.eq.s32.totalorder %s15, 3
    %p59 = por %p57, %p58
    %p61 = scmp.ne.s32.totalorder %s46, %s60
    %p62 = scmp.eq.s32.totalorder %s15, 0
    %p63 = por %p61, %p62
    %s65 = sadd.s32 %s64, 1
    %p68 = scmp.eq.s32.totalorder %s9, 3
    %p69 = scmp.ne.s32.totalorder %s64, %s66
    %p70 = scmp.eq.s32.totalorder %s9, 0
    %p71 = por %p69, %p70
    %p72 = scmp.ne.s32.totalorder %s64, %s66
    %p73 = scmp.eq.s32.totalorder %s14, 3
    %p74 = por %p72, %p73
    %p75 = scmp.ne.s32.totalorder %s66, %s67
    %p76 = scmp.eq.s32.totalorder %s14, 0
    %p77 = por %p75, %p76
    %p78 = scmp.ne.s32.totalorder %s66, %s67
    %p79 = scmp.eq.s32.totalorder %s15, 3
    %p80 = por %p78, %p79
    %p82 = scmp.ne.s32.totalorder %s67, %s81
    %p83 = scmp.eq.s32.totalorder %s15, 0
    %p84 = por %p82, %p83
    %s85 = ssub.s32 %s9, %s16
    %p86 = scmp.eq.s32.totalorder %s85, 0
    %s88 = sadd.s32 %s87, 1
    %s89 = scalar_select %p86, %s87, %s88
    %p92 = pneg %p86
    %p93 = scmp.eq.s32.totalorder %s9, 3
    %p94 = por %p92, %p93
    %p95 = scmp.ne.s32.totalorder %s87, %s90
    %p96 = scmp.eq.s32.totalorder %s9, 0
    %p97 = por %p95, %p96
    %p98 = scmp.ne.s32.totalorder %s87, %s90
    %p99 = scmp.eq.s32.totalorder %s14, 3
    %p100 = por %p98, %p99
    %p101 = scmp.ne.s32.totalorder %s90, %s91
    %p102 = scmp.eq.s32.totalorder %s14, 0
    %p103 = por %p101, %p102
    %p104 = scmp.ne.s32.totalorder %s90, %s91
    %p105 = scmp.eq.s32.totalorder %s15, 3
    %p106 = por %p104, %p105
    %p108 = scmp.ne.s32.totalorder %s91, %s107
    %p109 = scmp.eq.s32.totalorder %s15, 0
    %p110 = por %p108, %p109
    %p111 = scmp.le.s32.totalorder 1, %s9
    %p112 = scmp.lt.s32.totalorder %s9, 5
    %p113 = pnand %p111, %p112
    %p114 = pneg %p113
    // Predicated region
    $region9: #{forward.9} parent=5 // pred_check
      _
    $region10: #{forward.9} parent=5 // pred_check_branch
      %116 = sbr.rel (%p113) target = $region12
    $region11: #{forward.9} parent=5 // pred_region
      %s117 = ssub.s32 %s9, 1
      // Predicated region
      $region13: #{forward.9} parent=11 // pred_check
        %p118 = pneg %p56
      $region14: #{forward.9} parent=11 // pred_check_branch
        %120 = sbr.rel (%p118) target = $region16
      $region15: #{forward.9} parent=11 // pred_region
        _
      $region16: #{forward.9} parent=11 // pred_fallthru
        _
      // Predicated region
      $region17: #{forward.9} parent=11 // pred_check
        %p121 = pneg %p77
      $region18: #{forward.9} parent=11 // pred_check_branch
        %123 = sbr.rel (%p121) target = $region20
      $region19: #{forward.9} parent=11 // pred_region
        _
      $region20: #{forward.9} parent=11 // pred_fallthru
        _
    $region12: #{forward.9} parent=5 // pred_fallthru
      _
    %p124 = scmp.lt.s32.totalorder %s9, 4
    // Predicated region
    $region21: #{forward.9} parent=5 // pred_check
      %p125 = pneg %p124
    $region22: #{forward.9} parent=5 // pred_check_branch
      %127 = sbr.rel (%p125) target = $region24
    $region23: #{forward.9} parent=5 // pred_region
      // Predicated region
      $region25: #{forward.9} parent=23 // pred_check
        %p128 = pneg %p29
      $region26: #{forward.9} parent=23 // pred_check_branch
        %130 = sbr.rel (%p128) target = $region28
      $region27: #{forward.9} parent=23 // pred_region
        %s131 = smul.u32 256, %s9
        %p132 = scmp.lt.s32.totalorder %s131, 1023
        %s133 = scalar_select %p132, %s131, 1023
        %s134 = smul.addr %s133, 4
        %s135 = scalar_lea.vmem %s0, %s134
        %s136 = smul.u32 256, %s9
      $region28: #{forward.9} parent=23 // pred_fallthru
        _
    $region24: #{forward.9} parent=5 // pred_fallthru
      _
    %p137 = scmp.le.s32.totalorder 1, %s9
    %p138 = scmp.lt.s32.totalorder %s9, 5
    %p139 = pnand %p137, %p138
    %p140 = pneg %p139
    // Predicated region
    $region29: #{forward.9} parent=5 // pred_check
      _
    $region30: #{forward.9} parent=5 // pred_check_branch
      %142 = sbr.rel (%p139) target = $region32
    $region31: #{forward.9} parent=5 // pred_region
      %s143 = ssub.s32 %s9, 1
      %s144 = smul.u32 256, %s14
      %p145 = scmp.lt.s32.totalorder %s144, 1023
      %s146 = scalar_select %p145, %s144, 1023
      %s147 = smul.addr %s146, 4
      %s148 = scalar_lea.vmem %s0, %s147
      %p149 = pneg %p35
      %p150 = pneg %p32
      %p151 = pneg %p56
      %p152 = pneg %p53
      %p153 = pneg %p77
      %p154 = pneg %p74
      %p155 = pneg %p103
      %p156 = pneg %p100
      %s157 = smul.u32 256, %s14
      %p158 = scmp.lt.s32.totalorder %s157, 1023
      %s159 = scalar_select %p158, %s157, 1023
      %s160 = smul.addr %s159, 4
      %s161 = scalar_lea.vmem %s3, %s160
      %s162 = smul.u32 256, %s14
      %p163 = scmp.lt.s32.totalorder %s162, 1023
      %s164 = scalar_select %p163, %s162, 1023
      %s165 = smul.addr %s164, 4
      %s166 = scalar_lea.vmem %s0, %s165
      %s167 = smul.u32 256, %s14
      %s168 = smul.u32 256, %s14
      %p169 = scmp.lt.s32.totalorder %s168, 1023
      %s170 = scalar_select %p169, %s168, 1023
      %s171 = smul.addr %s170, 4
      %s172 = scalar_lea.vmem %s3, %s171
      %s173 = smul.u32 256, %s14
      %v175 = vld [vmem:[%s166] sm:$0xf]
      %v176 = vld [vmem:[%s166 + $0x4] sm:$0xf]
      %v177 = vld [vmem:[%s166 + $0x8] sm:$0xf]
      %v178 = vld [vmem:[%s166 + $0xc] sm:$0xf]
      %v179 = vld [vmem:[%s166 + $0x10] sm:$0xf]
      %v180 = vld [vmem:[%s166 + $0x14] sm:$0xf]
      %v181 = vld [vmem:[%s166 + $0x18] sm:$0xf]
      %v182 = vld [vmem:[%s166 + $0x1c] sm:$0xf]
      %v183 = vld [vmem:[%s166 + $0x20] sm:$0xf]
      %v184 = vld [vmem:[%s166 + $0x24] sm:$0xf]
      %v185 = vld [vmem:[%s166 + $0x28] sm:$0xf]
      %v186 = vld [vmem:[%s166 + $0x2c] sm:$0xf]
      %v187 = vld [vmem:[%s166 + $0x30] sm:$0xf]
      %v188 = vld [vmem:[%s166 + $0x34] sm:$0xf]
      %v189 = vld [vmem:[%s166 + $0x38] sm:$0xf]
      %v190 = vld [vmem:[%s166 + $0x3c] sm:$0xf]
      %v191 = vld [vmem:[%s166 + $0x40] sm:$0xf]
      %v192 = vld [vmem:[%s166 + $0x44] sm:$0xf]
      %v193 = vld [vmem:[%s166 + $0x48] sm:$0xf]
      %v194 = vld [vmem:[%s166 + $0x4c] sm:$0xf]
      %v195 = vld [vmem:[%s166 + $0x50] sm:$0xf]
      %v196 = vld [vmem:[%s166 + $0x54] sm:$0xf]
      %v197 = vld [vmem:[%s166 + $0x58] sm:$0xf]
      %v198 = vld [vmem:[%s166 + $0x5c] sm:$0xf]
      %v199 = vld [vmem:[%s166 + $0x60] sm:$0xf]
      %v200 = vld [vmem:[%s166 + $0x64] sm:$0xf]
      %v201 = vld [vmem:[%s166 + $0x68] sm:$0xf]
      %v202 = vld [vmem:[%s166 + $0x6c] sm:$0xf]
      %v203 = vld [vmem:[%s166 + $0x70] sm:$0xf]
      %v204 = vld [vmem:[%s166 + $0x74] sm:$0xf]
      %v205 = vld [vmem:[%s166 + $0x78] sm:$0xf]
      %v206 = vld [vmem:[%s166 + $0x7c] sm:$0xf]
      %v207 = vld [vmem:[%s166 + $0x80] sm:$0xf]
      %v208 = vld [vmem:[%s166 + $0x84] sm:$0xf]
      %v209 = vld [vmem:[%s166 + $0x88] sm:$0xf]
      %v210 = vld [vmem:[%s166 + $0x8c] sm:$0xf]
      %v211 = vld [vmem:[%s166 + $0x90] sm:$0xf]
      %v212 = vld [vmem:[%s166 + $0x94] sm:$0xf]
      %v213 = vld [vmem:[%s166 + $0x98] sm:$0xf]
      %v214 = vld [vmem:[%s166 + $0x9c] sm:$0xf]
      %v215 = vld [vmem:[%s166 + $0xa0] sm:$0xf]
      %v216 = vld [vmem:[%s166 + $0xa4] sm:$0xf]
      %v217 = vld [vmem:[%s166 + $0xa8] sm:$0xf]
      %v218 = vld [vmem:[%s166 + $0xac] sm:$0xf]
      %v219 = vld [vmem:[%s166 + $0xb0] sm:$0xf]
      %v220 = vld [vmem:[%s166 + $0xb4] sm:$0xf]
      %v221 = vld [vmem:[%s166 + $0xb8] sm:$0xf]
      %v222 = vld [vmem:[%s166 + $0xbc] sm:$0xf]
      %v223 = vld [vmem:[%s166 + $0xc0] sm:$0xf]
      %v224 = vld [vmem:[%s166 + $0xc4] sm:$0xf]
      %v225 = vld [vmem:[%s166 + $0xc8] sm:$0xf]
      %v226 = vld [vmem:[%s166 + $0xcc] sm:$0xf]
      %v227 = vld [vmem:[%s166 + $0xd0] sm:$0xf]
      %v228 = vld [vmem:[%s166 + $0xd4] sm:$0xf]
      %v229 = vld [vmem:[%s166 + $0xd8] sm:$0xf]
      %v230 = vld [vmem:[%s166 + $0xdc] sm:$0xf]
      %v231 = vld [vmem:[%s166 + $0xe0] sm:$0xf]
      %v232 = vld [vmem:[%s166 + $0xe4] sm:$0xf]
      %v233 = vld [vmem:[%s166 + $0xe8] sm:$0xf]
      %v234 = vld [vmem:[%s166 + $0xec] sm:$0xf]
      %v235 = vld [vmem:[%s166 + $0xf0] sm:$0xf]
      %v236 = vld [vmem:[%s166 + $0xf4] sm:$0xf]
      %v237 = vld [vmem:[%s166 + $0xf8] sm:$0xf]
      %v238 = vld [vmem:[%s166 + $0xfc] sm:$0xf]
      %v239 = vld [vmem:[%s166 + $0x100] sm:$0xf]
      %v240 = vld [vmem:[%s166 + $0x104] sm:$0xf]
      %v241 = vld [vmem:[%s166 + $0x108] sm:$0xf]
      %v242 = vld [vmem:[%s166 + $0x10c] sm:$0xf]
      %v243 = vld [vmem:[%s166 + $0x110] sm:$0xf]
      %v244 = vld [vmem:[%s166 + $0x114] sm:$0xf]
      %v245 = vld [vmem:[%s166 + $0x118] sm:$0xf]
      %v246 = vld [vmem:[%s166 + $0x11c] sm:$0xf]
      %v247 = vld [vmem:[%s166 + $0x120] sm:$0xf]
      %v248 = vld [vmem:[%s166 + $0x124] sm:$0xf]
      %v249 = vld [vmem:[%s166 + $0x128] sm:$0xf]
      %v250 = vld [vmem:[%s166 + $0x12c] sm:$0xf]
      %v251 = vld [vmem:[%s166 + $0x130] sm:$0xf]
      %v252 = vld [vmem:[%s166 + $0x134] sm:$0xf]
      %v253 = vld [vmem:[%s166 + $0x138] sm:$0xf]
      %v254 = vld [vmem:[%s166 + $0x13c] sm:$0xf]
      %v255 = vld [vmem:[%s166 + $0x140] sm:$0xf]
      %v256 = vld [vmem:[%s166 + $0x144] sm:$0xf]
      %v257 = vld [vmem:[%s166 + $0x148] sm:$0xf]
      %v258 = vld [vmem:[%s166 + $0x14c] sm:$0xf]
      %v259 = vld [vmem:[%s166 + $0x150] sm:$0xf]
      %v260 = vld [vmem:[%s166 + $0x154] sm:$0xf]
      %v261 = vld [vmem:[%s166 + $0x158] sm:$0xf]
      %v262 = vld [vmem:[%s166 + $0x15c] sm:$0xf]
      %v263 = vld [vmem:[%s166 + $0x160] sm:$0xf]
      %v264 = vld [vmem:[%s166 + $0x164] sm:$0xf]
      %v265 = vld [vmem:[%s166 + $0x168] sm:$0xf]
      %v266 = vld [vmem:[%s166 + $0x16c] sm:$0xf]
      %v267 = vld [vmem:[%s166 + $0x170] sm:$0xf]
      %v268 = vld [vmem:[%s166 + $0x174] sm:$0xf]
      %v269 = vld [vmem:[%s166 + $0x178] sm:$0xf]
      %v270 = vld [vmem:[%s166 + $0x17c] sm:$0xf]
      %v271 = vld [vmem:[%s166 + $0x180] sm:$0xf]
      %v272 = vld [vmem:[%s166 + $0x184] sm:$0xf]
      %v273 = vld [vmem:[%s166 + $0x188] sm:$0xf]
      %v274 = vld [vmem:[%s166 + $0x18c] sm:$0xf]
      %v275 = vld [vmem:[%s166 + $0x190] sm:$0xf]
      %v276 = vld [vmem:[%s166 + $0x194] sm:$0xf]
      %v277 = vld [vmem:[%s166 + $0x198] sm:$0xf]
      %v278 = vld [vmem:[%s166 + $0x19c] sm:$0xf]
      %v279 = vld [vmem:[%s166 + $0x1a0] sm:$0xf]
      %v280 = vld [vmem:[%s166 + $0x1a4] sm:$0xf]
      %v281 = vld [vmem:[%s166 + $0x1a8] sm:$0xf]
      %v282 = vld [vmem:[%s166 + $0x1ac] sm:$0xf]
      %v283 = vld [vmem:[%s166 + $0x1b0] sm:$0xf]
      %v284 = vld [vmem:[%s166 + $0x1b4] sm:$0xf]
      %v285 = vld [vmem:[%s166 + $0x1b8] sm:$0xf]
      %v286 = vld [vmem:[%s166 + $0x1bc] sm:$0xf]
      %v287 = vld [vmem:[%s166 + $0x1c0] sm:$0xf]
      %v288 = vld [vmem:[%s166 + $0x1c4] sm:$0xf]
      %v289 = vld [vmem:[%s166 + $0x1c8] sm:$0xf]
      %v290 = vld [vmem:[%s166 + $0x1cc] sm:$0xf]
      %v291 = vld [vmem:[%s166 + $0x1d0] sm:$0xf]
      %v292 = vld [vmem:[%s166 + $0x1d4] sm:$0xf]
      %v293 = vld [vmem:[%s166 + $0x1d8] sm:$0xf]
      %v294 = vld [vmem:[%s166 + $0x1dc] sm:$0xf]
      %v295 = vld [vmem:[%s166 + $0x1e0] sm:$0xf]
      %v296 = vld [vmem:[%s166 + $0x1e4] sm:$0xf]
      %v297 = vld [vmem:[%s166 + $0x1e8] sm:$0xf]
      %v298 = vld [vmem:[%s166 + $0x1ec] sm:$0xf]
      %v299 = vld [vmem:[%s166 + $0x1f0] sm:$0xf]
      %v300 = vld [vmem:[%s166 + $0x1f4] sm:$0xf]
      %v301 = vld [vmem:[%s166 + $0x1f8] sm:$0xf]
      %v302 = vld [vmem:[%s166 + $0x1fc] sm:$0xf]
      %v303 = vld [vmem:[%s166 + $0x200] sm:$0xf]
      %v304 = vld [vmem:[%s166 + $0x204] sm:$0xf]
      %v305 = vld [vmem:[%s166 + $0x208] sm:$0xf]
      %v306 = vld [vmem:[%s166 + $0x20c] sm:$0xf]
      %v307 = vld [vmem:[%s166 + $0x210] sm:$0xf]
      %v308 = vld [vmem:[%s166 + $0x214] sm:$0xf]
      %v309 = vld [vmem:[%s166 + $0x218] sm:$0xf]
      %v310 = vld [vmem:[%s166 + $0x21c] sm:$0xf]
      %v311 = vld [vmem:[%s166 + $0x220] sm:$0xf]
      %v312 = vld [vmem:[%s166 + $0x224] sm:$0xf]
      %v313 = vld [vmem:[%s166 + $0x228] sm:$0xf]
      %v314 = vld [vmem:[%s166 + $0x22c] sm:$0xf]
      %v315 = vld [vmem:[%s166 + $0x230] sm:$0xf]
      %v316 = vld [vmem:[%s166 + $0x234] sm:$0xf]
      %v317 = vld [vmem:[%s166 + $0x238] sm:$0xf]
      %v318 = vld [vmem:[%s166 + $0x23c] sm:$0xf]
      %v319 = vld [vmem:[%s166 + $0x240] sm:$0xf]
      %v320 = vld [vmem:[%s166 + $0x244] sm:$0xf]
      %v321 = vld [vmem:[%s166 + $0x248] sm:$0xf]
      %v322 = vld [vmem:[%s166 + $0x24c] sm:$0xf]
      %v323 = vld [vmem:[%s166 + $0x250] sm:$0xf]
      %v324 = vld [vmem:[%s166 + $0x254] sm:$0xf]
      %v325 = vld [vmem:[%s166 + $0x258] sm:$0xf]
      %v326 = vld [vmem:[%s166 + $0x25c] sm:$0xf]
      %v327 = vld [vmem:[%s166 + $0x260] sm:$0xf]
      %v328 = vld [vmem:[%s166 + $0x264] sm:$0xf]
      %v329 = vld [vmem:[%s166 + $0x268] sm:$0xf]
      %v330 = vld [vmem:[%s166 + $0x26c] sm:$0xf]
      %v331 = vld [vmem:[%s166 + $0x270] sm:$0xf]
      %v332 = vld [vmem:[%s166 + $0x274] sm:$0xf]
      %v333 = vld [vmem:[%s166 + $0x278] sm:$0xf]
      %v334 = vld [vmem:[%s166 + $0x27c] sm:$0xf]
      %v335 = vld [vmem:[%s166 + $0x280] sm:$0xf]
      %v336 = vld [vmem:[%s166 + $0x284] sm:$0xf]
      %v337 = vld [vmem:[%s166 + $0x288] sm:$0xf]
      %v338 = vld [vmem:[%s166 + $0x28c] sm:$0xf]
      %v339 = vld [vmem:[%s166 + $0x290] sm:$0xf]
      %v340 = vld [vmem:[%s166 + $0x294] sm:$0xf]
      %v341 = vld [vmem:[%s166 + $0x298] sm:$0xf]
      %v342 = vld [vmem:[%s166 + $0x29c] sm:$0xf]
      %v343 = vld [vmem:[%s166 + $0x2a0] sm:$0xf]
      %v344 = vld [vmem:[%s166 + $0x2a4] sm:$0xf]
      %v345 = vld [vmem:[%s166 + $0x2a8] sm:$0xf]
      %v346 = vld [vmem:[%s166 + $0x2ac] sm:$0xf]
      %v347 = vld [vmem:[%s166 + $0x2b0] sm:$0xf]
      %v348 = vld [vmem:[%s166 + $0x2b4] sm:$0xf]
      %v349 = vld [vmem:[%s166 + $0x2b8] sm:$0xf]
      %v350 = vld [vmem:[%s166 + $0x2bc] sm:$0xf]
      %v351 = vld [vmem:[%s166 + $0x2c0] sm:$0xf]
      %v352 = vld [vmem:[%s166 + $0x2c4] sm:$0xf]
      %v353 = vld [vmem:[%s166 + $0x2c8] sm:$0xf]
      %v354 = vld [vmem:[%s166 + $0x2cc] sm:$0xf]
      %v355 = vld [vmem:[%s166 + $0x2d0] sm:$0xf]
      %v356 = vld [vmem:[%s166 + $0x2d4] sm:$0xf]
      %v357 = vld [vmem:[%s166 + $0x2d8] sm:$0xf]
      %v358 = vld [vmem:[%s166 + $0x2dc] sm:$0xf]
      %v359 = vld [vmem:[%s166 + $0x2e0] sm:$0xf]
      %v360 = vld [vmem:[%s166 + $0x2e4] sm:$0xf]
      %v361 = vld [vmem:[%s166 + $0x2e8] sm:$0xf]
      %v362 = vld [vmem:[%s166 + $0x2ec] sm:$0xf]
      %v363 = vld [vmem:[%s166 + $0x2f0] sm:$0xf]
      %v364 = vld [vmem:[%s166 + $0x2f4] sm:$0xf]
      %v365 = vld [vmem:[%s166 + $0x2f8] sm:$0xf]
      %v366 = vld [vmem:[%s166 + $0x2fc] sm:$0xf]
      %v367 = vld [vmem:[%s166 + $0x300] sm:$0xf]
      %v368 = vld [vmem:[%s166 + $0x304] sm:$0xf]
      %v369 = vld [vmem:[%s166 + $0x308] sm:$0xf]
      %v370 = vld [vmem:[%s166 + $0x30c] sm:$0xf]
      %v371 = vld [vmem:[%s166 + $0x310] sm:$0xf]
      %v372 = vld [vmem:[%s166 + $0x314] sm:$0xf]
      %v373 = vld [vmem:[%s166 + $0x318] sm:$0xf]
      %v374 = vld [vmem:[%s166 + $0x31c] sm:$0xf]
      %v375 = vld [vmem:[%s166 + $0x320] sm:$0xf]
      %v376 = vld [vmem:[%s166 + $0x324] sm:$0xf]
      %v377 = vld [vmem:[%s166 + $0x328] sm:$0xf]
      %v378 = vld [vmem:[%s166 + $0x32c] sm:$0xf]
      %v379 = vld [vmem:[%s166 + $0x330] sm:$0xf]
      %v380 = vld [vmem:[%s166 + $0x334] sm:$0xf]
      %v381 = vld [vmem:[%s166 + $0x338] sm:$0xf]
      %v382 = vld [vmem:[%s166 + $0x33c] sm:$0xf]
      %v383 = vld [vmem:[%s166 + $0x340] sm:$0xf]
      %v384 = vld [vmem:[%s166 + $0x344] sm:$0xf]
      %v385 = vld [vmem:[%s166 + $0x348] sm:$0xf]
      %v386 = vld [vmem:[%s166 + $0x34c] sm:$0xf]
      %v387 = vld [vmem:[%s166 + $0x350] sm:$0xf]
      %v388 = vld [vmem:[%s166 + $0x354] sm:$0xf]
      %v389 = vld [vmem:[%s166 + $0x358] sm:$0xf]
      %v390 = vld [vmem:[%s166 + $0x35c] sm:$0xf]
      %v391 = vld [vmem:[%s166 + $0x360] sm:$0xf]
      %v392 = vld [vmem:[%s166 + $0x364] sm:$0xf]
      %v393 = vld [vmem:[%s166 + $0x368] sm:$0xf]
      %v394 = vld [vmem:[%s166 + $0x36c] sm:$0xf]
      %v395 = vld [vmem:[%s166 + $0x370] sm:$0xf]
      %v396 = vld [vmem:[%s166 + $0x374] sm:$0xf]
      %v397 = vld [vmem:[%s166 + $0x378] sm:$0xf]
      %v398 = vld [vmem:[%s166 + $0x37c] sm:$0xf]
      %v399 = vld [vmem:[%s166 + $0x380] sm:$0xf]
      %v400 = vld [vmem:[%s166 + $0x384] sm:$0xf]
      %v401 = vld [vmem:[%s166 + $0x388] sm:$0xf]
      %v402 = vld [vmem:[%s166 + $0x38c] sm:$0xf]
      %v403 = vld [vmem:[%s166 + $0x390] sm:$0xf]
      %v404 = vld [vmem:[%s166 + $0x394] sm:$0xf]
      %v405 = vld [vmem:[%s166 + $0x398] sm:$0xf]
      %v406 = vld [vmem:[%s166 + $0x39c] sm:$0xf]
      %v407 = vld [vmem:[%s166 + $0x3a0] sm:$0xf]
      %v408 = vld [vmem:[%s166 + $0x3a4] sm:$0xf]
      %v409 = vld [vmem:[%s166 + $0x3a8] sm:$0xf]
      %v410 = vld [vmem:[%s166 + $0x3ac] sm:$0xf]
      %v411 = vld [vmem:[%s166 + $0x3b0] sm:$0xf]
      %v412 = vld [vmem:[%s166 + $0x3b4] sm:$0xf]
      %v413 = vld [vmem:[%s166 + $0x3b8] sm:$0xf]
      %v414 = vld [vmem:[%s166 + $0x3bc] sm:$0xf]
      %v415 = vld [vmem:[%s166 + $0x3c0] sm:$0xf]
      %v416 = vld [vmem:[%s166 + $0x3c4] sm:$0xf]
      %v417 = vld [vmem:[%s166 + $0x3c8] sm:$0xf]
      %v418 = vld [vmem:[%s166 + $0x3cc] sm:$0xf]
      %v419 = vld [vmem:[%s166 + $0x3d0] sm:$0xf]
      %v420 = vld [vmem:[%s166 + $0x3d4] sm:$0xf]
      %v421 = vld [vmem:[%s166 + $0x3d8] sm:$0xf]
      %v422 = vld [vmem:[%s166 + $0x3dc] sm:$0xf]
      %v423 = vld [vmem:[%s166 + $0x3e0] sm:$0xf]
      %v424 = vld [vmem:[%s166 + $0x3e4] sm:$0xf]
      %v425 = vld [vmem:[%s166 + $0x3e8] sm:$0xf]
      %v426 = vld [vmem:[%s166 + $0x3ec] sm:$0xf]
      %v427 = vld [vmem:[%s166 + $0x3f0] sm:$0xf]
      %v428 = vld [vmem:[%s166 + $0x3f4] sm:$0xf]
      %v429 = vld [vmem:[%s166 + $0x3f8] sm:$0xf]
      %v430 = vld [vmem:[%s166 + $0x3fc] sm:$0xf]
      %v431 = vld [vmem:[%s1] sm:$0xf]
      %v432 = vld [vmem:[%s1 + $0x4] sm:$0xf]
      %v433 = vld [vmem:[%s1 + $0x8] sm:$0xf]
      %v434 = vld [vmem:[%s1 + $0xc] sm:$0xf]
      %v435 = vld [vmem:[%s1 + $0x10] sm:$0xf]
      %v436 = vld [vmem:[%s1 + $0x14] sm:$0xf]
      %v437 = vld [vmem:[%s1 + $0x18] sm:$0xf]
      %v438 = vld [vmem:[%s1 + $0x1c] sm:$0xf]
      %v439 = vld [vmem:[%s1 + $0x20] sm:$0xf]
      %v440 = vld [vmem:[%s1 + $0x24] sm:$0xf]
      %v441 = vld [vmem:[%s1 + $0x28] sm:$0xf]
      %v442 = vld [vmem:[%s1 + $0x2c] sm:$0xf]
      %v443 = vld [vmem:[%s1 + $0x30] sm:$0xf]
      %v444 = vld [vmem:[%s1 + $0x34] sm:$0xf]
      %v445 = vld [vmem:[%s1 + $0x38] sm:$0xf]
      %v446 = vld [vmem:[%s1 + $0x3c] sm:$0xf]
      %v447 = vld [vmem:[%s2] sm:$0x1]
      %v449 = vlaneseq
      %v450 = vshrl.u32 %v449, 7
      %v451 = vsub.s32 0, %v450
      %v452 = vrot.slane %v447, %v451
      %v710 = vunpack.c.l.b16 %v175
      %v711 = vunpack.c.l.b16 %v176
      %v712 = vunpack.c.l.b16 %v177
      %v713 = vunpack.c.l.b16 %v178
      %v714 = vunpack.c.l.b16 %v179
      %v715 = vunpack.c.l.b16 %v180
      %v716 = vunpack.c.l.b16 %v181
      %v717 = vunpack.c.l.b16 %v182
      %v718 = vunpack.c.l.b16 %v183
      %v719 = vunpack.c.l.b16 %v184
      %v720 = vunpack.c.l.b16 %v185
      %v721 = vunpack.c.l.b16 %v186
      %v722 = vunpack.c.l.b16 %v187
      %v723 = vunpack.c.l.b16 %v188
      %v724 = vunpack.c.l.b16 %v189
      %v725 = vunpack.c.l.b16 %v190
      %v726 = vunpack.c.l.b16 %v191
      %v727 = vunpack.c.l.b16 %v192
      %v728 = vunpack.c.l.b16 %v193
      %v729 = vunpack.c.l.b16 %v194
      %v730 = vunpack.c.l.b16 %v195
      %v731 = vunpack.c.l.b16 %v196
      %v732 = vunpack.c.l.b16 %v197
      %v733 = vunpack.c.l.b16 %v198
      %v734 = vunpack.c.l.b16 %v199
      %v735 = vunpack.c.l.b16 %v200
      %v736 = vunpack.c.l.b16 %v201
      %v737 = vunpack.c.l.b16 %v202
      %v738 = vunpack.c.l.b16 %v203
      %v739 = vunpack.c.l.b16 %v204
      %v740 = vunpack.c.l.b16 %v205
      %v741 = vunpack.c.l.b16 %v206
      %v742 = vunpack.c.l.b16 %v207
      %v743 = vunpack.c.l.b16 %v208
      %v744 = vunpack.c.l.b16 %v209
      %v745 = vunpack.c.l.b16 %v210
      %v746 = vunpack.c.l.b16 %v211
      %v747 = vunpack.c.l.b16 %v212
      %v748 = vunpack.c.l.b16 %v213
      %v749 = vunpack.c.l.b16 %v214
      %v750 = vunpack.c.l.b16 %v215
      %v751 = vunpack.c.l.b16 %v216
      %v752 = vunpack.c.l.b16 %v217
      %v753 = vunpack.c.l.b16 %v218
      %v754 = vunpack.c.l.b16 %v219
      %v755 = vunpack.c.l.b16 %v220
      %v756 = vunpack.c.l.b16 %v221
      %v757 = vunpack.c.l.b16 %v222
      %v758 = vunpack.c.l.b16 %v223
      %v759 = vunpack.c.l.b16 %v224
      %v760 = vunpack.c.l.b16 %v225
      %v761 = vunpack.c.l.b16 %v226
      %v762 = vunpack.c.l.b16 %v227
      %v763 = vunpack.c.l.b16 %v228
      %v764 = vunpack.c.l.b16 %v229
      %v765 = vunpack.c.l.b16 %v230
      %v766 = vunpack.c.l.b16 %v231
      %v767 = vunpack.c.l.b16 %v232
      %v768 = vunpack.c.l.b16 %v233
      %v769 = vunpack.c.l.b16 %v234
      %v770 = vunpack.c.l.b16 %v235
      %v771 = vunpack.c.l.b16 %v236
      %v772 = vunpack.c.l.b16 %v237
      %v773 = vunpack.c.l.b16 %v238
      %v774 = vunpack.c.l.b16 %v239
      %v775 = vunpack.c.l.b16 %v240
      %v776 = vunpack.c.l.b16 %v241
      %v777 = vunpack.c.l.b16 %v242
      %v778 = vunpack.c.l.b16 %v243
      %v779 = vunpack.c.l.b16 %v244
      %v780 = vunpack.c.l.b16 %v245
      %v781 = vunpack.c.l.b16 %v246
      %v782 = vunpack.c.l.b16 %v247
      %v783 = vunpack.c.l.b16 %v248
      %v784 = vunpack.c.l.b16 %v249
      %v785 = vunpack.c.l.b16 %v250
      %v786 = vunpack.c.l.b16 %v251
      %v787 = vunpack.c.l.b16 %v252
      %v788 = vunpack.c.l.b16 %v253
      %v789 = vunpack.c.l.b16 %v254
      %v790 = vunpack.c.l.b16 %v255
      %v791 = vunpack.c.l.b16 %v256
      %v792 = vunpack.c.l.b16 %v257
      %v793 = vunpack.c.l.b16 %v258
      %v794 = vunpack.c.l.b16 %v259
      %v795 = vunpack.c.l.b16 %v260
      %v796 = vunpack.c.l.b16 %v261
      %v797 = vunpack.c.l.b16 %v262
      %v798 = vunpack.c.l.b16 %v263
      %v799 = vunpack.c.l.b16 %v264
      %v800 = vunpack.c.l.b16 %v265
      %v801 = vunpack.c.l.b16 %v266
      %v802 = vunpack.c.l.b16 %v267
      %v803 = vunpack.c.l.b16 %v268
      %v804 = vunpack.c.l.b16 %v269
      %v805 = vunpack.c.l.b16 %v270
      %v806 = vunpack.c.l.b16 %v271
      %v807 = vunpack.c.l.b16 %v272
      %v808 = vunpack.c.l.b16 %v273
      %v809 = vunpack.c.l.b16 %v274
      %v810 = vunpack.c.l.b16 %v275
      %v811 = vunpack.c.l.b16 %v276
      %v812 = vunpack.c.l.b16 %v277
      %v813 = vunpack.c.l.b16 %v278
      %v814 = vunpack.c.l.b16 %v279
      %v815 = vunpack.c.l.b16 %v280
      %v816 = vunpack.c.l.b16 %v281
      %v817 = vunpack.c.l.b16 %v282
      %v818 = vunpack.c.l.b16 %v283
      %v819 = vunpack.c.l.b16 %v284
      %v820 = vunpack.c.l.b16 %v285
      %v821 = vunpack.c.l.b16 %v286
      %v822 = vunpack.c.l.b16 %v287
      %v823 = vunpack.c.l.b16 %v288
      %v824 = vunpack.c.l.b16 %v289
      %v825 = vunpack.c.l.b16 %v290
      %v826 = vunpack.c.l.b16 %v291
      %v827 = vunpack.c.l.b16 %v292
      %v828 = vunpack.c.l.b16 %v293
      %v829 = vunpack.c.l.b16 %v294
      %v830 = vunpack.c.l.b16 %v295
      %v831 = vunpack.c.l.b16 %v296
      %v832 = vunpack.c.l.b16 %v297
      %v833 = vunpack.c.l.b16 %v298
      %v834 = vunpack.c.l.b16 %v299
      %v835 = vunpack.c.l.b16 %v300
      %v836 = vunpack.c.l.b16 %v301
      %v837 = vunpack.c.l.b16 %v302
      %v838 = vunpack.c.l.b16 %v303
      %v839 = vunpack.c.l.b16 %v304
      %v840 = vunpack.c.l.b16 %v305
      %v841 = vunpack.c.l.b16 %v306
      %v842 = vunpack.c.l.b16 %v307
      %v843 = vunpack.c.l.b16 %v308
      %v844 = vunpack.c.l.b16 %v309
      %v845 = vunpack.c.l.b16 %v310
      %v846 = vunpack.c.l.b16 %v311
      %v847 = vunpack.c.l.b16 %v312
      %v848 = vunpack.c.l.b16 %v313
      %v849 = vunpack.c.l.b16 %v314
      %v850 = vunpack.c.l.b16 %v315
      %v851 = vunpack.c.l.b16 %v316
      %v852 = vunpack.c.l.b16 %v317
      %v853 = vunpack.c.l.b16 %v318
      %v854 = vunpack.c.l.b16 %v319
      %v855 = vunpack.c.l.b16 %v320
      %v856 = vunpack.c.l.b16 %v321
      %v857 = vunpack.c.l.b16 %v322
      %v858 = vunpack.c.l.b16 %v323
      %v859 = vunpack.c.l.b16 %v324
      %v860 = vunpack.c.l.b16 %v325
      %v861 = vunpack.c.l.b16 %v326
      %v862 = vunpack.c.l.b16 %v327
      %v863 = vunpack.c.l.b16 %v328
      %v864 = vunpack.c.l.b16 %v329
      %v865 = vunpack.c.l.b16 %v330
      %v866 = vunpack.c.l.b16 %v331
      %v867 = vunpack.c.l.b16 %v332
      %v868 = vunpack.c.l.b16 %v333
      %v869 = vunpack.c.l.b16 %v334
      %v870 = vunpack.c.l.b16 %v335
      %v871 = vunpack.c.l.b16 %v336
      %v872 = vunpack.c.l.b16 %v337
      %v873 = vunpack.c.l.b16 %v338
      %v874 = vunpack.c.l.b16 %v339
      %v875 = vunpack.c.l.b16 %v340
      %v876 = vunpack.c.l.b16 %v341
      %v877 = vunpack.c.l.b16 %v342
      %v878 = vunpack.c.l.b16 %v343
      %v879 = vunpack.c.l.b16 %v344
      %v880 = vunpack.c.l.b16 %v345
      %v881 = vunpack.c.l.b16 %v346
      %v882 = vunpack.c.l.b16 %v347
      %v883 = vunpack.c.l.b16 %v348
      %v884 = vunpack.c.l.b16 %v349
      %v885 = vunpack.c.l.b16 %v350
      %v886 = vunpack.c.l.b16 %v351
      %v887 = vunpack.c.l.b16 %v352
      %v888 = vunpack.c.l.b16 %v353
      %v889 = vunpack.c.l.b16 %v354
      %v890 = vunpack.c.l.b16 %v355
      %v891 = vunpack.c.l.b16 %v356
      %v892 = vunpack.c.l.b16 %v357
      %v893 = vunpack.c.l.b16 %v358
      %v894 = vunpack.c.l.b16 %v359
      %v895 = vunpack.c.l.b16 %v360
      %v896 = vunpack.c.l.b16 %v361
      %v897 = vunpack.c.l.b16 %v362
      %v898 = vunpack.c.l.b16 %v363
      %v899 = vunpack.c.l.b16 %v364
      %v900 = vunpack.c.l.b16 %v365
      %v901 = vunpack.c.l.b16 %v366
      %v902 = vunpack.c.l.b16 %v367
      %v903 = vunpack.c.l.b16 %v368
      %v904 = vunpack.c.l.b16 %v369
      %v905 = vunpack.c.l.b16 %v370
      %v906 = vunpack.c.l.b16 %v371
      %v907 = vunpack.c.l.b16 %v372
      %v908 = vunpack.c.l.b16 %v373
      %v909 = vunpack.c.l.b16 %v374
      %v910 = vunpack.c.l.b16 %v375
      %v911 = vunpack.c.l.b16 %v376
      %v912 = vunpack.c.l.b16 %v377
      %v913 = vunpack.c.l.b16 %v378
      %v914 = vunpack.c.l.b16 %v379
      %v915 = vunpack.c.l.b16 %v380
      %v916 = vunpack.c.l.b16 %v381
      %v917 = vunpack.c.l.b16 %v382
      %v918 = vunpack.c.l.b16 %v383
      %v919 = vunpack.c.l.b16 %v384
      %v920 = vunpack.c.l.b16 %v385
      %v921 = vunpack.c.l.b16 %v386
      %v922 = vunpack.c.l.b16 %v387
      %v923 = vunpack.c.l.b16 %v388
      %v924 = vunpack.c.l.b16 %v389
      %v925 = vunpack.c.l.b16 %v390
      %v926 = vunpack.c.l.b16 %v391
      %v927 = vunpack.c.l.b16 %v392
      %v928 = vunpack.c.l.b16 %v393
      %v929 = vunpack.c.l.b16 %v394
      %v930 = vunpack.c.l.b16 %v395
      %v931 = vunpack.c.l.b16 %v396
      %v932 = vunpack.c.l.b16 %v397
      %v933 = vunpack.c.l.b16 %v398
      %v934 = vunpack.c.l.b16 %v399
      %v935 = vunpack.c.l.b16 %v400
      %v936 = vunpack.c.l.b16 %v401
      %v937 = vunpack.c.l.b16 %v402
      %v938 = vunpack.c.l.b16 %v403
      %v939 = vunpack.c.l.b16 %v404
      %v940 = vunpack.c.l.b16 %v405
      %v941 = vunpack.c.l.b16 %v406
      %v942 = vunpack.c.l.b16 %v407
      %v943 = vunpack.c.l.b16 %v408
      %v944 = vunpack.c.l.b16 %v409
      %v945 = vunpack.c.l.b16 %v410
      %v946 = vunpack.c.l.b16 %v411
      %v947 = vunpack.c.l.b16 %v412
      %v948 = vunpack.c.l.b16 %v413
      %v949 = vunpack.c.l.b16 %v414
      %v950 = vunpack.c.l.b16 %v415
      %v951 = vunpack.c.l.b16 %v416
      %v952 = vunpack.c.l.b16 %v417
      %v953 = vunpack.c.l.b16 %v418
      %v954 = vunpack.c.l.b16 %v419
      %v955 = vunpack.c.l.b16 %v420
      %v956 = vunpack.c.l.b16 %v421
      %v957 = vunpack.c.l.b16 %v422
      %v958 = vunpack.c.l.b16 %v423
      %v959 = vunpack.c.l.b16 %v424
      %v960 = vunpack.c.l.b16 %v425
      %v961 = vunpack.c.l.b16 %v426
      %v962 = vunpack.c.l.b16 %v427
      %v963 = vunpack.c.l.b16 %v428
      %v964 = vunpack.c.l.b16 %v429
      %v965 = vunpack.c.l.b16 %v430
      %v966 = vpack.c.b16 %v711, %v710
      %v967 = vpack.c.b16 %v713, %v712
      %v968 = vpack.c.b16 %v715, %v714
      %v969 = vpack.c.b16 %v717, %v716
      %v970 = vpack.c.b16 %v719, %v718
      %v971 = vpack.c.b16 %v721, %v720
      %v972 = vpack.c.b16 %v723, %v722
      %v973 = vpack.c.b16 %v725, %v724
      %v974 = vpack.c.b16 %v727, %v726
      %v975 = vpack.c.b16 %v729, %v728
      %v976 = vpack.c.b16 %v731, %v730
      %v977 = vpack.c.b16 %v733, %v732
      %v978 = vpack.c.b16 %v735, %v734
      %v979 = vpack.c.b16 %v737, %v736
      %v980 = vpack.c.b16 %v739, %v738
      %v981 = vpack.c.b16 %v741, %v740
      %v982 = vpack.c.b16 %v743, %v742
      %v983 = vpack.c.b16 %v745, %v744
      %v984 = vpack.c.b16 %v747, %v746
      %v985 = vpack.c.b16 %v749, %v748
      %v986 = vpack.c.b16 %v751, %v750
      %v987 = vpack.c.b16 %v753, %v752
      %v988 = vpack.c.b16 %v755, %v754
      %v989 = vpack.c.b16 %v757, %v756
      %v990 = vpack.c.b16 %v759, %v758
      %v991 = vpack.c.b16 %v761, %v760
      %v992 = vpack.c.b16 %v763, %v762
      %v993 = vpack.c.b16 %v765, %v764
      %v994 = vpack.c.b16 %v767, %v766
      %v995 = vpack.c.b16 %v769, %v768
      %v996 = vpack.c.b16 %v771, %v770
      %v997 = vpack.c.b16 %v773, %v772
      %v998 = vpack.c.b16 %v775, %v774
      %v999 = vpack.c.b16 %v777, %v776
      %v1000 = vpack.c.b16 %v779, %v778
      %v1001 = vpack.c.b16 %v781, %v780
      %v1002 = vpack.c.b16 %v783, %v782
      %v1003 = vpack.c.b16 %v785, %v784
      %v1004 = vpack.c.b16 %v787, %v786
      %v1005 = vpack.c.b16 %v789, %v788
      %v1006 = vpack.c.b16 %v791, %v790
      %v1007 = vpack.c.b16 %v793, %v792
      %v1008 = vpack.c.b16 %v795, %v794
      %v1009 = vpack.c.b16 %v797, %v796
      %v1010 = vpack.c.b16 %v799, %v798
      %v1011 = vpack.c.b16 %v801, %v800
      %v1012 = vpack.c.b16 %v803, %v802
      %v1013 = vpack.c.b16 %v805, %v804
      %v1014 = vpack.c.b16 %v807, %v806
      %v1015 = vpack.c.b16 %v809, %v808
      %v1016 = vpack.c.b16 %v811, %v810
      %v1017 = vpack.c.b16 %v813, %v812
      %v1018 = vpack.c.b16 %v815, %v814
      %v1019 = vpack.c.b16 %v817, %v816
      %v1020 = vpack.c.b16 %v819, %v818
      %v1021 = vpack.c.b16 %v821, %v820
      %v1022 = vpack.c.b16 %v823, %v822
      %v1023 = vpack.c.b16 %v825, %v824
      %v1024 = vpack.c.b16 %v827, %v826
      %v1025 = vpack.c.b16 %v829, %v828
      %v1026 = vpack.c.b16 %v831, %v830
      %v1027 = vpack.c.b16 %v833, %v832
      %v1028 = vpack.c.b16 %v835, %v834
      %v1029 = vpack.c.b16 %v837, %v836
      %v1030 = vpack.c.b16 %v839, %v838
      %v1031 = vpack.c.b16 %v841, %v840
      %v1032 = vpack.c.b16 %v843, %v842
      %v1033 = vpack.c.b16 %v845, %v844
      %v1034 = vpack.c.b16 %v847, %v846
      %v1035 = vpack.c.b16 %v849, %v848
      %v1036 = vpack.c.b16 %v851, %v850
      %v1037 = vpack.c.b16 %v853, %v852
      %v1038 = vpack.c.b16 %v855, %v854
      %v1039 = vpack.c.b16 %v857, %v856
      %v1040 = vpack.c.b16 %v859, %v858
      %v1041 = vpack.c.b16 %v861, %v860
      %v1042 = vpack.c.b16 %v863, %v862
      %v1043 = vpack.c.b16 %v865, %v864
      %v1044 = vpack.c.b16 %v867, %v866
      %v1045 = vpack.c.b16 %v869, %v868
      %v1046 = vpack.c.b16 %v871, %v870
      %v1047 = vpack.c.b16 %v873, %v872
      %v1048 = vpack.c.b16 %v875, %v874
      %v1049 = vpack.c.b16 %v877, %v876
      %v1050 = vpack.c.b16 %v879, %v878
      %v1051 = vpack.c.b16 %v881, %v880
      %v1052 = vpack.c.b16 %v883, %v882
      %v1053 = vpack.c.b16 %v885, %v884
      %v1054 = vpack.c.b16 %v887, %v886
      %v1055 = vpack.c.b16 %v889, %v888
      %v1056 = vpack.c.b16 %v891, %v890
      %v1057 = vpack.c.b16 %v893, %v892
      %v1058 = vpack.c.b16 %v895, %v894
      %v1059 = vpack.c.b16 %v897, %v896
      %v1060 = vpack.c.b16 %v899, %v898
      %v1061 = vpack.c.b16 %v901, %v900
      %v1062 = vpack.c.b16 %v903, %v902
      %v1063 = vpack.c.b16 %v905, %v904
      %v1064 = vpack.c.b16 %v907, %v906
      %v1065 = vpack.c.b16 %v909, %v908
      %v1066 = vpack.c.b16 %v911, %v910
      %v1067 = vpack.c.b16 %v913, %v912
      %v1068 = vpack.c.b16 %v915, %v914
      %v1069 = vpack.c.b16 %v917, %v916
      %v1070 = vpack.c.b16 %v919, %v918
      %v1071 = vpack.c.b16 %v921, %v920
      %v1072 = vpack.c.b16 %v923, %v922
      %v1073 = vpack.c.b16 %v925, %v924
      %v1074 = vpack.c.b16 %v927, %v926
      %v1075 = vpack.c.b16 %v929, %v928
      %v1076 = vpack.c.b16 %v931, %v930
      %v1077 = vpack.c.b16 %v933, %v932
      %v1078 = vpack.c.b16 %v935, %v934
      %v1079 = vpack.c.b16 %v937, %v936
      %v1080 = vpack.c.b16 %v939, %v938
      %v1081 = vpack.c.b16 %v941, %v940
      %v1082 = vpack.c.b16 %v943, %v942
      %v1083 = vpack.c.b16 %v945, %v944
      %v1084 = vpack.c.b16 %v947, %v946
      %v1085 = vpack.c.b16 %v949, %v948
      %v1086 = vpack.c.b16 %v951, %v950
      %v1087 = vpack.c.b16 %v953, %v952
      %v1088 = vpack.c.b16 %v955, %v954
      %v1089 = vpack.c.b16 %v957, %v956
      %v1090 = vpack.c.b16 %v959, %v958
      %v1091 = vpack.c.b16 %v961, %v960
      %v1092 = vpack.c.b16 %v963, %v962
      %v1093 = vpack.c.b16 %v965, %v964
      %v1238 = vunpack.c.l.b16 %v431
      %v1239 = vunpack.c.l.b16 %v432
      %v1240 = vunpack.c.l.b16 %v433
      %v1241 = vunpack.c.l.b16 %v434
      %v1242 = vunpack.c.l.b16 %v435
      %v1243 = vunpack.c.l.b16 %v436
      %v1244 = vunpack.c.l.b16 %v437
      %v1245 = vunpack.c.l.b16 %v438
      %v1246 = vunpack.c.l.b16 %v439
      %v1247 = vunpack.c.l.b16 %v440
      %v1248 = vunpack.c.l.b16 %v441
      %v1249 = vunpack.c.l.b16 %v442
      %v1250 = vunpack.c.l.b16 %v443
      %v1251 = vunpack.c.l.b16 %v444
      %v1252 = vunpack.c.l.b16 %v445
      %v1253 = vunpack.c.l.b16 %v446
      %v1254 = vpack.c.b16 %v1239, %v1238
      %v1255 = vpack.c.b16 %v1241, %v1240
      %v1256 = vpack.c.b16 %v1243, %v1242
      %v1257 = vpack.c.b16 %v1245, %v1244
      %v1258 = vpack.c.b16 %v1247, %v1246
      %v1259 = vpack.c.b16 %v1249, %v1248
      %v1260 = vpack.c.b16 %v1251, %v1250
      %v1261 = vpack.c.b16 %v1253, %v1252
      %1270 = vmatprep.subr.bf16.mxu0 0
      %1271 = vmatpush1.bf16.msra.mxu0 %v1254
      %1272 = vmatprep.subr.bf16.mxu0 0
      %1273 = vmatpush1.bf16.msra.mxu0 %v1255
      %1274 = vmatprep.subr.bf16.mxu0 0
      %1275 = vmatpush1.bf16.msra.mxu0 %v1256
      %1276 = vmatprep.subr.bf16.mxu0 0
      %1277 = vmatpush1.bf16.msra.mxu0 %v1257
      %1278 = vmatprep.subr.bf16.mxu0 0
      %1279 = vmatpush1.bf16.msra.mxu0 %v1258
      %1280 = vmatprep.subr.bf16.mxu0 0
      %1281 = vmatpush1.bf16.msra.mxu0 %v1259
      %1282 = vmatprep.subr.bf16.mxu0 0
      %1283 = vmatpush1.bf16.msra.mxu0 %v1260
      %1284 = vmatprep.subr.bf16.mxu0 0
      %1285 = vmatpush1.bf16.msra.mxu0 %v1261
      %1286 = vmatprep.subr.bf16.mxu0 0
      %1287 = vmatpush1.bf16.msra.mxu0 0
      %1288 = vmatprep.subr.bf16.mxu0 0
      %1289 = vmatpush1.bf16.msra.mxu0 0
      %1290 = vmatprep.subr.bf16.mxu0 0
      %1291 = vmatpush1.bf16.msra.mxu0 0
      %1292 = vmatprep.subr.bf16.mxu0 0
      %1293 = vmatpush1.bf16.msra.mxu0 0
      %1294 = vmatprep.subr.bf16.mxu0 0
      %1295 = vmatpush1.bf16.msra.mxu0 0
      %1296 = vmatprep.subr.bf16.mxu0 0
      %1297 = vmatpush1.bf16.msra.mxu0 0
      %1298 = vmatprep.subr.bf16.mxu0 0
      %1299 = vmatpush1.bf16.msra.mxu0 0
      %1300 = vmatprep.subr.bf16.mxu0 0
      %1301 = vmatpush1.bf16.msra.mxu0 0
      %1302 = vmatprep.mubr.bf16.mxu0 0
      %1303 = vmatmul.mubr.bf16.gmra.mrb[0].mxu0 %v966
      %v1304 = vpop.f32.mrb[0].mxu0
      %v1305 = vadd.f32 %v452, %v1304
      %v1306 = vpop.f32.mrb[0].mxu0
      %v1307 = vpop.f32.mrb[0].mxu0
      %v1308 = vadd.f32 %v452, %v1307
      %v1309 = vpop.f32.mrb[0].mxu0
      %1310 = vmatprep.mubr.bf16.mxu0 0
      %1311 = vmatmul.mubr.bf16.gmra.mrb[0].mxu0 %v967
      %v1312 = vpop.f32.mrb[0].mxu0
      %v1313 = vadd.f32 %v452, %v1312
      %v1314 = vpop.f32.mrb[0].mxu0
      %v1315 = vpop.f32.mrb[0].mxu0
      %v1316 = vadd.f32 %v452, %v1315
      %v1317 = vpop.f32.mrb[0].mxu0
      %1318 = vmatprep.mubr.bf16.mxu0 0
      %1319 = vmatmul.mubr.bf16.gmra.mrb[0].mxu0 %v968
      %v1320 = vpop.f32.mrb[0].mxu0
      %v1321 = vadd.f32 %v452, %v1320
      %v1322 = vpop.f32.mrb[0].mxu0
      %v1323 = vpop.f32.mrb[0].mxu0
      %v1324 = vadd.f32 %v452, %v1323
      %v1325 = vpop.f32.mrb[0].mxu0
      %1326 = vmatprep.mubr.bf16.mxu0 0
      %1327 = vmatmul.mubr.bf16.gmra.mrb[0].mxu0 %v969
      %v1328 = vpop.f32.mrb[0].mxu0
      %v1329 = vadd.f32 %v452, %v1328
      %v1330 = vpop.f32.mrb[0].mxu0
      %v1331 = vpop.f32.mrb[0].mxu0
      %v1332 = vadd.f32 %v452, %v1331
      %v1333 = vpop.f32.mrb[0].mxu0
      %1334 = vmatprep.mubr.bf16.mxu0 0
      %1335 = vmatmul.mubr.bf16.gmra.mrb[0].mxu0 %v970
      %v1336 = vpop.f32.mrb[0].mxu0
      %v1337 = vadd.f32 %v452, %v1336
      %v1338 = vpop.f32.mrb[0].mxu0
      %v1339 = vpop.f32.mrb[0].mxu0
      %v1340 = vadd.f32 %v452, %v1339
      %v1341 = vpop.f32.mrb[0].mxu0
      %1342 = vmatprep.mubr.bf16.mxu0 0
      %1343 = vmatmul.mubr.bf16.gmra.mrb[0].mxu0 %v971
      %v1344 = vpop.f32.mrb[0].mxu0
      %v1345 = vadd.f32 %v452, %v1344
      %v1346 = vpop.f32.mrb[0].mxu0
      %v1347 = vpop.f32.mrb[0].mxu0
      %v1348 = vadd.f32 %v452, %v1347
      %v1349 = vpop.f32.mrb[0].mxu0
      %1350 = vmatprep.mubr.bf16.mxu0 0
      %1351 = vmatmul.mubr.bf16.gmra.mrb[0].mxu0 %v972
      %v1352 = vpop.f32.mrb[0].mxu0
      %v1353 = vadd.f32 %v452, %v1352
      %v1354 = vpop.f32.mrb[0].mxu0
      %v1355 = vpop.f32.mrb[0].mxu0
      %v1356 = vadd.f32 %v452, %v1355
      %v1357 = vpop.f32.mrb[0].mxu0
      %1358 = vmatprep.mubr.bf16.mxu0 0
      %1359 = vmatmul.mubr.bf16.gmra.mrb[0].mxu0 %v973
      %v1360 = vpop.f32.mrb[0].mxu0
      %v1361 = vadd.f32 %v452, %v1360
      %v1362 = vpop.f32.mrb[0].mxu0
      %v1363 = vpop.f32.mrb[0].mxu0
      %v1364 = vadd.f32 %v452, %v1363
      %v1365 = vpop.f32.mrb[0].mxu0
      %1366 = vmatprep.mubr.bf16.mxu0 0
      %1367 = vmatmul.mubr.bf16.gmra.mrb[0].mxu0 %v974
      %v1368 = vpop.f32.mrb[0].mxu0
      %v1369 = vadd.f32 %v452, %v1368
      %v1370 = vpop.f32.mrb[0].mxu0
      %v1371 = vpop.f32.mrb[0].mxu0
      %v1372 = vadd.f32 %v452, %v1371
      %v1373 = vpop.f32.mrb[0].mxu0
      %1374 = vmatprep.mubr.bf16.mxu0 0
      %1375 = vmatmul.mubr.bf16.gmra.mrb[0].mxu0 %v975
      %v1376 = vpop.f32.mrb[0].mxu0
      %v1377 = vadd.f32 %v452, %v1376
      %v1378 = vpop.f32.mrb[0].mxu0
      %v1379 = vpop.f32.mrb[0].mxu0
      %v1380 = vadd.f32 %v452, %v1379
      %v1381 = vpop.f32.mrb[0].mxu0
      %1382 = vmatprep.mubr.bf16.mxu0 0
      %1383 = vmatmul.mubr.bf16.gmra.mrb[0].mxu0 %v976
      %v1384 = vpop.f32.mrb[0].mxu0
      %v1385 = vadd.f32 %v452, %v1384
      %v1386 = vpop.f32.mrb[0].mxu0
      %v1387 = vpop.f32.mrb[0].mxu0
      %v1388 = vadd.f32 %v452, %v1387
      %v1389 = vpop.f32.mrb[0].mxu0
      %1390 = vmatprep.mubr.bf16.mxu0 0
      %1391 = vmatmul.mubr.bf16.gmra.mrb[0].mxu0 %v977
      %v1392 = vpop.f32.mrb[0].mxu0
      %v1393 = vadd.f32 %v452, %v1392
      %v1394 = vpop.f32.mrb[0].mxu0
      %v1395 = vpop.f32.mrb[0].mxu0
      %v1396 = vadd.f32 %v452, %v1395
      %v1397 = vpop.f32.mrb[0].mxu0
      %1398 = vmatprep.mubr.bf16.mxu0 0
      %1399 = vmatmul.mubr.bf16.gmra.mrb[0].mxu0 %v978
      %v1400 = vpop.f32.mrb[0].mxu0
      %v1401 = vadd.f32 %v452, %v1400
      %v1402 = vpop.f32.mrb[0].mxu0
      %v1403 = vpop.f32.mrb[0].mxu0
      %v1404 = vadd.f32 %v452, %v1403
      %v1405 = vpop.f32.mrb[0].mxu0
      %1406 = vmatprep.mubr.bf16.mxu0 0
      %1407 = vmatmul.mubr.bf16.gmra.mrb[0].mxu0 %v979
      %v1408 = vpop.f32.mrb[0].mxu0
      %v1409 = vadd.f32 %v452, %v1408
      %v1410 = vpop.f32.mrb[0].mxu0
      %v1411 = vpop.f32.mrb[0].mxu0
      %v1412 = vadd.f32 %v452, %v1411
      %v1413 = vpop.f32.mrb[0].mxu0
      %1414 = vmatprep.mubr.bf16.mxu0 0
      %1415 = vmatmul.mubr.bf16.gmra.mrb[0].mxu0 %v980
      %v1416 = vpop.f32.mrb[0].mxu0
      %v1417 = vadd.f32 %v452, %v1416
      %v1418 = vpop.f32.mrb[0].mxu0
      %v1419 = vpop.f32.mrb[0].mxu0
      %v1420 = vadd.f32 %v452, %v1419
      %v1421 = vpop.f32.mrb[0].mxu0
      %1422 = vmatprep.mubr.bf16.mxu0 0
      %1423 = vmatmul.mubr.bf16.gmra.mrb[0].mxu0 %v981
      %v1424 = vpop.f32.mrb[0].mxu0
      %v1425 = vadd.f32 %v452, %v1424
      %v1426 = vpop.f32.mrb[0].mxu0
      %v1427 = vpop.f32.mrb[0].mxu0
      %v1428 = vadd.f32 %v452, %v1427
      %v1429 = vpop.f32.mrb[0].mxu0
      %1430 = vmatprep.mubr.bf16.mxu0 0
      %1431 = vmatmul.mubr.bf16.gmra.mrb[0].mxu0 %v982
      %v1432 = vpop.f32.mrb[0].mxu0
      %v1433 = vadd.f32 %v452, %v1432
      %v1434 = vpop.f32.mrb[0].mxu0
      %v1435 = vpop.f32.mrb[0].mxu0
      %v1436 = vadd.f32 %v452, %v1435
      %v1437 = vpop.f32.mrb[0].mxu0
      %1438 = vmatprep.mubr.bf16.mxu0 0
      %1439 = vmatmul.mubr.bf16.gmra.mrb[0].mxu0 %v983
      %v1440 = vpop.f32.mrb[0].mxu0
      %v1441 = vadd.f32 %v452, %v1440
      %v1442 = vpop.f32.mrb[0].mxu0
      %v1443 = vpop.f32.mrb[0].mxu0
      %v1444 = vadd.f32 %v452, %v1443
      %v1445 = vpop.f32.mrb[0].mxu0
      %1446 = vmatprep.mubr.bf16.mxu0 0
      %1447 = vmatmul.mubr.bf16.gmra.mrb[0].mxu0 %v984
      %v1448 = vpop.f32.mrb[0].mxu0
      %v1449 = vadd.f32 %v452, %v1448
      %v1450 = vpop.f32.mrb[0].mxu0
      %v1451 = vpop.f32.mrb[0].mxu0
      %v1452 = vadd.f32 %v452, %v1451
      %v1453 = vpop.f32.mrb[0].mxu0
      %1454 = vmatprep.mubr.bf16.mxu0 0
      %1455 = vmatmul.mubr.bf16.gmra.mrb[0].mxu0 %v985
      %v1456 = vpop.f32.mrb[0].mxu0
      %v1457 = vadd.f32 %v452, %v1456
      %v1458 = vpop.f32.mrb[0].mxu0
      %v1459 = vpop.f32.mrb[0].mxu0
      %v1460 = vadd.f32 %v452, %v1459
      %v1461 = vpop.f32.mrb[0].mxu0
      %1462 = vmatprep.mubr.bf16.mxu0 0
      %1463 = vmatmul.mubr.bf16.gmra.mrb[0].mxu0 %v986
      %v1464 = vpop.f32.mrb[0].mxu0
      %v1465 = vadd.f32 %v452, %v1464
      %v1466 = vpop.f32.mrb[0].mxu0
      %v1467 = vpop.f32.mrb[0].mxu0
      %v1468 = vadd.f32 %v452, %v1467
      %v1469 = vpop.f32.mrb[0].mxu0
      %1470 = vmatprep.mubr.bf16.mxu0 0
      %1471 = vmatmul.mubr.bf16.gmra.mrb[0].mxu0 %v987
      %v1472 = vpop.f32.mrb[0].mxu0
      %v1473 = vadd.f32 %v452, %v1472
      %v1474 = vpop.f32.mrb[0].mxu0
      %v1475 = vpop.f32.mrb[0].mxu0
      %v1476 = vadd.f32 %v452, %v1475
      %v1477 = vpop.f32.mrb[0].mxu0
      %1478 = vmatprep.mubr.bf16.mxu0 0
      %1479 = vmatmul.mubr.bf16.gmra.mrb[0].mxu0 %v988
      %v1480 = vpop.f32.mrb[0].mxu0
      %v1481 = vadd.f32 %v452, %v1480
      %v1482 = vpop.f32.mrb[0].mxu0
      %v1483 = vpop.f32.mrb[0].mxu0
      %v1484 = vadd.f32 %v452, %v1483
      %v1485 = vpop.f32.mrb[0].mxu0
      %1486 = vmatprep.mubr.bf16.mxu0 0
      %1487 = vmatmul.mubr.bf16.gmra.mrb[0].mxu0 %v989
      %v1488 = vpop.f32.mrb[0].mxu0
      %v1489 = vadd.f32 %v452, %v1488
      %v1490 = vpop.f32.mrb[0].mxu0
      %v1491 = vpop.f32.mrb[0].mxu0
      %v1492 = vadd.f32 %v452, %v1491
      %v1493 = vpop.f32.mrb[0].mxu0
      %1494 = vmatprep.mubr.bf16.mxu0 0
      %1495 = vmatmul.mubr.bf16.gmra.mrb[0].mxu0 %v990
      %v1496 = vpop.f32.mrb[0].mxu0
      %v1497 = vadd.f32 %v452, %v1496
      %v1498 = vpop.f32.mrb[0].mxu0
      %v1499 = vpop.f32.mrb[0].mxu0
      %v1500 = vadd.f32 %v452, %v1499
      %v1501 = vpop.f32.mrb[0].mxu0
      %1502 = vmatprep.mubr.bf16.mxu0 0
      %1503 = vmatmul.mubr.bf16.gmra.mrb[0].mxu0 %v991
      %v1504 = vpop.f32.mrb[0].mxu0
      %v1505 = vadd.f32 %v452, %v1504
      %v1506 = vpop.f32.mrb[0].mxu0
      %v1507 = vpop.f32.mrb[0].mxu0
      %v1508 = vadd.f32 %v452, %v1507
      %v1509 = vpop.f32.mrb[0].mxu0
      %1510 = vmatprep.mubr.bf16.mxu0 0
      %1511 = vmatmul.mubr.bf16.gmra.mrb[0].mxu0 %v992
      %v1512 = vpop.f32.mrb[0].mxu0
      %v1513 = vadd.f32 %v452, %v1512
      %v1514 = vpop.f32.mrb[0].mxu0
      %v1515 = vpop.f32.mrb[0].mxu0
      %v1516 = vadd.f32 %v452, %v1515
      %v1517 = vpop.f32.mrb[0].mxu0
      %1518 = vmatprep.mubr.bf16.mxu0 0
      %1519 = vmatmul.mubr.bf16.gmra.mrb[0].mxu0 %v993
      %v1520 = vpop.f32.mrb[0].mxu0
      %v1521 = vadd.f32 %v452, %v1520
      %v1522 = vpop.f32.mrb[0].mxu0
      %v1523 = vpop.f32.mrb[0].mxu0
      %v1524 = vadd.f32 %v452, %v1523
      %v1525 = vpop.f32.mrb[0].mxu0
      %1526 = vmatprep.mubr.bf16.mxu0 0
      %1527 = vmatmul.mubr.bf16.gmra.mrb[0].mxu0 %v994
      %v1528 = vpop.f32.mrb[0].mxu0
      %v1529 = vadd.f32 %v452, %v1528
      %v1530 = vpop.f32.mrb[0].mxu0
      %v1531 = vpop.f32.mrb[0].mxu0
      %v1532 = vadd.f32 %v452, %v1531
      %v1533 = vpop.f32.mrb[0].mxu0
      %1534 = vmatprep.mubr.bf16.mxu0 0
      %1535 = vmatmul.mubr.bf16.gmra.mrb[0].mxu0 %v995
      %v1536 = vpop.f32.mrb[0].mxu0
      %v1537 = vadd.f32 %v452, %v1536
      %v1538 = vpop.f32.mrb[0].mxu0
      %v1539 = vpop.f32.mrb[0].mxu0
      %v1540 = vadd.f32 %v452, %v1539
      %v1541 = vpop.f32.mrb[0].mxu0
      %1542 = vmatprep.mubr.bf16.mxu0 0
      %1543 = vmatmul.mubr.bf16.gmra.mrb[0].mxu0 %v996
      %v1544 = vpop.f32.mrb[0].mxu0
      %v1545 = vadd.f32 %v452, %v1544
      %v1546 = vpop.f32.mrb[0].mxu0
      %v1547 = vpop.f32.mrb[0].mxu0
      %v1548 = vadd.f32 %v452, %v1547
      %v1549 = vpop.f32.mrb[0].mxu0
      %1550 = vmatprep.mubr.bf16.mxu0 0
      %1551 = vmatmul.mubr.bf16.gmra.mrb[0].mxu0 %v997
      %v1552 = vpop.f32.mrb[0].mxu0
      %v1553 = vadd.f32 %v452, %v1552
      %v1554 = vpop.f32.mrb[0].mxu0
      %v1555 = vpop.f32.mrb[0].mxu0
      %v1556 = vadd.f32 %v452, %v1555
      %v1557 = vpop.f32.mrb[0].mxu0
      %1558 = vmatprep.mubr.bf16.mxu0 0
      %1559 = vmatmul.mubr.bf16.gmra.mrb[0].mxu0 %v998
      %v1560 = vpop.f32.mrb[0].mxu0
      %v1561 = vadd.f32 %v452, %v1560
      %v1562 = vpop.f32.mrb[0].mxu0
      %v1563 = vpop.f32.mrb[0].mxu0
      %v1564 = vadd.f32 %v452, %v1563
      %v1565 = vpop.f32.mrb[0].mxu0
      %1566 = vmatprep.mubr.bf16.mxu0 0
      %1567 = vmatmul.mubr.bf16.gmra.mrb[0].mxu0 %v999
      %v1568 = vpop.f32.mrb[0].mxu0
      %v1569 = vadd.f32 %v452, %v1568
      %v1570 = vpop.f32.mrb[0].mxu0
      %v1571 = vpop.f32.mrb[0].mxu0
      %v1572 = vadd.f32 %v452, %v1571
      %v1573 = vpop.f32.mrb[0].mxu0
      %1574 = vmatprep.mubr.bf16.mxu0 0
      %1575 = vmatmul.mubr.bf16.gmra.mrb[0].mxu0 %v1000
      %v1576 = vpop.f32.mrb[0].mxu0
      %v1577 = vadd.f32 %v452, %v1576
      %v1578 = vpop.f32.mrb[0].mxu0
      %v1579 = vpop.f32.mrb[0].mxu0
      %v1580 = vadd.f32 %v452, %v1579
      %v1581 = vpop.f32.mrb[0].mxu0
      %1582 = vmatprep.mubr.bf16.mxu0 0
      %1583 = vmatmul.mubr.bf16.gmra.mrb[0].mxu0 %v1001
      %v1584 = vpop.f32.mrb[0].mxu0
      %v1585 = vadd.f32 %v452, %v1584
      %v1586 = vpop.f32.mrb[0].mxu0
      %v1587 = vpop.f32.mrb[0].mxu0
      %v1588 = vadd.f32 %v452, %v1587
      %v1589 = vpop.f32.mrb[0].mxu0
      %1590 = vmatprep.mubr.bf16.mxu0 0
      %1591 = vmatmul.mubr.bf16.gmra.mrb[0].mxu0 %v1002
      %v1592 = vpop.f32.mrb[0].mxu0
      %v1593 = vadd.f32 %v452, %v1592
      %v1594 = vpop.f32.mrb[0].mxu0
      %v1595 = vpop.f32.mrb[0].mxu0
      %v1596 = vadd.f32 %v452, %v1595
      %v1597 = vpop.f32.mrb[0].mxu0
      %1598 = vmatprep.mubr.bf16.mxu0 0
      %1599 = vmatmul.mubr.bf16.gmra.mrb[0].mxu0 %v1003
      %v1600 = vpop.f32.mrb[0].mxu0
      %v1601 = vadd.f32 %v452, %v1600
      %v1602 = vpop.f32.mrb[0].mxu0
      %v1603 = vpop.f32.mrb[0].mxu0
      %v1604 = vadd.f32 %v452, %v1603
      %v1605 = vpop.f32.mrb[0].mxu0
      %1606 = vmatprep.mubr.bf16.mxu0 0
      %1607 = vmatmul.mubr.bf16.gmra.mrb[0].mxu0 %v1004
      %v1608 = vpop.f32.mrb[0].mxu0
      %v1609 = vadd.f32 %v452, %v1608
      %v1610 = vpop.f32.mrb[0].mxu0
      %v1611 = vpop.f32.mrb[0].mxu0
      %v1612 = vadd.f32 %v452, %v1611
      %v1613 = vpop.f32.mrb[0].mxu0
      %1614 = vmatprep.mubr.bf16.mxu0 0
      %1615 = vmatmul.mubr.bf16.gmra.mrb[0].mxu0 %v1005
      %v1616 = vpop.f32.mrb[0].mxu0
      %v1617 = vadd.f32 %v452, %v1616
      %v1618 = vpop.f32.mrb[0].mxu0
      %v1619 = vpop.f32.mrb[0].mxu0
      %v1620 = vadd.f32 %v452, %v1619
      %v1621 = vpop.f32.mrb[0].mxu0
      %1622 = vmatprep.mubr.bf16.mxu0 0
      %1623 = vmatmul.mubr.bf16.gmra.mrb[0].mxu0 %v1006
      %v1624 = vpop.f32.mrb[0].mxu0
      %v1625 = vadd.f32 %v452, %v1624
      %v1626 = vpop.f32.mrb[0].mxu0
      %v1627 = vpop.f32.mrb[0].mxu0
      %v1628 = vadd.f32 %v452, %v1627
      %v1629 = vpop.f32.mrb[0].mxu0
      %1630 = vmatprep.mubr.bf16.mxu0 0
      %1631 = vmatmul.mubr.bf16.gmra.mrb[0].mxu0 %v1007
      %v1632 = vpop.f32.mrb[0].mxu0
      %v1633 = vadd.f32 %v452, %v1632
      %v1634 = vpop.f32.mrb[0].mxu0
      %v1635 = vpop.f32.mrb[0].mxu0
      %v1636 = vadd.f32 %v452, %v1635
      %v1637 = vpop.f32.mrb[0].mxu0
      %1638 = vmatprep.mubr.bf16.mxu0 0
      %1639 = vmatmul.mubr.bf16.gmra.mrb[0].mxu0 %v1008
      %v1640 = vpop.f32.mrb[0].mxu0
      %v1641 = vadd.f32 %v452, %v1640
      %v1642 = vpop.f32.mrb[0].mxu0
      %v1643 = vpop.f32.mrb[0].mxu0
      %v1644 = vadd.f32 %v452, %v1643
      %v1645 = vpop.f32.mrb[0].mxu0
      %1646 = vmatprep.mubr.bf16.mxu0 0
      %1647 = vmatmul.mubr.bf16.gmra.mrb[0].mxu0 %v1009
      %v1648 = vpop.f32.mrb[0].mxu0
      %v1649 = vadd.f32 %v452, %v1648
      %v1650 = vpop.f32.mrb[0].mxu0
      %v1651 = vpop.f32.mrb[0].mxu0
      %v1652 = vadd.f32 %v452, %v1651
      %v1653 = vpop.f32.mrb[0].mxu0
      %1654 = vmatprep.mubr.bf16.mxu0 0
      %1655 = vmatmul.mubr.bf16.gmra.mrb[0].mxu0 %v1010
      %v1656 = vpop.f32.mrb[0].mxu0
      %v1657 = vadd.f32 %v452, %v1656
      %v1658 = vpop.f32.mrb[0].mxu0
      %v1659 = vpop.f32.mrb[0].mxu0
      %v1660 = vadd.f32 %v452, %v1659
      %v1661 = vpop.f32.mrb[0].mxu0
      %1662 = vmatprep.mubr.bf16.mxu0 0
      %1663 = vmatmul.mubr.bf16.gmra.mrb[0].mxu0 %v1011
      %v1664 = vpop.f32.mrb[0].mxu0
      %v1665 = vadd.f32 %v452, %v1664
      %v1666 = vpop.f32.mrb[0].mxu0
      %v1667 = vpop.f32.mrb[0].mxu0
      %v1668 = vadd.f32 %v452, %v1667
      %v1669 = vpop.f32.mrb[0].mxu0
      %1670 = vmatprep.mubr.bf16.mxu0 0
      %1671 = vmatmul.mubr.bf16.gmra.mrb[0].mxu0 %v1012
      %v1672 = vpop.f32.mrb[0].mxu0
      %v1673 = vadd.f32 %v452, %v1672
      %v1674 = vpop.f32.mrb[0].mxu0
      %v1675 = vpop.f32.mrb[0].mxu0
      %v1676 = vadd.f32 %v452, %v1675
      %v1677 = vpop.f32.mrb[0].mxu0
      %1678 = vmatprep.mubr.bf16.mxu0 0
      %1679 = vmatmul.mubr.bf16.gmra.mrb[0].mxu0 %v1013
      %v1680 = vpop.f32.mrb[0].mxu0
      %v1681 = vadd.f32 %v452, %v1680
      %v1682 = vpop.f32.mrb[0].mxu0
      %v1683 = vpop.f32.mrb[0].mxu0
      %v1684 = vadd.f32 %v452, %v1683
      %v1685 = vpop.f32.mrb[0].mxu0
      %1686 = vmatprep.mubr.bf16.mxu0 0
      %1687 = vmatmul.mubr.bf16.gmra.mrb[0].mxu0 %v1014
      %v1688 = vpop.f32.mrb[0].mxu0
      %v1689 = vadd.f32 %v452, %v1688
      %v1690 = vpop.f32.mrb[0].mxu0
      %v1691 = vpop.f32.mrb[0].mxu0
      %v1692 = vadd.f32 %v452, %v1691
      %v1693 = vpop.f32.mrb[0].mxu0
      %1694 = vmatprep.mubr.bf16.mxu0 0
      %1695 = vmatmul.mubr.bf16.gmra.mrb[0].mxu0 %v1015
      %v1696 = vpop.f32.mrb[0].mxu0
      %v1697 = vadd.f32 %v452, %v1696
      %v1698 = vpop.f32.mrb[0].mxu0
      %v1699 = vpop.f32.mrb[0].mxu0
      %v1700 = vadd.f32 %v452, %v1699
      %v1701 = vpop.f32.mrb[0].mxu0
      %1702 = vmatprep.mubr.bf16.mxu0 0
      %1703 = vmatmul.mubr.bf16.gmra.mrb[0].mxu0 %v1016
      %v1704 = vpop.f32.mrb[0].mxu0
      %v1705 = vadd.f32 %v452, %v1704
      %v1706 = vpop.f32.mrb[0].mxu0
      %v1707 = vpop.f32.mrb[0].mxu0
      %v1708 = vadd.f32 %v452, %v1707
      %v1709 = vpop.f32.mrb[0].mxu0
      %1710 = vmatprep.mubr.bf16.mxu0 0
      %1711 = vmatmul.mubr.bf16.gmra.mrb[0].mxu0 %v1017
      %v1712 = vpop.f32.mrb[0].mxu0
      %v1713 = vadd.f32 %v452, %v1712
      %v1714 = vpop.f32.mrb[0].mxu0
      %v1715 = vpop.f32.mrb[0].mxu0
      %v1716 = vadd.f32 %v452, %v1715
      %v1717 = vpop.f32.mrb[0].mxu0
      %1718 = vmatprep.mubr.bf16.mxu0 0
      %1719 = vmatmul.mubr.bf16.gmra.mrb[0].mxu0 %v1018
      %v1720 = vpop.f32.mrb[0].mxu0
      %v1721 = vadd.f32 %v452, %v1720
      %v1722 = vpop.f32.mrb[0].mxu0
      %v1723 = vpop.f32.mrb[0].mxu0
      %v1724 = vadd.f32 %v452, %v1723
      %v1725 = vpop.f32.mrb[0].mxu0
      %1726 = vmatprep.mubr.bf16.mxu0 0
      %1727 = vmatmul.mubr.bf16.gmra.mrb[0].mxu0 %v1019
      %v1728 = vpop.f32.mrb[0].mxu0
      %v1729 = vadd.f32 %v452, %v1728
      %v1730 = vpop.f32.mrb[0].mxu0
      %v1731 = vpop.f32.mrb[0].mxu0
      %v1732 = vadd.f32 %v452, %v1731
      %v1733 = vpop.f32.mrb[0].mxu0
      %1734 = vmatprep.mubr.bf16.mxu0 0
      %1735 = vmatmul.mubr.bf16.gmra.mrb[0].mxu0 %v1020
      %v1736 = vpop.f32.mrb[0].mxu0
      %v1737 = vadd.f32 %v452, %v1736
      %v1738 = vpop.f32.mrb[0].mxu0
      %v1739 = vpop.f32.mrb[0].mxu0
      %v1740 = vadd.f32 %v452, %v1739
      %v1741 = vpop.f32.mrb[0].mxu0
      %1742 = vmatprep.mubr.bf16.mxu0 0
      %1743 = vmatmul.mubr.bf16.gmra.mrb[0].mxu0 %v1021
      %v1744 = vpop.f32.mrb[0].mxu0
      %v1745 = vadd.f32 %v452, %v1744
      %v1746 = vpop.f32.mrb[0].mxu0
      %v1747 = vpop.f32.mrb[0].mxu0
      %v1748 = vadd.f32 %v452, %v1747
      %v1749 = vpop.f32.mrb[0].mxu0
      %1750 = vmatprep.mubr.bf16.mxu0 0
      %1751 = vmatmul.mubr.bf16.gmra.mrb[0].mxu0 %v1022
      %v1752 = vpop.f32.mrb[0].mxu0
      %v1753 = vadd.f32 %v452, %v1752
      %v1754 = vpop.f32.mrb[0].mxu0
      %v1755 = vpop.f32.mrb[0].mxu0
      %v1756 = vadd.f32 %v452, %v1755
      %v1757 = vpop.f32.mrb[0].mxu0
      %1758 = vmatprep.mubr.bf16.mxu0 0
      %1759 = vmatmul.mubr.bf16.gmra.mrb[0].mxu0 %v1023
      %v1760 = vpop.f32.mrb[0].mxu0
      %v1761 = vadd.f32 %v452, %v1760
      %v1762 = vpop.f32.mrb[0].mxu0
      %v1763 = vpop.f32.mrb[0].mxu0
      %v1764 = vadd.f32 %v452, %v1763
      %v1765 = vpop.f32.mrb[0].mxu0
      %1766 = vmatprep.mubr.bf16.mxu0 0
      %1767 = vmatmul.mubr.bf16.gmra.mrb[0].mxu0 %v1024
      %v1768 = vpop.f32.mrb[0].mxu0
      %v1769 = vadd.f32 %v452, %v1768
      %v1770 = vpop.f32.mrb[0].mxu0
      %v1771 = vpop.f32.mrb[0].mxu0
      %v1772 = vadd.f32 %v452, %v1771
      %v1773 = vpop.f32.mrb[0].mxu0
      %1774 = vmatprep.mubr.bf16.mxu0 0
      %1775 = vmatmul.mubr.bf16.gmra.mrb[0].mxu0 %v1025
      %v1776 = vpop.f32.mrb[0].mxu0
      %v1777 = vadd.f32 %v452, %v1776
      %v1778 = vpop.f32.mrb[0].mxu0
      %v1779 = vpop.f32.mrb[0].mxu0
      %v1780 = vadd.f32 %v452, %v1779
      %v1781 = vpop.f32.mrb[0].mxu0
      %1782 = vmatprep.mubr.bf16.mxu0 0
      %1783 = vmatmul.mubr.bf16.gmra.mrb[0].mxu0 %v1026
      %v1784 = vpop.f32.mrb[0].mxu0
      %v1785 = vadd.f32 %v452, %v1784
      %v1786 = vpop.f32.mrb[0].mxu0
      %v1787 = vpop.f32.mrb[0].mxu0
      %v1788 = vadd.f32 %v452, %v1787
      %v1789 = vpop.f32.mrb[0].mxu0
      %1790 = vmatprep.mubr.bf16.mxu0 0
      %1791 = vmatmul.mubr.bf16.gmra.mrb[0].mxu0 %v1027
      %v1792 = vpop.f32.mrb[0].mxu0
      %v1793 = vadd.f32 %v452, %v1792
      %v1794 = vpop.f32.mrb[0].mxu0
      %v1795 = vpop.f32.mrb[0].mxu0
      %v1796 = vadd.f32 %v452, %v1795
      %v1797 = vpop.f32.mrb[0].mxu0
      %1798 = vmatprep.mubr.bf16.mxu0 0
      %1799 = vmatmul.mubr.bf16.gmra.mrb[0].mxu0 %v1028
      %v1800 = vpop.f32.mrb[0].mxu0
      %v1801 = vadd.f32 %v452, %v1800
      %v1802 = vpop.f32.mrb[0].mxu0
      %v1803 = vpop.f32.mrb[0].mxu0
      %v1804 = vadd.f32 %v452, %v1803
      %v1805 = vpop.f32.mrb[0].mxu0
      %1806 = vmatprep.mubr.bf16.mxu0 0
      %1807 = vmatmul.mubr.bf16.gmra.mrb[0].mxu0 %v1029
      %v1808 = vpop.f32.mrb[0].mxu0
      %v1809 = vadd.f32 %v452, %v1808
      %v1810 = vpop.f32.mrb[0].mxu0
      %v1811 = vpop.f32.mrb[0].mxu0
      %v1812 = vadd.f32 %v452, %v1811
      %v1813 = vpop.f32.mrb[0].mxu0
      %1814 = vmatprep.mubr.bf16.mxu0 0
      %1815 = vmatmul.mubr.bf16.gmra.mrb[0].mxu0 %v1030
      %v1816 = vpop.f32.mrb[0].mxu0
      %v1817 = vadd.f32 %v452, %v1816
      %v1818 = vpop.f32.mrb[0].mxu0
      %v1819 = vpop.f32.mrb[0].mxu0
      %v1820 = vadd.f32 %v452, %v1819
      %v1821 = vpop.f32.mrb[0].mxu0
      %1822 = vmatprep.mubr.bf16.mxu0 0
      %1823 = vmatmul.mubr.bf16.gmra.mrb[0].mxu0 %v1031
      %v1824 = vpop.f32.mrb[0].mxu0
      %v1825 = vadd.f32 %v452, %v1824
      %v1826 = vpop.f32.mrb[0].mxu0
      %v1827 = vpop.f32.mrb[0].mxu0
      %v1828 = vadd.f32 %v452, %v1827
      %v1829 = vpop.f32.mrb[0].mxu0
      %1830 = vmatprep.mubr.bf16.mxu0 0
      %1831 = vmatmul.mubr.bf16.gmra.mrb[0].mxu0 %v1032
      %v1832 = vpop.f32.mrb[0].mxu0
      %v1833 = vadd.f32 %v452, %v1832
      %v1834 = vpop.f32.mrb[0].mxu0
      %v1835 = vpop.f32.mrb[0].mxu0
      %v1836 = vadd.f32 %v452, %v1835
      %v1837 = vpop.f32.mrb[0].mxu0
      %1838 = vmatprep.mubr.bf16.mxu0 0
      %1839 = vmatmul.mubr.bf16.gmra.mrb[0].mxu0 %v1033
      %v1840 = vpop.f32.mrb[0].mxu0
      %v1841 = vadd.f32 %v452, %v1840
      %v1842 = vpop.f32.mrb[0].mxu0
      %v1843 = vpop.f32.mrb[0].mxu0
      %v1844 = vadd.f32 %v452, %v1843
      %v1845 = vpop.f32.mrb[0].mxu0
      %1846 = vmatprep.mubr.bf16.mxu0 0
      %1847 = vmatmul.mubr.bf16.gmra.mrb[0].mxu0 %v1034
      %v1848 = vpop.f32.mrb[0].mxu0
      %v1849 = vadd.f32 %v452, %v1848
      %v1850 = vpop.f32.mrb[0].mxu0
      %v1851 = vpop.f32.mrb[0].mxu0
      %v1852 = vadd.f32 %v452, %v1851
      %v1853 = vpop.f32.mrb[0].mxu0
      %1854 = vmatprep.mubr.bf16.mxu0 0
      %1855 = vmatmul.mubr.bf16.gmra.mrb[0].mxu0 %v1035
      %v1856 = vpop.f32.mrb[0].mxu0
      %v1857 = vadd.f32 %v452, %v1856
      %v1858 = vpop.f32.mrb[0].mxu0
      %v1859 = vpop.f32.mrb[0].mxu0
      %v1860 = vadd.f32 %v452, %v1859
      %v1861 = vpop.f32.mrb[0].mxu0
      %1862 = vmatprep.mubr.bf16.mxu0 0
      %1863 = vmatmul.mubr.bf16.gmra.mrb[0].mxu0 %v1036
      %v1864 = vpop.f32.mrb[0].mxu0
      %v1865 = vadd.f32 %v452, %v1864
      %v1866 = vpop.f32.mrb[0].mxu0
      %v1867 = vpop.f32.mrb[0].mxu0
      %v1868 = vadd.f32 %v452, %v1867
      %v1869 = vpop.f32.mrb[0].mxu0
      %1870 = vmatprep.mubr.bf16.mxu0 0
      %1871 = vmatmul.mubr.bf16.gmra.mrb[0].mxu0 %v1037
      %v1872 = vpop.f32.mrb[0].mxu0
      %v1873 = vadd.f32 %v452, %v1872
      %v1874 = vpop.f32.mrb[0].mxu0
      %v1875 = vpop.f32.mrb[0].mxu0
      %v1876 = vadd.f32 %v452, %v1875
      %v1877 = vpop.f32.mrb[0].mxu0
      %1878 = vmatprep.mubr.bf16.mxu0 0
      %1879 = vmatmul.mubr.bf16.gmra.mrb[0].mxu0 %v1038
      %v1880 = vpop.f32.mrb[0].mxu0
      %v1881 = vadd.f32 %v452, %v1880
      %v1882 = vpop.f32.mrb[0].mxu0
      %v1883 = vpop.f32.mrb[0].mxu0
      %v1884 = vadd.f32 %v452, %v1883
      %v1885 = vpop.f32.mrb[0].mxu0
      %1886 = vmatprep.mubr.bf16.mxu0 0
      %1887 = vmatmul.mubr.bf16.gmra.mrb[0].mxu0 %v1039
      %v1888 = vpop.f32.mrb[0].mxu0
      %v1889 = vadd.f32 %v452, %v1888
      %v1890 = vpop.f32.mrb[0].mxu0
      %v1891 = vpop.f32.mrb[0].mxu0
      %v1892 = vadd.f32 %v452, %v1891
      %v1893 = vpop.f32.mrb[0].mxu0
      %1894 = vmatprep.mubr.bf16.mxu0 0
      %1895 = vmatmul.mubr.bf16.gmra.mrb[0].mxu0 %v1040
      %v1896 = vpop.f32.mrb[0].mxu0
      %v1897 = vadd.f32 %v452, %v1896
      %v1898 = vpop.f32.mrb[0].mxu0
      %v1899 = vpop.f32.mrb[0].mxu0
      %v1900 = vadd.f32 %v452, %v1899
      %v1901 = vpop.f32.mrb[0].mxu0
      %1902 = vmatprep.mubr.bf16.mxu0 0
      %1903 = vmatmul.mubr.bf16.gmra.mrb[0].mxu0 %v1041
      %v1904 = vpop.f32.mrb[0].mxu0
      %v1905 = vadd.f32 %v452, %v1904
      %v1906 = vpop.f32.mrb[0].mxu0
      %v1907 = vpop.f32.mrb[0].mxu0
      %v1908 = vadd.f32 %v452, %v1907
      %v1909 = vpop.f32.mrb[0].mxu0
      %1910 = vmatprep.mubr.bf16.mxu0 0
      %1911 = vmatmul.mubr.bf16.gmra.mrb[0].mxu0 %v1042
      %v1912 = vpop.f32.mrb[0].mxu0
      %v1913 = vadd.f32 %v452, %v1912
      %v1914 = vpop.f32.mrb[0].mxu0
      %v1915 = vpop.f32.mrb[0].mxu0
      %v1916 = vadd.f32 %v452, %v1915
      %v1917 = vpop.f32.mrb[0].mxu0
      %1918 = vmatprep.mubr.bf16.mxu0 0
      %1919 = vmatmul.mubr.bf16.gmra.mrb[0].mxu0 %v1043
      %v1920 = vpop.f32.mrb[0].mxu0
      %v1921 = vadd.f32 %v452, %v1920
      %v1922 = vpop.f32.mrb[0].mxu0
      %v1923 = vpop.f32.mrb[0].mxu0
      %v1924 = vadd.f32 %v452, %v1923
      %v1925 = vpop.f32.mrb[0].mxu0
      %1926 = vmatprep.mubr.bf16.mxu0 0
      %1927 = vmatmul.mubr.bf16.gmra.mrb[0].mxu0 %v1044
      %v1928 = vpop.f32.mrb[0].mxu0
      %v1929 = vadd.f32 %v452, %v1928
      %v1930 = vpop.f32.mrb[0].mxu0
      %v1931 = vpop.f32.mrb[0].mxu0
      %v1932 = vadd.f32 %v452, %v1931
      %v1933 = vpop.f32.mrb[0].mxu0
      %1934 = vmatprep.mubr.bf16.mxu0 0
      %1935 = vmatmul.mubr.bf16.gmra.mrb[0].mxu0 %v1045
      %v1936 = vpop.f32.mrb[0].mxu0
      %v1937 = vadd.f32 %v452, %v1936
      %v1938 = vpop.f32.mrb[0].mxu0
      %v1939 = vpop.f32.mrb[0].mxu0
      %v1940 = vadd.f32 %v452, %v1939
      %v1941 = vpop.f32.mrb[0].mxu0
      %1942 = vmatprep.mubr.bf16.mxu0 0
      %1943 = vmatmul.mubr.bf16.gmra.mrb[0].mxu0 %v1046
      %v1944 = vpop.f32.mrb[0].mxu0
      %v1945 = vadd.f32 %v452, %v1944
      %v1946 = vpop.f32.mrb[0].mxu0
      %v1947 = vpop.f32.mrb[0].mxu0
      %v1948 = vadd.f32 %v452, %v1947
      %v1949 = vpop.f32.mrb[0].mxu0
      %1950 = vmatprep.mubr.bf16.mxu0 0
      %1951 = vmatmul.mubr.bf16.gmra.mrb[0].mxu0 %v1047
      %v1952 = vpop.f32.mrb[0].mxu0
      %v1953 = vadd.f32 %v452, %v1952
      %v1954 = vpop.f32.mrb[0].mxu0
      %v1955 = vpop.f32.mrb[0].mxu0
      %v1956 = vadd.f32 %v452, %v1955
      %v1957 = vpop.f32.mrb[0].mxu0
      %1958 = vmatprep.mubr.bf16.mxu0 0
      %1959 = vmatmul.mubr.bf16.gmra.mrb[0].mxu0 %v1048
      %v1960 = vpop.f32.mrb[0].mxu0
      %v1961 = vadd.f32 %v452, %v1960
      %v1962 = vpop.f32.mrb[0].mxu0
      %v1963 = vpop.f32.mrb[0].mxu0
      %v1964 = vadd.f32 %v452, %v1963
      %v1965 = vpop.f32.mrb[0].mxu0
      %1966 = vmatprep.mubr.bf16.mxu0 0
      %1967 = vmatmul.mubr.bf16.gmra.mrb[0].mxu0 %v1049
      %v1968 = vpop.f32.mrb[0].mxu0
      %v1969 = vadd.f32 %v452, %v1968
      %v1970 = vpop.f32.mrb[0].mxu0
      %v1971 = vpop.f32.mrb[0].mxu0
      %v1972 = vadd.f32 %v452, %v1971
      %v1973 = vpop.f32.mrb[0].mxu0
      %1974 = vmatprep.mubr.bf16.mxu0 0
      %1975 = vmatmul.mubr.bf16.gmra.mrb[0].mxu0 %v1050
      %v1976 = vpop.f32.mrb[0].mxu0
      %v1977 = vadd.f32 %v452, %v1976
      %v1978 = vpop.f32.mrb[0].mxu0
      %v1979 = vpop.f32.mrb[0].mxu0
      %v1980 = vadd.f32 %v452, %v1979
      %v1981 = vpop.f32.mrb[0].mxu0
      %1982 = vmatprep.mubr.bf16.mxu0 0
      %1983 = vmatmul.mubr.bf16.gmra.mrb[0].mxu0 %v1051
      %v1984 = vpop.f32.mrb[0].mxu0
      %v1985 = vadd.f32 %v452, %v1984
      %v1986 = vpop.f32.mrb[0].mxu0
      %v1987 = vpop.f32.mrb[0].mxu0
      %v1988 = vadd.f32 %v452, %v1987
      %v1989 = vpop.f32.mrb[0].mxu0
      %1990 = vmatprep.mubr.bf16.mxu0 0
      %1991 = vmatmul.mubr.bf16.gmra.mrb[0].mxu0 %v1052
      %v1992 = vpop.f32.mrb[0].mxu0
      %v1993 = vadd.f32 %v452, %v1992
      %v1994 = vpop.f32.mrb[0].mxu0
      %v1995 = vpop.f32.mrb[0].mxu0
      %v1996 = vadd.f32 %v452, %v1995
      %v1997 = vpop.f32.mrb[0].mxu0
      %1998 = vmatprep.mubr.bf16.mxu0 0
      %1999 = vmatmul.mubr.bf16.gmra.mrb[0].mxu0 %v1053
      %v2000 = vpop.f32.mrb[0].mxu0
      %v2001 = vadd.f32 %v452, %v2000
      %v2002 = vpop.f32.mrb[0].mxu0
      %v2003 = vpop.f32.mrb[0].mxu0
      %v2004 = vadd.f32 %v452, %v2003
      %v2005 = vpop.f32.mrb[0].mxu0
      %2006 = vmatprep.mubr.bf16.mxu0 0
      %2007 = vmatmul.mubr.bf16.gmra.mrb[0].mxu0 %v1054
      %v2008 = vpop.f32.mrb[0].mxu0
      %v2009 = vadd.f32 %v452, %v2008
      %v2010 = vpop.f32.mrb[0].mxu0
      %v2011 = vpop.f32.mrb[0].mxu0
      %v2012 = vadd.f32 %v452, %v2011
      %v2013 = vpop.f32.mrb[0].mxu0
      %2014 = vmatprep.mubr.bf16.mxu0 0
      %2015 = vmatmul.mubr.bf16.gmra.mrb[0].mxu0 %v1055
      %v2016 = vpop.f32.mrb[0].mxu0
      %v2017 = vadd.f32 %v452, %v2016
      %v2018 = vpop.f32.mrb[0].mxu0
      %v2019 = vpop.f32.mrb[0].mxu0
      %v2020 = vadd.f32 %v452, %v2019
      %v2021 = vpop.f32.mrb[0].mxu0
      %2022 = vmatprep.mubr.bf16.mxu0 0
      %2023 = vmatmul.mubr.bf16.gmra.mrb[0].mxu0 %v1056
      %v2024 = vpop.f32.mrb[0].mxu0
      %v2025 = vadd.f32 %v452, %v2024
      %v2026 = vpop.f32.mrb[0].mxu0
      %v2027 = vpop.f32.mrb[0].mxu0
      %v2028 = vadd.f32 %v452, %v2027
      %v2029 = vpop.f32.mrb[0].mxu0
      %2030 = vmatprep.mubr.bf16.mxu0 0
      %2031 = vmatmul.mubr.bf16.gmra.mrb[0].mxu0 %v1057
      %v2032 = vpop.f32.mrb[0].mxu0
      %v2033 = vadd.f32 %v452, %v2032
      %v2034 = vpop.f32.mrb[0].mxu0
      %v2035 = vpop.f32.mrb[0].mxu0
      %v2036 = vadd.f32 %v452, %v2035
      %v2037 = vpop.f32.mrb[0].mxu0
      %2038 = vmatprep.mubr.bf16.mxu0 0
      %2039 = vmatmul.mubr.bf16.gmra.mrb[0].mxu0 %v1058
      %v2040 = vpop.f32.mrb[0].mxu0
      %v2041 = vadd.f32 %v452, %v2040
      %v2042 = vpop.f32.mrb[0].mxu0
      %v2043 = vpop.f32.mrb[0].mxu0
      %v2044 = vadd.f32 %v452, %v2043
      %v2045 = vpop.f32.mrb[0].mxu0
      %2046 = vmatprep.mubr.bf16.mxu0 0
      %2047 = vmatmul.mubr.bf16.gmra.mrb[0].mxu0 %v1059
      %v2048 = vpop.f32.mrb[0].mxu0
      %v2049 = vadd.f32 %v452, %v2048
      %v2050 = vpop.f32.mrb[0].mxu0
      %v2051 = vpop.f32.mrb[0].mxu0
      %v2052 = vadd.f32 %v452, %v2051
      %v2053 = vpop.f32.mrb[0].mxu0
      %2054 = vmatprep.mubr.bf16.mxu0 0
      %2055 = vmatmul.mubr.bf16.gmra.mrb[0].mxu0 %v1060
      %v2056 = vpop.f32.mrb[0].mxu0
      %v2057 = vadd.f32 %v452, %v2056
      %v2058 = vpop.f32.mrb[0].mxu0
      %v2059 = vpop.f32.mrb[0].mxu0
      %v2060 = vadd.f32 %v452, %v2059
      %v2061 = vpop.f32.mrb[0].mxu0
      %2062 = vmatprep.mubr.bf16.mxu0 0
      %2063 = vmatmul.mubr.bf16.gmra.mrb[0].mxu0 %v1061
      %v2064 = vpop.f32.mrb[0].mxu0
      %v2065 = vadd.f32 %v452, %v2064
      %v2066 = vpop.f32.mrb[0].mxu0
      %v2067 = vpop.f32.mrb[0].mxu0
      %v2068 = vadd.f32 %v452, %v2067
      %v2069 = vpop.f32.mrb[0].mxu0
      %2070 = vmatprep.mubr.bf16.mxu0 0
      %2071 = vmatmul.mubr.bf16.gmra.mrb[0].mxu0 %v1062
      %v2072 = vpop.f32.mrb[0].mxu0
      %v2073 = vadd.f32 %v452, %v2072
      %v2074 = vpop.f32.mrb[0].mxu0
      %v2075 = vpop.f32.mrb[0].mxu0
      %v2076 = vadd.f32 %v452, %v2075
      %v2077 = vpop.f32.mrb[0].mxu0
      %2078 = vmatprep.mubr.bf16.mxu0 0
      %2079 = vmatmul.mubr.bf16.gmra.mrb[0].mxu0 %v1063
      %v2080 = vpop.f32.mrb[0].mxu0
      %v2081 = vadd.f32 %v452, %v2080
      %v2082 = vpop.f32.mrb[0].mxu0
      %v2083 = vpop.f32.mrb[0].mxu0
      %v2084 = vadd.f32 %v452, %v2083
      %v2085 = vpop.f32.mrb[0].mxu0
      %2086 = vmatprep.mubr.bf16.mxu0 0
      %2087 = vmatmul.mubr.bf16.gmra.mrb[0].mxu0 %v1064
      %v2088 = vpop.f32.mrb[0].mxu0
      %v2089 = vadd.f32 %v452, %v2088
      %v2090 = vpop.f32.mrb[0].mxu0
      %v2091 = vpop.f32.mrb[0].mxu0
      %v2092 = vadd.f32 %v452, %v2091
      %v2093 = vpop.f32.mrb[0].mxu0
      %2094 = vmatprep.mubr.bf16.mxu0 0
      %2095 = vmatmul.mubr.bf16.gmra.mrb[0].mxu0 %v1065
      %v2096 = vpop.f32.mrb[0].mxu0
      %v2097 = vadd.f32 %v452, %v2096
      %v2098 = vpop.f32.mrb[0].mxu0
      %v2099 = vpop.f32.mrb[0].mxu0
      %v2100 = vadd.f32 %v452, %v2099
      %v2101 = vpop.f32.mrb[0].mxu0
      %2102 = vmatprep.mubr.bf16.mxu0 0
      %2103 = vmatmul.mubr.bf16.gmra.mrb[0].mxu0 %v1066
      %v2104 = vpop.f32.mrb[0].mxu0
      %v2105 = vadd.f32 %v452, %v2104
      %v2106 = vpop.f32.mrb[0].mxu0
      %v2107 = vpop.f32.mrb[0].mxu0
      %v2108 = vadd.f32 %v452, %v2107
      %v2109 = vpop.f32.mrb[0].mxu0
      %2110 = vmatprep.mubr.bf16.mxu0 0
      %2111 = vmatmul.mubr.bf16.gmra.mrb[0].mxu0 %v1067
      %v2112 = vpop.f32.mrb[0].mxu0
      %v2113 = vadd.f32 %v452, %v2112
      %v2114 = vpop.f32.mrb[0].mxu0
      %v2115 = vpop.f32.mrb[0].mxu0
      %v2116 = vadd.f32 %v452, %v2115
      %v2117 = vpop.f32.mrb[0].mxu0
      %2118 = vmatprep.mubr.bf16.mxu0 0
      %2119 = vmatmul.mubr.bf16.gmra.mrb[0].mxu0 %v1068
      %v2120 = vpop.f32.mrb[0].mxu0
      %v2121 = vadd.f32 %v452, %v2120
      %v2122 = vpop.f32.mrb[0].mxu0
      %v2123 = vpop.f32.mrb[0].mxu0
      %v2124 = vadd.f32 %v452, %v2123
      %v2125 = vpop.f32.mrb[0].mxu0
      %2126 = vmatprep.mubr.bf16.mxu0 0
      %2127 = vmatmul.mubr.bf16.gmra.mrb[0].mxu0 %v1069
      %v2128 = vpop.f32.mrb[0].mxu0
      %v2129 = vadd.f32 %v452, %v2128
      %v2130 = vpop.f32.mrb[0].mxu0
      %v2131 = vpop.f32.mrb[0].mxu0
      %v2132 = vadd.f32 %v452, %v2131
      %v2133 = vpop.f32.mrb[0].mxu0
      %2134 = vmatprep.mubr.bf16.mxu0 0
      %2135 = vmatmul.mubr.bf16.gmra.mrb[0].mxu0 %v1070
      %v2136 = vpop.f32.mrb[0].mxu0
      %v2137 = vadd.f32 %v452, %v2136
      %v2138 = vpop.f32.mrb[0].mxu0
      %v2139 = vpop.f32.mrb[0].mxu0
      %v2140 = vadd.f32 %v452, %v2139
      %v2141 = vpop.f32.mrb[0].mxu0
      %2142 = vmatprep.mubr.bf16.mxu0 0
      %2143 = vmatmul.mubr.bf16.gmra.mrb[0].mxu0 %v1071
      %v2144 = vpop.f32.mrb[0].mxu0
      %v2145 = vadd.f32 %v452, %v2144
      %v2146 = vpop.f32.mrb[0].mxu0
      %v2147 = vpop.f32.mrb[0].mxu0
      %v2148 = vadd.f32 %v452, %v2147
      %v2149 = vpop.f32.mrb[0].mxu0
      %2150 = vmatprep.mubr.bf16.mxu0 0
      %2151 = vmatmul.mubr.bf16.gmra.mrb[0].mxu0 %v1072
      %v2152 = vpop.f32.mrb[0].mxu0
      %v2153 = vadd.f32 %v452, %v2152
      %v2154 = vpop.f32.mrb[0].mxu0
      %v2155 = vpop.f32.mrb[0].mxu0
      %v2156 = vadd.f32 %v452, %v2155
      %v2157 = vpop.f32.mrb[0].mxu0
      %2158 = vmatprep.mubr.bf16.mxu0 0
      %2159 = vmatmul.mubr.bf16.gmra.mrb[0].mxu0 %v1073
      %v2160 = vpop.f32.mrb[0].mxu0
      %v2161 = vadd.f32 %v452, %v2160
      %v2162 = vpop.f32.mrb[0].mxu0
      %v2163 = vpop.f32.mrb[0].mxu0
      %v2164 = vadd.f32 %v452, %v2163
      %v2165 = vpop.f32.mrb[0].mxu0
      %2166 = vmatprep.mubr.bf16.mxu0 0
      %2167 = vmatmul.mubr.bf16.gmra.mrb[0].mxu0 %v1074
      %v2168 = vpop.f32.mrb[0].mxu0
      %v2169 = vadd.f32 %v452, %v2168
      %v2170 = vpop.f32.mrb[0].mxu0
      %v2171 = vpop.f32.mrb[0].mxu0
      %v2172 = vadd.f32 %v452, %v2171
      %v2173 = vpop.f32.mrb[0].mxu0
      %2174 = vmatprep.mubr.bf16.mxu0 0
      %2175 = vmatmul.mubr.bf16.gmra.mrb[0].mxu0 %v1075
      %v2176 = vpop.f32.mrb[0].mxu0
      %v2177 = vadd.f32 %v452, %v2176
      %v2178 = vpop.f32.mrb[0].mxu0
      %v2179 = vpop.f32.mrb[0].mxu0
      %v2180 = vadd.f32 %v452, %v2179
      %v2181 = vpop.f32.mrb[0].mxu0
      %2182 = vmatprep.mubr.bf16.mxu0 0
      %2183 = vmatmul.mubr.bf16.gmra.mrb[0].mxu0 %v1076
      %v2184 = vpop.f32.mrb[0].mxu0
      %v2185 = vadd.f32 %v452, %v2184
      %v2186 = vpop.f32.mrb[0].mxu0
      %v2187 = vpop.f32.mrb[0].mxu0
      %v2188 = vadd.f32 %v452, %v2187
      %v2189 = vpop.f32.mrb[0].mxu0
      %2190 = vmatprep.mubr.bf16.mxu0 0
      %2191 = vmatmul.mubr.bf16.gmra.mrb[0].mxu0 %v1077
      %v2192 = vpop.f32.mrb[0].mxu0
      %v2193 = vadd.f32 %v452, %v2192
      %v2194 = vpop.f32.mrb[0].mxu0
      %v2195 = vpop.f32.mrb[0].mxu0
      %v2196 = vadd.f32 %v452, %v2195
      %v2197 = vpop.f32.mrb[0].mxu0
      %2198 = vmatprep.mubr.bf16.mxu0 0
      %2199 = vmatmul.mubr.bf16.gmra.mrb[0].mxu0 %v1078
      %v2200 = vpop.f32.mrb[0].mxu0
      %v2201 = vadd.f32 %v452, %v2200
      %v2202 = vpop.f32.mrb[0].mxu0
      %v2203 = vpop.f32.mrb[0].mxu0
      %v2204 = vadd.f32 %v452, %v2203
      %v2205 = vpop.f32.mrb[0].mxu0
      %2206 = vmatprep.mubr.bf16.mxu0 0
      %2207 = vmatmul.mubr.bf16.gmra.mrb[0].mxu0 %v1079
      %v2208 = vpop.f32.mrb[0].mxu0
      %v2209 = vadd.f32 %v452, %v2208
      %v2210 = vpop.f32.mrb[0].mxu0
      %v2211 = vpop.f32.mrb[0].mxu0
      %v2212 = vadd.f32 %v452, %v2211
      %v2213 = vpop.f32.mrb[0].mxu0
      %2214 = vmatprep.mubr.bf16.mxu0 0
      %2215 = vmatmul.mubr.bf16.gmra.mrb[0].mxu0 %v1080
      %v2216 = vpop.f32.mrb[0].mxu0
      %v2217 = vadd.f32 %v452, %v2216
      %v2218 = vpop.f32.mrb[0].mxu0
      %v2219 = vpop.f32.mrb[0].mxu0
      %v2220 = vadd.f32 %v452, %v2219
      %v2221 = vpop.f32.mrb[0].mxu0
      %2222 = vmatprep.mubr.bf16.mxu0 0
      %2223 = vmatmul.mubr.bf16.gmra.mrb[0].mxu0 %v1081
      %v2224 = vpop.f32.mrb[0].mxu0
      %v2225 = vadd.f32 %v452, %v2224
      %v2226 = vpop.f32.mrb[0].mxu0
      %v2227 = vpop.f32.mrb[0].mxu0
      %v2228 = vadd.f32 %v452, %v2227
      %v2229 = vpop.f32.mrb[0].mxu0
      %2230 = vmatprep.mubr.bf16.mxu0 0
      %2231 = vmatmul.mubr.bf16.gmra.mrb[0].mxu0 %v1082
      %v2232 = vpop.f32.mrb[0].mxu0
      %v2233 = vadd.f32 %v452, %v2232
      %v2234 = vpop.f32.mrb[0].mxu0
      %v2235 = vpop.f32.mrb[0].mxu0
      %v2236 = vadd.f32 %v452, %v2235
      %v2237 = vpop.f32.mrb[0].mxu0
      %2238 = vmatprep.mubr.bf16.mxu0 0
      %2239 = vmatmul.mubr.bf16.gmra.mrb[0].mxu0 %v1083
      %v2240 = vpop.f32.mrb[0].mxu0
      %v2241 = vadd.f32 %v452, %v2240
      %v2242 = vpop.f32.mrb[0].mxu0
      %v2243 = vpop.f32.mrb[0].mxu0
      %v2244 = vadd.f32 %v452, %v2243
      %v2245 = vpop.f32.mrb[0].mxu0
      %2246 = vmatprep.mubr.bf16.mxu0 0
      %2247 = vmatmul.mubr.bf16.gmra.mrb[0].mxu0 %v1084
      %v2248 = vpop.f32.mrb[0].mxu0
      %v2249 = vadd.f32 %v452, %v2248
      %v2250 = vpop.f32.mrb[0].mxu0
      %v2251 = vpop.f32.mrb[0].mxu0
      %v2252 = vadd.f32 %v452, %v2251
      %v2253 = vpop.f32.mrb[0].mxu0
      %2254 = vmatprep.mubr.bf16.mxu0 0
      %2255 = vmatmul.mubr.bf16.gmra.mrb[0].mxu0 %v1085
      %v2256 = vpop.f32.mrb[0].mxu0
      %v2257 = vadd.f32 %v452, %v2256
      %v2258 = vpop.f32.mrb[0].mxu0
      %v2259 = vpop.f32.mrb[0].mxu0
      %v2260 = vadd.f32 %v452, %v2259
      %v2261 = vpop.f32.mrb[0].mxu0
      %2262 = vmatprep.mubr.bf16.mxu0 0
      %2263 = vmatmul.mubr.bf16.gmra.mrb[0].mxu0 %v1086
      %v2264 = vpop.f32.mrb[0].mxu0
      %v2265 = vadd.f32 %v452, %v2264
      %v2266 = vpop.f32.mrb[0].mxu0
      %v2267 = vpop.f32.mrb[0].mxu0
      %v2268 = vadd.f32 %v452, %v2267
      %v2269 = vpop.f32.mrb[0].mxu0
      %2270 = vmatprep.mubr.bf16.mxu0 0
      %2271 = vmatmul.mubr.bf16.gmra.mrb[0].mxu0 %v1087
      %v2272 = vpop.f32.mrb[0].mxu0
      %v2273 = vadd.f32 %v452, %v2272
      %v2274 = vpop.f32.mrb[0].mxu0
      %v2275 = vpop.f32.mrb[0].mxu0
      %v2276 = vadd.f32 %v452, %v2275
      %v2277 = vpop.f32.mrb[0].mxu0
      %2278 = vmatprep.mubr.bf16.mxu0 0
      %2279 = vmatmul.mubr.bf16.gmra.mrb[0].mxu0 %v1088
      %v2280 = vpop.f32.mrb[0].mxu0
      %v2281 = vadd.f32 %v452, %v2280
      %v2282 = vpop.f32.mrb[0].mxu0
      %v2283 = vpop.f32.mrb[0].mxu0
      %v2284 = vadd.f32 %v452, %v2283
      %v2285 = vpop.f32.mrb[0].mxu0
      %2286 = vmatprep.mubr.bf16.mxu0 0
      %2287 = vmatmul.mubr.bf16.gmra.mrb[0].mxu0 %v1089
      %v2288 = vpop.f32.mrb[0].mxu0
      %v2289 = vadd.f32 %v452, %v2288
      %v2290 = vpop.f32.mrb[0].mxu0
      %v2291 = vpop.f32.mrb[0].mxu0
      %v2292 = vadd.f32 %v452, %v2291
      %v2293 = vpop.f32.mrb[0].mxu0
      %2294 = vmatprep.mubr.bf16.mxu0 0
      %2295 = vmatmul.mubr.bf16.gmra.mrb[0].mxu0 %v1090
      %v2296 = vpop.f32.mrb[0].mxu0
      %v2297 = vadd.f32 %v452, %v2296
      %v2298 = vpop.f32.mrb[0].mxu0
      %v2299 = vpop.f32.mrb[0].mxu0
      %v2300 = vadd.f32 %v452, %v2299
      %v2301 = vpop.f32.mrb[0].mxu0
      %2302 = vmatprep.mubr.bf16.mxu0 0
      %2303 = vmatmul.mubr.bf16.gmra.mrb[0].mxu0 %v1091
      %v2304 = vpop.f32.mrb[0].mxu0
      %v2305 = vadd.f32 %v452, %v2304
      %v2306 = vpop.f32.mrb[0].mxu0
      %v2307 = vpop.f32.mrb[0].mxu0
      %v2308 = vadd.f32 %v452, %v2307
      %v2309 = vpop.f32.mrb[0].mxu0
      %2310 = vmatprep.mubr.bf16.mxu0 0
      %2311 = vmatmul.mubr.bf16.gmra.mrb[0].mxu0 %v1092
      %v2312 = vpop.f32.mrb[0].mxu0
      %v2313 = vadd.f32 %v452, %v2312
      %v2314 = vpop.f32.mrb[0].mxu0
      %v2315 = vpop.f32.mrb[0].mxu0
      %v2316 = vadd.f32 %v452, %v2315
      %v2317 = vpop.f32.mrb[0].mxu0
      %2318 = vmatprep.mubr.bf16.mxu0 0
      %2319 = vmatmul.mubr.bf16.gmra.mrb[0].mxu0 %v1093
      %v2320 = vpop.f32.mrb[0].mxu0
      %v2321 = vadd.f32 %v452, %v2320
      %v2322 = vpop.f32.mrb[0].mxu0
      %v2323 = vpop.f32.mrb[0].mxu0
      %v2324 = vadd.f32 %v452, %v2323
      %v2325 = vpop.f32.mrb[0].mxu0
      %2326 = vdwg.mxu0
      %v2327 = vtanh.pop %v1305
      %v2328 = vtanh.pop %v1308
      %v2329 = vtanh.pop %v1313
      %v2330 = vtanh.pop %v1316
      %v2331 = vtanh.pop %v1321
      %v2332 = vtanh.pop %v1324
      %v2333 = vtanh.pop %v1329
      %v2334 = vtanh.pop %v1332
      %v2335 = vtanh.pop %v1337
      %v2336 = vtanh.pop %v1340
      %v2337 = vtanh.pop %v1345
      %v2338 = vtanh.pop %v1348
      %v2339 = vtanh.pop %v1353
      %v2340 = vtanh.pop %v1356
      %v2341 = vtanh.pop %v1361
      %v2342 = vtanh.pop %v1364
      %v2343 = vtanh.pop %v1369
      %v2344 = vtanh.pop %v1372
      %v2345 = vtanh.pop %v1377
      %v2346 = vtanh.pop %v1380
      %v2347 = vtanh.pop %v1385
      %v2348 = vtanh.pop %v1388
      %v2349 = vtanh.pop %v1393
      %v2350 = vtanh.pop %v1396
      %v2351 = vtanh.pop %v1401
      %v2352 = vtanh.pop %v1404
      %v2353 = vtanh.pop %v1409
      %v2354 = vtanh.pop %v1412
      %v2355 = vtanh.pop %v1417
      %v2356 = vtanh.pop %v1420
      %v2357 = vtanh.pop %v1425
      %v2358 = vtanh.pop %v1428
      %v2359 = vtanh.pop %v1433
      %v2360 = vtanh.pop %v1436
      %v2361 = vtanh.pop %v1441
      %v2362 = vtanh.pop %v1444
      %v2363 = vtanh.pop %v1449
      %v2364 = vtanh.pop %v1452
      %v2365 = vtanh.pop %v1457
      %v2366 = vtanh.pop %v1460
      %v2367 = vtanh.pop %v1465
      %v2368 = vtanh.pop %v1468
      %v2369 = vtanh.pop %v1473
      %v2370 = vtanh.pop %v1476
      %v2371 = vtanh.pop %v1481
      %v2372 = vtanh.pop %v1484
      %v2373 = vtanh.pop %v1489
      %v2374 = vtanh.pop %v1492
      %v2375 = vtanh.pop %v1497
      %v2376 = vtanh.pop %v1500
      %v2377 = vtanh.pop %v1505
      %v2378 = vtanh.pop %v1508
      %v2379 = vtanh.pop %v1513
      %v2380 = vtanh.pop %v1516
      %v2381 = vtanh.pop %v1521
      %v2382 = vtanh.pop %v1524
      %v2383 = vtanh.pop %v1529
      %v2384 = vtanh.pop %v1532
      %v2385 = vtanh.pop %v1537
      %v2386 = vtanh.pop %v1540
      %v2387 = vtanh.pop %v1545
      %v2388 = vtanh.pop %v1548
      %v2389 = vtanh.pop %v1553
      %v2390 = vtanh.pop %v1556
      %v2391 = vtanh.pop %v1561
      %v2392 = vtanh.pop %v1564
      %v2393 = vtanh.pop %v1569
      %v2394 = vtanh.pop %v1572
      %v2395 = vtanh.pop %v1577
      %v2396 = vtanh.pop %v1580
      %v2397 = vtanh.pop %v1585
      %v2398 = vtanh.pop %v1588
      %v2399 = vtanh.pop %v1593
      %v2400 = vtanh.pop %v1596
      %v2401 = vtanh.pop %v1601
      %v2402 = vtanh.pop %v1604
      %v2403 = vtanh.pop %v1609
      %v2404 = vtanh.pop %v1612
      %v2405 = vtanh.pop %v1617
      %v2406 = vtanh.pop %v1620
      %v2407 = vtanh.pop %v1625
      %v2408 = vtanh.pop %v1628
      %v2409 = vtanh.pop %v1633
      %v2410 = vtanh.pop %v1636
      %v2411 = vtanh.pop %v1641
      %v2412 = vtanh.pop %v1644
      %v2413 = vtanh.pop %v1649
      %v2414 = vtanh.pop %v1652
      %v2415 = vtanh.pop %v1657
      %v2416 = vtanh.pop %v1660
      %v2417 = vtanh.pop %v1665
      %v2418 = vtanh.pop %v1668
      %v2419 = vtanh.pop %v1673
      %v2420 = vtanh.pop %v1676
      %v2421 = vtanh.pop %v1681
      %v2422 = vtanh.pop %v1684
      %v2423 = vtanh.pop %v1689
      %v2424 = vtanh.pop %v1692
      %v2425 = vtanh.pop %v1697
      %v2426 = vtanh.pop %v1700
      %v2427 = vtanh.pop %v1705
      %v2428 = vtanh.pop %v1708
      %v2429 = vtanh.pop %v1713
      %v2430 = vtanh.pop %v1716
      %v2431 = vtanh.pop %v1721
      %v2432 = vtanh.pop %v1724
      %v2433 = vtanh.pop %v1729
      %v2434 = vtanh.pop %v1732
      %v2435 = vtanh.pop %v1737
      %v2436 = vtanh.pop %v1740
      %v2437 = vtanh.pop %v1745
      %v2438 = vtanh.pop %v1748
      %v2439 = vtanh.pop %v1753
      %v2440 = vtanh.pop %v1756
      %v2441 = vtanh.pop %v1761
      %v2442 = vtanh.pop %v1764
      %v2443 = vtanh.pop %v1769
      %v2444 = vtanh.pop %v1772
      %v2445 = vtanh.pop %v1777
      %v2446 = vtanh.pop %v1780
      %v2447 = vtanh.pop %v1785
      %v2448 = vtanh.pop %v1788
      %v2449 = vtanh.pop %v1793
      %v2450 = vtanh.pop %v1796
      %v2451 = vtanh.pop %v1801
      %v2452 = vtanh.pop %v1804
      %v2453 = vtanh.pop %v1809
      %v2454 = vtanh.pop %v1812
      %v2455 = vtanh.pop %v1817
      %v2456 = vtanh.pop %v1820
      %v2457 = vtanh.pop %v1825
      %v2458 = vtanh.pop %v1828
      %v2459 = vtanh.pop %v1833
      %v2460 = vtanh.pop %v1836
      %v2461 = vtanh.pop %v1841
      %v2462 = vtanh.pop %v1844
      %v2463 = vtanh.pop %v1849
      %v2464 = vtanh.pop %v1852
      %v2465 = vtanh.pop %v1857
      %v2466 = vtanh.pop %v1860
      %v2467 = vtanh.pop %v1865
      %v2468 = vtanh.pop %v1868
      %v2469 = vtanh.pop %v1873
      %v2470 = vtanh.pop %v1876
      %v2471 = vtanh.pop %v1881
      %v2472 = vtanh.pop %v1884
      %v2473 = vtanh.pop %v1889
      %v2474 = vtanh.pop %v1892
      %v2475 = vtanh.pop %v1897
      %v2476 = vtanh.pop %v1900
      %v2477 = vtanh.pop %v1905
      %v2478 = vtanh.pop %v1908
      %v2479 = vtanh.pop %v1913
      %v2480 = vtanh.pop %v1916
      %v2481 = vtanh.pop %v1921
      %v2482 = vtanh.pop %v1924
      %v2483 = vtanh.pop %v1929
      %v2484 = vtanh.pop %v1932
      %v2485 = vtanh.pop %v1937
      %v2486 = vtanh.pop %v1940
      %v2487 = vtanh.pop %v1945
      %v2488 = vtanh.pop %v1948
      %v2489 = vtanh.pop %v1953
      %v2490 = vtanh.pop %v1956
      %v2491 = vtanh.pop %v1961
      %v2492 = vtanh.pop %v1964
      %v2493 = vtanh.pop %v1969
      %v2494 = vtanh.pop %v1972
      %v2495 = vtanh.pop %v1977
      %v2496 = vtanh.pop %v1980
      %v2497 = vtanh.pop %v1985
      %v2498 = vtanh.pop %v1988
      %v2499 = vtanh.pop %v1993
      %v2500 = vtanh.pop %v1996
      %v2501 = vtanh.pop %v2001
      %v2502 = vtanh.pop %v2004
      %v2503 = vtanh.pop %v2009
      %v2504 = vtanh.pop %v2012
      %v2505 = vtanh.pop %v2017
      %v2506 = vtanh.pop %v2020
      %v2507 = vtanh.pop %v2025
      %v2508 = vtanh.pop %v2028
      %v2509 = vtanh.pop %v2033
      %v2510 = vtanh.pop %v2036
      %v2511 = vtanh.pop %v2041
      %v2512 = vtanh.pop %v2044
      %v2513 = vtanh.pop %v2049
      %v2514 = vtanh.pop %v2052
      %v2515 = vtanh.pop %v2057
      %v2516 = vtanh.pop %v2060
      %v2517 = vtanh.pop %v2065
      %v2518 = vtanh.pop %v2068
      %v2519 = vtanh.pop %v2073
      %v2520 = vtanh.pop %v2076
      %v2521 = vtanh.pop %v2081
      %v2522 = vtanh.pop %v2084
      %v2523 = vtanh.pop %v2089
      %v2524 = vtanh.pop %v2092
      %v2525 = vtanh.pop %v2097
      %v2526 = vtanh.pop %v2100
      %v2527 = vtanh.pop %v2105
      %v2528 = vtanh.pop %v2108
      %v2529 = vtanh.pop %v2113
      %v2530 = vtanh.pop %v2116
      %v2531 = vtanh.pop %v2121
      %v2532 = vtanh.pop %v2124
      %v2533 = vtanh.pop %v2129
      %v2534 = vtanh.pop %v2132
      %v2535 = vtanh.pop %v2137
      %v2536 = vtanh.pop %v2140
      %v2537 = vtanh.pop %v2145
      %v2538 = vtanh.pop %v2148
      %v2539 = vtanh.pop %v2153
      %v2540 = vtanh.pop %v2156
      %v2541 = vtanh.pop %v2161
      %v2542 = vtanh.pop %v2164
      %v2543 = vtanh.pop %v2169
      %v2544 = vtanh.pop %v2172
      %v2545 = vtanh.pop %v2177
      %v2546 = vtanh.pop %v2180
      %v2547 = vtanh.pop %v2185
      %v2548 = vtanh.pop %v2188
      %v2549 = vtanh.pop %v2193
      %v2550 = vtanh.pop %v2196
      %v2551 = vtanh.pop %v2201
      %v2552 = vtanh.pop %v2204
      %v2553 = vtanh.pop %v2209
      %v2554 = vtanh.pop %v2212
      %v2555 = vtanh.pop %v2217
      %v2556 = vtanh.pop %v2220
      %v2557 = vtanh.pop %v2225
      %v2558 = vtanh.pop %v2228
      %v2559 = vtanh.pop %v2233
      %v2560 = vtanh.pop %v2236
      %v2561 = vtanh.pop %v2241
      %v2562 = vtanh.pop %v2244
      %v2563 = vtanh.pop %v2249
      %v2564 = vtanh.pop %v2252
      %v2565 = vtanh.pop %v2257
      %v2566 = vtanh.pop %v2260
      %v2567 = vtanh.pop %v2265
      %v2568 = vtanh.pop %v2268
      %v2569 = vtanh.pop %v2273
      %v2570 = vtanh.pop %v2276
      %v2571 = vtanh.pop %v2281
      %v2572 = vtanh.pop %v2284
      %v2573 = vtanh.pop %v2289
      %v2574 = vtanh.pop %v2292
      %v2575 = vtanh.pop %v2297
      %v2576 = vtanh.pop %v2300
      %v2577 = vtanh.pop %v2305
      %v2578 = vtanh.pop %v2308
      %v2579 = vtanh.pop %v2313
      %v2580 = vtanh.pop %v2316
      %v2581 = vtanh.pop %v2321
      %v2582 = vtanh.pop %v2324
      %v2583 = vpack.c.bf16 %v2328, %v2327
      %v2584 = vpack.c.bf16 %v2330, %v2329
      %v2585 = vpack.c.bf16 %v2332, %v2331
      %v2586 = vpack.c.bf16 %v2334, %v2333
      %v2587 = vpack.c.bf16 %v2336, %v2335
      %v2588 = vpack.c.bf16 %v2338, %v2337
      %v2589 = vpack.c.bf16 %v2340, %v2339
      %v2590 = vpack.c.bf16 %v2342, %v2341
      %v2591 = vpack.c.bf16 %v2344, %v2343
      %v2592 = vpack.c.bf16 %v2346, %v2345
      %v2593 = vpack.c.bf16 %v2348, %v2347
      %v2594 = vpack.c.bf16 %v2350, %v2349
      %v2595 = vpack.c.bf16 %v2352, %v2351
      %v2596 = vpack.c.bf16 %v2354, %v2353
      %v2597 = vpack.c.bf16 %v2356, %v2355
      %v2598 = vpack.c.bf16 %v2358, %v2357
      %v2599 = vpack.c.bf16 %v2360, %v2359
      %v2600 = vpack.c.bf16 %v2362, %v2361
      %v2601 = vpack.c.bf16 %v2364, %v2363
      %v2602 = vpack.c.bf16 %v2366, %v2365
      %v2603 = vpack.c.bf16 %v2368, %v2367
      %v2604 = vpack.c.bf16 %v2370, %v2369
      %v2605 = vpack.c.bf16 %v2372, %v2371
      %v2606 = vpack.c.bf16 %v2374, %v2373
      %v2607 = vpack.c.bf16 %v2376, %v2375
      %v2608 = vpack.c.bf16 %v2378, %v2377
      %v2609 = vpack.c.bf16 %v2380, %v2379
      %v2610 = vpack.c.bf16 %v2382, %v2381
      %v2611 = vpack.c.bf16 %v2384, %v2383
      %v2612 = vpack.c.bf16 %v2386, %v2385
      %v2613 = vpack.c.bf16 %v2388, %v2387
      %v2614 = vpack.c.bf16 %v2390, %v2389
      %v2615 = vpack.c.bf16 %v2392, %v2391
      %v2616 = vpack.c.bf16 %v2394, %v2393
      %v2617 = vpack.c.bf16 %v2396, %v2395
      %v2618 = vpack.c.bf16 %v2398, %v2397
      %v2619 = vpack.c.bf16 %v2400, %v2399
      %v2620 = vpack.c.bf16 %v2402, %v2401
      %v2621 = vpack.c.bf16 %v2404, %v2403
      %v2622 = vpack.c.bf16 %v2406, %v2405
      %v2623 = vpack.c.bf16 %v2408, %v2407
      %v2624 = vpack.c.bf16 %v2410, %v2409
      %v2625 = vpack.c.bf16 %v2412, %v2411
      %v2626 = vpack.c.bf16 %v2414, %v2413
      %v2627 = vpack.c.bf16 %v2416, %v2415
      %v2628 = vpack.c.bf16 %v2418, %v2417
      %v2629 = vpack.c.bf16 %v2420, %v2419
      %v2630 = vpack.c.bf16 %v2422, %v2421
      %v2631 = vpack.c.bf16 %v2424, %v2423
      %v2632 = vpack.c.bf16 %v2426, %v2425
      %v2633 = vpack.c.bf16 %v2428, %v2427
      %v2634 = vpack.c.bf16 %v2430, %v2429
      %v2635 = vpack.c.bf16 %v2432, %v2431
      %v2636 = vpack.c.bf16 %v2434, %v2433
      %v2637 = vpack.c.bf16 %v2436, %v2435
      %v2638 = vpack.c.bf16 %v2438, %v2437
      %v2639 = vpack.c.bf16 %v2440, %v2439
      %v2640 = vpack.c.bf16 %v2442, %v2441
      %v2641 = vpack.c.bf16 %v2444, %v2443
      %v2642 = vpack.c.bf16 %v2446, %v2445
      %v2643 = vpack.c.bf16 %v2448, %v2447
      %v2644 = vpack.c.bf16 %v2450, %v2449
      %v2645 = vpack.c.bf16 %v2452, %v2451
      %v2646 = vpack.c.bf16 %v2454, %v2453
      %v2647 = vpack.c.bf16 %v2456, %v2455
      %v2648 = vpack.c.bf16 %v2458, %v2457
      %v2649 = vpack.c.bf16 %v2460, %v2459
      %v2650 = vpack.c.bf16 %v2462, %v2461
      %v2651 = vpack.c.bf16 %v2464, %v2463
      %v2652 = vpack.c.bf16 %v2466, %v2465
      %v2653 = vpack.c.bf16 %v2468, %v2467
      %v2654 = vpack.c.bf16 %v2470, %v2469
      %v2655 = vpack.c.bf16 %v2472, %v2471
      %v2656 = vpack.c.bf16 %v2474, %v2473
      %v2657 = vpack.c.bf16 %v2476, %v2475
      %v2658 = vpack.c.bf16 %v2478, %v2477
      %v2659 = vpack.c.bf16 %v2480, %v2479
      %v2660 = vpack.c.bf16 %v2482, %v2481
      %v2661 = vpack.c.bf16 %v2484, %v2483
      %v2662 = vpack.c.bf16 %v2486, %v2485
      %v2663 = vpack.c.bf16 %v2488, %v2487
      %v2664 = vpack.c.bf16 %v2490, %v2489
      %v2665 = vpack.c.bf16 %v2492, %v2491
      %v2666 = vpack.c.bf16 %v2494, %v2493
      %v2667 = vpack.c.bf16 %v2496, %v2495
      %v2668 = vpack.c.bf16 %v2498, %v2497
      %v2669 = vpack.c.bf16 %v2500, %v2499
      %v2670 = vpack.c.bf16 %v2502, %v2501
      %v2671 = vpack.c.bf16 %v2504, %v2503
      %v2672 = vpack.c.bf16 %v2506, %v2505
      %v2673 = vpack.c.bf16 %v2508, %v2507
      %v2674 = vpack.c.bf16 %v2510, %v2509
      %v2675 = vpack.c.bf16 %v2512, %v2511
      %v2676 = vpack.c.bf16 %v2514, %v2513
      %v2677 = vpack.c.bf16 %v2516, %v2515
      %v2678 = vpack.c.bf16 %v2518, %v2517
      %v2679 = vpack.c.bf16 %v2520, %v2519
      %v2680 = vpack.c.bf16 %v2522, %v2521
      %v2681 = vpack.c.bf16 %v2524, %v2523
      %v2682 = vpack.c.bf16 %v2526, %v2525
      %v2683 = vpack.c.bf16 %v2528, %v2527
      %v2684 = vpack.c.bf16 %v2530, %v2529
      %v2685 = vpack.c.bf16 %v2532, %v2531
      %v2686 = vpack.c.bf16 %v2534, %v2533
      %v2687 = vpack.c.bf16 %v2536, %v2535
      %v2688 = vpack.c.bf16 %v2538, %v2537
      %v2689 = vpack.c.bf16 %v2540, %v2539
      %v2690 = vpack.c.bf16 %v2542, %v2541
      %v2691 = vpack.c.bf16 %v2544, %v2543
      %v2692 = vpack.c.bf16 %v2546, %v2545
      %v2693 = vpack.c.bf16 %v2548, %v2547
      %v2694 = vpack.c.bf16 %v2550, %v2549
      %v2695 = vpack.c.bf16 %v2552, %v2551
      %v2696 = vpack.c.bf16 %v2554, %v2553
      %v2697 = vpack.c.bf16 %v2556, %v2555
      %v2698 = vpack.c.bf16 %v2558, %v2557
      %v2699 = vpack.c.bf16 %v2560, %v2559
      %v2700 = vpack.c.bf16 %v2562, %v2561
      %v2701 = vpack.c.bf16 %v2564, %v2563
      %v2702 = vpack.c.bf16 %v2566, %v2565
      %v2703 = vpack.c.bf16 %v2568, %v2567
      %v2704 = vpack.c.bf16 %v2570, %v2569
      %v2705 = vpack.c.bf16 %v2572, %v2571
      %v2706 = vpack.c.bf16 %v2574, %v2573
      %v2707 = vpack.c.bf16 %v2576, %v2575
      %v2708 = vpack.c.bf16 %v2578, %v2577
      %v2709 = vpack.c.bf16 %v2580, %v2579
      %v2710 = vpack.c.bf16 %v2582, %v2581
      %v2839 = vunpack.c.l.b16 %v2583
      %v2840 = vunpack.c.h.b16 %v2583
      %v2841 = vunpack.c.l.b16 %v2584
      %v2842 = vunpack.c.h.b16 %v2584
      %v2843 = vunpack.c.l.b16 %v2585
      %v2844 = vunpack.c.h.b16 %v2585
      %v2845 = vunpack.c.l.b16 %v2586
      %v2846 = vunpack.c.h.b16 %v2586
      %v2847 = vunpack.c.l.b16 %v2587
      %v2848 = vunpack.c.h.b16 %v2587
      %v2849 = vunpack.c.l.b16 %v2588
      %v2850 = vunpack.c.h.b16 %v2588
      %v2851 = vunpack.c.l.b16 %v2589
      %v2852 = vunpack.c.h.b16 %v2589
      %v2853 = vunpack.c.l.b16 %v2590
      %v2854 = vunpack.c.h.b16 %v2590
      %v2855 = vunpack.c.l.b16 %v2591
      %v2856 = vunpack.c.h.b16 %v2591
      %v2857 = vunpack.c.l.b16 %v2592
      %v2858 = vunpack.c.h.b16 %v2592
      %v2859 = vunpack.c.l.b16 %v2593
      %v2860 = vunpack.c.h.b16 %v2593
      %v2861 = vunpack.c.l.b16 %v2594
      %v2862 = vunpack.c.h.b16 %v2594
      %v2863 = vunpack.c.l.b16 %v2595
      %v2864 = vunpack.c.h.b16 %v2595
      %v2865 = vunpack.c.l.b16 %v2596
      %v2866 = vunpack.c.h.b16 %v2596
      %v2867 = vunpack.c.l.b16 %v2597
      %v2868 = vunpack.c.h.b16 %v2597
      %v2869 = vunpack.c.l.b16 %v2598
      %v2870 = vunpack.c.h.b16 %v2598
      %v2871 = vunpack.c.l.b16 %v2599
      %v2872 = vunpack.c.h.b16 %v2599
      %v2873 = vunpack.c.l.b16 %v2600
      %v2874 = vunpack.c.h.b16 %v2600
      %v2875 = vunpack.c.l.b16 %v2601
      %v2876 = vunpack.c.h.b16 %v2601
      %v2877 = vunpack.c.l.b16 %v2602
      %v2878 = vunpack.c.h.b16 %v2602
      %v2879 = vunpack.c.l.b16 %v2603
      %v2880 = vunpack.c.h.b16 %v2603
      %v2881 = vunpack.c.l.b16 %v2604
      %v2882 = vunpack.c.h.b16 %v2604
      %v2883 = vunpack.c.l.b16 %v2605
      %v2884 = vunpack.c.h.b16 %v2605
      %v2885 = vunpack.c.l.b16 %v2606
      %v2886 = vunpack.c.h.b16 %v2606
      %v2887 = vunpack.c.l.b16 %v2607
      %v2888 = vunpack.c.h.b16 %v2607
      %v2889 = vunpack.c.l.b16 %v2608
      %v2890 = vunpack.c.h.b16 %v2608
      %v2891 = vunpack.c.l.b16 %v2609
      %v2892 = vunpack.c.h.b16 %v2609
      %v2893 = vunpack.c.l.b16 %v2610
      %v2894 = vunpack.c.h.b16 %v2610
      %v2895 = vunpack.c.l.b16 %v2611
      %v2896 = vunpack.c.h.b16 %v2611
      %v2897 = vunpack.c.l.b16 %v2612
      %v2898 = vunpack.c.h.b16 %v2612
      %v2899 = vunpack.c.l.b16 %v2613
      %v2900 = vunpack.c.h.b16 %v2613
      %v2901 = vunpack.c.l.b16 %v2614
      %v2902 = vunpack.c.h.b16 %v2614
      %v2903 = vunpack.c.l.b16 %v2615
      %v2904 = vunpack.c.h.b16 %v2615
      %v2905 = vunpack.c.l.b16 %v2616
      %v2906 = vunpack.c.h.b16 %v2616
      %v2907 = vunpack.c.l.b16 %v2617
      %v2908 = vunpack.c.h.b16 %v2617
      %v2909 = vunpack.c.l.b16 %v2618
      %v2910 = vunpack.c.h.b16 %v2618
      %v2911 = vunpack.c.l.b16 %v2619
      %v2912 = vunpack.c.h.b16 %v2619
      %v2913 = vunpack.c.l.b16 %v2620
      %v2914 = vunpack.c.h.b16 %v2620
      %v2915 = vunpack.c.l.b16 %v2621
      %v2916 = vunpack.c.h.b16 %v2621
      %v2917 = vunpack.c.l.b16 %v2622
      %v2918 = vunpack.c.h.b16 %v2622
      %v2919 = vunpack.c.l.b16 %v2623
      %v2920 = vunpack.c.h.b16 %v2623
      %v2921 = vunpack.c.l.b16 %v2624
      %v2922 = vunpack.c.h.b16 %v2624
      %v2923 = vunpack.c.l.b16 %v2625
      %v2924 = vunpack.c.h.b16 %v2625
      %v2925 = vunpack.c.l.b16 %v2626
      %v2926 = vunpack.c.h.b16 %v2626
      %v2927 = vunpack.c.l.b16 %v2627
      %v2928 = vunpack.c.h.b16 %v2627
      %v2929 = vunpack.c.l.b16 %v2628
      %v2930 = vunpack.c.h.b16 %v2628
      %v2931 = vunpack.c.l.b16 %v2629
      %v2932 = vunpack.c.h.b16 %v2629
      %v2933 = vunpack.c.l.b16 %v2630
      %v2934 = vunpack.c.h.b16 %v2630
      %v2935 = vunpack.c.l.b16 %v2631
      %v2936 = vunpack.c.h.b16 %v2631
      %v2937 = vunpack.c.l.b16 %v2632
      %v2938 = vunpack.c.h.b16 %v2632
      %v2939 = vunpack.c.l.b16 %v2633
      %v2940 = vunpack.c.h.b16 %v2633
      %v2941 = vunpack.c.l.b16 %v2634
      %v2942 = vunpack.c.h.b16 %v2634
      %v2943 = vunpack.c.l.b16 %v2635
      %v2944 = vunpack.c.h.b16 %v2635
      %v2945 = vunpack.c.l.b16 %v2636
      %v2946 = vunpack.c.h.b16 %v2636
      %v2947 = vunpack.c.l.b16 %v2637
      %v2948 = vunpack.c.h.b16 %v2637
      %v2949 = vunpack.c.l.b16 %v2638
      %v2950 = vunpack.c.h.b16 %v2638
      %v2951 = vunpack.c.l.b16 %v2639
      %v2952 = vunpack.c.h.b16 %v2639
      %v2953 = vunpack.c.l.b16 %v2640
      %v2954 = vunpack.c.h.b16 %v2640
      %v2955 = vunpack.c.l.b16 %v2641
      %v2956 = vunpack.c.h.b16 %v2641
      %v2957 = vunpack.c.l.b16 %v2642
      %v2958 = vunpack.c.h.b16 %v2642
      %v2959 = vunpack.c.l.b16 %v2643
      %v2960 = vunpack.c.h.b16 %v2643
      %v2961 = vunpack.c.l.b16 %v2644
      %v2962 = vunpack.c.h.b16 %v2644
      %v2963 = vunpack.c.l.b16 %v2645
      %v2964 = vunpack.c.h.b16 %v2645
      %v2965 = vunpack.c.l.b16 %v2646
      %v2966 = vunpack.c.h.b16 %v2646
      %v2967 = vunpack.c.l.b16 %v2647
      %v2968 = vunpack.c.h.b16 %v2647
      %v2969 = vunpack.c.l.b16 %v2648
      %v2970 = vunpack.c.h.b16 %v2648
      %v2971 = vunpack.c.l.b16 %v2649
      %v2972 = vunpack.c.h.b16 %v2649
      %v2973 = vunpack.c.l.b16 %v2650
      %v2974 = vunpack.c.h.b16 %v2650
      %v2975 = vunpack.c.l.b16 %v2651
      %v2976 = vunpack.c.h.b16 %v2651
      %v2977 = vunpack.c.l.b16 %v2652
      %v2978 = vunpack.c.h.b16 %v2652
      %v2979 = vunpack.c.l.b16 %v2653
      %v2980 = vunpack.c.h.b16 %v2653
      %v2981 = vunpack.c.l.b16 %v2654
      %v2982 = vunpack.c.h.b16 %v2654
      %v2983 = vunpack.c.l.b16 %v2655
      %v2984 = vunpack.c.h.b16 %v2655
      %v2985 = vunpack.c.l.b16 %v2656
      %v2986 = vunpack.c.h.b16 %v2656
      %v2987 = vunpack.c.l.b16 %v2657
      %v2988 = vunpack.c.h.b16 %v2657
      %v2989 = vunpack.c.l.b16 %v2658
      %v2990 = vunpack.c.h.b16 %v2658
      %v2991 = vunpack.c.l.b16 %v2659
      %v2992 = vunpack.c.h.b16 %v2659
      %v2993 = vunpack.c.l.b16 %v2660
      %v2994 = vunpack.c.h.b16 %v2660
      %v2995 = vunpack.c.l.b16 %v2661
      %v2996 = vunpack.c.h.b16 %v2661
      %v2997 = vunpack.c.l.b16 %v2662
      %v2998 = vunpack.c.h.b16 %v2662
      %v2999 = vunpack.c.l.b16 %v2663
      %v3000 = vunpack.c.h.b16 %v2663
      %v3001 = vunpack.c.l.b16 %v2664
      %v3002 = vunpack.c.h.b16 %v2664
      %v3003 = vunpack.c.l.b16 %v2665
      %v3004 = vunpack.c.h.b16 %v2665
      %v3005 = vunpack.c.l.b16 %v2666
      %v3006 = vunpack.c.h.b16 %v2666
      %v3007 = vunpack.c.l.b16 %v2667
      %v3008 = vunpack.c.h.b16 %v2667
      %v3009 = vunpack.c.l.b16 %v2668
      %v3010 = vunpack.c.h.b16 %v2668
      %v3011 = vunpack.c.l.b16 %v2669
      %v3012 = vunpack.c.h.b16 %v2669
      %v3013 = vunpack.c.l.b16 %v2670
      %v3014 = vunpack.c.h.b16 %v2670
      %v3015 = vunpack.c.l.b16 %v2671
      %v3016 = vunpack.c.h.b16 %v2671
      %v3017 = vunpack.c.l.b16 %v2672
      %v3018 = vunpack.c.h.b16 %v2672
      %v3019 = vunpack.c.l.b16 %v2673
      %v3020 = vunpack.c.h.b16 %v2673
      %v3021 = vunpack.c.l.b16 %v2674
      %v3022 = vunpack.c.h.b16 %v2674
      %v3023 = vunpack.c.l.b16 %v2675
      %v3024 = vunpack.c.h.b16 %v2675
      %v3025 = vunpack.c.l.b16 %v2676
      %v3026 = vunpack.c.h.b16 %v2676
      %v3027 = vunpack.c.l.b16 %v2677
      %v3028 = vunpack.c.h.b16 %v2677
      %v3029 = vunpack.c.l.b16 %v2678
      %v3030 = vunpack.c.h.b16 %v2678
      %v3031 = vunpack.c.l.b16 %v2679
      %v3032 = vunpack.c.h.b16 %v2679
      %v3033 = vunpack.c.l.b16 %v2680
      %v3034 = vunpack.c.h.b16 %v2680
      %v3035 = vunpack.c.l.b16 %v2681
      %v3036 = vunpack.c.h.b16 %v2681
      %v3037 = vunpack.c.l.b16 %v2682
      %v3038 = vunpack.c.h.b16 %v2682
      %v3039 = vunpack.c.l.b16 %v2683
      %v3040 = vunpack.c.h.b16 %v2683
      %v3041 = vunpack.c.l.b16 %v2684
      %v3042 = vunpack.c.h.b16 %v2684
      %v3043 = vunpack.c.l.b16 %v2685
      %v3044 = vunpack.c.h.b16 %v2685
      %v3045 = vunpack.c.l.b16 %v2686
      %v3046 = vunpack.c.h.b16 %v2686
      %v3047 = vunpack.c.l.b16 %v2687
      %v3048 = vunpack.c.h.b16 %v2687
      %v3049 = vunpack.c.l.b16 %v2688
      %v3050 = vunpack.c.h.b16 %v2688
      %v3051 = vunpack.c.l.b16 %v2689
      %v3052 = vunpack.c.h.b16 %v2689
      %v3053 = vunpack.c.l.b16 %v2690
      %v3054 = vunpack.c.h.b16 %v2690
      %v3055 = vunpack.c.l.b16 %v2691
      %v3056 = vunpack.c.h.b16 %v2691
      %v3057 = vunpack.c.l.b16 %v2692
      %v3058 = vunpack.c.h.b16 %v2692
      %v3059 = vunpack.c.l.b16 %v2693
      %v3060 = vunpack.c.h.b16 %v2693
      %v3061 = vunpack.c.l.b16 %v2694
      %v3062 = vunpack.c.h.b16 %v2694
      %v3063 = vunpack.c.l.b16 %v2695
      %v3064 = vunpack.c.h.b16 %v2695
      %v3065 = vunpack.c.l.b16 %v2696
      %v3066 = vunpack.c.h.b16 %v2696
      %v3067 = vunpack.c.l.b16 %v2697
      %v3068 = vunpack.c.h.b16 %v2697
      %v3069 = vunpack.c.l.b16 %v2698
      %v3070 = vunpack.c.h.b16 %v2698
      %v3071 = vunpack.c.l.b16 %v2699
      %v3072 = vunpack.c.h.b16 %v2699
      %v3073 = vunpack.c.l.b16 %v2700
      %v3074 = vunpack.c.h.b16 %v2700
      %v3075 = vunpack.c.l.b16 %v2701
      %v3076 = vunpack.c.h.b16 %v2701
      %v3077 = vunpack.c.l.b16 %v2702
      %v3078 = vunpack.c.h.b16 %v2702
      %v3079 = vunpack.c.l.b16 %v2703
      %v3080 = vunpack.c.h.b16 %v2703
      %v3081 = vunpack.c.l.b16 %v2704
      %v3082 = vunpack.c.h.b16 %v2704
      %v3083 = vunpack.c.l.b16 %v2705
      %v3084 = vunpack.c.h.b16 %v2705
      %v3085 = vunpack.c.l.b16 %v2706
      %v3086 = vunpack.c.h.b16 %v2706
      %v3087 = vunpack.c.l.b16 %v2707
      %v3088 = vunpack.c.h.b16 %v2707
      %v3089 = vunpack.c.l.b16 %v2708
      %v3090 = vunpack.c.h.b16 %v2708
      %v3091 = vunpack.c.l.b16 %v2709
      %v3092 = vunpack.c.h.b16 %v2709
      %v3093 = vunpack.c.l.b16 %v2710
      %v3094 = vunpack.c.h.b16 %v2710
      %v3095 = vpack.c.b16 %v2839, %v2839
      %v3096 = vpack.c.b16 %v2840, %v2840
      %v3097 = vpack.c.b16 %v2841, %v2841
      %v3098 = vpack.c.b16 %v2842, %v2842
      %v3099 = vpack.c.b16 %v2843, %v2843
      %v3100 = vpack.c.b16 %v2844, %v2844
      %v3101 = vpack.c.b16 %v2845, %v2845
      %v3102 = vpack.c.b16 %v2846, %v2846
      %v3103 = vpack.c.b16 %v2847, %v2847
      %v3104 = vpack.c.b16 %v2848, %v2848
      %v3105 = vpack.c.b16 %v2849, %v2849
      %v3106 = vpack.c.b16 %v2850, %v2850
      %v3107 = vpack.c.b16 %v2851, %v2851
      %v3108 = vpack.c.b16 %v2852, %v2852
      %v3109 = vpack.c.b16 %v2853, %v2853
      %v3110 = vpack.c.b16 %v2854, %v2854
      %v3111 = vpack.c.b16 %v2855, %v2855
      %v3112 = vpack.c.b16 %v2856, %v2856
      %v3113 = vpack.c.b16 %v2857, %v2857
      %v3114 = vpack.c.b16 %v2858, %v2858
      %v3115 = vpack.c.b16 %v2859, %v2859
      %v3116 = vpack.c.b16 %v2860, %v2860
      %v3117 = vpack.c.b16 %v2861, %v2861
      %v3118 = vpack.c.b16 %v2862, %v2862
      %v3119 = vpack.c.b16 %v2863, %v2863
      %v3120 = vpack.c.b16 %v2864, %v2864
      %v3121 = vpack.c.b16 %v2865, %v2865
      %v3122 = vpack.c.b16 %v2866, %v2866
      %v3123 = vpack.c.b16 %v2867, %v2867
      %v3124 = vpack.c.b16 %v2868, %v2868
      %v3125 = vpack.c.b16 %v2869, %v2869
      %v3126 = vpack.c.b16 %v2870, %v2870
      %v3127 = vpack.c.b16 %v2871, %v2871
      %v3128 = vpack.c.b16 %v2872, %v2872
      %v3129 = vpack.c.b16 %v2873, %v2873
      %v3130 = vpack.c.b16 %v2874, %v2874
      %v3131 = vpack.c.b16 %v2875, %v2875
      %v3132 = vpack.c.b16 %v2876, %v2876
      %v3133 = vpack.c.b16 %v2877, %v2877
      %v3134 = vpack.c.b16 %v2878, %v2878
      %v3135 = vpack.c.b16 %v2879, %v2879
      %v3136 = vpack.c.b16 %v2880, %v2880
      %v3137 = vpack.c.b16 %v2881, %v2881
      %v3138 = vpack.c.b16 %v2882, %v2882
      %v3139 = vpack.c.b16 %v2883, %v2883
      %v3140 = vpack.c.b16 %v2884, %v2884
      %v3141 = vpack.c.b16 %v2885, %v2885
      %v3142 = vpack.c.b16 %v2886, %v2886
      %v3143 = vpack.c.b16 %v2887, %v2887
      %v3144 = vpack.c.b16 %v2888, %v2888
      %v3145 = vpack.c.b16 %v2889, %v2889
      %v3146 = vpack.c.b16 %v2890, %v2890
      %v3147 = vpack.c.b16 %v2891, %v2891
      %v3148 = vpack.c.b16 %v2892, %v2892
      %v3149 = vpack.c.b16 %v2893, %v2893
      %v3150 = vpack.c.b16 %v2894, %v2894
      %v3151 = vpack.c.b16 %v2895, %v2895
      %v3152 = vpack.c.b16 %v2896, %v2896
      %v3153 = vpack.c.b16 %v2897, %v2897
      %v3154 = vpack.c.b16 %v2898, %v2898
      %v3155 = vpack.c.b16 %v2899, %v2899
      %v3156 = vpack.c.b16 %v2900, %v2900
      %v3157 = vpack.c.b16 %v2901, %v2901
      %v3158 = vpack.c.b16 %v2902, %v2902
      %v3159 = vpack.c.b16 %v2903, %v2903
      %v3160 = vpack.c.b16 %v2904, %v2904
      %v3161 = vpack.c.b16 %v2905, %v2905
      %v3162 = vpack.c.b16 %v2906, %v2906
      %v3163 = vpack.c.b16 %v2907, %v2907
      %v3164 = vpack.c.b16 %v2908, %v2908
      %v3165 = vpack.c.b16 %v2909, %v2909
      %v3166 = vpack.c.b16 %v2910, %v2910
      %v3167 = vpack.c.b16 %v2911, %v2911
      %v3168 = vpack.c.b16 %v2912, %v2912
      %v3169 = vpack.c.b16 %v2913, %v2913
      %v3170 = vpack.c.b16 %v2914, %v2914
      %v3171 = vpack.c.b16 %v2915, %v2915
      %v3172 = vpack.c.b16 %v2916, %v2916
      %v3173 = vpack.c.b16 %v2917, %v2917
      %v3174 = vpack.c.b16 %v2918, %v2918
      %v3175 = vpack.c.b16 %v2919, %v2919
      %v3176 = vpack.c.b16 %v2920, %v2920
      %v3177 = vpack.c.b16 %v2921, %v2921
      %v3178 = vpack.c.b16 %v2922, %v2922
      %v3179 = vpack.c.b16 %v2923, %v2923
      %v3180 = vpack.c.b16 %v2924, %v2924
      %v3181 = vpack.c.b16 %v2925, %v2925
      %v3182 = vpack.c.b16 %v2926, %v2926
      %v3183 = vpack.c.b16 %v2927, %v2927
      %v3184 = vpack.c.b16 %v2928, %v2928
      %v3185 = vpack.c.b16 %v2929, %v2929
      %v3186 = vpack.c.b16 %v2930, %v2930
      %v3187 = vpack.c.b16 %v2931, %v2931
      %v3188 = vpack.c.b16 %v2932, %v2932
      %v3189 = vpack.c.b16 %v2933, %v2933
      %v3190 = vpack.c.b16 %v2934, %v2934
      %v3191 = vpack.c.b16 %v2935, %v2935
      %v3192 = vpack.c.b16 %v2936, %v2936
      %v3193 = vpack.c.b16 %v2937, %v2937
      %v3194 = vpack.c.b16 %v2938, %v2938
      %v3195 = vpack.c.b16 %v2939, %v2939
      %v3196 = vpack.c.b16 %v2940, %v2940
      %v3197 = vpack.c.b16 %v2941, %v2941
      %v3198 = vpack.c.b16 %v2942, %v2942
      %v3199 = vpack.c.b16 %v2943, %v2943
      %v3200 = vpack.c.b16 %v2944, %v2944
      %v3201 = vpack.c.b16 %v2945, %v2945
      %v3202 = vpack.c.b16 %v2946, %v2946
      %v3203 = vpack.c.b16 %v2947, %v2947
      %v3204 = vpack.c.b16 %v2948, %v2948
      %v3205 = vpack.c.b16 %v2949, %v2949
      %v3206 = vpack.c.b16 %v2950, %v2950
      %v3207 = vpack.c.b16 %v2951, %v2951
      %v3208 = vpack.c.b16 %v2952, %v2952
      %v3209 = vpack.c.b16 %v2953, %v2953
      %v3210 = vpack.c.b16 %v2954, %v2954
      %v3211 = vpack.c.b16 %v2955, %v2955
      %v3212 = vpack.c.b16 %v2956, %v2956
      %v3213 = vpack.c.b16 %v2957, %v2957
      %v3214 = vpack.c.b16 %v2958, %v2958
      %v3215 = vpack.c.b16 %v2959, %v2959
      %v3216 = vpack.c.b16 %v2960, %v2960
      %v3217 = vpack.c.b16 %v2961, %v2961
      %v3218 = vpack.c.b16 %v2962, %v2962
      %v3219 = vpack.c.b16 %v2963, %v2963
      %v3220 = vpack.c.b16 %v2964, %v2964
      %v3221 = vpack.c.b16 %v2965, %v2965
      %v3222 = vpack.c.b16 %v2966, %v2966
      %v3223 = vpack.c.b16 %v2967, %v2967
      %v3224 = vpack.c.b16 %v2968, %v2968
      %v3225 = vpack.c.b16 %v2969, %v2969
      %v3226 = vpack.c.b16 %v2970, %v2970
      %v3227 = vpack.c.b16 %v2971, %v2971
      %v3228 = vpack.c.b16 %v2972, %v2972
      %v3229 = vpack.c.b16 %v2973, %v2973
      %v3230 = vpack.c.b16 %v2974, %v2974
      %v3231 = vpack.c.b16 %v2975, %v2975
      %v3232 = vpack.c.b16 %v2976, %v2976
      %v3233 = vpack.c.b16 %v2977, %v2977
      %v3234 = vpack.c.b16 %v2978, %v2978
      %v3235 = vpack.c.b16 %v2979, %v2979
      %v3236 = vpack.c.b16 %v2980, %v2980
      %v3237 = vpack.c.b16 %v2981, %v2981
      %v3238 = vpack.c.b16 %v2982, %v2982
      %v3239 = vpack.c.b16 %v2983, %v2983
      %v3240 = vpack.c.b16 %v2984, %v2984
      %v3241 = vpack.c.b16 %v2985, %v2985
      %v3242 = vpack.c.b16 %v2986, %v2986
      %v3243 = vpack.c.b16 %v2987, %v2987
      %v3244 = vpack.c.b16 %v2988, %v2988
      %v3245 = vpack.c.b16 %v2989, %v2989
      %v3246 = vpack.c.b16 %v2990, %v2990
      %v3247 = vpack.c.b16 %v2991, %v2991
      %v3248 = vpack.c.b16 %v2992, %v2992
      %v3249 = vpack.c.b16 %v2993, %v2993
      %v3250 = vpack.c.b16 %v2994, %v2994
      %v3251 = vpack.c.b16 %v2995, %v2995
      %v3252 = vpack.c.b16 %v2996, %v2996
      %v3253 = vpack.c.b16 %v2997, %v2997
      %v3254 = vpack.c.b16 %v2998, %v2998
      %v3255 = vpack.c.b16 %v2999, %v2999
      %v3256 = vpack.c.b16 %v3000, %v3000
      %v3257 = vpack.c.b16 %v3001, %v3001
      %v3258 = vpack.c.b16 %v3002, %v3002
      %v3259 = vpack.c.b16 %v3003, %v3003
      %v3260 = vpack.c.b16 %v3004, %v3004
      %v3261 = vpack.c.b16 %v3005, %v3005
      %v3262 = vpack.c.b16 %v3006, %v3006
      %v3263 = vpack.c.b16 %v3007, %v3007
      %v3264 = vpack.c.b16 %v3008, %v3008
      %v3265 = vpack.c.b16 %v3009, %v3009
      %v3266 = vpack.c.b16 %v3010, %v3010
      %v3267 = vpack.c.b16 %v3011, %v3011
      %v3268 = vpack.c.b16 %v3012, %v3012
      %v3269 = vpack.c.b16 %v3013, %v3013
      %v3270 = vpack.c.b16 %v3014, %v3014
      %v3271 = vpack.c.b16 %v3015, %v3015
      %v3272 = vpack.c.b16 %v3016, %v3016
      %v3273 = vpack.c.b16 %v3017, %v3017
      %v3274 = vpack.c.b16 %v3018, %v3018
      %v3275 = vpack.c.b16 %v3019, %v3019
      %v3276 = vpack.c.b16 %v3020, %v3020
      %v3277 = vpack.c.b16 %v3021, %v3021
      %v3278 = vpack.c.b16 %v3022, %v3022
      %v3279 = vpack.c.b16 %v3023, %v3023
      %v3280 = vpack.c.b16 %v3024, %v3024
      %v3281 = vpack.c.b16 %v3025, %v3025
      %v3282 = vpack.c.b16 %v3026, %v3026
      %v3283 = vpack.c.b16 %v3027, %v3027
      %v3284 = vpack.c.b16 %v3028, %v3028
      %v3285 = vpack.c.b16 %v3029, %v3029
      %v3286 = vpack.c.b16 %v3030, %v3030
      %v3287 = vpack.c.b16 %v3031, %v3031
      %v3288 = vpack.c.b16 %v3032, %v3032
      %v3289 = vpack.c.b16 %v3033, %v3033
      %v3290 = vpack.c.b16 %v3034, %v3034
      %v3291 = vpack.c.b16 %v3035, %v3035
      %v3292 = vpack.c.b16 %v3036, %v3036
      %v3293 = vpack.c.b16 %v3037, %v3037
      %v3294 = vpack.c.b16 %v3038, %v3038
      %v3295 = vpack.c.b16 %v3039, %v3039
      %v3296 = vpack.c.b16 %v3040, %v3040
      %v3297 = vpack.c.b16 %v3041, %v3041
      %v3298 = vpack.c.b16 %v3042, %v3042
      %v3299 = vpack.c.b16 %v3043, %v3043
      %v3300 = vpack.c.b16 %v3044, %v3044
      %v3301 = vpack.c.b16 %v3045, %v3045
      %v3302 = vpack.c.b16 %v3046, %v3046
      %v3303 = vpack.c.b16 %v3047, %v3047
      %v3304 = vpack.c.b16 %v3048, %v3048
      %v3305 = vpack.c.b16 %v3049, %v3049
      %v3306 = vpack.c.b16 %v3050, %v3050
      %v3307 = vpack.c.b16 %v3051, %v3051
      %v3308 = vpack.c.b16 %v3052, %v3052
      %v3309 = vpack.c.b16 %v3053, %v3053
      %v3310 = vpack.c.b16 %v3054, %v3054
      %v3311 = vpack.c.b16 %v3055, %v3055
      %v3312 = vpack.c.b16 %v3056, %v3056
      %v3313 = vpack.c.b16 %v3057, %v3057
      %v3314 = vpack.c.b16 %v3058, %v3058
      %v3315 = vpack.c.b16 %v3059, %v3059
      %v3316 = vpack.c.b16 %v3060, %v3060
      %v3317 = vpack.c.b16 %v3061, %v3061
      %v3318 = vpack.c.b16 %v3062, %v3062
      %v3319 = vpack.c.b16 %v3063, %v3063
      %v3320 = vpack.c.b16 %v3064, %v3064
      %v3321 = vpack.c.b16 %v3065, %v3065
      %v3322 = vpack.c.b16 %v3066, %v3066
      %v3323 = vpack.c.b16 %v3067, %v3067
      %v3324 = vpack.c.b16 %v3068, %v3068
      %v3325 = vpack.c.b16 %v3069, %v3069
      %v3326 = vpack.c.b16 %v3070, %v3070
      %v3327 = vpack.c.b16 %v3071, %v3071
      %v3328 = vpack.c.b16 %v3072, %v3072
      %v3329 = vpack.c.b16 %v3073, %v3073
      %v3330 = vpack.c.b16 %v3074, %v3074
      %v3331 = vpack.c.b16 %v3075, %v3075
      %v3332 = vpack.c.b16 %v3076, %v3076
      %v3333 = vpack.c.b16 %v3077, %v3077
      %v3334 = vpack.c.b16 %v3078, %v3078
      %v3335 = vpack.c.b16 %v3079, %v3079
      %v3336 = vpack.c.b16 %v3080, %v3080
      %v3337 = vpack.c.b16 %v3081, %v3081
      %v3338 = vpack.c.b16 %v3082, %v3082
      %v3339 = vpack.c.b16 %v3083, %v3083
      %v3340 = vpack.c.b16 %v3084, %v3084
      %v3341 = vpack.c.b16 %v3085, %v3085
      %v3342 = vpack.c.b16 %v3086, %v3086
      %v3343 = vpack.c.b16 %v3087, %v3087
      %v3344 = vpack.c.b16 %v3088, %v3088
      %v3345 = vpack.c.b16 %v3089, %v3089
      %v3346 = vpack.c.b16 %v3090, %v3090
      %v3347 = vpack.c.b16 %v3091, %v3091
      %v3348 = vpack.c.b16 %v3092, %v3092
      %v3349 = vpack.c.b16 %v3093, %v3093
      %v3350 = vpack.c.b16 %v3094, %v3094
      %3607 = vst [vmem:[%s172] sm:$0xf] %v3095
      %3608 = vst [vmem:[%s172 + $0x4] sm:$0xf] %v3096
      %3609 = vst [vmem:[%s172 + $0x8] sm:$0xf] %v3097
      %3610 = vst [vmem:[%s172 + $0xc] sm:$0xf] %v3098
      %3611 = vst [vmem:[%s172 + $0x10] sm:$0xf] %v3099
      %3612 = vst [vmem:[%s172 + $0x14] sm:$0xf] %v3100
      %3613 = vst [vmem:[%s172 + $0x18] sm:$0xf] %v3101
      %3614 = vst [vmem:[%s172 + $0x1c] sm:$0xf] %v3102
      %3615 = vst [vmem:[%s172 + $0x20] sm:$0xf] %v3103
      %3616 = vst [vmem:[%s172 + $0x24] sm:$0xf] %v3104
      %3617 = vst [vmem:[%s172 + $0x28] sm:$0xf] %v3105
      %3618 = vst [vmem:[%s172 + $0x2c] sm:$0xf] %v3106
      %3619 = vst [vmem:[%s172 + $0x30] sm:$0xf] %v3107
      %3620 = vst [vmem:[%s172 + $0x34] sm:$0xf] %v3108
      %3621 = vst [vmem:[%s172 + $0x38] sm:$0xf] %v3109
      %3622 = vst [vmem:[%s172 + $0x3c] sm:$0xf] %v3110
      %3623 = vst [vmem:[%s172 + $0x40] sm:$0xf] %v3111
      %3624 = vst [vmem:[%s172 + $0x44] sm:$0xf] %v3112
      %3625 = vst [vmem:[%s172 + $0x48] sm:$0xf] %v3113
      %3626 = vst [vmem:[%s172 + $0x4c] sm:$0xf] %v3114
      %3627 = vst [vmem:[%s172 + $0x50] sm:$0xf] %v3115
      %3628 = vst [vmem:[%s172 + $0x54] sm:$0xf] %v3116
      %3629 = vst [vmem:[%s172 + $0x58] sm:$0xf] %v3117
      %3630 = vst [vmem:[%s172 + $0x5c] sm:$0xf] %v3118
      %3631 = vst [vmem:[%s172 + $0x60] sm:$0xf] %v3119
      %3632 = vst [vmem:[%s172 + $0x64] sm:$0xf] %v3120
      %3633 = vst [vmem:[%s172 + $0x68] sm:$0xf] %v3121
      %3634 = vst [vmem:[%s172 + $0x6c] sm:$0xf] %v3122
      %3635 = vst [vmem:[%s172 + $0x70] sm:$0xf] %v3123
      %3636 = vst [vmem:[%s172 + $0x74] sm:$0xf] %v3124
      %3637 = vst [vmem:[%s172 + $0x78] sm:$0xf] %v3125
      %3638 = vst [vmem:[%s172 + $0x7c] sm:$0xf] %v3126
      %3639 = vst [vmem:[%s172 + $0x80] sm:$0xf] %v3127
      %3640 = vst [vmem:[%s172 + $0x84] sm:$0xf] %v3128
      %3641 = vst [vmem:[%s172 + $0x88] sm:$0xf] %v3129
      %3642 = vst [vmem:[%s172 + $0x8c] sm:$0xf] %v3130
      %3643 = vst [vmem:[%s172 + $0x90] sm:$0xf] %v3131
      %3644 = vst [vmem:[%s172 + $0x94] sm:$0xf] %v3132
      %3645 = vst [vmem:[%s172 + $0x98] sm:$0xf] %v3133
      %3646 = vst [vmem:[%s172 + $0x9c] sm:$0xf] %v3134
      %3647 = vst [vmem:[%s172 + $0xa0] sm:$0xf] %v3135
      %3648 = vst [vmem:[%s172 + $0xa4] sm:$0xf] %v3136
      %3649 = vst [vmem:[%s172 + $0xa8] sm:$0xf] %v3137
      %3650 = vst [vmem:[%s172 + $0xac] sm:$0xf] %v3138
      %3651 = vst [vmem:[%s172 + $0xb0] sm:$0xf] %v3139
      %3652 = vst [vmem:[%s172 + $0xb4] sm:$0xf] %v3140
      %3653 = vst [vmem:[%s172 + $0xb8] sm:$0xf] %v3141
      %3654 = vst [vmem:[%s172 + $0xbc] sm:$0xf] %v3142
      %3655 = vst [vmem:[%s172 + $0xc0] sm:$0xf] %v3143
      %3656 = vst [vmem:[%s172 + $0xc4] sm:$0xf] %v3144
      %3657 = vst [vmem:[%s172 + $0xc8] sm:$0xf] %v3145
      %3658 = vst [vmem:[%s172 + $0xcc] sm:$0xf] %v3146
      %3659 = vst [vmem:[%s172 + $0xd0] sm:$0xf] %v3147
      %3660 = vst [vmem:[%s172 + $0xd4] sm:$0xf] %v3148
      %3661 = vst [vmem:[%s172 + $0xd8] sm:$0xf] %v3149
      %3662 = vst [vmem:[%s172 + $0xdc] sm:$0xf] %v3150
      %3663 = vst [vmem:[%s172 + $0xe0] sm:$0xf] %v3151
      %3664 = vst [vmem:[%s172 + $0xe4] sm:$0xf] %v3152
      %3665 = vst [vmem:[%s172 + $0xe8] sm:$0xf] %v3153
      %3666 = vst [vmem:[%s172 + $0xec] sm:$0xf] %v3154
      %3667 = vst [vmem:[%s172 + $0xf0] sm:$0xf] %v3155
      %3668 = vst [vmem:[%s172 + $0xf4] sm:$0xf] %v3156
      %3669 = vst [vmem:[%s172 + $0xf8] sm:$0xf] %v3157
      %3670 = vst [vmem:[%s172 + $0xfc] sm:$0xf] %v3158
      %3671 = vst [vmem:[%s172 + $0x100] sm:$0xf] %v3159
      %3672 = vst [vmem:[%s172 + $0x104] sm:$0xf] %v3160
      %3673 = vst [vmem:[%s172 + $0x108] sm:$0xf] %v3161
      %3674 = vst [vmem:[%s172 + $0x10c] sm:$0xf] %v3162
      %3675 = vst [vmem:[%s172 + $0x110] sm:$0xf] %v3163
      %3676 = vst [vmem:[%s172 + $0x114] sm:$0xf] %v3164
      %3677 = vst [vmem:[%s172 + $0x118] sm:$0xf] %v3165
      %3678 = vst [vmem:[%s172 + $0x11c] sm:$0xf] %v3166
      %3679 = vst [vmem:[%s172 + $0x120] sm:$0xf] %v3167
      %3680 = vst [vmem:[%s172 + $0x124] sm:$0xf] %v3168
      %3681 = vst [vmem:[%s172 + $0x128] sm:$0xf] %v3169
      %3682 = vst [vmem:[%s172 + $0x12c] sm:$0xf] %v3170
      %3683 = vst [vmem:[%s172 + $0x130] sm:$0xf] %v3171
      %3684 = vst [vmem:[%s172 + $0x134] sm:$0xf] %v3172
      %3685 = vst [vmem:[%s172 + $0x138] sm:$0xf] %v3173
      %3686 = vst [vmem:[%s172 + $0x13c] sm:$0xf] %v3174
      %3687 = vst [vmem:[%s172 + $0x140] sm:$0xf] %v3175
      %3688 = vst [vmem:[%s172 + $0x144] sm:$0xf] %v3176
      %3689 = vst [vmem:[%s172 + $0x148] sm:$0xf] %v3177
      %3690 = vst [vmem:[%s172 + $0x14c] sm:$0xf] %v3178
      %3691 = vst [vmem:[%s172 + $0x150] sm:$0xf] %v3179
      %3692 = vst [vmem:[%s172 + $0x154] sm:$0xf] %v3180
      %3693 = vst [vmem:[%s172 + $0x158] sm:$0xf] %v3181
      %3694 = vst [vmem:[%s172 + $0x15c] sm:$0xf] %v3182
      %3695 = vst [vmem:[%s172 + $0x160] sm:$0xf] %v3183
      %3696 = vst [vmem:[%s172 + $0x164] sm:$0xf] %v3184
      %3697 = vst [vmem:[%s172 + $0x168] sm:$0xf] %v3185
      %3698 = vst [vmem:[%s172 + $0x16c] sm:$0xf] %v3186
      %3699 = vst [vmem:[%s172 + $0x170] sm:$0xf] %v3187
      %3700 = vst [vmem:[%s172 + $0x174] sm:$0xf] %v3188
      %3701 = vst [vmem:[%s172 + $0x178] sm:$0xf] %v3189
      %3702 = vst [vmem:[%s172 + $0x17c] sm:$0xf] %v3190
      %3703 = vst [vmem:[%s172 + $0x180] sm:$0xf] %v3191
      %3704 = vst [vmem:[%s172 + $0x184] sm:$0xf] %v3192
      %3705 = vst [vmem:[%s172 + $0x188] sm:$0xf] %v3193
      %3706 = vst [vmem:[%s172 + $0x18c] sm:$0xf] %v3194
      %3707 = vst [vmem:[%s172 + $0x190] sm:$0xf] %v3195
      %3708 = vst [vmem:[%s172 + $0x194] sm:$0xf] %v3196
      %3709 = vst [vmem:[%s172 + $0x198] sm:$0xf] %v3197
      %3710 = vst [vmem:[%s172 + $0x19c] sm:$0xf] %v3198
      %3711 = vst [vmem:[%s172 + $0x1a0] sm:$0xf] %v3199
      %3712 = vst [vmem:[%s172 + $0x1a4] sm:$0xf] %v3200
      %3713 = vst [vmem:[%s172 + $0x1a8] sm:$0xf] %v3201
      %3714 = vst [vmem:[%s172 + $0x1ac] sm:$0xf] %v3202
      %3715 = vst [vmem:[%s172 + $0x1b0] sm:$0xf] %v3203
      %3716 = vst [vmem:[%s172 + $0x1b4] sm:$0xf] %v3204
      %3717 = vst [vmem:[%s172 + $0x1b8] sm:$0xf] %v3205
      %3718 = vst [vmem:[%s172 + $0x1bc] sm:$0xf] %v3206
      %3719 = vst [vmem:[%s172 + $0x1c0] sm:$0xf] %v3207
      %3720 = vst [vmem:[%s172 + $0x1c4] sm:$0xf] %v3208
      %3721 = vst [vmem:[%s172 + $0x1c8] sm:$0xf] %v3209
      %3722 = vst [vmem:[%s172 + $0x1cc] sm:$0xf] %v3210
      %3723 = vst [vmem:[%s172 + $0x1d0] sm:$0xf] %v3211
      %3724 = vst [vmem:[%s172 + $0x1d4] sm:$0xf] %v3212
      %3725 = vst [vmem:[%s172 + $0x1d8] sm:$0xf] %v3213
      %3726 = vst [vmem:[%s172 + $0x1dc] sm:$0xf] %v3214
      %3727 = vst [vmem:[%s172 + $0x1e0] sm:$0xf] %v3215
      %3728 = vst [vmem:[%s172 + $0x1e4] sm:$0xf] %v3216
      %3729 = vst [vmem:[%s172 + $0x1e8] sm:$0xf] %v3217
      %3730 = vst [vmem:[%s172 + $0x1ec] sm:$0xf] %v3218
      %3731 = vst [vmem:[%s172 + $0x1f0] sm:$0xf] %v3219
      %3732 = vst [vmem:[%s172 + $0x1f4] sm:$0xf] %v3220
      %3733 = vst [vmem:[%s172 + $0x1f8] sm:$0xf] %v3221
      %3734 = vst [vmem:[%s172 + $0x1fc] sm:$0xf] %v3222
      %3735 = vst [vmem:[%s172 + $0x200] sm:$0xf] %v3223
      %3736 = vst [vmem:[%s172 + $0x204] sm:$0xf] %v3224
      %3737 = vst [vmem:[%s172 + $0x208] sm:$0xf] %v3225
      %3738 = vst [vmem:[%s172 + $0x20c] sm:$0xf] %v3226
      %3739 = vst [vmem:[%s172 + $0x210] sm:$0xf] %v3227
      %3740 = vst [vmem:[%s172 + $0x214] sm:$0xf] %v3228
      %3741 = vst [vmem:[%s172 + $0x218] sm:$0xf] %v3229
      %3742 = vst [vmem:[%s172 + $0x21c] sm:$0xf] %v3230
      %3743 = vst [vmem:[%s172 + $0x220] sm:$0xf] %v3231
      %3744 = vst [vmem:[%s172 + $0x224] sm:$0xf] %v3232
      %3745 = vst [vmem:[%s172 + $0x228] sm:$0xf] %v3233
      %3746 = vst [vmem:[%s172 + $0x22c] sm:$0xf] %v3234
      %3747 = vst [vmem:[%s172 + $0x230] sm:$0xf] %v3235
      %3748 = vst [vmem:[%s172 + $0x234] sm:$0xf] %v3236
      %3749 = vst [vmem:[%s172 + $0x238] sm:$0xf] %v3237
      %3750 = vst [vmem:[%s172 + $0x23c] sm:$0xf] %v3238
      %3751 = vst [vmem:[%s172 + $0x240] sm:$0xf] %v3239
      %3752 = vst [vmem:[%s172 + $0x244] sm:$0xf] %v3240
      %3753 = vst [vmem:[%s172 + $0x248] sm:$0xf] %v3241
      %3754 = vst [vmem:[%s172 + $0x24c] sm:$0xf] %v3242
      %3755 = vst [vmem:[%s172 + $0x250] sm:$0xf] %v3243
      %3756 = vst [vmem:[%s172 + $0x254] sm:$0xf] %v3244
      %3757 = vst [vmem:[%s172 + $0x258] sm:$0xf] %v3245
      %3758 = vst [vmem:[%s172 + $0x25c] sm:$0xf] %v3246
      %3759 = vst [vmem:[%s172 + $0x260] sm:$0xf] %v3247
      %3760 = vst [vmem:[%s172 + $0x264] sm:$0xf] %v3248
      %3761 = vst [vmem:[%s172 + $0x268] sm:$0xf] %v3249
      %3762 = vst [vmem:[%s172 + $0x26c] sm:$0xf] %v3250
      %3763 = vst [vmem:[%s172 + $0x270] sm:$0xf] %v3251
      %3764 = vst [vmem:[%s172 + $0x274] sm:$0xf] %v3252
      %3765 = vst [vmem:[%s172 + $0x278] sm:$0xf] %v3253
      %3766 = vst [vmem:[%s172 + $0x27c] sm:$0xf] %v3254
      %3767 = vst [vmem:[%s172 + $0x280] sm:$0xf] %v3255
      %3768 = vst [vmem:[%s172 + $0x284] sm:$0xf] %v3256
      %3769 = vst [vmem:[%s172 + $0x288] sm:$0xf] %v3257
      %3770 = vst [vmem:[%s172 + $0x28c] sm:$0xf] %v3258
      %3771 = vst [vmem:[%s172 + $0x290] sm:$0xf] %v3259
      %3772 = vst [vmem:[%s172 + $0x294] sm:$0xf] %v3260
      %3773 = vst [vmem:[%s172 + $0x298] sm:$0xf] %v3261
      %3774 = vst [vmem:[%s172 + $0x29c] sm:$0xf] %v3262
      %3775 = vst [vmem:[%s172 + $0x2a0] sm:$0xf] %v3263
      %3776 = vst [vmem:[%s172 + $0x2a4] sm:$0xf] %v3264
      %3777 = vst [vmem:[%s172 + $0x2a8] sm:$0xf] %v3265
      %3778 = vst [vmem:[%s172 + $0x2ac] sm:$0xf] %v3266
      %3779 = vst [vmem:[%s172 + $0x2b0] sm:$0xf] %v3267
      %3780 = vst [vmem:[%s172 + $0x2b4] sm:$0xf] %v3268
      %3781 = vst [vmem:[%s172 + $0x2b8] sm:$0xf] %v3269
      %3782 = vst [vmem:[%s172 + $0x2bc] sm:$0xf] %v3270
      %3783 = vst [vmem:[%s172 + $0x2c0] sm:$0xf] %v3271
      %3784 = vst [vmem:[%s172 + $0x2c4] sm:$0xf] %v3272
      %3785 = vst [vmem:[%s172 + $0x2c8] sm:$0xf] %v3273
      %3786 = vst [vmem:[%s172 + $0x2cc] sm:$0xf] %v3274
      %3787 = vst [vmem:[%s172 + $0x2d0] sm:$0xf] %v3275
      %3788 = vst [vmem:[%s172 + $0x2d4] sm:$0xf] %v3276
      %3789 = vst [vmem:[%s172 + $0x2d8] sm:$0xf] %v3277
      %3790 = vst [vmem:[%s172 + $0x2dc] sm:$0xf] %v3278
      %3791 = vst [vmem:[%s172 + $0x2e0] sm:$0xf] %v3279
      %3792 = vst [vmem:[%s172 + $0x2e4] sm:$0xf] %v3280
      %3793 = vst [vmem:[%s172 + $0x2e8] sm:$0xf] %v3281
      %3794 = vst [vmem:[%s172 + $0x2ec] sm:$0xf] %v3282
      %3795 = vst [vmem:[%s172 + $0x2f0] sm:$0xf] %v3283
      %3796 = vst [vmem:[%s172 + $0x2f4] sm:$0xf] %v3284
      %3797 = vst [vmem:[%s172 + $0x2f8] sm:$0xf] %v3285
      %3798 = vst [vmem:[%s172 + $0x2fc] sm:$0xf] %v3286
      %3799 = vst [vmem:[%s172 + $0x300] sm:$0xf] %v3287
      %3800 = vst [vmem:[%s172 + $0x304] sm:$0xf] %v3288
      %3801 = vst [vmem:[%s172 + $0x308] sm:$0xf] %v3289
      %3802 = vst [vmem:[%s172 + $0x30c] sm:$0xf] %v3290
      %3803 = vst [vmem:[%s172 + $0x310] sm:$0xf] %v3291
      %3804 = vst [vmem:[%s172 + $0x314] sm:$0xf] %v3292
      %3805 = vst [vmem:[%s172 + $0x318] sm:$0xf] %v3293
      %3806 = vst [vmem:[%s172 + $0x31c] sm:$0xf] %v3294
      %3807 = vst [vmem:[%s172 + $0x320] sm:$0xf] %v3295
      %3808 = vst [vmem:[%s172 + $0x324] sm:$0xf] %v3296
      %3809 = vst [vmem:[%s172 + $0x328] sm:$0xf] %v3297
      %3810 = vst [vmem:[%s172 + $0x32c] sm:$0xf] %v3298
      %3811 = vst [vmem:[%s172 + $0x330] sm:$0xf] %v3299
      %3812 = vst [vmem:[%s172 + $0x334] sm:$0xf] %v3300
      %3813 = vst [vmem:[%s172 + $0x338] sm:$0xf] %v3301
      %3814 = vst [vmem:[%s172 + $0x33c] sm:$0xf] %v3302
      %3815 = vst [vmem:[%s172 + $0x340] sm:$0xf] %v3303
      %3816 = vst [vmem:[%s172 + $0x344] sm:$0xf] %v3304
      %3817 = vst [vmem:[%s172 + $0x348] sm:$0xf] %v3305
      %3818 = vst [vmem:[%s172 + $0x34c] sm:$0xf] %v3306
      %3819 = vst [vmem:[%s172 + $0x350] sm:$0xf] %v3307
      %3820 = vst [vmem:[%s172 + $0x354] sm:$0xf] %v3308
      %3821 = vst [vmem:[%s172 + $0x358] sm:$0xf] %v3309
      %3822 = vst [vmem:[%s172 + $0x35c] sm:$0xf] %v3310
      %3823 = vst [vmem:[%s172 + $0x360] sm:$0xf] %v3311
      %3824 = vst [vmem:[%s172 + $0x364] sm:$0xf] %v3312
      %3825 = vst [vmem:[%s172 + $0x368] sm:$0xf] %v3313
      %3826 = vst [vmem:[%s172 + $0x36c] sm:$0xf] %v3314
      %3827 = vst [vmem:[%s172 + $0x370] sm:$0xf] %v3315
      %3828 = vst [vmem:[%s172 + $0x374] sm:$0xf] %v3316
      %3829 = vst [vmem:[%s172 + $0x378] sm:$0xf] %v3317
      %3830 = vst [vmem:[%s172 + $0x37c] sm:$0xf] %v3318
      %3831 = vst [vmem:[%s172 + $0x380] sm:$0xf] %v3319
      %3832 = vst [vmem:[%s172 + $0x384] sm:$0xf] %v3320
      %3833 = vst [vmem:[%s172 + $0x388] sm:$0xf] %v3321
      %3834 = vst [vmem:[%s172 + $0x38c] sm:$0xf] %v3322
      %3835 = vst [vmem:[%s172 + $0x390] sm:$0xf] %v3323
      %3836 = vst [vmem:[%s172 + $0x394] sm:$0xf] %v3324
      %3837 = vst [vmem:[%s172 + $0x398] sm:$0xf] %v3325
      %3838 = vst [vmem:[%s172 + $0x39c] sm:$0xf] %v3326
      %3839 = vst [vmem:[%s172 + $0x3a0] sm:$0xf] %v3327
      %3840 = vst [vmem:[%s172 + $0x3a4] sm:$0xf] %v3328
      %3841 = vst [vmem:[%s172 + $0x3a8] sm:$0xf] %v3329
      %3842 = vst [vmem:[%s172 + $0x3ac] sm:$0xf] %v3330
      %3843 = vst [vmem:[%s172 + $0x3b0] sm:$0xf] %v3331
      %3844 = vst [vmem:[%s172 + $0x3b4] sm:$0xf] %v3332
      %3845 = vst [vmem:[%s172 + $0x3b8] sm:$0xf] %v3333
      %3846 = vst [vmem:[%s172 + $0x3bc] sm:$0xf] %v3334
      %3847 = vst [vmem:[%s172 + $0x3c0] sm:$0xf] %v3335
      %3848 = vst [vmem:[%s172 + $0x3c4] sm:$0xf] %v3336
      %3849 = vst [vmem:[%s172 + $0x3c8] sm:$0xf] %v3337
      %3850 = vst [vmem:[%s172 + $0x3cc] sm:$0xf] %v3338
      %3851 = vst [vmem:[%s172 + $0x3d0] sm:$0xf] %v3339
      %3852 = vst [vmem:[%s172 + $0x3d4] sm:$0xf] %v3340
      %3853 = vst [vmem:[%s172 + $0x3d8] sm:$0xf] %v3341
      %3854 = vst [vmem:[%s172 + $0x3dc] sm:$0xf] %v3342
      %3855 = vst [vmem:[%s172 + $0x3e0] sm:$0xf] %v3343
      %3856 = vst [vmem:[%s172 + $0x3e4] sm:$0xf] %v3344
      %3857 = vst [vmem:[%s172 + $0x3e8] sm:$0xf] %v3345
      %3858 = vst [vmem:[%s172 + $0x3ec] sm:$0xf] %v3346
      %3859 = vst [vmem:[%s172 + $0x3f0] sm:$0xf] %v3347
      %3860 = vst [vmem:[%s172 + $0x3f4] sm:$0xf] %v3348
      %3861 = vst [vmem:[%s172 + $0x3f8] sm:$0xf] %v3349
      %3862 = vst [vmem:[%s172 + $0x3fc] sm:$0xf] %v3350
      %s3863 = smul.u32 256, %s14
      %p3864 = scmp.lt.s32.totalorder %s3863, 1023
      %s3865 = scalar_select %p3864, %s3863, 1023
      %s3866 = smul.addr %s3865, 4
      %s3867 = scalar_lea.vmem %s3, %s3866
      // Predicated region
      $region33: #{forward.9} parent=31 // pred_check
        %p3868 = pneg %p100
      $region34: #{forward.9} parent=31 // pred_check_branch
        %3870 = sbr.rel (%p3868) target = $region36
      $region35: #{forward.9} parent=31 // pred_region
        %s3871 = smul.u32 256, %s14
      $region36: #{forward.9} parent=31 // pred_fallthru
        _
    $region32: #{forward.9} parent=5 // pred_fallthru
      _
    %p3872 = scmp.le.s32.totalorder 2, %s9
    // Predicated region
    $region37: #{forward.9} parent=5 // pred_check
      %p3873 = pneg %p3872
    $region38: #{forward.9} parent=5 // pred_check_branch
      %3875 = sbr.rel (%p3873) target = $region40
    $region39: #{forward.9} parent=5 // pred_region
      %s3876 = ssub.s32 %s9, 2
      // Predicated region
      $region41: #{forward.9} parent=39 // pred_check
        %p3877 = pneg %p106
      $region42: #{forward.9} parent=39 // pred_check_branch
        %3879 = sbr.rel (%p3877) target = $region44
      $region43: #{forward.9} parent=39 // pred_region
        %s3880 = smul.u32 256, %s15
        %p3881 = scmp.lt.s32.totalorder %s3880, 1023
        %s3882 = scalar_select %p3881, %s3880, 1023
        %s3883 = smul.addr %s3882, 4
        %s3884 = scalar_lea.vmem %s3, %s3883
      $region44: #{forward.9} parent=39 // pred_fallthru
        _
    $region40: #{forward.9} parent=5 // pred_fallthru
      _
  $region6: #{forward.9} parent=0 // loop_footer
    %s13 = sadd.s32 1, %s9
  $region7: #{forward.9} parent=0 // loop_footer_branch
    %8 = sbr.rel target = $region3
  $region8: #{forward.9} parent=0 // loop_exit
    _

</llo_original>
